<compile_context>
chip_gen: v7x
topology: tpu7x:2x2x1
jax: 0.10.0
libtpu: 0.0.40
codegen_flags: <defaults>
</compile_context>

<pallas_src>
import functools

import jax
import jax.numpy as jnp
from jax.experimental import pallas as pl
from jax.experimental.pallas import tpu as pltpu

BN_EPS = 1e-5
MAX_TM = 256
MAX_TN = 256
MAX_TK = 256
COMPUTE_DTYPE = jnp.bfloat16


# ----------------------------------------------------------------------------- kernel
def _mm_scale_bias_kernel(x_ref, w_ref, s_ref, b_ref, *rest, relu, fuse_add):
    """Tiled matmul with fused per-channel scale/bias (+ optional residual add, ReLU)."""
    if fuse_add:
        id_ref, o_ref, acc_ref = rest
    else:
        id_ref = None
        o_ref, acc_ref = rest

    @pl.when(pl.program_id(2) == 0)
    def _init():
        acc_ref[...] = jnp.zeros_like(acc_ref)

    acc_ref[...] += jnp.dot(x_ref[...], w_ref[...],
                            preferred_element_type=jnp.float32)

    @pl.when(pl.program_id(2) == pl.num_programs(2) - 1)
    def _finalize():
        y = acc_ref[...] * s_ref[...] + b_ref[...]
        if fuse_add:
            y = y + id_ref[...].astype(jnp.float32)
        if relu:
            y = jnp.maximum(y, 0.0)
        o_ref[...] = y.astype(o_ref.dtype)


# ----------------------------------------------------------------------------- wrapper
def _round_up(x, m):
    return (x + m - 1) // m * m


def matmul_scale_bias(x, w, scale, bias, relu, identity=None,
                      out_dtype=COMPUTE_DTYPE):
    """(M,K) @ (K,N) * scale[N] + bias[N] (+ identity) (+ ReLU), bf16 operands, f32 acc."""
    M, K = x.shape
    K2, N = w.shape
    assert K == K2

    # Adaptive, lane-dense tiles: no bigger than the (padded) problem, capped at 256.
    tm = min(_round_up(M, 8), MAX_TM)
    tn = min(_round_up(N, 128), MAX_TN)
    tk = min(_round_up(K, 128), MAX_TK)
    Mp, Kp, Np = _round_up(M, tm), _round_up(K, tk), _round_up(N, tn)

    xp = x.astype(COMPUTE_DTYPE)
    wp = w.astype(COMPUTE_DTYPE)
    if (Mp, Kp) != (M, K):
        xp = jnp.pad(xp, ((0, Mp - M), (0, Kp - K)))
    if (Kp, Np) != (K, N):
        wp = jnp.pad(wp, ((0, Kp - K), (0, Np - N)))
    sp = jnp.pad(scale.astype(jnp.float32), (0, Np - N)).reshape(1, Np)
    bp = jnp.pad(bias.astype(jnp.float32), (0, Np - N)).reshape(1, Np)

    in_specs = [
        pl.BlockSpec((tm, tk), lambda i, j, k: (i, k)),
        pl.BlockSpec((tk, tn), lambda i, j, k: (k, j)),
        pl.BlockSpec((1, tn), lambda i, j, k: (0, j)),
        pl.BlockSpec((1, tn), lambda i, j, k: (0, j)),
    ]
    args = [xp, wp, sp, bp]

    fuse_add = identity is not None
    if fuse_add:
        idp = identity.astype(COMPUTE_DTYPE)
        if (Mp, Np) != idp.shape:
            idp = jnp.pad(idp, ((0, Mp - idp.shape[0]), (0, Np - idp.shape[1])))
        in_specs.append(pl.BlockSpec((tm, tn), lambda i, j, k: (i, j)))
        args.append(idp)

    grid = (Mp // tm, Np // tn, Kp // tk)
    out = pl.pallas_call(
        functools.partial(_mm_scale_bias_kernel, relu=relu, fuse_add=fuse_add),
        out_shape=jax.ShapeDtypeStruct((Mp, Np), out_dtype),
        grid_spec=pltpu.PrefetchScalarGridSpec(
            num_scalar_prefetch=0,
            grid=grid,
            in_specs=in_specs,
            out_specs=pl.BlockSpec((tm, tn), lambda i, j, k: (i, j)),
            scratch_shapes=[pltpu.VMEM((tm, tn), jnp.float32)],
        ),
        compiler_params=pltpu.CompilerParams(
            dimension_semantics=("parallel", "parallel", "arbitrary"),
            vmem_limit_bytes=32 * 1024 * 1024),
    )(*args)
    return out[:M, :N]


# ----------------------------------------------------------------------------- glue (im2col, pooling)
def im2col(x, kh, kw, stride, padding):
    """x: NHWC -> patches (N*OH*OW, kh*kw*C). stride/padding are static Python ints."""
    N, H, W, C = x.shape
    xp = jnp.pad(x, ((0, 0), (padding, padding), (padding, padding), (0, 0)))
    OH = (H + 2 * padding - kh) // stride + 1
    OW = (W + 2 * padding - kw) // stride + 1
    cols = []
    for i in range(kh):
        for j in range(kw):
            cols.append(xp[:, i:i + stride * OH:stride, j:j + stride * OW:stride, :])
    patches = jnp.stack(cols, axis=3)  # (N, OH, OW, kh*kw, C)
    return patches.reshape(N * OH * OW, kh * kw * C), (N, OH, OW)


def fold_bn(bn):
    scale = bn["gamma"] / jnp.sqrt(bn["var"] + BN_EPS)
    bias = bn["beta"] - bn["mean"] * scale
    return scale, bias


def conv_bn(x_nhwc, w, bn, stride, padding, relu, identity=None):
    """Conv2d (no bias) + folded BatchNorm (+ residual) (+ ReLU) via fused Pallas matmul."""
    cout, cin, kh, kw = w.shape
    patches, (N, OH, OW) = im2col(x_nhwc.astype(COMPUTE_DTYPE), kh, kw, stride, padding)
    w_mat = jnp.transpose(w, (2, 3, 1, 0)).reshape(kh * kw * cin, cout)
    scale, bias = fold_bn(bn)
    y = matmul_scale_bias(patches, w_mat, scale, bias, relu, identity=identity)
    return y.reshape(N, OH, OW, cout)


def maxpool2d(x, k=3, stride=2, padding=1):
    # small op; kept in plain JAX glue
    N, H, W, C = x.shape
    xp = jnp.pad(x, ((0, 0), (padding, padding), (padding, padding), (0, 0)),
                 constant_values=-jnp.inf)
    OH = (H + 2 * padding - k) // stride + 1
    OW = (W + 2 * padding - k) // stride + 1
    out = jnp.full((N, OH, OW, C), -jnp.inf, x.dtype)
    for i in range(k):
        for j in range(k):
            out = jnp.maximum(
                out, xp[:, i:i + stride * OH:stride, j:j + stride * OW:stride, :])
    return out


# ----------------------------------------------------------------------------- model
def basic_block(x, blk, stride):
    if "ds_conv" in blk:
        identity = conv_bn(x, blk["ds_conv"], blk["ds_bn"],
                           stride=stride, padding=0, relu=False)
    else:
        identity = x
    out = conv_bn(x, blk["conv1"], blk["bn1"], stride=stride, padding=1, relu=True)
    N, H, W, C = out.shape
    id2d = identity.reshape(N * H * W, C)
    # conv2 + BN2 + residual add + ReLU fused into one Pallas kernel.
    out = conv_bn(out, blk["conv2"], blk["bn2"], stride=1, padding=1, relu=True,
                  identity=id2d)
    return out


def resnet_forward(params, x_nchw, arch):
    x = jnp.transpose(x_nchw, (0, 2, 3, 1)).astype(COMPUTE_DTYPE)  # NCHW -> NHWC
    # stem: conv7x7 s2 p3 + BN + ReLU + maxpool3x3 s2 p1
    x = conv_bn(x, params["stem_conv"], params["stem_bn"], stride=2, padding=3, relu=True)
    x = maxpool2d(x, k=3, stride=2, padding=1)
    for stage_params, stage_strides in zip(params["stages"], arch):
        for blk, s in zip(stage_params, stage_strides):
            x = basic_block(x, blk, s)
    # adaptive avg pool (1,1) + flatten (tiny reduction; plain JAX glue, f32)
    x = jnp.mean(x.astype(jnp.float32), axis=(1, 2))  # (N, C)
    # fc: M=2, K=512, N=10 — far too small for a tiled MXU pass; plain XLA dot.
    return x @ params["fc_w"].T.astype(jnp.float32) + params["fc_b"]


# ----------------------------------------------------------------------------- deterministic init
def init_params(key, layers, num_classes):
    keys = iter(jax.random.split(key, 256))

    def conv_w(shape):
        return 0.05 * jax.random.normal(next(keys), shape, jnp.float32)

    def bn_p(c):
        return dict(
            gamma=1.0 + 0.1 * jax.random.normal(next(keys), (c,), jnp.float32),
            beta=0.1 * jax.random.normal(next(keys), (c,), jnp.float32),
            mean=0.1 * jax.random.normal(next(keys), (c,), jnp.float32),
            var=1.0 + 0.1 * jnp.abs(jax.random.normal(next(keys), (c,), jnp.float32)),
        )

    params = {
        "stem_conv": conv_w((64, 3, 7, 7)),
        "stem_bn": bn_p(64),
        "stages": [],
    }
    arch = []  # static (non-traced) per-block strides

    inplanes = 64
    expansion = 1  # BasicBlock
    for planes, num_blocks, stride in zip((64, 128, 256, 512), layers, (1, 2, 2, 2)):
        stage = []
        strides = []
        for b in range(num_blocks):
            s = stride if b == 0 else 1
            blk = {
                "conv1": conv_w((planes, inplanes, 3, 3)),
                "bn1": bn_p(planes),
                "conv2": conv_w((planes, planes, 3, 3)),
                "bn2": bn_p(planes),
            }
            if s != 1 or inplanes != planes * expansion:
                blk["ds_conv"] = conv_w((planes * expansion, inplanes, 1, 1))
                blk["ds_bn"] = bn_p(planes * expansion)
            inplanes = planes * expansion
            stage.append(blk)
            strides.append(s)
        params["stages"].append(stage)
        arch.append(tuple(strides))

    params["fc_w"] = 0.05 * jax.random.normal(next(keys), (num_classes, 512 * expansion),
                                              jnp.float32)
    params["fc_b"] = 0.05 * jax.random.normal(next(keys), (num_classes,), jnp.float32)
    return params, tuple(arch)


# ----------------------------------------------------------------------------- main
if __name__ == "__main__":
    key = jax.random.PRNGKey(0)
    pkey, xkey = jax.random.split(key)

    layers = [1, 1, 1, 1]     # one BasicBlock per stage (small, deterministic)
    num_classes = 10
    params, arch = init_params(pkey, layers, num_classes)

    x = jax.random.normal(xkey, (2, 3, 32, 32), jnp.float32)  # NCHW, like PyTorch

    fwd = jax.jit(functools.partial(resnet_forward, arch=arch))  # arch is static
    out = jax.block_until_ready(fwd(params, x))

    assert out.shape == (2, num_classes), out.shape
    assert jnp.all(jnp.isfinite(out))
    print("KERNEL_OK")
</pallas_src>

<mosaic_0001>
module attributes {stable_mosaic.version = 11 : i64} {
  func.func @_mm_scale_bias_kernel(%arg0: i32, %arg1: i32, %arg2: i32, %arg3: memref<256x256xbf16, #tpu.memory_space<vmem>>, %arg4: memref<256x128xbf16, #tpu.memory_space<vmem>>, %arg5: memref<1x128xf32, #tpu.memory_space<vmem>>, %arg6: memref<1x128xf32, #tpu.memory_space<vmem>>, %arg7: memref<256x128xbf16, #tpu.memory_space<vmem>>, %arg8: memref<256x128xf32, #tpu.memory_space<vmem>>) attributes {dimension_semantics = [#tpu.dimension_semantics<parallel>, #tpu.dimension_semantics<parallel>, #tpu.dimension_semantics<arbitrary>], iteration_bounds = array<i64: 2, 1, 1>, scalar_prefetch = 0 : i64, scratch_operands = 1 : i64, tpu.core_type = #tpu.core_type<tc>, window_params = [{transform_indices = @transform_0, window_bounds = array<i64: 256, 256>}, {transform_indices = @transform_1, window_bounds = array<i64: 256, 128>}, {transform_indices = @transform_2, window_bounds = array<i64: 1, 128>}, {transform_indices = @transform_3, window_bounds = array<i64: 1, 128>}, {transform_indices = @transform_4, window_bounds = array<i64: 256, 128>}]} {
    %c0_i32 = arith.constant 0 : i32
    %0 = arith.cmpi eq, %arg2, %c0_i32 : i32
    %1 = arith.extui %0 : i1 to i32
    %c0_i32_0 = arith.constant 0 : i32
    %2 = arith.cmpi ne, %1, %c0_i32_0 : i32
    scf.if %2 {
      %cst_10 = arith.constant 0.000000e+00 : f32
      %12 = vector.broadcast %cst_10 : f32 to vector<256x128xf32>
      %c0_11 = arith.constant 0 : index
      %c0_12 = arith.constant 0 : index
      %13 = vector.load %arg8[%c0_11, %c0_12] : memref<256x128xf32, #tpu.memory_space<vmem>>, vector<256x128xf32>
      tpu.vector_store %arg8[%c0_11, %c0_12], %12 {strides = array<i32>} : memref<256x128xf32, #tpu.memory_space<vmem>>, vector<256x128xf32>,
    } else {
    }
    %c0 = arith.constant 0 : index
    %c0_1 = arith.constant 0 : index
    %3 = vector.load %arg8[%c0, %c0_1] : memref<256x128xf32, #tpu.memory_space<vmem>>, vector<256x128xf32>
    %c0_2 = arith.constant 0 : index
    %c0_3 = arith.constant 0 : index
    %4 = vector.load %arg3[%c0_2, %c0_3] : memref<256x256xbf16, #tpu.memory_space<vmem>>, vector<256x256xbf16>
    %c0_4 = arith.constant 0 : index
    %c0_5 = arith.constant 0 : index
    %5 = vector.load %arg4[%c0_4, %c0_5] : memref<256x128xbf16, #tpu.memory_space<vmem>>, vector<256x128xbf16>
    %cst = arith.constant dense<0.000000e+00> : vector<256x128xf32>
    %6 = tpu.matmul %4, %5, %cst {dimension_numbers = #tpu.dot_dimension_numbers<[1], [0], [0], [1], [0, 0, 1, 1], [], []>} : vector<256x256xbf16>, vector<256x128xbf16>, vector<256x128xf32> -> vector<256x128xf32>
    %7 = arith.addf %3, %6 : vector<256x128xf32>
    %c0_6 = arith.constant 0 : index
    %c0_7 = arith.constant 0 : index
    %8 = vector.load %arg8[%c0_6, %c0_7] : memref<256x128xf32, #tpu.memory_space<vmem>>, vector<256x128xf32>
    tpu.vector_store %arg8[%c0_6, %c0_7], %7 {strides = array<i32>} : memref<256x128xf32, #tpu.memory_space<vmem>>, vector<256x128xf32>,
    %c0_i32_8 = arith.constant 0 : i32
    %9 = arith.cmpi eq, %arg2, %c0_i32_8 : i32
    %10 = arith.extui %9 : i1 to i32
    %c0_i32_9 = arith.constant 0 : i32
    %11 = arith.cmpi ne, %10, %c0_i32_9 : i32
    scf.if %11 {
      %c0_10 = arith.constant 0 : index
      %c0_11 = arith.constant 0 : index
      %12 = vector.load %arg8[%c0_10, %c0_11] : memref<256x128xf32, #tpu.memory_space<vmem>>, vector<256x128xf32>
      %c0_12 = arith.constant 0 : index
      %c0_13 = arith.constant 0 : index
      %13 = vector.load %arg5[%c0_12, %c0_13] : memref<1x128xf32, #tpu.memory_space<vmem>>, vector<1x128xf32>
      %14 = vector.broadcast %13 : vector<1x128xf32> to vector<256x128xf32>
      %15 = arith.mulf %12, %14 : vector<256x128xf32>
      %c0_14 = arith.constant 0 : index
      %c0_15 = arith.constant 0 : index
      %16 = vector.load %arg6[%c0_14, %c0_15] : memref<1x128xf32, #tpu.memory_space<vmem>>, vector<1x128xf32>
      %17 = vector.broadcast %16 : vector<1x128xf32> to vector<256x128xf32>
      %18 = arith.addf %15, %17 : vector<256x128xf32>
      %cst_16 = arith.constant 0.000000e+00 : f32
      %19 = vector.broadcast %cst_16 : f32 to vector<256x128xf32>
      %20 = arith.maximumf %18, %19 : vector<256x128xf32>
      %21 = arith.truncf %20 : vector<256x128xf32> to vector<256x128xbf16>
      %c0_17 = arith.constant 0 : index
      %c0_18 = arith.constant 0 : index
      %22 = vector.load %arg7[%c0_17, %c0_18] : memref<256x128xbf16, #tpu.memory_space<vmem>>, vector<256x128xbf16>
      tpu.vector_store %arg7[%c0_17, %c0_18], %21 {strides = array<i32>} : memref<256x128xbf16, #tpu.memory_space<vmem>>, vector<256x128xbf16>,
    } else {
    }
    return
  }
  func.func @transform_0(%arg0: i32, %arg1: i32, %arg2: i32) -> (i32, i32) {
    %c0_i32 = arith.constant 0 : i32
    return %arg0, %arg2 : i32, i32
  }
  func.func @transform_1(%arg0: i32, %arg1: i32, %arg2: i32) -> (i32, i32) {
    %c0_i32 = arith.constant 0 : i32
    return %arg2, %arg1 : i32, i32
  }
  func.func @transform_2(%arg0: i32, %arg1: i32, %arg2: i32) -> (i32, i32) {
    %c0_i32 = arith.constant 0 : i32
    %c0_i32_0 = arith.constant 0 : i32
    return %c0_i32, %arg1 : i32, i32
  }
  func.func @transform_3(%arg0: i32, %arg1: i32, %arg2: i32) -> (i32, i32) {
    %c0_i32 = arith.constant 0 : i32
    %c0_i32_0 = arith.constant 0 : i32
    return %c0_i32, %arg1 : i32, i32
  }
  func.func @transform_4(%arg0: i32, %arg1: i32, %arg2: i32) -> (i32, i32) {
    %c0_i32 = arith.constant 0 : i32
    return %arg0, %arg1 : i32, i32
  }
}

module attributes {stable_mosaic.version = 11 : i64} {
  func.func @_mm_scale_bias_kernel(%arg0: i32, %arg1: i32, %arg2: i32, %arg3: memref<128x256xbf16, #tpu.memory_space<vmem>>, %arg4: memref<256x128xbf16, #tpu.memory_space<vmem>>, %arg5: memref<1x128xf32, #tpu.memory_space<vmem>>, %arg6: memref<1x128xf32, #tpu.memory_space<vmem>>, %arg7: memref<128x128xbf16, #tpu.memory_space<vmem>>, %arg8: memref<128x128xf32, #tpu.memory_space<vmem>>) attributes {dimension_semantics = [#tpu.dimension_semantics<parallel>, #tpu.dimension_semantics<parallel>, #tpu.dimension_semantics<arbitrary>], iteration_bounds = array<i64: 1, 1, 3>, scalar_prefetch = 0 : i64, scratch_operands = 1 : i64, tpu.core_type = #tpu.core_type<tc>, window_params = [{transform_indices = @transform_0, window_bounds = array<i64: 128, 256>}, {transform_indices = @transform_1, window_bounds = array<i64: 256, 128>}, {transform_indices = @transform_2, window_bounds = array<i64: 1, 128>}, {transform_indices = @transform_3, window_bounds = array<i64: 1, 128>}, {transform_indices = @transform_4, window_bounds = array<i64: 128, 128>}]} {
    %c0_i32 = arith.constant 0 : i32
    %0 = arith.cmpi eq, %arg2, %c0_i32 : i32
    %1 = arith.extui %0 : i1 to i32
    %c0_i32_0 = arith.constant 0 : i32
    %2 = arith.cmpi ne, %1, %c0_i32_0 : i32
    scf.if %2 {
      %cst_9 = arith.constant 0.000000e+00 : f32
      %12 = vector.broadcast %cst_9 : f32 to vector<128x128xf32>
      %c0_10 = arith.constant 0 : index
      %c0_11 = arith.constant 0 : index
      %13 = vector.load %arg8[%c0_10, %c0_11] : memref<128x128xf32, #tpu.memory_space<vmem>>, vector<128x128xf32>
      tpu.vector_store %arg8[%c0_10, %c0_11], %12 {strides = array<i32>} : memref<128x128xf32, #tpu.memory_space<vmem>>, vector<128x128xf32>,
    } else {
    }
    %c0 = arith.constant 0 : index
    %c0_1 = arith.constant 0 : index
    %3 = vector.load %arg8[%c0, %c0_1] : memref<128x128xf32, #tpu.memory_space<vmem>>, vector<128x128xf32>
    %c0_2 = arith.constant 0 : index
    %c0_3 = arith.constant 0 : index
    %4 = vector.load %arg3[%c0_2, %c0_3] : memref<128x256xbf16, #tpu.memory_space<vmem>>, vector<128x256xbf16>
    %c0_4 = arith.constant 0 : index
    %c0_5 = arith.constant 0 : index
    %5 = vector.load %arg4[%c0_4, %c0_5] : memref<256x128xbf16, #tpu.memory_space<vmem>>, vector<256x128xbf16>
    %cst = arith.constant dense<0.000000e+00> : vector<128x128xf32>
    %6 = tpu.matmul %4, %5, %cst {dimension_numbers = #tpu.dot_dimension_numbers<[1], [0], [0], [1], [0, 0, 1, 1], [], []>} : vector<128x256xbf16>, vector<256x128xbf16>, vector<128x128xf32> -> vector<128x128xf32>
    %7 = arith.addf %3, %6 : vector<128x128xf32>
    %c0_6 = arith.constant 0 : index
    %c0_7 = arith.constant 0 : index
    %8 = vector.load %arg8[%c0_6, %c0_7] : memref<128x128xf32, #tpu.memory_space<vmem>>, vector<128x128xf32>
    tpu.vector_store %arg8[%c0_6, %c0_7], %7 {strides = array<i32>} : memref<128x128xf32, #tpu.memory_space<vmem>>, vector<128x128xf32>,
    %c2_i32 = arith.constant 2 : i32
    %9 = arith.cmpi eq, %arg2, %c2_i32 : i32
    %10 = arith.extui %9 : i1 to i32
    %c0_i32_8 = arith.constant 0 : i32
    %11 = arith.cmpi ne, %10, %c0_i32_8 : i32
    scf.if %11 {
      %c0_9 = arith.constant 0 : index
      %c0_10 = arith.constant 0 : index
      %12 = vector.load %arg8[%c0_9, %c0_10] : memref<128x128xf32, #tpu.memory_space<vmem>>, vector<128x128xf32>
      %c0_11 = arith.constant 0 : index
      %c0_12 = arith.constant 0 : index
      %13 = vector.load %arg5[%c0_11, %c0_12] : memref<1x128xf32, #tpu.memory_space<vmem>>, vector<1x128xf32>
      %14 = vector.broadcast %13 : vector<1x128xf32> to vector<128x128xf32>
      %15 = arith.mulf %12, %14 : vector<128x128xf32>
      %c0_13 = arith.constant 0 : index
      %c0_14 = arith.constant 0 : index
      %16 = vector.load %arg6[%c0_13, %c0_14] : memref<1x128xf32, #tpu.memory_space<vmem>>, vector<1x128xf32>
      %17 = vector.broadcast %16 : vector<1x128xf32> to vector<128x128xf32>
      %18 = arith.addf %15, %17 : vector<128x128xf32>
      %cst_15 = arith.constant 0.000000e+00 : f32
      %19 = vector.broadcast %cst_15 : f32 to vector<128x128xf32>
      %20 = arith.maximumf %18, %19 : vector<128x128xf32>
      %21 = arith.truncf %20 : vector<128x128xf32> to vector<128x128xbf16>
      %c0_16 = arith.constant 0 : index
      %c0_17 = arith.constant 0 : index
      %22 = vector.load %arg7[%c0_16, %c0_17] : memref<128x128xbf16, #tpu.memory_space<vmem>>, vector<128x128xbf16>
      tpu.vector_store %arg7[%c0_16, %c0_17], %21 {strides = array<i32>} : memref<128x128xbf16, #tpu.memory_space<vmem>>, vector<128x128xbf16>,
    } else {
    }
    return
  }
  func.func @transform_0(%arg0: i32, %arg1: i32, %arg2: i32) -> (i32, i32) {
    %c0_i32 = arith.constant 0 : i32
    return %arg0, %arg2 : i32, i32
  }
  func.func @transform_1(%arg0: i32, %arg1: i32, %arg2: i32) -> (i32, i32) {
    %c0_i32 = arith.constant 0 : i32
    return %arg2, %arg1 : i32, i32
  }
  func.func @transform_2(%arg0: i32, %arg1: i32, %arg2: i32) -> (i32, i32) {
    %c0_i32 = arith.constant 0 : i32
    %c0_i32_0 = arith.constant 0 : i32
    return %c0_i32, %arg1 : i32, i32
  }
  func.func @transform_3(%arg0: i32, %arg1: i32, %arg2: i32) -> (i32, i32) {
    %c0_i32 = arith.constant 0 : i32
    %c0_i32_0 = arith.constant 0 : i32
    return %c0_i32, %arg1 : i32, i32
  }
  func.func @transform_4(%arg0: i32, %arg1: i32, %arg2: i32) -> (i32, i32) {
    %c0_i32 = arith.constant 0 : i32
    return %arg0, %arg1 : i32, i32
  }
}

module attributes {stable_mosaic.version = 11 : i64} {
  func.func @_mm_scale_bias_kernel(%arg0: i32, %arg1: i32, %arg2: i32, %arg3: memref<128x256xbf16, #tpu.memory_space<vmem>>, %arg4: memref<256x128xbf16, #tpu.memory_space<vmem>>, %arg5: memref<1x128xf32, #tpu.memory_space<vmem>>, %arg6: memref<1x128xf32, #tpu.memory_space<vmem>>, %arg7: memref<128x128xbf16, #tpu.memory_space<vmem>>, %arg8: memref<128x128xbf16, #tpu.memory_space<vmem>>, %arg9: memref<128x128xf32, #tpu.memory_space<vmem>>) attributes {dimension_semantics = [#tpu.dimension_semantics<parallel>, #tpu.dimension_semantics<parallel>, #tpu.dimension_semantics<arbitrary>], iteration_bounds = array<i64: 1, 1, 3>, scalar_prefetch = 0 : i64, scratch_operands = 1 : i64, tpu.core_type = #tpu.core_type<tc>, window_params = [{transform_indices = @transform_0, window_bounds = array<i64: 128, 256>}, {transform_indices = @transform_1, window_bounds = array<i64: 256, 128>}, {transform_indices = @transform_2, window_bounds = array<i64: 1, 128>}, {transform_indices = @transform_3, window_bounds = array<i64: 1, 128>}, {transform_indices = @transform_4, window_bounds = array<i64: 128, 128>}, {transform_indices = @transform_5, window_bounds = array<i64: 128, 128>}]} {
    %c0_i32 = arith.constant 0 : i32
    %0 = arith.cmpi eq, %arg2, %c0_i32 : i32
    %1 = arith.extui %0 : i1 to i32
    %c0_i32_0 = arith.constant 0 : i32
    %2 = arith.cmpi ne, %1, %c0_i32_0 : i32
    scf.if %2 {
      %cst_9 = arith.constant 0.000000e+00 : f32
      %12 = vector.broadcast %cst_9 : f32 to vector<128x128xf32>
      %c0_10 = arith.constant 0 : index
      %c0_11 = arith.constant 0 : index
      %13 = vector.load %arg9[%c0_10, %c0_11] : memref<128x128xf32, #tpu.memory_space<vmem>>, vector<128x128xf32>
      tpu.vector_store %arg9[%c0_10, %c0_11], %12 {strides = array<i32>} : memref<128x128xf32, #tpu.memory_space<vmem>>, vector<128x128xf32>,
    } else {
    }
    %c0 = arith.constant 0 : index
    %c0_1 = arith.constant 0 : index
    %3 = vector.load %arg9[%c0, %c0_1] : memref<128x128xf32, #tpu.memory_space<vmem>>, vector<128x128xf32>
    %c0_2 = arith.constant 0 : index
    %c0_3 = arith.constant 0 : index
    %4 = vector.load %arg3[%c0_2, %c0_3] : memref<128x256xbf16, #tpu.memory_space<vmem>>, vector<128x256xbf16>
    %c0_4 = arith.constant 0 : index
    %c0_5 = arith.constant 0 : index
    %5 = vector.load %arg4[%c0_4, %c0_5] : memref<256x128xbf16, #tpu.memory_space<vmem>>, vector<256x128xbf16>
    %cst = arith.constant dense<0.000000e+00> : vector<128x128xf32>
    %6 = tpu.matmul %4, %5, %cst {dimension_numbers = #tpu.dot_dimension_numbers<[1], [0], [0], [1], [0, 0, 1, 1], [], []>} : vector<128x256xbf16>, vector<256x128xbf16>, vector<128x128xf32> -> vector<128x128xf32>
    %7 = arith.addf %3, %6 : vector<128x128xf32>
    %c0_6 = arith.constant 0 : index
    %c0_7 = arith.constant 0 : index
    %8 = vector.load %arg9[%c0_6, %c0_7] : memref<128x128xf32, #tpu.memory_space<vmem>>, vector<128x128xf32>
    tpu.vector_store %arg9[%c0_6, %c0_7], %7 {strides = array<i32>} : memref<128x128xf32, #tpu.memory_space<vmem>>, vector<128x128xf32>,
    %c2_i32 = arith.constant 2 : i32
    %9 = arith.cmpi eq, %arg2, %c2_i32 : i32
    %10 = arith.extui %9 : i1 to i32
    %c0_i32_8 = arith.constant 0 : i32
    %11 = arith.cmpi ne, %10, %c0_i32_8 : i32
    scf.if %11 {
      %c0_9 = arith.constant 0 : index
      %c0_10 = arith.constant 0 : index
      %12 = vector.load %arg9[%c0_9, %c0_10] : memref<128x128xf32, #tpu.memory_space<vmem>>, vector<128x128xf32>
      %c0_11 = arith.constant 0 : index
      %c0_12 = arith.constant 0 : index
      %13 = vector.load %arg5[%c0_11, %c0_12] : memref<1x128xf32, #tpu.memory_space<vmem>>, vector<1x128xf32>
      %14 = vector.broadcast %13 : vector<1x128xf32> to vector<128x128xf32>
      %15 = arith.mulf %12, %14 : vector<128x128xf32>
      %c0_13 = arith.constant 0 : index
      %c0_14 = arith.constant 0 : index
      %16 = vector.load %arg6[%c0_13, %c0_14] : memref<1x128xf32, #tpu.memory_space<vmem>>, vector<1x128xf32>
      %17 = vector.broadcast %16 : vector<1x128xf32> to vector<128x128xf32>
      %18 = arith.addf %15, %17 : vector<128x128xf32>
      %c0_15 = arith.constant 0 : index
      %c0_16 = arith.constant 0 : index
      %19 = vector.load %arg7[%c0_15, %c0_16] : memref<128x128xbf16, #tpu.memory_space<vmem>>, vector<128x128xbf16>
      %20 = arith.extf %19 : vector<128x128xbf16> to vector<128x128xf32>
      %21 = arith.addf %18, %20 : vector<128x128xf32>
      %cst_17 = arith.constant 0.000000e+00 : f32
      %22 = vector.broadcast %cst_17 : f32 to vector<128x128xf32>
      %23 = arith.maximumf %21, %22 : vector<128x128xf32>
      %24 = arith.truncf %23 : vector<128x128xf32> to vector<128x128xbf16>
      %c0_18 = arith.constant 0 : index
      %c0_19 = arith.constant 0 : index
      %25 = vector.load %arg8[%c0_18, %c0_19] : memref<128x128xbf16, #tpu.memory_space<vmem>>, vector<128x128xbf16>
      tpu.vector_store %arg8[%c0_18, %c0_19], %24 {strides = array<i32>} : memref<128x128xbf16, #tpu.memory_space<vmem>>, vector<128x128xbf16>,
    } else {
    }
    return
  }
  func.func @transform_0(%arg0: i32, %arg1: i32, %arg2: i32) -> (i32, i32) {
    %c0_i32 = arith.constant 0 : i32
    return %arg0, %arg2 : i32, i32
  }
  func.func @transform_1(%arg0: i32, %arg1: i32, %arg2: i32) -> (i32, i32) {
    %c0_i32 = arith.constant 0 : i32
    return %arg2, %arg1 : i32, i32
  }
  func.func @transform_2(%arg0: i32, %arg1: i32, %arg2: i32) -> (i32, i32) {
    %c0_i32 = arith.constant 0 : i32
    %c0_i32_0 = arith.constant 0 : i32
    return %c0_i32, %arg1 : i32, i32
  }
  func.func @transform_3(%arg0: i32, %arg1: i32, %arg2: i32) -> (i32, i32) {
    %c0_i32 = arith.constant 0 : i32
    %c0_i32_0 = arith.constant 0 : i32
    return %c0_i32, %arg1 : i32, i32
  }
  func.func @transform_4(%arg0: i32, %arg1: i32, %arg2: i32) -> (i32, i32) {
    %c0_i32 = arith.constant 0 : i32
    return %arg0, %arg1 : i32, i32
  }
  func.func @transform_5(%arg0: i32, %arg1: i32, %arg2: i32) -> (i32, i32) {
    %c0_i32 = arith.constant 0 : i32
    return %arg0, %arg1 : i32, i32
  }
}

module attributes {stable_mosaic.version = 11 : i64} {
  func.func @_mm_scale_bias_kernel(%arg0: i32, %arg1: i32, %arg2: i32, %arg3: memref<32x256xbf16, #tpu.memory_space<vmem>>, %arg4: memref<256x128xbf16, #tpu.memory_space<vmem>>, %arg5: memref<1x128xf32, #tpu.memory_space<vmem>>, %arg6: memref<1x128xf32, #tpu.memory_space<vmem>>, %arg7: memref<32x128xbf16, #tpu.memory_space<vmem>>, %arg8: memref<32x128xf32, #tpu.memory_space<vmem>>) attributes {dimension_semantics = [#tpu.dimension_semantics<parallel>, #tpu.dimension_semantics<parallel>, #tpu.dimension_semantics<arbitrary>], iteration_bounds = array<i64: 1, 1, 3>, scalar_prefetch = 0 : i64, scratch_operands = 1 : i64, tpu.core_type = #tpu.core_type<tc>, window_params = [{transform_indices = @transform_0, window_bounds = array<i64: 32, 256>}, {transform_indices = @transform_1, window_bounds = array<i64: 256, 128>}, {transform_indices = @transform_2, window_bounds = array<i64: 1, 128>}, {transform_indices = @transform_3, window_bounds = array<i64: 1, 128>}, {transform_indices = @transform_4, window_bounds = array<i64: 32, 128>}]} {
    %c0_i32 = arith.constant 0 : i32
    %0 = arith.cmpi eq, %arg2, %c0_i32 : i32
    %1 = arith.extui %0 : i1 to i32
    %c0_i32_0 = arith.constant 0 : i32
    %2 = arith.cmpi ne, %1, %c0_i32_0 : i32
    scf.if %2 {
      %cst_9 = arith.constant 0.000000e+00 : f32
      %12 = vector.broadcast %cst_9 : f32 to vector<32x128xf32>
      %c0_10 = arith.constant 0 : index
      %c0_11 = arith.constant 0 : index
      %13 = vector.load %arg8[%c0_10, %c0_11] : memref<32x128xf32, #tpu.memory_space<vmem>>, vector<32x128xf32>
      tpu.vector_store %arg8[%c0_10, %c0_11], %12 {strides = array<i32>} : memref<32x128xf32, #tpu.memory_space<vmem>>, vector<32x128xf32>,
    } else {
    }
    %c0 = arith.constant 0 : index
    %c0_1 = arith.constant 0 : index
    %3 = vector.load %arg8[%c0, %c0_1] : memref<32x128xf32, #tpu.memory_space<vmem>>, vector<32x128xf32>
    %c0_2 = arith.constant 0 : index
    %c0_3 = arith.constant 0 : index
    %4 = vector.load %arg3[%c0_2, %c0_3] : memref<32x256xbf16, #tpu.memory_space<vmem>>, vector<32x256xbf16>
    %c0_4 = arith.constant 0 : index
    %c0_5 = arith.constant 0 : index
    %5 = vector.load %arg4[%c0_4, %c0_5] : memref<256x128xbf16, #tpu.memory_space<vmem>>, vector<256x128xbf16>
    %cst = arith.constant dense<0.000000e+00> : vector<32x128xf32>
    %6 = tpu.matmul %4, %5, %cst {dimension_numbers = #tpu.dot_dimension_numbers<[1], [0], [0], [1], [0, 0, 1, 1], [], []>} : vector<32x256xbf16>, vector<256x128xbf16>, vector<32x128xf32> -> vector<32x128xf32>
    %7 = arith.addf %3, %6 : vector<32x128xf32>
    %c0_6 = arith.constant 0 : index
    %c0_7 = arith.constant 0 : index
    %8 = vector.load %arg8[%c0_6, %c0_7] : memref<32x128xf32, #tpu.memory_space<vmem>>, vector<32x128xf32>
    tpu.vector_store %arg8[%c0_6, %c0_7], %7 {strides = array<i32>} : memref<32x128xf32, #tpu.memory_space<vmem>>, vector<32x128xf32>,
    %c2_i32 = arith.constant 2 : i32
    %9 = arith.cmpi eq, %arg2, %c2_i32 : i32
    %10 = arith.extui %9 : i1 to i32
    %c0_i32_8 = arith.constant 0 : i32
    %11 = arith.cmpi ne, %10, %c0_i32_8 : i32
    scf.if %11 {
      %c0_9 = arith.constant 0 : index
      %c0_10 = arith.constant 0 : index
      %12 = vector.load %arg8[%c0_9, %c0_10] : memref<32x128xf32, #tpu.memory_space<vmem>>, vector<32x128xf32>
      %c0_11 = arith.constant 0 : index
      %c0_12 = arith.constant 0 : index
      %13 = vector.load %arg5[%c0_11, %c0_12] : memref<1x128xf32, #tpu.memory_space<vmem>>, vector<1x128xf32>
      %14 = vector.broadcast %13 : vector<1x128xf32> to vector<32x128xf32>
      %15 = arith.mulf %12, %14 : vector<32x128xf32>
      %c0_13 = arith.constant 0 : index
      %c0_14 = arith.constant 0 : index
      %16 = vector.load %arg6[%c0_13, %c0_14] : memref<1x128xf32, #tpu.memory_space<vmem>>, vector<1x128xf32>
      %17 = vector.broadcast %16 : vector<1x128xf32> to vector<32x128xf32>
      %18 = arith.addf %15, %17 : vector<32x128xf32>
      %cst_15 = arith.constant 0.000000e+00 : f32
      %19 = vector.broadcast %cst_15 : f32 to vector<32x128xf32>
      %20 = arith.maximumf %18, %19 : vector<32x128xf32>
      %21 = arith.truncf %20 : vector<32x128xf32> to vector<32x128xbf16>
      %c0_16 = arith.constant 0 : index
      %c0_17 = arith.constant 0 : index
      %22 = vector.load %arg7[%c0_16, %c0_17] : memref<32x128xbf16, #tpu.memory_space<vmem>>, vector<32x128xbf16>
      tpu.vector_store %arg7[%c0_16, %c0_17], %21 {strides = array<i32>} : memref<32x128xbf16, #tpu.memory_space<vmem>>, vector<32x128xbf16>,
    } else {
    }
    return
  }
  func.func @transform_0(%arg0: i32, %arg1: i32, %arg2: i32) -> (i32, i32) {
    %c0_i32 = arith.constant 0 : i32
    return %arg0, %arg2 : i32, i32
  }
  func.func @transform_1(%arg0: i32, %arg1: i32, %arg2: i32) -> (i32, i32) {
    %c0_i32 = arith.constant 0 : i32
    return %arg2, %arg1 : i32, i32
  }
  func.func @transform_2(%arg0: i32, %arg1: i32, %arg2: i32) -> (i32, i32) {
    %c0_i32 = arith.constant 0 : i32
    %c0_i32_0 = arith.constant 0 : i32
    return %c0_i32, %arg1 : i32, i32
  }
  func.func @transform_3(%arg0: i32, %arg1: i32, %arg2: i32) -> (i32, i32) {
    %c0_i32 = arith.constant 0 : i32
    %c0_i32_0 = arith.constant 0 : i32
    return %c0_i32, %arg1 : i32, i32
  }
  func.func @transform_4(%arg0: i32, %arg1: i32, %arg2: i32) -> (i32, i32) {
    %c0_i32 = arith.constant 0 : i32
    return %arg0, %arg1 : i32, i32
  }
}

module attributes {stable_mosaic.version = 11 : i64} {
  func.func @_mm_scale_bias_kernel(%arg0: i32, %arg1: i32, %arg2: i32, %arg3: memref<32x256xbf16, #tpu.memory_space<vmem>>, %arg4: memref<256x128xbf16, #tpu.memory_space<vmem>>, %arg5: memref<1x128xf32, #tpu.memory_space<vmem>>, %arg6: memref<1x128xf32, #tpu.memory_space<vmem>>, %arg7: memref<32x128xbf16, #tpu.memory_space<vmem>>, %arg8: memref<32x128xbf16, #tpu.memory_space<vmem>>, %arg9: memref<32x128xf32, #tpu.memory_space<vmem>>) attributes {dimension_semantics = [#tpu.dimension_semantics<parallel>, #tpu.dimension_semantics<parallel>, #tpu.dimension_semantics<arbitrary>], iteration_bounds = array<i64: 1, 1, 5>, scalar_prefetch = 0 : i64, scratch_operands = 1 : i64, tpu.core_type = #tpu.core_type<tc>, window_params = [{transform_indices = @transform_0, window_bounds = array<i64: 32, 256>}, {transform_indices = @transform_1, window_bounds = array<i64: 256, 128>}, {transform_indices = @transform_2, window_bounds = array<i64: 1, 128>}, {transform_indices = @transform_3, window_bounds = array<i64: 1, 128>}, {transform_indices = @transform_4, window_bounds = array<i64: 32, 128>}, {transform_indices = @transform_5, window_bounds = array<i64: 32, 128>}]} {
    %c0_i32 = arith.constant 0 : i32
    %0 = arith.cmpi eq, %arg2, %c0_i32 : i32
    %1 = arith.extui %0 : i1 to i32
    %c0_i32_0 = arith.constant 0 : i32
    %2 = arith.cmpi ne, %1, %c0_i32_0 : i32
    scf.if %2 {
      %cst_9 = arith.constant 0.000000e+00 : f32
      %12 = vector.broadcast %cst_9 : f32 to vector<32x128xf32>
      %c0_10 = arith.constant 0 : index
      %c0_11 = arith.constant 0 : index
      %13 = vector.load %arg9[%c0_10, %c0_11] : memref<32x128xf32, #tpu.memory_space<vmem>>, vector<32x128xf32>
      tpu.vector_store %arg9[%c0_10, %c0_11], %12 {strides = array<i32>} : memref<32x128xf32, #tpu.memory_space<vmem>>, vector<32x128xf32>,
    } else {
    }
    %c0 = arith.constant 0 : index
    %c0_1 = arith.constant 0 : index
    %3 = vector.load %arg9[%c0, %c0_1] : memref<32x128xf32, #tpu.memory_space<vmem>>, vector<32x128xf32>
    %c0_2 = arith.constant 0 : index
    %c0_3 = arith.constant 0 : index
    %4 = vector.load %arg3[%c0_2, %c0_3] : memref<32x256xbf16, #tpu.memory_space<vmem>>, vector<32x256xbf16>
    %c0_4 = arith.constant 0 : index
    %c0_5 = arith.constant 0 : index
    %5 = vector.load %arg4[%c0_4, %c0_5] : memref<256x128xbf16, #tpu.memory_space<vmem>>, vector<256x128xbf16>
    %cst = arith.constant dense<0.000000e+00> : vector<32x128xf32>
    %6 = tpu.matmul %4, %5, %cst {dimension_numbers = #tpu.dot_dimension_numbers<[1], [0], [0], [1], [0, 0, 1, 1], [], []>} : vector<32x256xbf16>, vector<256x128xbf16>, vector<32x128xf32> -> vector<32x128xf32>
    %7 = arith.addf %3, %6 : vector<32x128xf32>
    %c0_6 = arith.constant 0 : index
    %c0_7 = arith.constant 0 : index
    %8 = vector.load %arg9[%c0_6, %c0_7] : memref<32x128xf32, #tpu.memory_space<vmem>>, vector<32x128xf32>
    tpu.vector_store %arg9[%c0_6, %c0_7], %7 {strides = array<i32>} : memref<32x128xf32, #tpu.memory_space<vmem>>, vector<32x128xf32>,
    %c4_i32 = arith.constant 4 : i32
    %9 = arith.cmpi eq, %arg2, %c4_i32 : i32
    %10 = arith.extui %9 : i1 to i32
    %c0_i32_8 = arith.constant 0 : i32
    %11 = arith.cmpi ne, %10, %c0_i32_8 : i32
    scf.if %11 {
      %c0_9 = arith.constant 0 : index
      %c0_10 = arith.constant 0 : index
      %12 = vector.load %arg9[%c0_9, %c0_10] : memref<32x128xf32, #tpu.memory_space<vmem>>, vector<32x128xf32>
      %c0_11 = arith.constant 0 : index
      %c0_12 = arith.constant 0 : index
      %13 = vector.load %arg5[%c0_11, %c0_12] : memref<1x128xf32, #tpu.memory_space<vmem>>, vector<1x128xf32>
      %14 = vector.broadcast %13 : vector<1x128xf32> to vector<32x128xf32>
      %15 = arith.mulf %12, %14 : vector<32x128xf32>
      %c0_13 = arith.constant 0 : index
      %c0_14 = arith.constant 0 : index
      %16 = vector.load %arg6[%c0_13, %c0_14] : memref<1x128xf32, #tpu.memory_space<vmem>>, vector<1x128xf32>
      %17 = vector.broadcast %16 : vector<1x128xf32> to vector<32x128xf32>
      %18 = arith.addf %15, %17 : vector<32x128xf32>
      %c0_15 = arith.constant 0 : index
      %c0_16 = arith.constant 0 : index
      %19 = vector.load %arg7[%c0_15, %c0_16] : memref<32x128xbf16, #tpu.memory_space<vmem>>, vector<32x128xbf16>
      %20 = arith.extf %19 : vector<32x128xbf16> to vector<32x128xf32>
      %21 = arith.addf %18, %20 : vector<32x128xf32>
      %cst_17 = arith.constant 0.000000e+00 : f32
      %22 = vector.broadcast %cst_17 : f32 to vector<32x128xf32>
      %23 = arith.maximumf %21, %22 : vector<32x128xf32>
      %24 = arith.truncf %23 : vector<32x128xf32> to vector<32x128xbf16>
      %c0_18 = arith.constant 0 : index
      %c0_19 = arith.constant 0 : index
      %25 = vector.load %arg8[%c0_18, %c0_19] : memref<32x128xbf16, #tpu.memory_space<vmem>>, vector<32x128xbf16>
      tpu.vector_store %arg8[%c0_18, %c0_19], %24 {strides = array<i32>} : memref<32x128xbf16, #tpu.memory_space<vmem>>, vector<32x128xbf16>,
    } else {
    }
    return
  }
  func.func @transform_0(%arg0: i32, %arg1: i32, %arg2: i32) -> (i32, i32) {
    %c0_i32 = arith.constant 0 : i32
    return %arg0, %arg2 : i32, i32
  }
  func.func @transform_1(%arg0: i32, %arg1: i32, %arg2: i32) -> (i32, i32) {
    %c0_i32 = arith.constant 0 : i32
    return %arg2, %arg1 : i32, i32
  }
  func.func @transform_2(%arg0: i32, %arg1: i32, %arg2: i32) -> (i32, i32) {
    %c0_i32 = arith.constant 0 : i32
    %c0_i32_0 = arith.constant 0 : i32
    return %c0_i32, %arg1 : i32, i32
  }
  func.func @transform_3(%arg0: i32, %arg1: i32, %arg2: i32) -> (i32, i32) {
    %c0_i32 = arith.constant 0 : i32
    %c0_i32_0 = arith.constant 0 : i32
    return %c0_i32, %arg1 : i32, i32
  }
  func.func @transform_4(%arg0: i32, %arg1: i32, %arg2: i32) -> (i32, i32) {
    %c0_i32 = arith.constant 0 : i32
    return %arg0, %arg1 : i32, i32
  }
  func.func @transform_5(%arg0: i32, %arg1: i32, %arg2: i32) -> (i32, i32) {
    %c0_i32 = arith.constant 0 : i32
    return %arg0, %arg1 : i32, i32
  }
}

module attributes {stable_mosaic.version = 11 : i64} {
  func.func @_mm_scale_bias_kernel(%arg0: i32, %arg1: i32, %arg2: i32, %arg3: memref<32x128xbf16, #tpu.memory_space<vmem>>, %arg4: memref<128x128xbf16, #tpu.memory_space<vmem>>, %arg5: memref<1x128xf32, #tpu.memory_space<vmem>>, %arg6: memref<1x128xf32, #tpu.memory_space<vmem>>, %arg7: memref<32x128xbf16, #tpu.memory_space<vmem>>, %arg8: memref<32x128xf32, #tpu.memory_space<vmem>>) attributes {dimension_semantics = [#tpu.dimension_semantics<parallel>, #tpu.dimension_semantics<parallel>, #tpu.dimension_semantics<arbitrary>], iteration_bounds = array<i64: 1, 1, 1>, scalar_prefetch = 0 : i64, scratch_operands = 1 : i64, tpu.core_type = #tpu.core_type<tc>, window_params = [{transform_indices = @transform_0, window_bounds = array<i64: 32, 128>}, {transform_indices = @transform_1, window_bounds = array<i64: 128, 128>}, {transform_indices = @transform_2, window_bounds = array<i64: 1, 128>}, {transform_indices = @transform_3, window_bounds = array<i64: 1, 128>}, {transform_indices = @transform_4, window_bounds = array<i64: 32, 128>}]} {
    %c0_i32 = arith.constant 0 : i32
    %0 = arith.cmpi eq, %arg2, %c0_i32 : i32
    %1 = arith.extui %0 : i1 to i32
    %c0_i32_0 = arith.constant 0 : i32
    %2 = arith.cmpi ne, %1, %c0_i32_0 : i32
    scf.if %2 {
      %cst_10 = arith.constant 0.000000e+00 : f32
      %12 = vector.broadcast %cst_10 : f32 to vector<32x128xf32>
      %c0_11 = arith.constant 0 : index
      %c0_12 = arith.constant 0 : index
      %13 = vector.load %arg8[%c0_11, %c0_12] : memref<32x128xf32, #tpu.memory_space<vmem>>, vector<32x128xf32>
      tpu.vector_store %arg8[%c0_11, %c0_12], %12 {strides = array<i32>} : memref<32x128xf32, #tpu.memory_space<vmem>>, vector<32x128xf32>,
    } else {
    }
    %c0 = arith.constant 0 : index
    %c0_1 = arith.constant 0 : index
    %3 = vector.load %arg8[%c0, %c0_1] : memref<32x128xf32, #tpu.memory_space<vmem>>, vector<32x128xf32>
    %c0_2 = arith.constant 0 : index
    %c0_3 = arith.constant 0 : index
    %4 = vector.load %arg3[%c0_2, %c0_3] : memref<32x128xbf16, #tpu.memory_space<vmem>>, vector<32x128xbf16>
    %c0_4 = arith.constant 0 : index
    %c0_5 = arith.constant 0 : index
    %5 = vector.load %arg4[%c0_4, %c0_5] : memref<128x128xbf16, #tpu.memory_space<vmem>>, vector<128x128xbf16>
    %cst = arith.constant dense<0.000000e+00> : vector<32x128xf32>
    %6 = tpu.matmul %4, %5, %cst {dimension_numbers = #tpu.dot_dimension_numbers<[1], [0], [0], [1], [0, 0, 1, 1], [], []>} : vector<32x128xbf16>, vector<128x128xbf16>, vector<32x128xf32> -> vector<32x128xf32>
    %7 = arith.addf %3, %6 : vector<32x128xf32>
    %c0_6 = arith.constant 0 : index
    %c0_7 = arith.constant 0 : index
    %8 = vector.load %arg8[%c0_6, %c0_7] : memref<32x128xf32, #tpu.memory_space<vmem>>, vector<32x128xf32>
    tpu.vector_store %arg8[%c0_6, %c0_7], %7 {strides = array<i32>} : memref<32x128xf32, #tpu.memory_space<vmem>>, vector<32x128xf32>,
    %c0_i32_8 = arith.constant 0 : i32
    %9 = arith.cmpi eq, %arg2, %c0_i32_8 : i32
    %10 = arith.extui %9 : i1 to i32
    %c0_i32_9 = arith.constant 0 : i32
    %11 = arith.cmpi ne, %10, %c0_i32_9 : i32
    scf.if %11 {
      %c0_10 = arith.constant 0 : index
      %c0_11 = arith.constant 0 : index
      %12 = vector.load %arg8[%c0_10, %c0_11] : memref<32x128xf32, #tpu.memory_space<vmem>>, vector<32x128xf32>
      %c0_12 = arith.constant 0 : index
      %c0_13 = arith.constant 0 : index
      %13 = vector.load %arg5[%c0_12, %c0_13] : memref<1x128xf32, #tpu.memory_space<vmem>>, vector<1x128xf32>
      %14 = vector.broadcast %13 : vector<1x128xf32> to vector<32x128xf32>
      %15 = arith.mulf %12, %14 : vector<32x128xf32>
      %c0_14 = arith.constant 0 : index
      %c0_15 = arith.constant 0 : index
      %16 = vector.load %arg6[%c0_14, %c0_15] : memref<1x128xf32, #tpu.memory_space<vmem>>, vector<1x128xf32>
      %17 = vector.broadcast %16 : vector<1x128xf32> to vector<32x128xf32>
      %18 = arith.addf %15, %17 : vector<32x128xf32>
      %19 = arith.truncf %18 : vector<32x128xf32> to vector<32x128xbf16>
      %c0_16 = arith.constant 0 : index
      %c0_17 = arith.constant 0 : index
      %20 = vector.load %arg7[%c0_16, %c0_17] : memref<32x128xbf16, #tpu.memory_space<vmem>>, vector<32x128xbf16>
      tpu.vector_store %arg7[%c0_16, %c0_17], %19 {strides = array<i32>} : memref<32x128xbf16, #tpu.memory_space<vmem>>, vector<32x128xbf16>,
    } else {
    }
    return
  }
  func.func @transform_0(%arg0: i32, %arg1: i32, %arg2: i32) -> (i32, i32) {
    %c0_i32 = arith.constant 0 : i32
    return %arg0, %arg2 : i32, i32
  }
  func.func @transform_1(%arg0: i32, %arg1: i32, %arg2: i32) -> (i32, i32) {
    %c0_i32 = arith.constant 0 : i32
    return %arg2, %arg1 : i32, i32
  }
  func.func @transform_2(%arg0: i32, %arg1: i32, %arg2: i32) -> (i32, i32) {
    %c0_i32 = arith.constant 0 : i32
    %c0_i32_0 = arith.constant 0 : i32
    return %c0_i32, %arg1 : i32, i32
  }
  func.func @transform_3(%arg0: i32, %arg1: i32, %arg2: i32) -> (i32, i32) {
    %c0_i32 = arith.constant 0 : i32
    %c0_i32_0 = arith.constant 0 : i32
    return %c0_i32, %arg1 : i32, i32
  }
  func.func @transform_4(%arg0: i32, %arg1: i32, %arg2: i32) -> (i32, i32) {
    %c0_i32 = arith.constant 0 : i32
    return %arg0, %arg1 : i32, i32
  }
}

module attributes {stable_mosaic.version = 11 : i64} {
  func.func @_mm_scale_bias_kernel(%arg0: i32, %arg1: i32, %arg2: i32, %arg3: memref<8x256xbf16, #tpu.memory_space<vmem>>, %arg4: memref<256x256xbf16, #tpu.memory_space<vmem>>, %arg5: memref<1x256xf32, #tpu.memory_space<vmem>>, %arg6: memref<1x256xf32, #tpu.memory_space<vmem>>, %arg7: memref<8x256xbf16, #tpu.memory_space<vmem>>, %arg8: memref<8x256xf32, #tpu.memory_space<vmem>>) attributes {dimension_semantics = [#tpu.dimension_semantics<parallel>, #tpu.dimension_semantics<parallel>, #tpu.dimension_semantics<arbitrary>], iteration_bounds = array<i64: 1, 1, 5>, scalar_prefetch = 0 : i64, scratch_operands = 1 : i64, tpu.core_type = #tpu.core_type<tc>, window_params = [{transform_indices = @transform_0, window_bounds = array<i64: 8, 256>}, {transform_indices = @transform_1, window_bounds = array<i64: 256, 256>}, {transform_indices = @transform_2, window_bounds = array<i64: 1, 256>}, {transform_indices = @transform_3, window_bounds = array<i64: 1, 256>}, {transform_indices = @transform_4, window_bounds = array<i64: 8, 256>}]} {
    %c0_i32 = arith.constant 0 : i32
    %0 = arith.cmpi eq, %arg2, %c0_i32 : i32
    %1 = arith.extui %0 : i1 to i32
    %c0_i32_0 = arith.constant 0 : i32
    %2 = arith.cmpi ne, %1, %c0_i32_0 : i32
    scf.if %2 {
      %cst_9 = arith.constant 0.000000e+00 : f32
      %12 = vector.broadcast %cst_9 : f32 to vector<8x256xf32>
      %c0_10 = arith.constant 0 : index
      %c0_11 = arith.constant 0 : index
      %13 = vector.load %arg8[%c0_10, %c0_11] : memref<8x256xf32, #tpu.memory_space<vmem>>, vector<8x256xf32>
      tpu.vector_store %arg8[%c0_10, %c0_11], %12 {strides = array<i32>} : memref<8x256xf32, #tpu.memory_space<vmem>>, vector<8x256xf32>,
    } else {
    }
    %c0 = arith.constant 0 : index
    %c0_1 = arith.constant 0 : index
    %3 = vector.load %arg8[%c0, %c0_1] : memref<8x256xf32, #tpu.memory_space<vmem>>, vector<8x256xf32>
    %c0_2 = arith.constant 0 : index
    %c0_3 = arith.constant 0 : index
    %4 = vector.load %arg3[%c0_2, %c0_3] : memref<8x256xbf16, #tpu.memory_space<vmem>>, vector<8x256xbf16>
    %c0_4 = arith.constant 0 : index
    %c0_5 = arith.constant 0 : index
    %5 = vector.load %arg4[%c0_4, %c0_5] : memref<256x256xbf16, #tpu.memory_space<vmem>>, vector<256x256xbf16>
    %cst = arith.constant dense<0.000000e+00> : vector<8x256xf32>
    %6 = tpu.matmul %4, %5, %cst {dimension_numbers = #tpu.dot_dimension_numbers<[1], [0], [0], [1], [0, 0, 1, 1], [], []>} : vector<8x256xbf16>, vector<256x256xbf16>, vector<8x256xf32> -> vector<8x256xf32>
    %7 = arith.addf %3, %6 : vector<8x256xf32>
    %c0_6 = arith.constant 0 : index
    %c0_7 = arith.constant 0 : index
    %8 = vector.load %arg8[%c0_6, %c0_7] : memref<8x256xf32, #tpu.memory_space<vmem>>, vector<8x256xf32>
    tpu.vector_store %arg8[%c0_6, %c0_7], %7 {strides = array<i32>} : memref<8x256xf32, #tpu.memory_space<vmem>>, vector<8x256xf32>,
    %c4_i32 = arith.constant 4 : i32
    %9 = arith.cmpi eq, %arg2, %c4_i32 : i32
    %10 = arith.extui %9 : i1 to i32
    %c0_i32_8 = arith.constant 0 : i32
    %11 = arith.cmpi ne, %10, %c0_i32_8 : i32
    scf.if %11 {
      %c0_9 = arith.constant 0 : index
      %c0_10 = arith.constant 0 : index
      %12 = vector.load %arg8[%c0_9, %c0_10] : memref<8x256xf32, #tpu.memory_space<vmem>>, vector<8x256xf32>
      %c0_11 = arith.constant 0 : index
      %c0_12 = arith.constant 0 : index
      %13 = vector.load %arg5[%c0_11, %c0_12] : memref<1x256xf32, #tpu.memory_space<vmem>>, vector<1x256xf32>
      %14 = vector.broadcast %13 : vector<1x256xf32> to vector<8x256xf32>
      %15 = arith.mulf %12, %14 : vector<8x256xf32>
      %c0_13 = arith.constant 0 : index
      %c0_14 = arith.constant 0 : index
      %16 = vector.load %arg6[%c0_13, %c0_14] : memref<1x256xf32, #tpu.memory_space<vmem>>, vector<1x256xf32>
      %17 = vector.broadcast %16 : vector<1x256xf32> to vector<8x256xf32>
      %18 = arith.addf %15, %17 : vector<8x256xf32>
      %cst_15 = arith.constant 0.000000e+00 : f32
      %19 = vector.broadcast %cst_15 : f32 to vector<8x256xf32>
      %20 = arith.maximumf %18, %19 : vector<8x256xf32>
      %21 = arith.truncf %20 : vector<8x256xf32> to vector<8x256xbf16>
      %c0_16 = arith.constant 0 : index
      %c0_17 = arith.constant 0 : index
      %22 = vector.load %arg7[%c0_16, %c0_17] : memref<8x256xbf16, #tpu.memory_space<vmem>>, vector<8x256xbf16>
      tpu.vector_store %arg7[%c0_16, %c0_17], %21 {strides = array<i32>} : memref<8x256xbf16, #tpu.memory_space<vmem>>, vector<8x256xbf16>,
    } else {
    }
    return
  }
  func.func @transform_0(%arg0: i32, %arg1: i32, %arg2: i32) -> (i32, i32) {
    %c0_i32 = arith.constant 0 : i32
    return %arg0, %arg2 : i32, i32
  }
  func.func @transform_1(%arg0: i32, %arg1: i32, %arg2: i32) -> (i32, i32) {
    %c0_i32 = arith.constant 0 : i32
    return %arg2, %arg1 : i32, i32
  }
  func.func @transform_2(%arg0: i32, %arg1: i32, %arg2: i32) -> (i32, i32) {
    %c0_i32 = arith.constant 0 : i32
    %c0_i32_0 = arith.constant 0 : i32
    return %c0_i32, %arg1 : i32, i32
  }
  func.func @transform_3(%arg0: i32, %arg1: i32, %arg2: i32) -> (i32, i32) {
    %c0_i32 = arith.constant 0 : i32
    %c0_i32_0 = arith.constant 0 : i32
    return %c0_i32, %arg1 : i32, i32
  }
  func.func @transform_4(%arg0: i32, %arg1: i32, %arg2: i32) -> (i32, i32) {
    %c0_i32 = arith.constant 0 : i32
    return %arg0, %arg1 : i32, i32
  }
}

module attributes {stable_mosaic.version = 11 : i64} {
  func.func @_mm_scale_bias_kernel(%arg0: i32, %arg1: i32, %arg2: i32, %arg3: memref<8x128xbf16, #tpu.memory_space<vmem>>, %arg4: memref<128x256xbf16, #tpu.memory_space<vmem>>, %arg5: memref<1x256xf32, #tpu.memory_space<vmem>>, %arg6: memref<1x256xf32, #tpu.memory_space<vmem>>, %arg7: memref<8x256xbf16, #tpu.memory_space<vmem>>, %arg8: memref<8x256xf32, #tpu.memory_space<vmem>>) attributes {dimension_semantics = [#tpu.dimension_semantics<parallel>, #tpu.dimension_semantics<parallel>, #tpu.dimension_semantics<arbitrary>], iteration_bounds = array<i64: 1, 1, 1>, scalar_prefetch = 0 : i64, scratch_operands = 1 : i64, tpu.core_type = #tpu.core_type<tc>, window_params = [{transform_indices = @transform_0, window_bounds = array<i64: 8, 128>}, {transform_indices = @transform_1, window_bounds = array<i64: 128, 256>}, {transform_indices = @transform_2, window_bounds = array<i64: 1, 256>}, {transform_indices = @transform_3, window_bounds = array<i64: 1, 256>}, {transform_indices = @transform_4, window_bounds = array<i64: 8, 256>}]} {
    %c0_i32 = arith.constant 0 : i32
    %0 = arith.cmpi eq, %arg2, %c0_i32 : i32
    %1 = arith.extui %0 : i1 to i32
    %c0_i32_0 = arith.constant 0 : i32
    %2 = arith.cmpi ne, %1, %c0_i32_0 : i32
    scf.if %2 {
      %cst_10 = arith.constant 0.000000e+00 : f32
      %12 = vector.broadcast %cst_10 : f32 to vector<8x256xf32>
      %c0_11 = arith.constant 0 : index
      %c0_12 = arith.constant 0 : index
      %13 = vector.load %arg8[%c0_11, %c0_12] : memref<8x256xf32, #tpu.memory_space<vmem>>, vector<8x256xf32>
      tpu.vector_store %arg8[%c0_11, %c0_12], %12 {strides = array<i32>} : memref<8x256xf32, #tpu.memory_space<vmem>>, vector<8x256xf32>,
    } else {
    }
    %c0 = arith.constant 0 : index
    %c0_1 = arith.constant 0 : index
    %3 = vector.load %arg8[%c0, %c0_1] : memref<8x256xf32, #tpu.memory_space<vmem>>, vector<8x256xf32>
    %c0_2 = arith.constant 0 : index
    %c0_3 = arith.constant 0 : index
    %4 = vector.load %arg3[%c0_2, %c0_3] : memref<8x128xbf16, #tpu.memory_space<vmem>>, vector<8x128xbf16>
    %c0_4 = arith.constant 0 : index
    %c0_5 = arith.constant 0 : index
    %5 = vector.load %arg4[%c0_4, %c0_5] : memref<128x256xbf16, #tpu.memory_space<vmem>>, vector<128x256xbf16>
    %cst = arith.constant dense<0.000000e+00> : vector<8x256xf32>
    %6 = tpu.matmul %4, %5, %cst {dimension_numbers = #tpu.dot_dimension_numbers<[1], [0], [0], [1], [0, 0, 1, 1], [], []>} : vector<8x128xbf16>, vector<128x256xbf16>, vector<8x256xf32> -> vector<8x256xf32>
    %7 = arith.addf %3, %6 : vector<8x256xf32>
    %c0_6 = arith.constant 0 : index
    %c0_7 = arith.constant 0 : index
    %8 = vector.load %arg8[%c0_6, %c0_7] : memref<8x256xf32, #tpu.memory_space<vmem>>, vector<8x256xf32>
    tpu.vector_store %arg8[%c0_6, %c0_7], %7 {strides = array<i32>} : memref<8x256xf32, #tpu.memory_space<vmem>>, vector<8x256xf32>,
    %c0_i32_8 = arith.constant 0 : i32
    %9 = arith.cmpi eq, %arg2, %c0_i32_8 : i32
    %10 = arith.extui %9 : i1 to i32
    %c0_i32_9 = arith.constant 0 : i32
    %11 = arith.cmpi ne, %10, %c0_i32_9 : i32
    scf.if %11 {
      %c0_10 = arith.constant 0 : index
      %c0_11 = arith.constant 0 : index
      %12 = vector.load %arg8[%c0_10, %c0_11] : memref<8x256xf32, #tpu.memory_space<vmem>>, vector<8x256xf32>
      %c0_12 = arith.constant 0 : index
      %c0_13 = arith.constant 0 : index
      %13 = vector.load %arg5[%c0_12, %c0_13] : memref<1x256xf32, #tpu.memory_space<vmem>>, vector<1x256xf32>
      %14 = vector.broadcast %13 : vector<1x256xf32> to vector<8x256xf32>
      %15 = arith.mulf %12, %14 : vector<8x256xf32>
      %c0_14 = arith.constant 0 : index
      %c0_15 = arith.constant 0 : index
      %16 = vector.load %arg6[%c0_14, %c0_15] : memref<1x256xf32, #tpu.memory_space<vmem>>, vector<1x256xf32>
      %17 = vector.broadcast %16 : vector<1x256xf32> to vector<8x256xf32>
      %18 = arith.addf %15, %17 : vector<8x256xf32>
      %19 = arith.truncf %18 : vector<8x256xf32> to vector<8x256xbf16>
      %c0_16 = arith.constant 0 : index
      %c0_17 = arith.constant 0 : index
      %20 = vector.load %arg7[%c0_16, %c0_17] : memref<8x256xbf16, #tpu.memory_space<vmem>>, vector<8x256xbf16>
      tpu.vector_store %arg7[%c0_16, %c0_17], %19 {strides = array<i32>} : memref<8x256xbf16, #tpu.memory_space<vmem>>, vector<8x256xbf16>,
    } else {
    }
    return
  }
  func.func @transform_0(%arg0: i32, %arg1: i32, %arg2: i32) -> (i32, i32) {
    %c0_i32 = arith.constant 0 : i32
    return %arg0, %arg2 : i32, i32
  }
  func.func @transform_1(%arg0: i32, %arg1: i32, %arg2: i32) -> (i32, i32) {
    %c0_i32 = arith.constant 0 : i32
    return %arg2, %arg1 : i32, i32
  }
  func.func @transform_2(%arg0: i32, %arg1: i32, %arg2: i32) -> (i32, i32) {
    %c0_i32 = arith.constant 0 : i32
    %c0_i32_0 = arith.constant 0 : i32
    return %c0_i32, %arg1 : i32, i32
  }
  func.func @transform_3(%arg0: i32, %arg1: i32, %arg2: i32) -> (i32, i32) {
    %c0_i32 = arith.constant 0 : i32
    %c0_i32_0 = arith.constant 0 : i32
    return %c0_i32, %arg1 : i32, i32
  }
  func.func @transform_4(%arg0: i32, %arg1: i32, %arg2: i32) -> (i32, i32) {
    %c0_i32 = arith.constant 0 : i32
    return %arg0, %arg1 : i32, i32
  }
}

module attributes {stable_mosaic.version = 11 : i64} {
  func.func @_mm_scale_bias_kernel(%arg0: i32, %arg1: i32, %arg2: i32, %arg3: memref<8x256xbf16, #tpu.memory_space<vmem>>, %arg4: memref<256x256xbf16, #tpu.memory_space<vmem>>, %arg5: memref<1x256xf32, #tpu.memory_space<vmem>>, %arg6: memref<1x256xf32, #tpu.memory_space<vmem>>, %arg7: memref<8x256xbf16, #tpu.memory_space<vmem>>, %arg8: memref<8x256xbf16, #tpu.memory_space<vmem>>, %arg9: memref<8x256xf32, #tpu.memory_space<vmem>>) attributes {dimension_semantics = [#tpu.dimension_semantics<parallel>, #tpu.dimension_semantics<parallel>, #tpu.dimension_semantics<arbitrary>], iteration_bounds = array<i64: 1, 1, 9>, scalar_prefetch = 0 : i64, scratch_operands = 1 : i64, tpu.core_type = #tpu.core_type<tc>, window_params = [{transform_indices = @transform_0, window_bounds = array<i64: 8, 256>}, {transform_indices = @transform_1, window_bounds = array<i64: 256, 256>}, {transform_indices = @transform_2, window_bounds = array<i64: 1, 256>}, {transform_indices = @transform_3, window_bounds = array<i64: 1, 256>}, {transform_indices = @transform_4, window_bounds = array<i64: 8, 256>}, {transform_indices = @transform_5, window_bounds = array<i64: 8, 256>}]} {
    %c0_i32 = arith.constant 0 : i32
    %0 = arith.cmpi eq, %arg2, %c0_i32 : i32
    %1 = arith.extui %0 : i1 to i32
    %c0_i32_0 = arith.constant 0 : i32
    %2 = arith.cmpi ne, %1, %c0_i32_0 : i32
    scf.if %2 {
      %cst_9 = arith.constant 0.000000e+00 : f32
      %12 = vector.broadcast %cst_9 : f32 to vector<8x256xf32>
      %c0_10 = arith.constant 0 : index
      %c0_11 = arith.constant 0 : index
      %13 = vector.load %arg9[%c0_10, %c0_11] : memref<8x256xf32, #tpu.memory_space<vmem>>, vector<8x256xf32>
      tpu.vector_store %arg9[%c0_10, %c0_11], %12 {strides = array<i32>} : memref<8x256xf32, #tpu.memory_space<vmem>>, vector<8x256xf32>,
    } else {
    }
    %c0 = arith.constant 0 : index
    %c0_1 = arith.constant 0 : index
    %3 = vector.load %arg9[%c0, %c0_1] : memref<8x256xf32, #tpu.memory_space<vmem>>, vector<8x256xf32>
    %c0_2 = arith.constant 0 : index
    %c0_3 = arith.constant 0 : index
    %4 = vector.load %arg3[%c0_2, %c0_3] : memref<8x256xbf16, #tpu.memory_space<vmem>>, vector<8x256xbf16>
    %c0_4 = arith.constant 0 : index
    %c0_5 = arith.constant 0 : index
    %5 = vector.load %arg4[%c0_4, %c0_5] : memref<256x256xbf16, #tpu.memory_space<vmem>>, vector<256x256xbf16>
    %cst = arith.constant dense<0.000000e+00> : vector<8x256xf32>
    %6 = tpu.matmul %4, %5, %cst {dimension_numbers = #tpu.dot_dimension_numbers<[1], [0], [0], [1], [0, 0, 1, 1], [], []>} : vector<8x256xbf16>, vector<256x256xbf16>, vector<8x256xf32> -> vector<8x256xf32>
    %7 = arith.addf %3, %6 : vector<8x256xf32>
    %c0_6 = arith.constant 0 : index
    %c0_7 = arith.constant 0 : index
    %8 = vector.load %arg9[%c0_6, %c0_7] : memref<8x256xf32, #tpu.memory_space<vmem>>, vector<8x256xf32>
    tpu.vector_store %arg9[%c0_6, %c0_7], %7 {strides = array<i32>} : memref<8x256xf32, #tpu.memory_space<vmem>>, vector<8x256xf32>,
    %c8_i32 = arith.constant 8 : i32
    %9 = arith.cmpi eq, %arg2, %c8_i32 : i32
    %10 = arith.extui %9 : i1 to i32
    %c0_i32_8 = arith.constant 0 : i32
    %11 = arith.cmpi ne, %10, %c0_i32_8 : i32
    scf.if %11 {
      %c0_9 = arith.constant 0 : index
      %c0_10 = arith.constant 0 : index
      %12 = vector.load %arg9[%c0_9, %c0_10] : memref<8x256xf32, #tpu.memory_space<vmem>>, vector<8x256xf32>
      %c0_11 = arith.constant 0 : index
      %c0_12 = arith.constant 0 : index
      %13 = vector.load %arg5[%c0_11, %c0_12] : memref<1x256xf32, #tpu.memory_space<vmem>>, vector<1x256xf32>
      %14 = vector.broadcast %13 : vector<1x256xf32> to vector<8x256xf32>
      %15 = arith.mulf %12, %14 : vector<8x256xf32>
      %c0_13 = arith.constant 0 : index
      %c0_14 = arith.constant 0 : index
      %16 = vector.load %arg6[%c0_13, %c0_14] : memref<1x256xf32, #tpu.memory_space<vmem>>, vector<1x256xf32>
      %17 = vector.broadcast %16 : vector<1x256xf32> to vector<8x256xf32>
      %18 = arith.addf %15, %17 : vector<8x256xf32>
      %c0_15 = arith.constant 0 : index
      %c0_16 = arith.constant 0 : index
      %19 = vector.load %arg7[%c0_15, %c0_16] : memref<8x256xbf16, #tpu.memory_space<vmem>>, vector<8x256xbf16>
      %20 = arith.extf %19 : vector<8x256xbf16> to vector<8x256xf32>
      %21 = arith.addf %18, %20 : vector<8x256xf32>
      %cst_17 = arith.constant 0.000000e+00 : f32
      %22 = vector.broadcast %cst_17 : f32 to vector<8x256xf32>
      %23 = arith.maximumf %21, %22 : vector<8x256xf32>
      %24 = arith.truncf %23 : vector<8x256xf32> to vector<8x256xbf16>
      %c0_18 = arith.constant 0 : index
      %c0_19 = arith.constant 0 : index
      %25 = vector.load %arg8[%c0_18, %c0_19] : memref<8x256xbf16, #tpu.memory_space<vmem>>, vector<8x256xbf16>
      tpu.vector_store %arg8[%c0_18, %c0_19], %24 {strides = array<i32>} : memref<8x256xbf16, #tpu.memory_space<vmem>>, vector<8x256xbf16>,
    } else {
    }
    return
  }
  func.func @transform_0(%arg0: i32, %arg1: i32, %arg2: i32) -> (i32, i32) {
    %c0_i32 = arith.constant 0 : i32
    return %arg0, %arg2 : i32, i32
  }
  func.func @transform_1(%arg0: i32, %arg1: i32, %arg2: i32) -> (i32, i32) {
    %c0_i32 = arith.constant 0 : i32
    return %arg2, %arg1 : i32, i32
  }
  func.func @transform_2(%arg0: i32, %arg1: i32, %arg2: i32) -> (i32, i32) {
    %c0_i32 = arith.constant 0 : i32
    %c0_i32_0 = arith.constant 0 : i32
    return %c0_i32, %arg1 : i32, i32
  }
  func.func @transform_3(%arg0: i32, %arg1: i32, %arg2: i32) -> (i32, i32) {
    %c0_i32 = arith.constant 0 : i32
    %c0_i32_0 = arith.constant 0 : i32
    return %c0_i32, %arg1 : i32, i32
  }
  func.func @transform_4(%arg0: i32, %arg1: i32, %arg2: i32) -> (i32, i32) {
    %c0_i32 = arith.constant 0 : i32
    return %arg0, %arg1 : i32, i32
  }
  func.func @transform_5(%arg0: i32, %arg1: i32, %arg2: i32) -> (i32, i32) {
    %c0_i32 = arith.constant 0 : i32
    return %arg0, %arg1 : i32, i32
  }
}

module attributes {stable_mosaic.version = 11 : i64} {
  func.func @_mm_scale_bias_kernel(%arg0: i32, %arg1: i32, %arg2: i32, %arg3: memref<8x256xbf16, #tpu.memory_space<vmem>>, %arg4: memref<256x256xbf16, #tpu.memory_space<vmem>>, %arg5: memref<1x256xf32, #tpu.memory_space<vmem>>, %arg6: memref<1x256xf32, #tpu.memory_space<vmem>>, %arg7: memref<8x256xbf16, #tpu.memory_space<vmem>>, %arg8: memref<8x256xf32, #tpu.memory_space<vmem>>) attributes {dimension_semantics = [#tpu.dimension_semantics<parallel>, #tpu.dimension_semantics<parallel>, #tpu.dimension_semantics<arbitrary>], iteration_bounds = array<i64: 1, 2, 9>, scalar_prefetch = 0 : i64, scratch_operands = 1 : i64, tpu.core_type = #tpu.core_type<tc>, window_params = [{transform_indices = @transform_0, window_bounds = array<i64: 8, 256>}, {transform_indices = @transform_1, window_bounds = array<i64: 256, 256>}, {transform_indices = @transform_2, window_bounds = array<i64: 1, 256>}, {transform_indices = @transform_3, window_bounds = array<i64: 1, 256>}, {transform_indices = @transform_4, window_bounds = array<i64: 8, 256>}]} {
    %c0_i32 = arith.constant 0 : i32
    %0 = arith.cmpi eq, %arg2, %c0_i32 : i32
    %1 = arith.extui %0 : i1 to i32
    %c0_i32_0 = arith.constant 0 : i32
    %2 = arith.cmpi ne, %1, %c0_i32_0 : i32
    scf.if %2 {
      %cst_9 = arith.constant 0.000000e+00 : f32
      %12 = vector.broadcast %cst_9 : f32 to vector<8x256xf32>
      %c0_10 = arith.constant 0 : index
      %c0_11 = arith.constant 0 : index
      %13 = vector.load %arg8[%c0_10, %c0_11] : memref<8x256xf32, #tpu.memory_space<vmem>>, vector<8x256xf32>
      tpu.vector_store %arg8[%c0_10, %c0_11], %12 {strides = array<i32>} : memref<8x256xf32, #tpu.memory_space<vmem>>, vector<8x256xf32>,
    } else {
    }
    %c0 = arith.constant 0 : index
    %c0_1 = arith.constant 0 : index
    %3 = vector.load %arg8[%c0, %c0_1] : memref<8x256xf32, #tpu.memory_space<vmem>>, vector<8x256xf32>
    %c0_2 = arith.constant 0 : index
    %c0_3 = arith.constant 0 : index
    %4 = vector.load %arg3[%c0_2, %c0_3] : memref<8x256xbf16, #tpu.memory_space<vmem>>, vector<8x256xbf16>
    %c0_4 = arith.constant 0 : index
    %c0_5 = arith.constant 0 : index
    %5 = vector.load %arg4[%c0_4, %c0_5] : memref<256x256xbf16, #tpu.memory_space<vmem>>, vector<256x256xbf16>
    %cst = arith.constant dense<0.000000e+00> : vector<8x256xf32>
    %6 = tpu.matmul %4, %5, %cst {dimension_numbers = #tpu.dot_dimension_numbers<[1], [0], [0], [1], [0, 0, 1, 1], [], []>} : vector<8x256xbf16>, vector<256x256xbf16>, vector<8x256xf32> -> vector<8x256xf32>
    %7 = arith.addf %3, %6 : vector<8x256xf32>
    %c0_6 = arith.constant 0 : index
    %c0_7 = arith.constant 0 : index
    %8 = vector.load %arg8[%c0_6, %c0_7] : memref<8x256xf32, #tpu.memory_space<vmem>>, vector<8x256xf32>
    tpu.vector_store %arg8[%c0_6, %c0_7], %7 {strides = array<i32>} : memref<8x256xf32, #tpu.memory_space<vmem>>, vector<8x256xf32>,
    %c8_i32 = arith.constant 8 : i32
    %9 = arith.cmpi eq, %arg2, %c8_i32 : i32
    %10 = arith.extui %9 : i1 to i32
    %c0_i32_8 = arith.constant 0 : i32
    %11 = arith.cmpi ne, %10, %c0_i32_8 : i32
    scf.if %11 {
      %c0_9 = arith.constant 0 : index
      %c0_10 = arith.constant 0 : index
      %12 = vector.load %arg8[%c0_9, %c0_10] : memref<8x256xf32, #tpu.memory_space<vmem>>, vector<8x256xf32>
      %c0_11 = arith.constant 0 : index
      %c0_12 = arith.constant 0 : index
      %13 = vector.load %arg5[%c0_11, %c0_12] : memref<1x256xf32, #tpu.memory_space<vmem>>, vector<1x256xf32>
      %14 = vector.broadcast %13 : vector<1x256xf32> to vector<8x256xf32>
      %15 = arith.mulf %12, %14 : vector<8x256xf32>
      %c0_13 = arith.constant 0 : index
      %c0_14 = arith.constant 0 : index
      %16 = vector.load %arg6[%c0_13, %c0_14] : memref<1x256xf32, #tpu.memory_space<vmem>>, vector<1x256xf32>
      %17 = vector.broadcast %16 : vector<1x256xf32> to vector<8x256xf32>
      %18 = arith.addf %15, %17 : vector<8x256xf32>
      %cst_15 = arith.constant 0.000000e+00 : f32
      %19 = vector.broadcast %cst_15 : f32 to vector<8x256xf32>
      %20 = arith.maximumf %18, %19 : vector<8x256xf32>
      %21 = arith.truncf %20 : vector<8x256xf32> to vector<8x256xbf16>
      %c0_16 = arith.constant 0 : index
      %c0_17 = arith.constant 0 : index
      %22 = vector.load %arg7[%c0_16, %c0_17] : memref<8x256xbf16, #tpu.memory_space<vmem>>, vector<8x256xbf16>
      tpu.vector_store %arg7[%c0_16, %c0_17], %21 {strides = array<i32>} : memref<8x256xbf16, #tpu.memory_space<vmem>>, vector<8x256xbf16>,
    } else {
    }
    return
  }
  func.func @transform_0(%arg0: i32, %arg1: i32, %arg2: i32) -> (i32, i32) {
    %c0_i32 = arith.constant 0 : i32
    return %arg0, %arg2 : i32, i32
  }
  func.func @transform_1(%arg0: i32, %arg1: i32, %arg2: i32) -> (i32, i32) {
    %c0_i32 = arith.constant 0 : i32
    return %arg2, %arg1 : i32, i32
  }
  func.func @transform_2(%arg0: i32, %arg1: i32, %arg2: i32) -> (i32, i32) {
    %c0_i32 = arith.constant 0 : i32
    %c0_i32_0 = arith.constant 0 : i32
    return %c0_i32, %arg1 : i32, i32
  }
  func.func @transform_3(%arg0: i32, %arg1: i32, %arg2: i32) -> (i32, i32) {
    %c0_i32 = arith.constant 0 : i32
    %c0_i32_0 = arith.constant 0 : i32
    return %c0_i32, %arg1 : i32, i32
  }
  func.func @transform_4(%arg0: i32, %arg1: i32, %arg2: i32) -> (i32, i32) {
    %c0_i32 = arith.constant 0 : i32
    return %arg0, %arg1 : i32, i32
  }
}

module attributes {stable_mosaic.version = 11 : i64} {
  func.func @_mm_scale_bias_kernel(%arg0: i32, %arg1: i32, %arg2: i32, %arg3: memref<8x256xbf16, #tpu.memory_space<vmem>>, %arg4: memref<256x256xbf16, #tpu.memory_space<vmem>>, %arg5: memref<1x256xf32, #tpu.memory_space<vmem>>, %arg6: memref<1x256xf32, #tpu.memory_space<vmem>>, %arg7: memref<8x256xbf16, #tpu.memory_space<vmem>>, %arg8: memref<8x256xf32, #tpu.memory_space<vmem>>) attributes {dimension_semantics = [#tpu.dimension_semantics<parallel>, #tpu.dimension_semantics<parallel>, #tpu.dimension_semantics<arbitrary>], iteration_bounds = array<i64: 1, 2, 1>, scalar_prefetch = 0 : i64, scratch_operands = 1 : i64, tpu.core_type = #tpu.core_type<tc>, window_params = [{transform_indices = @transform_0, window_bounds = array<i64: 8, 256>}, {transform_indices = @transform_1, window_bounds = array<i64: 256, 256>}, {transform_indices = @transform_2, window_bounds = array<i64: 1, 256>}, {transform_indices = @transform_3, window_bounds = array<i64: 1, 256>}, {transform_indices = @transform_4, window_bounds = array<i64: 8, 256>}]} {
    %c0_i32 = arith.constant 0 : i32
    %0 = arith.cmpi eq, %arg2, %c0_i32 : i32
    %1 = arith.extui %0 : i1 to i32
    %c0_i32_0 = arith.constant 0 : i32
    %2 = arith.cmpi ne, %1, %c0_i32_0 : i32
    scf.if %2 {
      %cst_10 = arith.constant 0.000000e+00 : f32
      %12 = vector.broadcast %cst_10 : f32 to vector<8x256xf32>
      %c0_11 = arith.constant 0 : index
      %c0_12 = arith.constant 0 : index
      %13 = vector.load %arg8[%c0_11, %c0_12] : memref<8x256xf32, #tpu.memory_space<vmem>>, vector<8x256xf32>
      tpu.vector_store %arg8[%c0_11, %c0_12], %12 {strides = array<i32>} : memref<8x256xf32, #tpu.memory_space<vmem>>, vector<8x256xf32>,
    } else {
    }
    %c0 = arith.constant 0 : index
    %c0_1 = arith.constant 0 : index
    %3 = vector.load %arg8[%c0, %c0_1] : memref<8x256xf32, #tpu.memory_space<vmem>>, vector<8x256xf32>
    %c0_2 = arith.constant 0 : index
    %c0_3 = arith.constant 0 : index
    %4 = vector.load %arg3[%c0_2, %c0_3] : memref<8x256xbf16, #tpu.memory_space<vmem>>, vector<8x256xbf16>
    %c0_4 = arith.constant 0 : index
    %c0_5 = arith.constant 0 : index
    %5 = vector.load %arg4[%c0_4, %c0_5] : memref<256x256xbf16, #tpu.memory_space<vmem>>, vector<256x256xbf16>
    %cst = arith.constant dense<0.000000e+00> : vector<8x256xf32>
    %6 = tpu.matmul %4, %5, %cst {dimension_numbers = #tpu.dot_dimension_numbers<[1], [0], [0], [1], [0, 0, 1, 1], [], []>} : vector<8x256xbf16>, vector<256x256xbf16>, vector<8x256xf32> -> vector<8x256xf32>
    %7 = arith.addf %3, %6 : vector<8x256xf32>
    %c0_6 = arith.constant 0 : index
    %c0_7 = arith.constant 0 : index
    %8 = vector.load %arg8[%c0_6, %c0_7] : memref<8x256xf32, #tpu.memory_space<vmem>>, vector<8x256xf32>
    tpu.vector_store %arg8[%c0_6, %c0_7], %7 {strides = array<i32>} : memref<8x256xf32, #tpu.memory_space<vmem>>, vector<8x256xf32>,
    %c0_i32_8 = arith.constant 0 : i32
    %9 = arith.cmpi eq, %arg2, %c0_i32_8 : i32
    %10 = arith.extui %9 : i1 to i32
    %c0_i32_9 = arith.constant 0 : i32
    %11 = arith.cmpi ne, %10, %c0_i32_9 : i32
    scf.if %11 {
      %c0_10 = arith.constant 0 : index
      %c0_11 = arith.constant 0 : index
      %12 = vector.load %arg8[%c0_10, %c0_11] : memref<8x256xf32, #tpu.memory_space<vmem>>, vector<8x256xf32>
      %c0_12 = arith.constant 0 : index
      %c0_13 = arith.constant 0 : index
      %13 = vector.load %arg5[%c0_12, %c0_13] : memref<1x256xf32, #tpu.memory_space<vmem>>, vector<1x256xf32>
      %14 = vector.broadcast %13 : vector<1x256xf32> to vector<8x256xf32>
      %15 = arith.mulf %12, %14 : vector<8x256xf32>
      %c0_14 = arith.constant 0 : index
      %c0_15 = arith.constant 0 : index
      %16 = vector.load %arg6[%c0_14, %c0_15] : memref<1x256xf32, #tpu.memory_space<vmem>>, vector<1x256xf32>
      %17 = vector.broadcast %16 : vector<1x256xf32> to vector<8x256xf32>
      %18 = arith.addf %15, %17 : vector<8x256xf32>
      %19 = arith.truncf %18 : vector<8x256xf32> to vector<8x256xbf16>
      %c0_16 = arith.constant 0 : index
      %c0_17 = arith.constant 0 : index
      %20 = vector.load %arg7[%c0_16, %c0_17] : memref<8x256xbf16, #tpu.memory_space<vmem>>, vector<8x256xbf16>
      tpu.vector_store %arg7[%c0_16, %c0_17], %19 {strides = array<i32>} : memref<8x256xbf16, #tpu.memory_space<vmem>>, vector<8x256xbf16>,
    } else {
    }
    return
  }
  func.func @transform_0(%arg0: i32, %arg1: i32, %arg2: i32) -> (i32, i32) {
    %c0_i32 = arith.constant 0 : i32
    return %arg0, %arg2 : i32, i32
  }
  func.func @transform_1(%arg0: i32, %arg1: i32, %arg2: i32) -> (i32, i32) {
    %c0_i32 = arith.constant 0 : i32
    return %arg2, %arg1 : i32, i32
  }
  func.func @transform_2(%arg0: i32, %arg1: i32, %arg2: i32) -> (i32, i32) {
    %c0_i32 = arith.constant 0 : i32
    %c0_i32_0 = arith.constant 0 : i32
    return %c0_i32, %arg1 : i32, i32
  }
  func.func @transform_3(%arg0: i32, %arg1: i32, %arg2: i32) -> (i32, i32) {
    %c0_i32 = arith.constant 0 : i32
    %c0_i32_0 = arith.constant 0 : i32
    return %c0_i32, %arg1 : i32, i32
  }
  func.func @transform_4(%arg0: i32, %arg1: i32, %arg2: i32) -> (i32, i32) {
    %c0_i32 = arith.constant 0 : i32
    return %arg0, %arg1 : i32, i32
  }
}

module attributes {stable_mosaic.version = 11 : i64} {
  func.func @_mm_scale_bias_kernel(%arg0: i32, %arg1: i32, %arg2: i32, %arg3: memref<8x256xbf16, #tpu.memory_space<vmem>>, %arg4: memref<256x256xbf16, #tpu.memory_space<vmem>>, %arg5: memref<1x256xf32, #tpu.memory_space<vmem>>, %arg6: memref<1x256xf32, #tpu.memory_space<vmem>>, %arg7: memref<8x256xbf16, #tpu.memory_space<vmem>>, %arg8: memref<8x256xbf16, #tpu.memory_space<vmem>>, %arg9: memref<8x256xf32, #tpu.memory_space<vmem>>) attributes {dimension_semantics = [#tpu.dimension_semantics<parallel>, #tpu.dimension_semantics<parallel>, #tpu.dimension_semantics<arbitrary>], iteration_bounds = array<i64: 1, 2, 18>, scalar_prefetch = 0 : i64, scratch_operands = 1 : i64, tpu.core_type = #tpu.core_type<tc>, window_params = [{transform_indices = @transform_0, window_bounds = array<i64: 8, 256>}, {transform_indices = @transform_1, window_bounds = array<i64: 256, 256>}, {transform_indices = @transform_2, window_bounds = array<i64: 1, 256>}, {transform_indices = @transform_3, window_bounds = array<i64: 1, 256>}, {transform_indices = @transform_4, window_bounds = array<i64: 8, 256>}, {transform_indices = @transform_5, window_bounds = array<i64: 8, 256>}]} {
    %c0_i32 = arith.constant 0 : i32
    %0 = arith.cmpi eq, %arg2, %c0_i32 : i32
    %1 = arith.extui %0 : i1 to i32
    %c0_i32_0 = arith.constant 0 : i32
    %2 = arith.cmpi ne, %1, %c0_i32_0 : i32
    scf.if %2 {
      %cst_9 = arith.constant 0.000000e+00 : f32
      %12 = vector.broadcast %cst_9 : f32 to vector<8x256xf32>
      %c0_10 = arith.constant 0 : index
      %c0_11 = arith.constant 0 : index
      %13 = vector.load %arg9[%c0_10, %c0_11] : memref<8x256xf32, #tpu.memory_space<vmem>>, vector<8x256xf32>
      tpu.vector_store %arg9[%c0_10, %c0_11], %12 {strides = array<i32>} : memref<8x256xf32, #tpu.memory_space<vmem>>, vector<8x256xf32>,
    } else {
    }
    %c0 = arith.constant 0 : index
    %c0_1 = arith.constant 0 : index
    %3 = vector.load %arg9[%c0, %c0_1] : memref<8x256xf32, #tpu.memory_space<vmem>>, vector<8x256xf32>
    %c0_2 = arith.constant 0 : index
    %c0_3 = arith.constant 0 : index
    %4 = vector.load %arg3[%c0_2, %c0_3] : memref<8x256xbf16, #tpu.memory_space<vmem>>, vector<8x256xbf16>
    %c0_4 = arith.constant 0 : index
    %c0_5 = arith.constant 0 : index
    %5 = vector.load %arg4[%c0_4, %c0_5] : memref<256x256xbf16, #tpu.memory_space<vmem>>, vector<256x256xbf16>
    %cst = arith.constant dense<0.000000e+00> : vector<8x256xf32>
    %6 = tpu.matmul %4, %5, %cst {dimension_numbers = #tpu.dot_dimension_numbers<[1], [0], [0], [1], [0, 0, 1, 1], [], []>} : vector<8x256xbf16>, vector<256x256xbf16>, vector<8x256xf32> -> vector<8x256xf32>
    %7 = arith.addf %3, %6 : vector<8x256xf32>
    %c0_6 = arith.constant 0 : index
    %c0_7 = arith.constant 0 : index
    %8 = vector.load %arg9[%c0_6, %c0_7] : memref<8x256xf32, #tpu.memory_space<vmem>>, vector<8x256xf32>
    tpu.vector_store %arg9[%c0_6, %c0_7], %7 {strides = array<i32>} : memref<8x256xf32, #tpu.memory_space<vmem>>, vector<8x256xf32>,
    %c17_i32 = arith.constant 17 : i32
    %9 = arith.cmpi eq, %arg2, %c17_i32 : i32
    %10 = arith.extui %9 : i1 to i32
    %c0_i32_8 = arith.constant 0 : i32
    %11 = arith.cmpi ne, %10, %c0_i32_8 : i32
    scf.if %11 {
      %c0_9 = arith.constant 0 : index
      %c0_10 = arith.constant 0 : index
      %12 = vector.load %arg9[%c0_9, %c0_10] : memref<8x256xf32, #tpu.memory_space<vmem>>, vector<8x256xf32>
      %c0_11 = arith.constant 0 : index
      %c0_12 = arith.constant 0 : index
      %13 = vector.load %arg5[%c0_11, %c0_12] : memref<1x256xf32, #tpu.memory_space<vmem>>, vector<1x256xf32>
      %14 = vector.broadcast %13 : vector<1x256xf32> to vector<8x256xf32>
      %15 = arith.mulf %12, %14 : vector<8x256xf32>
      %c0_13 = arith.constant 0 : index
      %c0_14 = arith.constant 0 : index
      %16 = vector.load %arg6[%c0_13, %c0_14] : memref<1x256xf32, #tpu.memory_space<vmem>>, vector<1x256xf32>
      %17 = vector.broadcast %16 : vector<1x256xf32> to vector<8x256xf32>
      %18 = arith.addf %15, %17 : vector<8x256xf32>
      %c0_15 = arith.constant 0 : index
      %c0_16 = arith.constant 0 : index
      %19 = vector.load %arg7[%c0_15, %c0_16] : memref<8x256xbf16, #tpu.memory_space<vmem>>, vector<8x256xbf16>
      %20 = arith.extf %19 : vector<8x256xbf16> to vector<8x256xf32>
      %21 = arith.addf %18, %20 : vector<8x256xf32>
      %cst_17 = arith.constant 0.000000e+00 : f32
      %22 = vector.broadcast %cst_17 : f32 to vector<8x256xf32>
      %23 = arith.maximumf %21, %22 : vector<8x256xf32>
      %24 = arith.truncf %23 : vector<8x256xf32> to vector<8x256xbf16>
      %c0_18 = arith.constant 0 : index
      %c0_19 = arith.constant 0 : index
      %25 = vector.load %arg8[%c0_18, %c0_19] : memref<8x256xbf16, #tpu.memory_space<vmem>>, vector<8x256xbf16>
      tpu.vector_store %arg8[%c0_18, %c0_19], %24 {strides = array<i32>} : memref<8x256xbf16, #tpu.memory_space<vmem>>, vector<8x256xbf16>,
    } else {
    }
    return
  }
  func.func @transform_0(%arg0: i32, %arg1: i32, %arg2: i32) -> (i32, i32) {
    %c0_i32 = arith.constant 0 : i32
    return %arg0, %arg2 : i32, i32
  }
  func.func @transform_1(%arg0: i32, %arg1: i32, %arg2: i32) -> (i32, i32) {
    %c0_i32 = arith.constant 0 : i32
    return %arg2, %arg1 : i32, i32
  }
  func.func @transform_2(%arg0: i32, %arg1: i32, %arg2: i32) -> (i32, i32) {
    %c0_i32 = arith.constant 0 : i32
    %c0_i32_0 = arith.constant 0 : i32
    return %c0_i32, %arg1 : i32, i32
  }
  func.func @transform_3(%arg0: i32, %arg1: i32, %arg2: i32) -> (i32, i32) {
    %c0_i32 = arith.constant 0 : i32
    %c0_i32_0 = arith.constant 0 : i32
    return %c0_i32, %arg1 : i32, i32
  }
  func.func @transform_4(%arg0: i32, %arg1: i32, %arg2: i32) -> (i32, i32) {
    %c0_i32 = arith.constant 0 : i32
    return %arg0, %arg1 : i32, i32
  }
  func.func @transform_5(%arg0: i32, %arg1: i32, %arg2: i32) -> (i32, i32) {
    %c0_i32 = arith.constant 0 : i32
    return %arg0, %arg1 : i32, i32
  }
}

</mosaic_0001>

<llo_original>
// kernel: resnet_forward.12
$region0: #{resnet_forward.12}
  #allocation0 [shape = 'u32[]', space=smem, size = 0x4, offset = 0x4, fixed_abs, tag = 'smem constant byte address 0x4 - core index']
  #allocation1 [shape = 'u32[144,128]{1,0:T(1,128)}', space=vmem, size = 0x12000, scoped, tag = 'internal scratch']
  #allocation2 [shape = 'f32[256,128]{1,0:T(8,128)}', space=vmem, size = 0x20000, scoped, tag = 'scratch operand']
  %s0 = inlined_call_operand.vmem [shape: bf16[512,256], index: 0, kind: input, shape index: {}]
  %s1 = inlined_call_operand.vmem [shape: bf16[256,128], index: 1, kind: input, shape index: {}]
  %s2 = inlined_call_operand.vmem [shape: f32[1,128], index: 2, kind: input, shape index: {}]
  %s3 = inlined_call_operand.vmem [shape: f32[1,128], index: 3, kind: input, shape index: {}]
  %s4 = inlined_call_operand.vmem [shape: bf16[512,128], index: 4, kind: output, shape index: {}]
  %s5 = sld [smem:[#allocation0]]
  $region57: #{resnet_forward.12} parent=0
    _
  %s7 = ssub.s32 1, %s5
  %s8 = scalar_select 0, %s7, %s5
  loop: start=0, step=1, limit=4
  $region2: #{resnet_forward.12} parent=0 // loop_pre_header
    _
  $region3: #{resnet_forward.12} parent=0 // loop_header
    %s10 = sphi 0, %s14
    %p11 = scmp.ge.s32.totalorder %s10, 4
    %s17 = sphi 0, %s36
    %s18 = sphi 0, %s32
    %s19 = sphi 0, %s28
    %s20 = sphi 0, %s17
    %s21 = sphi 0, %s18
    %s22 = sphi 0, %s19
    %s23 = sphi 0, %s20
    %s24 = sphi 0, %s21
    %s25 = sphi 0, %s22
    %s41 = sphi 0, %s43
    %s44 = sphi 0, %s41
    %s45 = sphi 0, %s44
    %s61 = sphi 0, %s45
    %s69 = sphi 0, %s71
    %s72 = sphi 0, %s69
    %s73 = sphi 0, %s72
    %s89 = sphi 0, %s73
    %s95 = sphi 0, %s97
    %s98 = sphi 0, %s95
    %s99 = sphi 0, %s98
    %s115 = sphi 0, %s99
    %s121 = sphi 0, %s123
    %s124 = sphi 0, %s121
    %s125 = sphi 0, %s124
    %s141 = sphi 0, %s125
    %s149 = sphi 0, %s151
    %s152 = sphi 0, %s149
    %s153 = sphi 0, %s152
    %s169 = sphi 0, %s153
  $region4: #{resnet_forward.12} parent=0 // loop_header_branch
    %13 = sbr.rel (%p11) target = $region8
  $region5: #{resnet_forward.12} parent=0 // loop_body
    %s15 = ssub.s32 %s10, 1
    %s16 = ssub.s32 %s10, 2
    %s26 = sadd.s32 1, %s19
    %p27 = scmp.ge.s32.totalorder %s26, 1
    %s28 = scalar_select %p27, 0, %s26
    %s29 = sadd.s32 1, %s18
    %s30 = scalar_select %p27, %s29, %s18
    %p31 = scmp.ge.s32.totalorder %s30, 1
    %s32 = scalar_select %p31, 0, %s30
    %s33 = sadd.s32 1, %s17
    %s34 = scalar_select %p31, %s33, %s17
    %p35 = scmp.ge.s32.totalorder %s34, 2
    %s36 = scalar_select %p35, 0, %s34
    %s37 = ssub.s32 %s17, %s36
    %s38 = ssub.s32 %s19, %s28
    %s39 = sor.u32 %s37, %s38
    %p40 = scmp.eq.s32.totalorder %s39, 0
    %s42 = sadd.s32 %s41, 1
    %s43 = scalar_select %p40, %s41, %s42
    %p46 = pneg %p40
    %p47 = scmp.eq.s32.totalorder %s10, 1
    %p48 = por %p46, %p47
    %p49 = scmp.ne.s32.totalorder %s41, %s44
    %p50 = scmp.eq.s32.totalorder %s10, 0
    %p51 = por %p49, %p50
    %p52 = scmp.ne.s32.totalorder %s41, %s44
    %p53 = scmp.eq.s32.totalorder %s15, 1
    %p54 = por %p52, %p53
    %p55 = scmp.ne.s32.totalorder %s44, %s45
    %p56 = scmp.eq.s32.totalorder %s15, 0
    %p57 = por %p55, %p56
    %p58 = scmp.ne.s32.totalorder %s44, %s45
    %p59 = scmp.eq.s32.totalorder %s16, 1
    %p60 = por %p58, %p59
    %p62 = scmp.ne.s32.totalorder %s45, %s61
    %p63 = scmp.eq.s32.totalorder %s16, 0
    %p64 = por %p62, %p63
    %s65 = ssub.s32 %s19, %s28
    %s66 = ssub.s32 %s18, %s32
    %s67 = sor.u32 %s65, %s66
    %p68 = scmp.eq.s32.totalorder %s67, 0
    %s70 = sadd.s32 %s69, 1
    %s71 = scalar_select %p68, %s69, %s70
    %p74 = pneg %p68
    %p75 = scmp.eq.s32.totalorder %s10, 1
    %p76 = por %p74, %p75
    %p77 = scmp.ne.s32.totalorder %s69, %s72
    %p78 = scmp.eq.s32.totalorder %s10, 0
    %p79 = por %p77, %p78
    %p80 = scmp.ne.s32.totalorder %s69, %s72
    %p81 = scmp.eq.s32.totalorder %s15, 1
    %p82 = por %p80, %p81
    %p83 = scmp.ne.s32.totalorder %s72, %s73
    %p84 = scmp.eq.s32.totalorder %s15, 0
    %p85 = por %p83, %p84
    %p86 = scmp.ne.s32.totalorder %s72, %s73
    %p87 = scmp.eq.s32.totalorder %s16, 1
    %p88 = por %p86, %p87
    %p90 = scmp.ne.s32.totalorder %s73, %s89
    %p91 = scmp.eq.s32.totalorder %s16, 0
    %p92 = por %p90, %p91
    %s93 = ssub.s32 %s18, %s32
    %p94 = scmp.eq.s32.totalorder %s93, 0
    %s96 = sadd.s32 %s95, 1
    %s97 = scalar_select %p94, %s95, %s96
    %p100 = pneg %p94
    %p101 = scmp.eq.s32.totalorder %s10, 1
    %p102 = por %p100, %p101
    %p103 = scmp.ne.s32.totalorder %s95, %s98
    %p104 = scmp.eq.s32.totalorder %s10, 0
    %p105 = por %p103, %p104
    %p106 = scmp.ne.s32.totalorder %s95, %s98
    %p107 = scmp.eq.s32.totalorder %s15, 1
    %p108 = por %p106, %p107
    %p109 = scmp.ne.s32.totalorder %s98, %s99
    %p110 = scmp.eq.s32.totalorder %s15, 0
    %p111 = por %p109, %p110
    %p112 = scmp.ne.s32.totalorder %s98, %s99
    %p113 = scmp.eq.s32.totalorder %s16, 1
    %p114 = por %p112, %p113
    %p116 = scmp.ne.s32.totalorder %s99, %s115
    %p117 = scmp.eq.s32.totalorder %s16, 0
    %p118 = por %p116, %p117
    %s119 = ssub.s32 %s18, %s32
    %p120 = scmp.eq.s32.totalorder %s119, 0
    %s122 = sadd.s32 %s121, 1
    %s123 = scalar_select %p120, %s121, %s122
    %p126 = pneg %p120
    %p127 = scmp.eq.s32.totalorder %s10, 1
    %p128 = por %p126, %p127
    %p129 = scmp.ne.s32.totalorder %s121, %s124
    %p130 = scmp.eq.s32.totalorder %s10, 0
    %p131 = por %p129, %p130
    %p132 = scmp.ne.s32.totalorder %s121, %s124
    %p133 = scmp.eq.s32.totalorder %s15, 1
    %p134 = por %p132, %p133
    %p135 = scmp.ne.s32.totalorder %s124, %s125
    %p136 = scmp.eq.s32.totalorder %s15, 0
    %p137 = por %p135, %p136
    %p138 = scmp.ne.s32.totalorder %s124, %s125
    %p139 = scmp.eq.s32.totalorder %s16, 1
    %p140 = por %p138, %p139
    %p142 = scmp.ne.s32.totalorder %s125, %s141
    %p143 = scmp.eq.s32.totalorder %s16, 0
    %p144 = por %p142, %p143
    %s145 = ssub.s32 %s17, %s36
    %s146 = ssub.s32 %s18, %s32
    %s147 = sor.u32 %s145, %s146
    %p148 = scmp.eq.s32.totalorder %s147, 0
    %s150 = sadd.s32 %s149, 1
    %s151 = scalar_select %p148, %s149, %s150
    %p154 = pneg %p148
    %p155 = scmp.eq.s32.totalorder %s10, 1
    %p156 = por %p154, %p155
    %p157 = scmp.ne.s32.totalorder %s149, %s152
    %p158 = scmp.eq.s32.totalorder %s10, 0
    %p159 = por %p157, %p158
    %p160 = scmp.ne.s32.totalorder %s149, %s152
    %p161 = scmp.eq.s32.totalorder %s15, 1
    %p162 = por %p160, %p161
    %p163 = scmp.ne.s32.totalorder %s152, %s153
    %p164 = scmp.eq.s32.totalorder %s15, 0
    %p165 = por %p163, %p164
    %p166 = scmp.ne.s32.totalorder %s152, %s153
    %p167 = scmp.eq.s32.totalorder %s16, 1
    %p168 = por %p166, %p167
    %p170 = scmp.ne.s32.totalorder %s153, %s169
    %p171 = scmp.eq.s32.totalorder %s16, 0
    %p172 = por %p170, %p171
    %p173 = scmp.le.s32.totalorder 1, %s10
    %p174 = scmp.lt.s32.totalorder %s10, 3
    %p175 = pnand %p173, %p174
    %p176 = pneg %p175
    // Predicated region
    $region9: #{resnet_forward.12} parent=5 // pred_check
      _
    $region10: #{resnet_forward.12} parent=5 // pred_check_branch
      %178 = sbr.rel (%p175) target = $region12
    $region11: #{resnet_forward.12} parent=5 // pred_region
      %s179 = ssub.s32 %s10, 1
      // Predicated region
      $region13: #{resnet_forward.12} parent=11 // pred_check
        %p180 = pneg %p85
      $region14: #{resnet_forward.12} parent=11 // pred_check_branch
        %182 = sbr.rel (%p180) target = $region16
      $region15: #{resnet_forward.12} parent=11 // pred_region
        %s183 = smul.u32 32, %s22
        %p184 = scmp.lt.s32.totalorder %s183, 31
        %s185 = scalar_select %p184, %s183, 31
        %p186 = scmp.lt.s32.totalorder %s21, 0
        %s187 = scalar_select %p186, %s21, 0
        %s188 = sadd.s32 %s187, %s185
        %s189 = smul.addr %s188, 4
        %s190 = scalar_lea.vmem %s1, %s189
        %s191 = smul.u32 32, %s22
      $region16: #{resnet_forward.12} parent=11 // pred_fallthru
        _
      // Predicated region
      $region17: #{resnet_forward.12} parent=11 // pred_check
        %p192 = pneg %p111
      $region18: #{resnet_forward.12} parent=11 // pred_check_branch
        %194 = sbr.rel (%p192) target = $region20
      $region19: #{resnet_forward.12} parent=11 // pred_region
        %p195 = scmp.lt.s32.totalorder %s21, 0
        %s196 = scalar_select %p195, %s21, 0
        %s197 = scalar_lea.vmem %s2, %s196
      $region20: #{resnet_forward.12} parent=11 // pred_fallthru
        _
      // Predicated region
      $region21: #{resnet_forward.12} parent=11 // pred_check
        %p198 = pneg %p137
      $region22: #{resnet_forward.12} parent=11 // pred_check_branch
        %200 = sbr.rel (%p198) target = $region24
      $region23: #{resnet_forward.12} parent=11 // pred_region
        %p201 = scmp.lt.s32.totalorder %s21, 0
        %s202 = scalar_select %p201, %s21, 0
        %s203 = scalar_lea.vmem %s3, %s202
      $region24: #{resnet_forward.12} parent=11 // pred_fallthru
        _
    $region12: #{resnet_forward.12} parent=5 // pred_fallthru
      _
    %p204 = scmp.lt.s32.totalorder %s10, 2
    // Predicated region
    $region25: #{resnet_forward.12} parent=5 // pred_check
      %p205 = pneg %p204
    $region26: #{resnet_forward.12} parent=5 // pred_check_branch
      %207 = sbr.rel (%p205) target = $region28
    $region27: #{resnet_forward.12} parent=5 // pred_region
      // Predicated region
      $region29: #{resnet_forward.12} parent=27 // pred_check
        %p208 = pneg %p51
      $region30: #{resnet_forward.12} parent=27 // pred_check_branch
        %210 = sbr.rel (%p208) target = $region32
      $region31: #{resnet_forward.12} parent=27 // pred_region
        %s211 = smul.u32 32, %s17
        %s212 = smul.u32 2, %s19
        %p213 = scmp.lt.s32.totalorder %s211, 63
        %s214 = scalar_select %p213, %s211, 63
        %p215 = scmp.lt.s32.totalorder %s212, 1
        %s216 = scalar_select %p215, %s212, 1
        %s217 = smul.addr %s214, 2
        %s218 = sadd.s32 %s216, %s217
        %s219 = smul.addr %s218, 4
        %s220 = scalar_lea.vmem %s0, %s219
        %s221 = smul.u32 32, %s17
        %s222 = smul.u32 2, %s19
      $region32: #{resnet_forward.12} parent=27 // pred_fallthru
        _
    $region28: #{resnet_forward.12} parent=5 // pred_fallthru
      _
    %p223 = scmp.le.s32.totalorder 1, %s10
    %p224 = scmp.lt.s32.totalorder %s10, 3
    %p225 = pnand %p223, %p224
    %p226 = pneg %p225
    // Predicated region
    $region33: #{resnet_forward.12} parent=5 // pred_check
      _
    $region34: #{resnet_forward.12} parent=5 // pred_check_branch
      %228 = sbr.rel (%p225) target = $region36
    $region35: #{resnet_forward.12} parent=5 // pred_region
      %s229 = ssub.s32 %s10, 1
      %s230 = smul.u32 32, %s20
      %s231 = smul.u32 2, %s22
      %p232 = scmp.lt.s32.totalorder %s230, 63
      %s233 = scalar_select %p232, %s230, 63
      %p234 = scmp.lt.s32.totalorder %s231, 1
      %s235 = scalar_select %p234, %s231, 1
      %s236 = smul.addr %s233, 2
      %s237 = sadd.s32 %s235, %s236
      %s238 = smul.addr %s237, 4
      %s239 = scalar_lea.vmem %s0, %s238
      %p240 = pneg %p57
      %p241 = pneg %p54
      %s242 = smul.u32 32, %s22
      %p243 = scmp.lt.s32.totalorder %s242, 31
      %s244 = scalar_select %p243, %s242, 31
      %p245 = scmp.lt.s32.totalorder %s21, 0
      %s246 = scalar_select %p245, %s21, 0
      %s247 = sadd.s32 %s246, %s244
      %s248 = smul.addr %s247, 4
      %s249 = scalar_lea.vmem %s1, %s248
      %p250 = pneg %p85
      %p251 = pneg %p82
      %p252 = scmp.lt.s32.totalorder %s21, 0
      %s253 = scalar_select %p252, %s21, 0
      %s254 = scalar_lea.vmem %s2, %s253
      %p255 = pneg %p111
      %p256 = pneg %p108
      %p257 = scmp.lt.s32.totalorder %s21, 0
      %s258 = scalar_select %p257, %s21, 0
      %s259 = scalar_lea.vmem %s3, %s258
      %p260 = pneg %p137
      %p261 = pneg %p134
      %p262 = pneg %p165
      %p263 = pneg %p162
      %s264 = smul.u32 32, %s20
      %p265 = scmp.lt.s32.totalorder %s264, 63
      %s266 = scalar_select %p265, %s264, 63
      %p267 = scmp.lt.s32.totalorder %s21, 0
      %s268 = scalar_select %p267, %s21, 0
      %s269 = sadd.s32 %s268, %s266
      %s270 = smul.addr %s269, 4
      %s271 = scalar_lea.vmem %s4, %s270
      %s272 = smul.u32 32, %s20
      %s273 = smul.u32 2, %s22
      %p274 = scmp.lt.s32.totalorder %s272, 63
      %s275 = scalar_select %p274, %s272, 63
      %p276 = scmp.lt.s32.totalorder %s273, 1
      %s277 = scalar_select %p276, %s273, 1
      %s278 = smul.addr %s275, 2
      %s279 = sadd.s32 %s277, %s278
      %s280 = smul.addr %s279, 4
      %s281 = scalar_lea.vmem %s0, %s280
      %s282 = smul.u32 32, %s20
      %s283 = smul.u32 2, %s22
      %s284 = smul.u32 32, %s22
      %p285 = scmp.lt.s32.totalorder %s284, 31
      %s286 = scalar_select %p285, %s284, 31
      %p287 = scmp.lt.s32.totalorder %s21, 0
      %s288 = scalar_select %p287, %s21, 0
      %s289 = sadd.s32 %s288, %s286
      %s290 = smul.addr %s289, 4
      %s291 = scalar_lea.vmem %s1, %s290
      %s292 = smul.u32 32, %s22
      %p293 = scmp.lt.s32.totalorder %s21, 0
      %s294 = scalar_select %p293, %s21, 0
      %s295 = scalar_lea.vmem %s2, %s294
      %p296 = scmp.lt.s32.totalorder %s21, 0
      %s297 = scalar_select %p296, %s21, 0
      %s298 = scalar_lea.vmem %s3, %s297
      %s299 = smul.u32 32, %s20
      %p300 = scmp.lt.s32.totalorder %s299, 63
      %s301 = scalar_select %p300, %s299, 63
      %p302 = scmp.lt.s32.totalorder %s21, 0
      %s303 = scalar_select %p302, %s21, 0
      %s304 = sadd.s32 %s303, %s301
      %s305 = smul.addr %s304, 4
      %s306 = scalar_lea.vmem %s4, %s305
      %s307 = smul.u32 32, %s20
      %p309 = scmp.eq.s32.totalorder %s22, 0
      // Predicated region
      $region37: #{resnet_forward.12} parent=35 // pred_check
        %p310 = pneg %p309
      $region38: #{resnet_forward.12} parent=35 // pred_check_branch
        %312 = sbr.rel (%p310) target = $region40
      $region39: #{resnet_forward.12} parent=35 // pred_region
        %313 = vst [vmem:[#allocation2] sm:$0xff] 0.0
        %314 = vst [vmem:[#allocation2 + $0x8] sm:$0xff] 0.0
        %315 = vst [vmem:[#allocation2 + $0x10] sm:$0xff] 0.0
        %316 = vst [vmem:[#allocation2 + $0x18] sm:$0xff] 0.0
        %317 = vst [vmem:[#allocation2 + $0x20] sm:$0xff] 0.0
        %318 = vst [vmem:[#allocation2 + $0x28] sm:$0xff] 0.0
        %319 = vst [vmem:[#allocation2 + $0x30] sm:$0xff] 0.0
        %320 = vst [vmem:[#allocation2 + $0x38] sm:$0xff] 0.0
        %321 = vst [vmem:[#allocation2 + $0x40] sm:$0xff] 0.0
        %322 = vst [vmem:[#allocation2 + $0x48] sm:$0xff] 0.0
        %323 = vst [vmem:[#allocation2 + $0x50] sm:$0xff] 0.0
        %324 = vst [vmem:[#allocation2 + $0x58] sm:$0xff] 0.0
        %325 = vst [vmem:[#allocation2 + $0x60] sm:$0xff] 0.0
        %326 = vst [vmem:[#allocation2 + $0x68] sm:$0xff] 0.0
        %327 = vst [vmem:[#allocation2 + $0x70] sm:$0xff] 0.0
        %328 = vst [vmem:[#allocation2 + $0x78] sm:$0xff] 0.0
        %329 = vst [vmem:[#allocation2 + $0x80] sm:$0xff] 0.0
        %330 = vst [vmem:[#allocation2 + $0x88] sm:$0xff] 0.0
        %331 = vst [vmem:[#allocation2 + $0x90] sm:$0xff] 0.0
        %332 = vst [vmem:[#allocation2 + $0x98] sm:$0xff] 0.0
        %333 = vst [vmem:[#allocation2 + $0xa0] sm:$0xff] 0.0
        %334 = vst [vmem:[#allocation2 + $0xa8] sm:$0xff] 0.0
        %335 = vst [vmem:[#allocation2 + $0xb0] sm:$0xff] 0.0
        %336 = vst [vmem:[#allocation2 + $0xb8] sm:$0xff] 0.0
        %337 = vst [vmem:[#allocation2 + $0xc0] sm:$0xff] 0.0
        %338 = vst [vmem:[#allocation2 + $0xc8] sm:$0xff] 0.0
        %339 = vst [vmem:[#allocation2 + $0xd0] sm:$0xff] 0.0
        %340 = vst [vmem:[#allocation2 + $0xd8] sm:$0xff] 0.0
        %341 = vst [vmem:[#allocation2 + $0xe0] sm:$0xff] 0.0
        %342 = vst [vmem:[#allocation2 + $0xe8] sm:$0xff] 0.0
        %343 = vst [vmem:[#allocation2 + $0xf0] sm:$0xff] 0.0
        %344 = vst [vmem:[#allocation2 + $0xf8] sm:$0xff] 0.0
      $region40: #{resnet_forward.12} parent=35 // pred_fallthru
        _
      %v345 = vld [vmem:[#allocation2] sm:$0xff]
      %v346 = vld [vmem:[#allocation2 + $0x8] sm:$0xff]
      %v347 = vld [vmem:[#allocation2 + $0x10] sm:$0xff]
      %v348 = vld [vmem:[#allocation2 + $0x18] sm:$0xff]
      %v349 = vld [vmem:[#allocation2 + $0x20] sm:$0xff]
      %v350 = vld [vmem:[#allocation2 + $0x28] sm:$0xff]
      %v351 = vld [vmem:[#allocation2 + $0x30] sm:$0xff]
      %v352 = vld [vmem:[#allocation2 + $0x38] sm:$0xff]
      %v353 = vld [vmem:[#allocation2 + $0x40] sm:$0xff]
      %v354 = vld [vmem:[#allocation2 + $0x48] sm:$0xff]
      %v355 = vld [vmem:[#allocation2 + $0x50] sm:$0xff]
      %v356 = vld [vmem:[#allocation2 + $0x58] sm:$0xff]
      %v357 = vld [vmem:[#allocation2 + $0x60] sm:$0xff]
      %v358 = vld [vmem:[#allocation2 + $0x68] sm:$0xff]
      %v359 = vld [vmem:[#allocation2 + $0x70] sm:$0xff]
      %v360 = vld [vmem:[#allocation2 + $0x78] sm:$0xff]
      %v361 = vld [vmem:[#allocation2 + $0x80] sm:$0xff]
      %v362 = vld [vmem:[#allocation2 + $0x88] sm:$0xff]
      %v363 = vld [vmem:[#allocation2 + $0x90] sm:$0xff]
      %v364 = vld [vmem:[#allocation2 + $0x98] sm:$0xff]
      %v365 = vld [vmem:[#allocation2 + $0xa0] sm:$0xff]
      %v366 = vld [vmem:[#allocation2 + $0xa8] sm:$0xff]
      %v367 = vld [vmem:[#allocation2 + $0xb0] sm:$0xff]
      %v368 = vld [vmem:[#allocation2 + $0xb8] sm:$0xff]
      %v369 = vld [vmem:[#allocation2 + $0xc0] sm:$0xff]
      %v370 = vld [vmem:[#allocation2 + $0xc8] sm:$0xff]
      %v371 = vld [vmem:[#allocation2 + $0xd0] sm:$0xff]
      %v372 = vld [vmem:[#allocation2 + $0xd8] sm:$0xff]
      %v373 = vld [vmem:[#allocation2 + $0xe0] sm:$0xff]
      %v374 = vld [vmem:[#allocation2 + $0xe8] sm:$0xff]
      %v375 = vld [vmem:[#allocation2 + $0xf0] sm:$0xff]
      %v376 = vld [vmem:[#allocation2 + $0xf8] sm:$0xff]
      %v377 = vld [vmem:[%s281] sm:$0xff]
      %v378 = vld [vmem:[%s281 + $0x8] sm:$0xff]
      %v379 = vld [vmem:[%s281 + $0x10] sm:$0xff]
      %v380 = vld [vmem:[%s281 + $0x18] sm:$0xff]
      %v381 = vld [vmem:[%s281 + $0x20] sm:$0xff]
      %v382 = vld [vmem:[%s281 + $0x28] sm:$0xff]
      %v383 = vld [vmem:[%s281 + $0x30] sm:$0xff]
      %v384 = vld [vmem:[%s281 + $0x38] sm:$0xff]
      %v385 = vld [vmem:[%s281 + $0x40] sm:$0xff]
      %v386 = vld [vmem:[%s281 + $0x48] sm:$0xff]
      %v387 = vld [vmem:[%s281 + $0x50] sm:$0xff]
      %v388 = vld [vmem:[%s281 + $0x58] sm:$0xff]
      %v389 = vld [vmem:[%s281 + $0x60] sm:$0xff]
      %v390 = vld [vmem:[%s281 + $0x68] sm:$0xff]
      %v391 = vld [vmem:[%s281 + $0x70] sm:$0xff]
      %v392 = vld [vmem:[%s281 + $0x78] sm:$0xff]
      %v393 = vld [vmem:[%s281 + $0x80] sm:$0xff]
      %v394 = vld [vmem:[%s281 + $0x88] sm:$0xff]
      %v395 = vld [vmem:[%s281 + $0x90] sm:$0xff]
      %v396 = vld [vmem:[%s281 + $0x98] sm:$0xff]
      %v397 = vld [vmem:[%s281 + $0xa0] sm:$0xff]
      %v398 = vld [vmem:[%s281 + $0xa8] sm:$0xff]
      %v399 = vld [vmem:[%s281 + $0xb0] sm:$0xff]
      %v400 = vld [vmem:[%s281 + $0xb8] sm:$0xff]
      %v401 = vld [vmem:[%s281 + $0xc0] sm:$0xff]
      %v402 = vld [vmem:[%s281 + $0xc8] sm:$0xff]
      %v403 = vld [vmem:[%s281 + $0xd0] sm:$0xff]
      %v404 = vld [vmem:[%s281 + $0xd8] sm:$0xff]
      %v405 = vld [vmem:[%s281 + $0xe0] sm:$0xff]
      %v406 = vld [vmem:[%s281 + $0xe8] sm:$0xff]
      %v407 = vld [vmem:[%s281 + $0xf0] sm:$0xff]
      %v408 = vld [vmem:[%s281 + $0xf8] sm:$0xff]
      %v409 = vld [vmem:[%s291] sm:$0xf]
      %v410 = vld [vmem:[%s291 + $0x4] sm:$0xf]
      %v411 = vld [vmem:[%s291 + $0x8] sm:$0xf]
      %v412 = vld [vmem:[%s291 + $0xc] sm:$0xf]
      %v413 = vld [vmem:[%s291 + $0x10] sm:$0xf]
      %v414 = vld [vmem:[%s291 + $0x14] sm:$0xf]
      %v415 = vld [vmem:[%s291 + $0x18] sm:$0xf]
      %v416 = vld [vmem:[%s291 + $0x1c] sm:$0xf]
      %v417 = vld [vmem:[%s291 + $0x20] sm:$0xf]
      %v418 = vld [vmem:[%s291 + $0x24] sm:$0xf]
      %v419 = vld [vmem:[%s291 + $0x28] sm:$0xf]
      %v420 = vld [vmem:[%s291 + $0x2c] sm:$0xf]
      %v421 = vld [vmem:[%s291 + $0x30] sm:$0xf]
      %v422 = vld [vmem:[%s291 + $0x34] sm:$0xf]
      %v423 = vld [vmem:[%s291 + $0x38] sm:$0xf]
      %v424 = vld [vmem:[%s291 + $0x3c] sm:$0xf]
      %v425 = vld [vmem:[%s291 + $0x40] sm:$0xf]
      %v426 = vld [vmem:[%s291 + $0x44] sm:$0xf]
      %v427 = vld [vmem:[%s291 + $0x48] sm:$0xf]
      %v428 = vld [vmem:[%s291 + $0x4c] sm:$0xf]
      %v429 = vld [vmem:[%s291 + $0x50] sm:$0xf]
      %v430 = vld [vmem:[%s291 + $0x54] sm:$0xf]
      %v431 = vld [vmem:[%s291 + $0x58] sm:$0xf]
      %v432 = vld [vmem:[%s291 + $0x5c] sm:$0xf]
      %v433 = vld [vmem:[%s291 + $0x60] sm:$0xf]
      %v434 = vld [vmem:[%s291 + $0x64] sm:$0xf]
      %v435 = vld [vmem:[%s291 + $0x68] sm:$0xf]
      %v436 = vld [vmem:[%s291 + $0x6c] sm:$0xf]
      %v437 = vld [vmem:[%s291 + $0x70] sm:$0xf]
      %v438 = vld [vmem:[%s291 + $0x74] sm:$0xf]
      %v439 = vld [vmem:[%s291 + $0x78] sm:$0xf]
      %v440 = vld [vmem:[%s291 + $0x7c] sm:$0xf]
      %v473 = vunpack.c.l.b16 %v377
      %v474 = vunpack.c.h.b16 %v377
      %v475 = vunpack.c.l.b16 %v378
      %v476 = vunpack.c.h.b16 %v378
      %v477 = vunpack.c.l.b16 %v379
      %v478 = vunpack.c.h.b16 %v379
      %v479 = vunpack.c.l.b16 %v380
      %v480 = vunpack.c.h.b16 %v380
      %v481 = vunpack.c.l.b16 %v381
      %v482 = vunpack.c.h.b16 %v381
      %v483 = vunpack.c.l.b16 %v382
      %v484 = vunpack.c.h.b16 %v382
      %v485 = vunpack.c.l.b16 %v383
      %v486 = vunpack.c.h.b16 %v383
      %v487 = vunpack.c.l.b16 %v384
      %v488 = vunpack.c.h.b16 %v384
      %v489 = vunpack.c.l.b16 %v385
      %v490 = vunpack.c.h.b16 %v385
      %v491 = vunpack.c.l.b16 %v386
      %v492 = vunpack.c.h.b16 %v386
      %v493 = vunpack.c.l.b16 %v387
      %v494 = vunpack.c.h.b16 %v387
      %v495 = vunpack.c.l.b16 %v388
      %v496 = vunpack.c.h.b16 %v388
      %v497 = vunpack.c.l.b16 %v389
      %v498 = vunpack.c.h.b16 %v389
      %v499 = vunpack.c.l.b16 %v390
      %v500 = vunpack.c.h.b16 %v390
      %v501 = vunpack.c.l.b16 %v391
      %v502 = vunpack.c.h.b16 %v391
      %v503 = vunpack.c.l.b16 %v392
      %v504 = vunpack.c.h.b16 %v392
      %v505 = vunpack.c.l.b16 %v393
      %v506 = vunpack.c.h.b16 %v393
      %v507 = vunpack.c.l.b16 %v394
      %v508 = vunpack.c.h.b16 %v394
      %v509 = vunpack.c.l.b16 %v395
      %v510 = vunpack.c.h.b16 %v395
      %v511 = vunpack.c.l.b16 %v396
      %v512 = vunpack.c.h.b16 %v396
      %v513 = vunpack.c.l.b16 %v397
      %v514 = vunpack.c.h.b16 %v397
      %v515 = vunpack.c.l.b16 %v398
      %v516 = vunpack.c.h.b16 %v398
      %v517 = vunpack.c.l.b16 %v399
      %v518 = vunpack.c.h.b16 %v399
      %v519 = vunpack.c.l.b16 %v400
      %v520 = vunpack.c.h.b16 %v400
      %v521 = vunpack.c.l.b16 %v401
      %v522 = vunpack.c.h.b16 %v401
      %v523 = vunpack.c.l.b16 %v402
      %v524 = vunpack.c.h.b16 %v402
      %v525 = vunpack.c.l.b16 %v403
      %v526 = vunpack.c.h.b16 %v403
      %v527 = vunpack.c.l.b16 %v404
      %v528 = vunpack.c.h.b16 %v404
      %v529 = vunpack.c.l.b16 %v405
      %v530 = vunpack.c.h.b16 %v405
      %v531 = vunpack.c.l.b16 %v406
      %v532 = vunpack.c.h.b16 %v406
      %v533 = vunpack.c.l.b16 %v407
      %v534 = vunpack.c.h.b16 %v407
      %v535 = vunpack.c.l.b16 %v408
      %v536 = vunpack.c.h.b16 %v408
      %v537 = vpack.c.b16 %v475, %v473
      %v538 = vpack.c.b16 %v476, %v474
      %v539 = vpack.c.b16 %v479, %v477
      %v540 = vpack.c.b16 %v480, %v478
      %v541 = vpack.c.b16 %v483, %v481
      %v542 = vpack.c.b16 %v484, %v482
      %v543 = vpack.c.b16 %v487, %v485
      %v544 = vpack.c.b16 %v488, %v486
      %v545 = vpack.c.b16 %v491, %v489
      %v546 = vpack.c.b16 %v492, %v490
      %v547 = vpack.c.b16 %v495, %v493
      %v548 = vpack.c.b16 %v496, %v494
      %v549 = vpack.c.b16 %v499, %v497
      %v550 = vpack.c.b16 %v500, %v498
      %v551 = vpack.c.b16 %v503, %v501
      %v552 = vpack.c.b16 %v504, %v502
      %v553 = vpack.c.b16 %v507, %v505
      %v554 = vpack.c.b16 %v508, %v506
      %v555 = vpack.c.b16 %v511, %v509
      %v556 = vpack.c.b16 %v512, %v510
      %v557 = vpack.c.b16 %v515, %v513
      %v558 = vpack.c.b16 %v516, %v514
      %v559 = vpack.c.b16 %v519, %v517
      %v560 = vpack.c.b16 %v520, %v518
      %v561 = vpack.c.b16 %v523, %v521
      %v562 = vpack.c.b16 %v524, %v522
      %v563 = vpack.c.b16 %v527, %v525
      %v564 = vpack.c.b16 %v528, %v526
      %v565 = vpack.c.b16 %v531, %v529
      %v566 = vpack.c.b16 %v532, %v530
      %v567 = vpack.c.b16 %v535, %v533
      %v568 = vpack.c.b16 %v536, %v534
      %v633 = vunpack.c.l.b16 %v409
      %v634 = vunpack.c.l.b16 %v410
      %v635 = vunpack.c.l.b16 %v411
      %v636 = vunpack.c.l.b16 %v412
      %v637 = vunpack.c.l.b16 %v413
      %v638 = vunpack.c.l.b16 %v414
      %v639 = vunpack.c.l.b16 %v415
      %v640 = vunpack.c.l.b16 %v416
      %v641 = vunpack.c.l.b16 %v417
      %v642 = vunpack.c.l.b16 %v418
      %v643 = vunpack.c.l.b16 %v419
      %v644 = vunpack.c.l.b16 %v420
      %v645 = vunpack.c.l.b16 %v421
      %v646 = vunpack.c.l.b16 %v422
      %v647 = vunpack.c.l.b16 %v423
      %v648 = vunpack.c.l.b16 %v424
      %v649 = vunpack.c.l.b16 %v425
      %v650 = vunpack.c.l.b16 %v426
      %v651 = vunpack.c.l.b16 %v427
      %v652 = vunpack.c.l.b16 %v428
      %v653 = vunpack.c.l.b16 %v429
      %v654 = vunpack.c.l.b16 %v430
      %v655 = vunpack.c.l.b16 %v431
      %v656 = vunpack.c.l.b16 %v432
      %v657 = vunpack.c.l.b16 %v433
      %v658 = vunpack.c.l.b16 %v434
      %v659 = vunpack.c.l.b16 %v435
      %v660 = vunpack.c.l.b16 %v436
      %v661 = vunpack.c.l.b16 %v437
      %v662 = vunpack.c.l.b16 %v438
      %v663 = vunpack.c.l.b16 %v439
      %v664 = vunpack.c.l.b16 %v440
      %v665 = vpack.c.b16 %v634, %v633
      %v666 = vpack.c.b16 %v636, %v635
      %v667 = vpack.c.b16 %v638, %v637
      %v668 = vpack.c.b16 %v640, %v639
      %v669 = vpack.c.b16 %v642, %v641
      %v670 = vpack.c.b16 %v644, %v643
      %v671 = vpack.c.b16 %v646, %v645
      %v672 = vpack.c.b16 %v648, %v647
      %v673 = vpack.c.b16 %v650, %v649
      %v674 = vpack.c.b16 %v652, %v651
      %v675 = vpack.c.b16 %v654, %v653
      %v676 = vpack.c.b16 %v656, %v655
      %v677 = vpack.c.b16 %v658, %v657
      %v678 = vpack.c.b16 %v660, %v659
      %v679 = vpack.c.b16 %v662, %v661
      %v680 = vpack.c.b16 %v664, %v663
      %697 = vmatprep.subr.bf16.mxu0 0
      %698 = vmatpush1.bf16.msra.mxu0 %v665
      %699 = vmatprep.subr.bf16.mxu0 0
      %700 = vmatpush1.bf16.msra.mxu0 %v666
      %701 = vmatprep.subr.bf16.mxu0 0
      %702 = vmatpush1.bf16.msra.mxu0 %v667
      %703 = vmatprep.subr.bf16.mxu0 0
      %704 = vmatpush1.bf16.msra.mxu0 %v668
      %705 = vmatprep.subr.bf16.mxu0 0
      %706 = vmatpush1.bf16.msra.mxu0 %v669
      %707 = vmatprep.subr.bf16.mxu0 0
      %708 = vmatpush1.bf16.msra.mxu0 %v670
      %709 = vmatprep.subr.bf16.mxu0 0
      %710 = vmatpush1.bf16.msra.mxu0 %v671
      %711 = vmatprep.subr.bf16.mxu0 0
      %712 = vmatpush1.bf16.msra.mxu0 %v672
      %713 = vmatprep.subr.bf16.mxu0 0
      %714 = vmatpush1.bf16.msra.mxu0 %v673
      %715 = vmatprep.subr.bf16.mxu0 0
      %716 = vmatpush1.bf16.msra.mxu0 %v674
      %717 = vmatprep.subr.bf16.mxu0 0
      %718 = vmatpush1.bf16.msra.mxu0 %v675
      %719 = vmatprep.subr.bf16.mxu0 0
      %720 = vmatpush1.bf16.msra.mxu0 %v676
      %721 = vmatprep.subr.bf16.mxu0 0
      %722 = vmatpush1.bf16.msra.mxu0 %v677
      %723 = vmatprep.subr.bf16.mxu0 0
      %724 = vmatpush1.bf16.msra.mxu0 %v678
      %725 = vmatprep.subr.bf16.mxu0 0
      %726 = vmatpush1.bf16.msra.mxu0 %v679
      %727 = vmatprep.subr.bf16.mxu0 0
      %728 = vmatpush1.bf16.msra.mxu0 %v680
      %729 = vmatprep.mubr.bf16.mxu0 %v538
      %730 = vmatmul.mubr.bf16.gmra.mrb[0].mxu0 %v537
      %v731 = vpop.f32.mrb[0].mxu0
      %v732 = vadd.f32 0.0, %v731
      %v733 = vpop.f32.mrb[0].mxu0
      %v734 = vpop.f32.mrb[0].mxu0
      %v735 = vadd.f32 0.0, %v734
      %v736 = vpop.f32.mrb[0].mxu0
      %737 = vmatprep.mubr.bf16.mxu0 %v540
      %738 = vmatmul.mubr.bf16.gmra.mrb[0].mxu0 %v539
      %v739 = vpop.f32.mrb[0].mxu0
      %v740 = vadd.f32 0.0, %v739
      %v741 = vpop.f32.mrb[0].mxu0
      %v742 = vpop.f32.mrb[0].mxu0
      %v743 = vadd.f32 0.0, %v742
      %v744 = vpop.f32.mrb[0].mxu0
      %745 = vmatprep.mubr.bf16.mxu0 %v542
      %746 = vmatmul.mubr.bf16.gmra.mrb[0].mxu0 %v541
      %v747 = vpop.f32.mrb[0].mxu0
      %v748 = vadd.f32 0.0, %v747
      %v749 = vpop.f32.mrb[0].mxu0
      %v750 = vpop.f32.mrb[0].mxu0
      %v751 = vadd.f32 0.0, %v750
      %v752 = vpop.f32.mrb[0].mxu0
      %753 = vmatprep.mubr.bf16.mxu0 %v544
      %754 = vmatmul.mubr.bf16.gmra.mrb[0].mxu0 %v543
      %v755 = vpop.f32.mrb[0].mxu0
      %v756 = vadd.f32 0.0, %v755
      %v757 = vpop.f32.mrb[0].mxu0
      %v758 = vpop.f32.mrb[0].mxu0
      %v759 = vadd.f32 0.0, %v758
      %v760 = vpop.f32.mrb[0].mxu0
      %761 = vmatprep.mubr.bf16.mxu0 %v546
      %762 = vmatmul.mubr.bf16.gmra.mrb[0].mxu0 %v545
      %v763 = vpop.f32.mrb[0].mxu0
      %v764 = vadd.f32 0.0, %v763
      %v765 = vpop.f32.mrb[0].mxu0
      %v766 = vpop.f32.mrb[0].mxu0
      %v767 = vadd.f32 0.0, %v766
      %v768 = vpop.f32.mrb[0].mxu0
      %769 = vmatprep.mubr.bf16.mxu0 %v548
      %770 = vmatmul.mubr.bf16.gmra.mrb[0].mxu0 %v547
      %v771 = vpop.f32.mrb[0].mxu0
      %v772 = vadd.f32 0.0, %v771
      %v773 = vpop.f32.mrb[0].mxu0
      %v774 = vpop.f32.mrb[0].mxu0
      %v775 = vadd.f32 0.0, %v774
      %v776 = vpop.f32.mrb[0].mxu0
      %777 = vmatprep.mubr.bf16.mxu0 %v550
      %778 = vmatmul.mubr.bf16.gmra.mrb[0].mxu0 %v549
      %v779 = vpop.f32.mrb[0].mxu0
      %v780 = vadd.f32 0.0, %v779
      %v781 = vpop.f32.mrb[0].mxu0
      %v782 = vpop.f32.mrb[0].mxu0
      %v783 = vadd.f32 0.0, %v782
      %v784 = vpop.f32.mrb[0].mxu0
      %785 = vmatprep.mubr.bf16.mxu0 %v552
      %786 = vmatmul.mubr.bf16.gmra.mrb[0].mxu0 %v551
      %v787 = vpop.f32.mrb[0].mxu0
      %v788 = vadd.f32 0.0, %v787
      %v789 = vpop.f32.mrb[0].mxu0
      %v790 = vpop.f32.mrb[0].mxu0
      %v791 = vadd.f32 0.0, %v790
      %v792 = vpop.f32.mrb[0].mxu0
      %793 = vmatprep.mubr.bf16.mxu0 %v554
      %794 = vmatmul.mubr.bf16.gmra.mrb[0].mxu0 %v553
      %v795 = vpop.f32.mrb[0].mxu0
      %v796 = vadd.f32 0.0, %v795
      %v797 = vpop.f32.mrb[0].mxu0
      %v798 = vpop.f32.mrb[0].mxu0
      %v799 = vadd.f32 0.0, %v798
      %v800 = vpop.f32.mrb[0].mxu0
      %801 = vmatprep.mubr.bf16.mxu0 %v556
      %802 = vmatmul.mubr.bf16.gmra.mrb[0].mxu0 %v555
      %v803 = vpop.f32.mrb[0].mxu0
      %v804 = vadd.f32 0.0, %v803
      %v805 = vpop.f32.mrb[0].mxu0
      %v806 = vpop.f32.mrb[0].mxu0
      %v807 = vadd.f32 0.0, %v806
      %v808 = vpop.f32.mrb[0].mxu0
      %809 = vmatprep.mubr.bf16.mxu0 %v558
      %810 = vmatmul.mubr.bf16.gmra.mrb[0].mxu0 %v557
      %v811 = vpop.f32.mrb[0].mxu0
      %v812 = vadd.f32 0.0, %v811
      %v813 = vpop.f32.mrb[0].mxu0
      %v814 = vpop.f32.mrb[0].mxu0
      %v815 = vadd.f32 0.0, %v814
      %v816 = vpop.f32.mrb[0].mxu0
      %817 = vmatprep.mubr.bf16.mxu0 %v560
      %818 = vmatmul.mubr.bf16.gmra.mrb[0].mxu0 %v559
      %v819 = vpop.f32.mrb[0].mxu0
      %v820 = vadd.f32 0.0, %v819
      %v821 = vpop.f32.mrb[0].mxu0
      %v822 = vpop.f32.mrb[0].mxu0
      %v823 = vadd.f32 0.0, %v822
      %v824 = vpop.f32.mrb[0].mxu0
      %825 = vmatprep.mubr.bf16.mxu0 %v562
      %826 = vmatmul.mubr.bf16.gmra.mrb[0].mxu0 %v561
      %v827 = vpop.f32.mrb[0].mxu0
      %v828 = vadd.f32 0.0, %v827
      %v829 = vpop.f32.mrb[0].mxu0
      %v830 = vpop.f32.mrb[0].mxu0
      %v831 = vadd.f32 0.0, %v830
      %v832 = vpop.f32.mrb[0].mxu0
      %833 = vmatprep.mubr.bf16.mxu0 %v564
      %834 = vmatmul.mubr.bf16.gmra.mrb[0].mxu0 %v563
      %v835 = vpop.f32.mrb[0].mxu0
      %v836 = vadd.f32 0.0, %v835
      %v837 = vpop.f32.mrb[0].mxu0
      %v838 = vpop.f32.mrb[0].mxu0
      %v839 = vadd.f32 0.0, %v838
      %v840 = vpop.f32.mrb[0].mxu0
      %841 = vmatprep.mubr.bf16.mxu0 %v566
      %842 = vmatmul.mubr.bf16.gmra.mrb[0].mxu0 %v565
      %v843 = vpop.f32.mrb[0].mxu0
      %v844 = vadd.f32 0.0, %v843
      %v845 = vpop.f32.mrb[0].mxu0
      %v846 = vpop.f32.mrb[0].mxu0
      %v847 = vadd.f32 0.0, %v846
      %v848 = vpop.f32.mrb[0].mxu0
      %849 = vmatprep.mubr.bf16.mxu0 %v568
      %850 = vmatmul.mubr.bf16.gmra.mrb[0].mxu0 %v567
      %v851 = vpop.f32.mrb[0].mxu0
      %v852 = vadd.f32 0.0, %v851
      %v853 = vpop.f32.mrb[0].mxu0
      %v854 = vpop.f32.mrb[0].mxu0
      %v855 = vadd.f32 0.0, %v854
      %v856 = vpop.f32.mrb[0].mxu0
      %857 = vdwg.mxu0
      %v858 = vadd.f32 %v345, %v732
      %v859 = vadd.f32 %v346, %v735
      %v860 = vadd.f32 %v347, %v740
      %v861 = vadd.f32 %v348, %v743
      %v862 = vadd.f32 %v349, %v748
      %v863 = vadd.f32 %v350, %v751
      %v864 = vadd.f32 %v351, %v756
      %v865 = vadd.f32 %v352, %v759
      %v866 = vadd.f32 %v353, %v764
      %v867 = vadd.f32 %v354, %v767
      %v868 = vadd.f32 %v355, %v772
      %v869 = vadd.f32 %v356, %v775
      %v870 = vadd.f32 %v357, %v780
      %v871 = vadd.f32 %v358, %v783
      %v872 = vadd.f32 %v359, %v788
      %v873 = vadd.f32 %v360, %v791
      %v874 = vadd.f32 %v361, %v796
      %v875 = vadd.f32 %v362, %v799
      %v876 = vadd.f32 %v363, %v804
      %v877 = vadd.f32 %v364, %v807
      %v878 = vadd.f32 %v365, %v812
      %v879 = vadd.f32 %v366, %v815
      %v880 = vadd.f32 %v367, %v820
      %v881 = vadd.f32 %v368, %v823
      %v882 = vadd.f32 %v369, %v828
      %v883 = vadd.f32 %v370, %v831
      %v884 = vadd.f32 %v371, %v836
      %v885 = vadd.f32 %v372, %v839
      %v886 = vadd.f32 %v373, %v844
      %v887 = vadd.f32 %v374, %v847
      %v888 = vadd.f32 %v375, %v852
      %v889 = vadd.f32 %v376, %v855
      %890 = vst [vmem:[#allocation2] sm:$0xff] %v858
      %891 = vst [vmem:[#allocation2 + $0x8] sm:$0xff] %v859
      %892 = vst [vmem:[#allocation2 + $0x10] sm:$0xff] %v860
      %893 = vst [vmem:[#allocation2 + $0x18] sm:$0xff] %v861
      %894 = vst [vmem:[#allocation2 + $0x20] sm:$0xff] %v862
      %895 = vst [vmem:[#allocation2 + $0x28] sm:$0xff] %v863
      %896 = vst [vmem:[#allocation2 + $0x30] sm:$0xff] %v864
      %897 = vst [vmem:[#allocation2 + $0x38] sm:$0xff] %v865
      %898 = vst [vmem:[#allocation2 + $0x40] sm:$0xff] %v866
      %899 = vst [vmem:[#allocation2 + $0x48] sm:$0xff] %v867
      %900 = vst [vmem:[#allocation2 + $0x50] sm:$0xff] %v868
      %901 = vst [vmem:[#allocation2 + $0x58] sm:$0xff] %v869
      %902 = vst [vmem:[#allocation2 + $0x60] sm:$0xff] %v870
      %903 = vst [vmem:[#allocation2 + $0x68] sm:$0xff] %v871
      %904 = vst [vmem:[#allocation2 + $0x70] sm:$0xff] %v872
      %905 = vst [vmem:[#allocation2 + $0x78] sm:$0xff] %v873
      %906 = vst [vmem:[#allocation2 + $0x80] sm:$0xff] %v874
      %907 = vst [vmem:[#allocation2 + $0x88] sm:$0xff] %v875
      %908 = vst [vmem:[#allocation2 + $0x90] sm:$0xff] %v876
      %909 = vst [vmem:[#allocation2 + $0x98] sm:$0xff] %v877
      %910 = vst [vmem:[#allocation2 + $0xa0] sm:$0xff] %v878
      %911 = vst [vmem:[#allocation2 + $0xa8] sm:$0xff] %v879
      %912 = vst [vmem:[#allocation2 + $0xb0] sm:$0xff] %v880
      %913 = vst [vmem:[#allocation2 + $0xb8] sm:$0xff] %v881
      %914 = vst [vmem:[#allocation2 + $0xc0] sm:$0xff] %v882
      %915 = vst [vmem:[#allocation2 + $0xc8] sm:$0xff] %v883
      %916 = vst [vmem:[#allocation2 + $0xd0] sm:$0xff] %v884
      %917 = vst [vmem:[#allocation2 + $0xd8] sm:$0xff] %v885
      %918 = vst [vmem:[#allocation2 + $0xe0] sm:$0xff] %v886
      %919 = vst [vmem:[#allocation2 + $0xe8] sm:$0xff] %v887
      %920 = vst [vmem:[#allocation2 + $0xf0] sm:$0xff] %v888
      %921 = vst [vmem:[#allocation2 + $0xf8] sm:$0xff] %v889
      // Predicated region
      $region41: #{resnet_forward.12} parent=35 // pred_check
        %p922 = pneg %p309
      $region42: #{resnet_forward.12} parent=35 // pred_check_branch
        %924 = sbr.rel (%p922) target = $region44
      $region43: #{resnet_forward.12} parent=35 // pred_region
        %v925 = vld [vmem:[#allocation2] sm:$0xff]
        %v926 = vld [vmem:[#allocation2 + $0x8] sm:$0xff]
        %v927 = vld [vmem:[#allocation2 + $0x10] sm:$0xff]
        %v928 = vld [vmem:[#allocation2 + $0x18] sm:$0xff]
        %v929 = vld [vmem:[#allocation2 + $0x20] sm:$0xff]
        %v930 = vld [vmem:[#allocation2 + $0x28] sm:$0xff]
        %v931 = vld [vmem:[#allocation2 + $0x30] sm:$0xff]
        %v932 = vld [vmem:[#allocation2 + $0x38] sm:$0xff]
        %v933 = vld [vmem:[#allocation2 + $0x40] sm:$0xff]
        %v934 = vld [vmem:[#allocation2 + $0x48] sm:$0xff]
        %v935 = vld [vmem:[#allocation2 + $0x50] sm:$0xff]
        %v936 = vld [vmem:[#allocation2 + $0x58] sm:$0xff]
        %v937 = vld [vmem:[#allocation2 + $0x60] sm:$0xff]
        %v938 = vld [vmem:[#allocation2 + $0x68] sm:$0xff]
        %v939 = vld [vmem:[#allocation2 + $0x70] sm:$0xff]
        %v940 = vld [vmem:[#allocation2 + $0x78] sm:$0xff]
        %v941 = vld [vmem:[#allocation2 + $0x80] sm:$0xff]
        %v942 = vld [vmem:[#allocation2 + $0x88] sm:$0xff]
        %v943 = vld [vmem:[#allocation2 + $0x90] sm:$0xff]
        %v944 = vld [vmem:[#allocation2 + $0x98] sm:$0xff]
        %v945 = vld [vmem:[#allocation2 + $0xa0] sm:$0xff]
        %v946 = vld [vmem:[#allocation2 + $0xa8] sm:$0xff]
        %v947 = vld [vmem:[#allocation2 + $0xb0] sm:$0xff]
        %v948 = vld [vmem:[#allocation2 + $0xb8] sm:$0xff]
        %v949 = vld [vmem:[#allocation2 + $0xc0] sm:$0xff]
        %v950 = vld [vmem:[#allocation2 + $0xc8] sm:$0xff]
        %v951 = vld [vmem:[#allocation2 + $0xd0] sm:$0xff]
        %v952 = vld [vmem:[#allocation2 + $0xd8] sm:$0xff]
        %v953 = vld [vmem:[#allocation2 + $0xe0] sm:$0xff]
        %v954 = vld [vmem:[#allocation2 + $0xe8] sm:$0xff]
        %v955 = vld [vmem:[#allocation2 + $0xf0] sm:$0xff]
        %v956 = vld [vmem:[#allocation2 + $0xf8] sm:$0xff]
        %v957 = vld [vmem:[%s295] sm:$0x1]
        %v959 = vlaneseq
        %v960 = vshrl.u32 %v959, 7
        %v961 = vsub.s32 0, %v960
        %v962 = vrot.slane %v957, %v961
        %v964 = vmul.f32 %v925, %v962
        %v965 = vmul.f32 %v926, %v962
        %v966 = vmul.f32 %v927, %v962
        %v967 = vmul.f32 %v928, %v962
        %v968 = vmul.f32 %v929, %v962
        %v969 = vmul.f32 %v930, %v962
        %v970 = vmul.f32 %v931, %v962
        %v971 = vmul.f32 %v932, %v962
        %v972 = vmul.f32 %v933, %v962
        %v973 = vmul.f32 %v934, %v962
        %v974 = vmul.f32 %v935, %v962
        %v975 = vmul.f32 %v936, %v962
        %v976 = vmul.f32 %v937, %v962
        %v977 = vmul.f32 %v938, %v962
        %v978 = vmul.f32 %v939, %v962
        %v979 = vmul.f32 %v940, %v962
        %v980 = vmul.f32 %v941, %v962
        %v981 = vmul.f32 %v942, %v962
        %v982 = vmul.f32 %v943, %v962
        %v983 = vmul.f32 %v944, %v962
        %v984 = vmul.f32 %v945, %v962
        %v985 = vmul.f32 %v946, %v962
        %v986 = vmul.f32 %v947, %v962
        %v987 = vmul.f32 %v948, %v962
        %v988 = vmul.f32 %v949, %v962
        %v989 = vmul.f32 %v950, %v962
        %v990 = vmul.f32 %v951, %v962
        %v991 = vmul.f32 %v952, %v962
        %v992 = vmul.f32 %v953, %v962
        %v993 = vmul.f32 %v954, %v962
        %v994 = vmul.f32 %v955, %v962
        %v995 = vmul.f32 %v956, %v962
        %v996 = vld [vmem:[%s298] sm:$0x1]
        %v998 = vlaneseq
        %v999 = vshrl.u32 %v998, 7
        %v1000 = vsub.s32 0, %v999
        %v1001 = vrot.slane %v996, %v1000
        %v1003 = vadd.f32 %v964, %v1001
        %v1004 = vadd.f32 %v965, %v1001
        %v1005 = vadd.f32 %v966, %v1001
        %v1006 = vadd.f32 %v967, %v1001
        %v1007 = vadd.f32 %v968, %v1001
        %v1008 = vadd.f32 %v969, %v1001
        %v1009 = vadd.f32 %v970, %v1001
        %v1010 = vadd.f32 %v971, %v1001
        %v1011 = vadd.f32 %v972, %v1001
        %v1012 = vadd.f32 %v973, %v1001
        %v1013 = vadd.f32 %v974, %v1001
        %v1014 = vadd.f32 %v975, %v1001
        %v1015 = vadd.f32 %v976, %v1001
        %v1016 = vadd.f32 %v977, %v1001
        %v1017 = vadd.f32 %v978, %v1001
        %v1018 = vadd.f32 %v979, %v1001
        %v1019 = vadd.f32 %v980, %v1001
        %v1020 = vadd.f32 %v981, %v1001
        %v1021 = vadd.f32 %v982, %v1001
        %v1022 = vadd.f32 %v983, %v1001
        %v1023 = vadd.f32 %v984, %v1001
        %v1024 = vadd.f32 %v985, %v1001
        %v1025 = vadd.f32 %v986, %v1001
        %v1026 = vadd.f32 %v987, %v1001
        %v1027 = vadd.f32 %v988, %v1001
        %v1028 = vadd.f32 %v989, %v1001
        %v1029 = vadd.f32 %v990, %v1001
        %v1030 = vadd.f32 %v991, %v1001
        %v1031 = vadd.f32 %v992, %v1001
        %v1032 = vadd.f32 %v993, %v1001
        %v1033 = vadd.f32 %v994, %v1001
        %v1034 = vadd.f32 %v995, %v1001
        %v1035 = vmax.f32 %v1003, 0.0
        %v1036 = vmax.f32 %v1004, 0.0
        %v1037 = vmax.f32 %v1005, 0.0
        %v1038 = vmax.f32 %v1006, 0.0
        %v1039 = vmax.f32 %v1007, 0.0
        %v1040 = vmax.f32 %v1008, 0.0
        %v1041 = vmax.f32 %v1009, 0.0
        %v1042 = vmax.f32 %v1010, 0.0
        %v1043 = vmax.f32 %v1011, 0.0
        %v1044 = vmax.f32 %v1012, 0.0
        %v1045 = vmax.f32 %v1013, 0.0
        %v1046 = vmax.f32 %v1014, 0.0
        %v1047 = vmax.f32 %v1015, 0.0
        %v1048 = vmax.f32 %v1016, 0.0
        %v1049 = vmax.f32 %v1017, 0.0
        %v1050 = vmax.f32 %v1018, 0.0
        %v1051 = vmax.f32 %v1019, 0.0
        %v1052 = vmax.f32 %v1020, 0.0
        %v1053 = vmax.f32 %v1021, 0.0
        %v1054 = vmax.f32 %v1022, 0.0
        %v1055 = vmax.f32 %v1023, 0.0
        %v1056 = vmax.f32 %v1024, 0.0
        %v1057 = vmax.f32 %v1025, 0.0
        %v1058 = vmax.f32 %v1026, 0.0
        %v1059 = vmax.f32 %v1027, 0.0
        %v1060 = vmax.f32 %v1028, 0.0
        %v1061 = vmax.f32 %v1029, 0.0
        %v1062 = vmax.f32 %v1030, 0.0
        %v1063 = vmax.f32 %v1031, 0.0
        %v1064 = vmax.f32 %v1032, 0.0
        %v1065 = vmax.f32 %v1033, 0.0
        %v1066 = vmax.f32 %v1034, 0.0
        %v1067 = vpack.c.bf16 %v1036, %v1035
        %v1068 = vpack.c.bf16 %v1038, %v1037
        %v1069 = vpack.c.bf16 %v1040, %v1039
        %v1070 = vpack.c.bf16 %v1042, %v1041
        %v1071 = vpack.c.bf16 %v1044, %v1043
        %v1072 = vpack.c.bf16 %v1046, %v1045
        %v1073 = vpack.c.bf16 %v1048, %v1047
        %v1074 = vpack.c.bf16 %v1050, %v1049
        %v1075 = vpack.c.bf16 %v1052, %v1051
        %v1076 = vpack.c.bf16 %v1054, %v1053
        %v1077 = vpack.c.bf16 %v1056, %v1055
        %v1078 = vpack.c.bf16 %v1058, %v1057
        %v1079 = vpack.c.bf16 %v1060, %v1059
        %v1080 = vpack.c.bf16 %v1062, %v1061
        %v1081 = vpack.c.bf16 %v1064, %v1063
        %v1082 = vpack.c.bf16 %v1066, %v1065
        %v1099 = vunpack.c.l.b16 %v1067
        %v1100 = vunpack.c.h.b16 %v1067
        %v1101 = vunpack.c.l.b16 %v1068
        %v1102 = vunpack.c.h.b16 %v1068
        %v1103 = vunpack.c.l.b16 %v1069
        %v1104 = vunpack.c.h.b16 %v1069
        %v1105 = vunpack.c.l.b16 %v1070
        %v1106 = vunpack.c.h.b16 %v1070
        %v1107 = vunpack.c.l.b16 %v1071
        %v1108 = vunpack.c.h.b16 %v1071
        %v1109 = vunpack.c.l.b16 %v1072
        %v1110 = vunpack.c.h.b16 %v1072
        %v1111 = vunpack.c.l.b16 %v1073
        %v1112 = vunpack.c.h.b16 %v1073
        %v1113 = vunpack.c.l.b16 %v1074
        %v1114 = vunpack.c.h.b16 %v1074
        %v1115 = vunpack.c.l.b16 %v1075
        %v1116 = vunpack.c.h.b16 %v1075
        %v1117 = vunpack.c.l.b16 %v1076
        %v1118 = vunpack.c.h.b16 %v1076
        %v1119 = vunpack.c.l.b16 %v1077
        %v1120 = vunpack.c.h.b16 %v1077
        %v1121 = vunpack.c.l.b16 %v1078
        %v1122 = vunpack.c.h.b16 %v1078
        %v1123 = vunpack.c.l.b16 %v1079
        %v1124 = vunpack.c.h.b16 %v1079
        %v1125 = vunpack.c.l.b16 %v1080
        %v1126 = vunpack.c.h.b16 %v1080
        %v1127 = vunpack.c.l.b16 %v1081
        %v1128 = vunpack.c.h.b16 %v1081
        %v1129 = vunpack.c.l.b16 %v1082
        %v1130 = vunpack.c.h.b16 %v1082
        %v1131 = vpack.c.b16 %v1099, %v1099
        %v1132 = vpack.c.b16 %v1100, %v1100
        %v1133 = vpack.c.b16 %v1101, %v1101
        %v1134 = vpack.c.b16 %v1102, %v1102
        %v1135 = vpack.c.b16 %v1103, %v1103
        %v1136 = vpack.c.b16 %v1104, %v1104
        %v1137 = vpack.c.b16 %v1105, %v1105
        %v1138 = vpack.c.b16 %v1106, %v1106
        %v1139 = vpack.c.b16 %v1107, %v1107
        %v1140 = vpack.c.b16 %v1108, %v1108
        %v1141 = vpack.c.b16 %v1109, %v1109
        %v1142 = vpack.c.b16 %v1110, %v1110
        %v1143 = vpack.c.b16 %v1111, %v1111
        %v1144 = vpack.c.b16 %v1112, %v1112
        %v1145 = vpack.c.b16 %v1113, %v1113
        %v1146 = vpack.c.b16 %v1114, %v1114
        %v1147 = vpack.c.b16 %v1115, %v1115
        %v1148 = vpack.c.b16 %v1116, %v1116
        %v1149 = vpack.c.b16 %v1117, %v1117
        %v1150 = vpack.c.b16 %v1118, %v1118
        %v1151 = vpack.c.b16 %v1119, %v1119
        %v1152 = vpack.c.b16 %v1120, %v1120
        %v1153 = vpack.c.b16 %v1121, %v1121
        %v1154 = vpack.c.b16 %v1122, %v1122
        %v1155 = vpack.c.b16 %v1123, %v1123
        %v1156 = vpack.c.b16 %v1124, %v1124
        %v1157 = vpack.c.b16 %v1125, %v1125
        %v1158 = vpack.c.b16 %v1126, %v1126
        %v1159 = vpack.c.b16 %v1127, %v1127
        %v1160 = vpack.c.b16 %v1128, %v1128
        %v1161 = vpack.c.b16 %v1129, %v1129
        %v1162 = vpack.c.b16 %v1130, %v1130
        %1195 = vst [vmem:[%s306] sm:$0xf] %v1131
        %1196 = vst [vmem:[%s306 + $0x4] sm:$0xf] %v1132
        %1197 = vst [vmem:[%s306 + $0x8] sm:$0xf] %v1133
        %1198 = vst [vmem:[%s306 + $0xc] sm:$0xf] %v1134
        %1199 = vst [vmem:[%s306 + $0x10] sm:$0xf] %v1135
        %1200 = vst [vmem:[%s306 + $0x14] sm:$0xf] %v1136
        %1201 = vst [vmem:[%s306 + $0x18] sm:$0xf] %v1137
        %1202 = vst [vmem:[%s306 + $0x1c] sm:$0xf] %v1138
        %1203 = vst [vmem:[%s306 + $0x20] sm:$0xf] %v1139
        %1204 = vst [vmem:[%s306 + $0x24] sm:$0xf] %v1140
        %1205 = vst [vmem:[%s306 + $0x28] sm:$0xf] %v1141
        %1206 = vst [vmem:[%s306 + $0x2c] sm:$0xf] %v1142
        %1207 = vst [vmem:[%s306 + $0x30] sm:$0xf] %v1143
        %1208 = vst [vmem:[%s306 + $0x34] sm:$0xf] %v1144
        %1209 = vst [vmem:[%s306 + $0x38] sm:$0xf] %v1145
        %1210 = vst [vmem:[%s306 + $0x3c] sm:$0xf] %v1146
        %1211 = vst [vmem:[%s306 + $0x40] sm:$0xf] %v1147
        %1212 = vst [vmem:[%s306 + $0x44] sm:$0xf] %v1148
        %1213 = vst [vmem:[%s306 + $0x48] sm:$0xf] %v1149
        %1214 = vst [vmem:[%s306 + $0x4c] sm:$0xf] %v1150
        %1215 = vst [vmem:[%s306 + $0x50] sm:$0xf] %v1151
        %1216 = vst [vmem:[%s306 + $0x54] sm:$0xf] %v1152
        %1217 = vst [vmem:[%s306 + $0x58] sm:$0xf] %v1153
        %1218 = vst [vmem:[%s306 + $0x5c] sm:$0xf] %v1154
        %1219 = vst [vmem:[%s306 + $0x60] sm:$0xf] %v1155
        %1220 = vst [vmem:[%s306 + $0x64] sm:$0xf] %v1156
        %1221 = vst [vmem:[%s306 + $0x68] sm:$0xf] %v1157
        %1222 = vst [vmem:[%s306 + $0x6c] sm:$0xf] %v1158
        %1223 = vst [vmem:[%s306 + $0x70] sm:$0xf] %v1159
        %1224 = vst [vmem:[%s306 + $0x74] sm:$0xf] %v1160
        %1225 = vst [vmem:[%s306 + $0x78] sm:$0xf] %v1161
        %1226 = vst [vmem:[%s306 + $0x7c] sm:$0xf] %v1162
      $region44: #{resnet_forward.12} parent=35 // pred_fallthru
        _
      %s1227 = smul.u32 32, %s20
      %p1228 = scmp.lt.s32.totalorder %s1227, 63
      %s1229 = scalar_select %p1228, %s1227, 63
      %p1230 = scmp.lt.s32.totalorder %s21, 0
      %s1231 = scalar_select %p1230, %s21, 0
      %s1232 = sadd.s32 %s1231, %s1229
      %s1233 = smul.addr %s1232, 4
      %s1234 = scalar_lea.vmem %s4, %s1233
      // Predicated region
      $region45: #{resnet_forward.12} parent=35 // pred_check
        %p1235 = pneg %p162
      $region46: #{resnet_forward.12} parent=35 // pred_check_branch
        %1237 = sbr.rel (%p1235) target = $region48
      $region47: #{resnet_forward.12} parent=35 // pred_region
        %s1238 = smul.u32 32, %s20
      $region48: #{resnet_forward.12} parent=35 // pred_fallthru
        _
    $region36: #{resnet_forward.12} parent=5 // pred_fallthru
      _
    %p1239 = scmp.le.s32.totalorder 2, %s10
    // Predicated region
    $region49: #{resnet_forward.12} parent=5 // pred_check
      %p1240 = pneg %p1239
    $region50: #{resnet_forward.12} parent=5 // pred_check_branch
      %1242 = sbr.rel (%p1240) target = $region52
    $region51: #{resnet_forward.12} parent=5 // pred_region
      %s1243 = ssub.s32 %s10, 2
      // Predicated region
      $region53: #{resnet_forward.12} parent=51 // pred_check
        %p1244 = pneg %p168
      $region54: #{resnet_forward.12} parent=51 // pred_check_branch
        %1246 = sbr.rel (%p1244) target = $region56
      $region55: #{resnet_forward.12} parent=51 // pred_region
        %s1247 = smul.u32 32, %s23
        %p1248 = scmp.lt.s32.totalorder %s1247, 63
        %s1249 = scalar_select %p1248, %s1247, 63
        %p1250 = scmp.lt.s32.totalorder %s24, 0
        %s1251 = scalar_select %p1250, %s24, 0
        %s1252 = sadd.s32 %s1251, %s1249
        %s1253 = smul.addr %s1252, 4
        %s1254 = scalar_lea.vmem %s4, %s1253
      $region56: #{resnet_forward.12} parent=51 // pred_fallthru
        _
    $region52: #{resnet_forward.12} parent=5 // pred_fallthru
      _
  $region6: #{resnet_forward.12} parent=0 // loop_footer
    %s14 = sadd.s32 1, %s10
  $region7: #{resnet_forward.12} parent=0 // loop_footer_branch
    %9 = sbr.rel target = $region3
  $region8: #{resnet_forward.12} parent=0 // loop_exit
    _

// kernel: resnet_forward.13
$region0: #{resnet_forward.13}
  #allocation0 [shape = 'u32[]', space=smem, size = 0x4, offset = 0x4, fixed_abs, tag = 'smem constant byte address 0x4 - core index']
  #allocation1 [shape = 'u32[144,128]{1,0:T(1,128)}', space=vmem, size = 0x12000, scoped, tag = 'internal scratch']
  #allocation2 [shape = 'f32[128,128]{1,0:T(8,128)}', space=vmem, size = 0x10000, scoped, tag = 'scratch operand']
  %s0 = inlined_call_operand.vmem [shape: bf16[128,768], index: 0, kind: input, shape index: {}]
  %s1 = inlined_call_operand.vmem [shape: bf16[768,128], index: 1, kind: input, shape index: {}]
  %s2 = inlined_call_operand.vmem [shape: f32[1,128], index: 2, kind: input, shape index: {}]
  %s3 = inlined_call_operand.vmem [shape: f32[1,128], index: 3, kind: input, shape index: {}]
  %s4 = inlined_call_operand.vmem [shape: bf16[128,128], index: 4, kind: output, shape index: {}]
  %s5 = sld [smem:[#allocation0]]
  $region95: #{resnet_forward.13} parent=0
    _
  %s7 = ssub.s32 1, %s5
  %s8 = scalar_select 0, %s7, %s5
  $region1: #{resnet_forward.13} parent=0
    #allocation3 [shape = 'u8[131072]{0}', space=vmem, size = 0x20000, scoped, tag = 'input window, operand 0']
    loop: start=0, step=1, limit=5
    $region2: #{resnet_forward.13} parent=1 // loop_pre_header
      _
    $region3: #{resnet_forward.13} parent=1 // loop_header
      %s10 = sphi 0, %s14
      %p11 = scmp.ge.s32.totalorder %s10, 5
      %s17 = sphi 0, %s36
      %s18 = sphi 0, %s32
      %s19 = sphi 0, %s28
      %s20 = sphi 0, %s17
      %s21 = sphi 0, %s18
      %s22 = sphi 0, %s19
      %s23 = sphi 0, %s20
      %s24 = sphi 0, %s21
      %s25 = sphi 0, %s22
      %s41 = sphi 0, %s43
      %s44 = sphi 0, %s41
      %s45 = sphi 0, %s44
      %s61 = sphi 0, %s45
      %s69 = sphi 0, %s71
      %s72 = sphi 0, %s69
      %s73 = sphi 0, %s72
      %s89 = sphi 0, %s73
      %s95 = sphi 0, %s97
      %s98 = sphi 0, %s95
      %s99 = sphi 0, %s98
      %s115 = sphi 0, %s99
      %s121 = sphi 0, %s123
      %s124 = sphi 0, %s121
      %s125 = sphi 0, %s124
      %s141 = sphi 0, %s125
      %s149 = sphi 0, %s151
      %s152 = sphi 0, %s149
      %s153 = sphi 0, %s152
      %s169 = sphi 0, %s153
    $region4: #{resnet_forward.13} parent=1 // loop_header_branch
      %13 = sbr.rel (%p11) target = $region8
    $region5: #{resnet_forward.13} parent=1 // loop_body
      %s15 = ssub.s32 %s10, 1
      %s16 = ssub.s32 %s10, 2
      %s26 = sadd.s32 1, %s19
      %p27 = scmp.ge.s32.totalorder %s26, 3
      %s28 = scalar_select %p27, 0, %s26
      %s29 = sadd.s32 1, %s18
      %s30 = scalar_select %p27, %s29, %s18
      %p31 = scmp.ge.s32.totalorder %s30, 1
      %s32 = scalar_select %p31, 0, %s30
      %s33 = sadd.s32 1, %s17
      %s34 = scalar_select %p31, %s33, %s17
      %p35 = scmp.ge.s32.totalorder %s34, 1
      %s36 = scalar_select %p35, 0, %s34
      %s37 = ssub.s32 %s17, %s36
      %s38 = ssub.s32 %s19, %s28
      %s39 = sor.u32 %s37, %s38
      %p40 = scmp.eq.s32.totalorder %s39, 0
      %s42 = sadd.s32 %s41, 1
      %s43 = scalar_select %p40, %s41, %s42
      %p46 = pneg %p40
      %p47 = scmp.eq.s32.totalorder %s10, 2
      %p48 = por %p46, %p47
      %p49 = scmp.ne.s32.totalorder %s41, %s44
      %p50 = scmp.eq.s32.totalorder %s10, 0
      %p51 = por %p49, %p50
      %p52 = scmp.ne.s32.totalorder %s41, %s44
      %p53 = scmp.eq.s32.totalorder %s15, 2
      %p54 = por %p52, %p53
      %p55 = scmp.ne.s32.totalorder %s44, %s45
      %p56 = scmp.eq.s32.totalorder %s15, 0
      %p57 = por %p55, %p56
      %p58 = scmp.ne.s32.totalorder %s44, %s45
      %p59 = scmp.eq.s32.totalorder %s16, 2
      %p60 = por %p58, %p59
      %p62 = scmp.ne.s32.totalorder %s45, %s61
      %p63 = scmp.eq.s32.totalorder %s16, 0
      %p64 = por %p62, %p63
      %s65 = ssub.s32 %s19, %s28
      %s66 = ssub.s32 %s18, %s32
      %s67 = sor.u32 %s65, %s66
      %p68 = scmp.eq.s32.totalorder %s67, 0
      %s70 = sadd.s32 %s69, 1
      %s71 = scalar_select %p68, %s69, %s70
      %p74 = pneg %p68
      %p75 = scmp.eq.s32.totalorder %s10, 2
      %p76 = por %p74, %p75
      %p77 = scmp.ne.s32.totalorder %s69, %s72
      %p78 = scmp.eq.s32.totalorder %s10, 0
      %p79 = por %p77, %p78
      %p80 = scmp.ne.s32.totalorder %s69, %s72
      %p81 = scmp.eq.s32.totalorder %s15, 2
      %p82 = por %p80, %p81
      %p83 = scmp.ne.s32.totalorder %s72, %s73
      %p84 = scmp.eq.s32.totalorder %s15, 0
      %p85 = por %p83, %p84
      %p86 = scmp.ne.s32.totalorder %s72, %s73
      %p87 = scmp.eq.s32.totalorder %s16, 2
      %p88 = por %p86, %p87
      %p90 = scmp.ne.s32.totalorder %s73, %s89
      %p91 = scmp.eq.s32.totalorder %s16, 0
      %p92 = por %p90, %p91
      %s93 = ssub.s32 %s18, %s32
      %p94 = scmp.eq.s32.totalorder %s93, 0
      %s96 = sadd.s32 %s95, 1
      %s97 = scalar_select %p94, %s95, %s96
      %p100 = pneg %p94
      %p101 = scmp.eq.s32.totalorder %s10, 2
      %p102 = por %p100, %p101
      %p103 = scmp.ne.s32.totalorder %s95, %s98
      %p104 = scmp.eq.s32.totalorder %s10, 0
      %p105 = por %p103, %p104
      %p106 = scmp.ne.s32.totalorder %s95, %s98
      %p107 = scmp.eq.s32.totalorder %s15, 2
      %p108 = por %p106, %p107
      %p109 = scmp.ne.s32.totalorder %s98, %s99
      %p110 = scmp.eq.s32.totalorder %s15, 0
      %p111 = por %p109, %p110
      %p112 = scmp.ne.s32.totalorder %s98, %s99
      %p113 = scmp.eq.s32.totalorder %s16, 2
      %p114 = por %p112, %p113
      %p116 = scmp.ne.s32.totalorder %s99, %s115
      %p117 = scmp.eq.s32.totalorder %s16, 0
      %p118 = por %p116, %p117
      %s119 = ssub.s32 %s18, %s32
      %p120 = scmp.eq.s32.totalorder %s119, 0
      %s122 = sadd.s32 %s121, 1
      %s123 = scalar_select %p120, %s121, %s122
      %p126 = pneg %p120
      %p127 = scmp.eq.s32.totalorder %s10, 2
      %p128 = por %p126, %p127
      %p129 = scmp.ne.s32.totalorder %s121, %s124
      %p130 = scmp.eq.s32.totalorder %s10, 0
      %p131 = por %p129, %p130
      %p132 = scmp.ne.s32.totalorder %s121, %s124
      %p133 = scmp.eq.s32.totalorder %s15, 2
      %p134 = por %p132, %p133
      %p135 = scmp.ne.s32.totalorder %s124, %s125
      %p136 = scmp.eq.s32.totalorder %s15, 0
      %p137 = por %p135, %p136
      %p138 = scmp.ne.s32.totalorder %s124, %s125
      %p139 = scmp.eq.s32.totalorder %s16, 2
      %p140 = por %p138, %p139
      %p142 = scmp.ne.s32.totalorder %s125, %s141
      %p143 = scmp.eq.s32.totalorder %s16, 0
      %p144 = por %p142, %p143
      %s145 = ssub.s32 %s17, %s36
      %s146 = ssub.s32 %s18, %s32
      %s147 = sor.u32 %s145, %s146
      %p148 = scmp.eq.s32.totalorder %s147, 0
      %s150 = sadd.s32 %s149, 1
      %s151 = scalar_select %p148, %s149, %s150
      %p154 = pneg %p148
      %p155 = scmp.eq.s32.totalorder %s10, 2
      %p156 = por %p154, %p155
      %p157 = scmp.ne.s32.totalorder %s149, %s152
      %p158 = scmp.eq.s32.totalorder %s10, 0
      %p159 = por %p157, %p158
      %p160 = scmp.ne.s32.totalorder %s149, %s152
      %p161 = scmp.eq.s32.totalorder %s15, 2
      %p162 = por %p160, %p161
      %p163 = scmp.ne.s32.totalorder %s152, %s153
      %p164 = scmp.eq.s32.totalorder %s15, 0
      %p165 = por %p163, %p164
      %p166 = scmp.ne.s32.totalorder %s152, %s153
      %p167 = scmp.eq.s32.totalorder %s16, 2
      %p168 = por %p166, %p167
      %p170 = scmp.ne.s32.totalorder %s153, %s169
      %p171 = scmp.eq.s32.totalorder %s16, 0
      %p172 = por %p170, %p171
      %p173 = scmp.le.s32.totalorder 1, %s10
      %p174 = scmp.lt.s32.totalorder %s10, 4
      %p175 = pnand %p173, %p174
      %p176 = pneg %p175
      // Predicated region
      $region9: #{resnet_forward.13} parent=5 // pred_check
        _
      $region10: #{resnet_forward.13} parent=5 // pred_check_branch
        %178 = sbr.rel (%p175) target = $region12
      $region11: #{resnet_forward.13} parent=5 // pred_region
        %s179 = ssub.s32 %s10, 1
        // Predicated region
        $region13: #{resnet_forward.13} parent=11 // pred_check
          %p180 = pneg %p111
        $region14: #{resnet_forward.13} parent=11 // pred_check_branch
          %182 = sbr.rel (%p180) target = $region16
        $region15: #{resnet_forward.13} parent=11 // pred_region
          %p183 = scmp.lt.s32.totalorder %s21, 0
          %s184 = scalar_select %p183, %s21, 0
          %s185 = scalar_lea.vmem %s2, %s184
        $region16: #{resnet_forward.13} parent=11 // pred_fallthru
          _
        // Predicated region
        $region17: #{resnet_forward.13} parent=11 // pred_check
          %p186 = pneg %p137
        $region18: #{resnet_forward.13} parent=11 // pred_check_branch
          %188 = sbr.rel (%p186) target = $region20
        $region19: #{resnet_forward.13} parent=11 // pred_region
          %p189 = scmp.lt.s32.totalorder %s21, 0
          %s190 = scalar_select %p189, %s21, 0
          %s191 = scalar_lea.vmem %s3, %s190
        $region20: #{resnet_forward.13} parent=11 // pred_fallthru
          _
      $region12: #{resnet_forward.13} parent=5 // pred_fallthru
        _
      %p192 = scmp.lt.s32.totalorder %s10, 3
      // Predicated region
      $region21: #{resnet_forward.13} parent=5 // pred_check
        %p193 = pneg %p192
      $region22: #{resnet_forward.13} parent=5 // pred_check_branch
        %195 = sbr.rel (%p193) target = $region24
      $region23: #{resnet_forward.13} parent=5 // pred_region
        // Predicated region
        $region25: #{resnet_forward.13} parent=23 // pred_check
          %p196 = pneg %p51
        $region26: #{resnet_forward.13} parent=23 // pred_check_branch
          %198 = sbr.rel (%p196) target = $region28
        $region27: #{resnet_forward.13} parent=23 // pred_region
          %s199 = sand.u32 %s41, 1
          %s200 = sand.u32 %s41, 1
          %s201 = smul.addr %s200, 128
          %s202 = scalar_lea.vmem [#allocation3], %s201
          %s203 = smul.u32 16, %s17
          %s204 = smul.u32 2, %s19
          %s205 = smul.addr %s203, 6
          %s206 = sadd.s32 %s204, %s205
          %s207 = smul.addr %s206, 4
          %s208 = scalar_lea.vmem %s0, %s207
          // Predicated region
          $region29: #{resnet_forward.13} parent=27 // pred_check
            _
          $region30: #{resnet_forward.13} parent=27 // pred_check_branch
            %210 = sbr.rel (0) target = $region32
          $region31: #{resnet_forward.13} parent=27 // pred_region
            // Predicated region
            $region33: #{resnet_forward.13} parent=31 // pred_check
              _
            $region34: #{resnet_forward.13} parent=31 // pred_check_branch
              %212 = sbr.rel (0) target = $region36
            $region35: #{resnet_forward.13} parent=31 // pred_region
              // Predicated region
              $region48: #{resnet_forward.13} parent=35 // pred_check
                _
              $region49: #{resnet_forward.13} parent=35 // pred_check_branch
                %257 = sbr.rel (0) target = $region51
              $region50: #{resnet_forward.13} parent=35 // pred_region
                loop: start=0, step=1, limit=1
                $region52: #{resnet_forward.13} parent=50 // loop_pre_header
                  _
                $region53: #{resnet_forward.13} parent=50 // loop_header
                  %s259 = sphi 0, %s263
                  %p260 = scmp.ge.s32.totalorder %s259, 1
                  %s264 = sphi %s208, %s208
                  %s265 = sphi %s202, %s202
                $region54: #{resnet_forward.13} parent=50 // loop_header_branch
                  %262 = sbr.rel (%p260) target = $region58
                $region55: #{resnet_forward.13} parent=50 // loop_body
                  %v266 = vld [vmem:[%s264] sm:$0xff]
                  %267 = vst [vmem:[%s265] sm:$0xff] %v266
                  %v268 = vld [vmem:[%s264 + $0x18] sm:$0xff]
                  %269 = vst [vmem:[%s265 + $0x8] sm:$0xff] %v268
                  %v270 = vld [vmem:[%s264 + $0x30] sm:$0xff]
                  %271 = vst [vmem:[%s265 + $0x10] sm:$0xff] %v270
                  %v272 = vld [vmem:[%s264 + $0x48] sm:$0xff]
                  %273 = vst [vmem:[%s265 + $0x18] sm:$0xff] %v272
                  %v274 = vld [vmem:[%s264 + $0x60] sm:$0xff]
                  %275 = vst [vmem:[%s265 + $0x20] sm:$0xff] %v274
                  %v276 = vld [vmem:[%s264 + $0x78] sm:$0xff]
                  %277 = vst [vmem:[%s265 + $0x28] sm:$0xff] %v276
                  %v278 = vld [vmem:[%s264 + $0x90] sm:$0xff]
                  %279 = vst [vmem:[%s265 + $0x30] sm:$0xff] %v278
                  %v280 = vld [vmem:[%s264 + $0xa8] sm:$0xff]
                  %281 = vst [vmem:[%s265 + $0x38] sm:$0xff] %v280
                  %v282 = vld [vmem:[%s264 + $0xc0] sm:$0xff]
                  %283 = vst [vmem:[%s265 + $0x40] sm:$0xff] %v282
                  %v284 = vld [vmem:[%s264 + $0xd8] sm:$0xff]
                  %285 = vst [vmem:[%s265 + $0x48] sm:$0xff] %v284
                  %v286 = vld [vmem:[%s264 + $0xf0] sm:$0xff]
                  %287 = vst [vmem:[%s265 + $0x50] sm:$0xff] %v286
                  %v288 = vld [vmem:[%s264 + $0x108] sm:$0xff]
                  %289 = vst [vmem:[%s265 + $0x58] sm:$0xff] %v288
                  %v290 = vld [vmem:[%s264 + $0x120] sm:$0xff]
                  %291 = vst [vmem:[%s265 + $0x60] sm:$0xff] %v290
                  %v292 = vld [vmem:[%s264 + $0x138] sm:$0xff]
                  %293 = vst [vmem:[%s265 + $0x68] sm:$0xff] %v292
                  %v294 = vld [vmem:[%s264 + $0x150] sm:$0xff]
                  %295 = vst [vmem:[%s265 + $0x70] sm:$0xff] %v294
                  %v296 = vld [vmem:[%s264 + $0x168] sm:$0xff]
                  %297 = vst [vmem:[%s265 + $0x78] sm:$0xff] %v296
                $region56: #{resnet_forward.13} parent=50 // loop_footer
                  %s263 = sadd.s32 1, %s259
                $region57: #{resnet_forward.13} parent=50 // loop_footer_branch
                  %258 = sbr.rel target = $region53
                $region58: #{resnet_forward.13} parent=50 // loop_exit
                  _
              $region51: #{resnet_forward.13} parent=35 // pred_fallthru
                _
              // Predicated region
              $region59: #{resnet_forward.13} parent=35 // pred_check
                _
              $region60: #{resnet_forward.13} parent=35 // pred_check_branch
                %299 = sbr.rel target = $region62
              $region61: #{resnet_forward.13} parent=35 // pred_region
                _
              $region62: #{resnet_forward.13} parent=35 // pred_fallthru
                _
            $region36: #{resnet_forward.13} parent=31 // pred_fallthru
              _
            // Predicated region
            $region37: #{resnet_forward.13} parent=31 // pred_check
              _
            $region38: #{resnet_forward.13} parent=31 // pred_check_branch
              %214 = sbr.rel target = $region40
            $region39: #{resnet_forward.13} parent=31 // pred_region
              loop: start=0, step=1, limit=1
              $region41: #{resnet_forward.13} parent=39 // loop_pre_header
                _
              $region42: #{resnet_forward.13} parent=39 // loop_header
                %s217 = sphi 0, %s221
                %p218 = scmp.ge.s32.totalorder %s217, 1
                %s222 = sphi %s208, %s208
                %s223 = sphi %s202, %s202
              $region43: #{resnet_forward.13} parent=39 // loop_header_branch
                %220 = sbr.rel (%p218) target = $region47
              $region44: #{resnet_forward.13} parent=39 // loop_body
                %v224 = vld [vmem:[%s222] sm:$0xff]
                %225 = vst [vmem:[%s223] sm:$0xff] %v224
                %v226 = vld [vmem:[%s222 + $0x18] sm:$0xff]
                %227 = vst [vmem:[%s223 + $0x8] sm:$0xff] %v226
                %v228 = vld [vmem:[%s222 + $0x30] sm:$0xff]
                %229 = vst [vmem:[%s223 + $0x10] sm:$0xff] %v228
                %v230 = vld [vmem:[%s222 + $0x48] sm:$0xff]
                %231 = vst [vmem:[%s223 + $0x18] sm:$0xff] %v230
                %v232 = vld [vmem:[%s222 + $0x60] sm:$0xff]
                %233 = vst [vmem:[%s223 + $0x20] sm:$0xff] %v232
                %v234 = vld [vmem:[%s222 + $0x78] sm:$0xff]
                %235 = vst [vmem:[%s223 + $0x28] sm:$0xff] %v234
                %v236 = vld [vmem:[%s222 + $0x90] sm:$0xff]
                %237 = vst [vmem:[%s223 + $0x30] sm:$0xff] %v236
                %v238 = vld [vmem:[%s222 + $0xa8] sm:$0xff]
                %239 = vst [vmem:[%s223 + $0x38] sm:$0xff] %v238
                %v240 = vld [vmem:[%s222 + $0xc0] sm:$0xff]
                %241 = vst [vmem:[%s223 + $0x40] sm:$0xff] %v240
                %v242 = vld [vmem:[%s222 + $0xd8] sm:$0xff]
                %243 = vst [vmem:[%s223 + $0x48] sm:$0xff] %v242
                %v244 = vld [vmem:[%s222 + $0xf0] sm:$0xff]
                %245 = vst [vmem:[%s223 + $0x50] sm:$0xff] %v244
                %v246 = vld [vmem:[%s222 + $0x108] sm:$0xff]
                %247 = vst [vmem:[%s223 + $0x58] sm:$0xff] %v246
                %v248 = vld [vmem:[%s222 + $0x120] sm:$0xff]
                %249 = vst [vmem:[%s223 + $0x60] sm:$0xff] %v248
                %v250 = vld [vmem:[%s222 + $0x138] sm:$0xff]
                %251 = vst [vmem:[%s223 + $0x68] sm:$0xff] %v250
                %v252 = vld [vmem:[%s222 + $0x150] sm:$0xff]
                %253 = vst [vmem:[%s223 + $0x70] sm:$0xff] %v252
                %v254 = vld [vmem:[%s222 + $0x168] sm:$0xff]
                %255 = vst [vmem:[%s223 + $0x78] sm:$0xff] %v254
              $region45: #{resnet_forward.13} parent=39 // loop_footer
                %s221 = sadd.s32 1, %s217
              $region46: #{resnet_forward.13} parent=39 // loop_footer_branch
                %216 = sbr.rel target = $region42
              $region47: #{resnet_forward.13} parent=39 // loop_exit
                _
            $region40: #{resnet_forward.13} parent=31 // pred_fallthru
              _
          $region32: #{resnet_forward.13} parent=27 // pred_fallthru
            _
          %300 = vnop
        $region28: #{resnet_forward.13} parent=23 // pred_fallthru
          _
        // Predicated region
        $region63: #{resnet_forward.13} parent=23 // pred_check
          %p301 = pneg %p79
        $region64: #{resnet_forward.13} parent=23 // pred_check_branch
          %303 = sbr.rel (%p301) target = $region66
        $region65: #{resnet_forward.13} parent=23 // pred_region
          %s304 = smul.u32 32, %s19
          %p305 = scmp.lt.s32.totalorder %s304, 95
          %s306 = scalar_select %p305, %s304, 95
          %p307 = scmp.lt.s32.totalorder %s18, 0
          %s308 = scalar_select %p307, %s18, 0
          %s309 = sadd.s32 %s308, %s306
          %s310 = smul.addr %s309, 4
          %s311 = scalar_lea.vmem %s1, %s310
          %s312 = smul.u32 32, %s19
        $region66: #{resnet_forward.13} parent=23 // pred_fallthru
          _
      $region24: #{resnet_forward.13} parent=5 // pred_fallthru
        _
      %p313 = scmp.le.s32.totalorder 1, %s10
      %p314 = scmp.lt.s32.totalorder %s10, 4
      %p315 = pnand %p313, %p314
      %p316 = pneg %p315
      // Predicated region
      $region67: #{resnet_forward.13} parent=5 // pred_check
        _
      $region68: #{resnet_forward.13} parent=5 // pred_check_branch
        %318 = sbr.rel (%p315) target = $region70
      $region69: #{resnet_forward.13} parent=5 // pred_region
        %s319 = ssub.s32 %s10, 1
        %s320 = sand.u32 %s44, 1
        %s321 = sand.u32 %s44, 1
        %s322 = smul.addr %s321, 128
        %s323 = scalar_lea.vmem [#allocation3], %s322
        // Predicated region
        $region71: #{resnet_forward.13} parent=69 // pred_check
          %p324 = pneg %p57
        $region72: #{resnet_forward.13} parent=69 // pred_check_branch
          %326 = sbr.rel (%p324) target = $region74
        $region73: #{resnet_forward.13} parent=69 // pred_region
          _
        $region74: #{resnet_forward.13} parent=69 // pred_fallthru
          _
        %s327 = sand.u32 %s44, 1
        %s328 = sand.u32 %s44, 1
        %s329 = smul.addr %s328, 128
        %s330 = scalar_lea.vmem [#allocation3], %s329
        %p331 = pneg %p57
        %p332 = pneg %p54
        %s333 = smul.u32 32, %s22
        %p334 = scmp.lt.s32.totalorder %s333, 95
        %s335 = scalar_select %p334, %s333, 95
        %p336 = scmp.lt.s32.totalorder %s21, 0
        %s337 = scalar_select %p336, %s21, 0
        %s338 = sadd.s32 %s337, %s335
        %s339 = smul.addr %s338, 4
        %s340 = scalar_lea.vmem %s1, %s339
        %p341 = pneg %p85
        %p342 = pneg %p82
        %p343 = scmp.lt.s32.totalorder %s21, 0
        %s344 = scalar_select %p343, %s21, 0
        %s345 = scalar_lea.vmem %s2, %s344
        %p346 = pneg %p111
        %p347 = pneg %p108
        %p348 = scmp.lt.s32.totalorder %s21, 0
        %s349 = scalar_select %p348, %s21, 0
        %s350 = scalar_lea.vmem %s3, %s349
        %p351 = pneg %p137
        %p352 = pneg %p134
        %p353 = pneg %p165
        %p354 = pneg %p162
        %s355 = smul.u32 16, %s20
        %p356 = scmp.lt.s32.totalorder %s355, 15
        %s357 = scalar_select %p356, %s355, 15
        %p358 = scmp.lt.s32.totalorder %s21, 0
        %s359 = scalar_select %p358, %s21, 0
        %s360 = sadd.s32 %s359, %s357
        %s361 = smul.addr %s360, 4
        %s362 = scalar_lea.vmem %s4, %s361
        %s363 = smul.u32 16, %s20
        %s364 = smul.u32 2, %s22
        %s365 = smul.u32 32, %s22
        %p366 = scmp.lt.s32.totalorder %s365, 95
        %s367 = scalar_select %p366, %s365, 95
        %p368 = scmp.lt.s32.totalorder %s21, 0
        %s369 = scalar_select %p368, %s21, 0
        %s370 = sadd.s32 %s369, %s367
        %s371 = smul.addr %s370, 4
        %s372 = scalar_lea.vmem %s1, %s371
        %s373 = smul.u32 32, %s22
        %p374 = scmp.lt.s32.totalorder %s21, 0
        %s375 = scalar_select %p374, %s21, 0
        %s376 = scalar_lea.vmem %s2, %s375
        %p377 = scmp.lt.s32.totalorder %s21, 0
        %s378 = scalar_select %p377, %s21, 0
        %s379 = scalar_lea.vmem %s3, %s378
        %s380 = smul.u32 16, %s20
        %p381 = scmp.lt.s32.totalorder %s380, 15
        %s382 = scalar_select %p381, %s380, 15
        %p383 = scmp.lt.s32.totalorder %s21, 0
        %s384 = scalar_select %p383, %s21, 0
        %s385 = sadd.s32 %s384, %s382
        %s386 = smul.addr %s385, 4
        %s387 = scalar_lea.vmem %s4, %s386
        %s388 = smul.u32 16, %s20
        %p390 = scmp.eq.s32.totalorder %s22, 0
        // Predicated region
        $region75: #{resnet_forward.13} parent=69 // pred_check
          %p391 = pneg %p390
        $region76: #{resnet_forward.13} parent=69 // pred_check_branch
          %393 = sbr.rel (%p391) target = $region78
        $region77: #{resnet_forward.13} parent=69 // pred_region
          %394 = vst [vmem:[#allocation2] sm:$0xff] 0.0
          %395 = vst [vmem:[#allocation2 + $0x8] sm:$0xff] 0.0
          %396 = vst [vmem:[#allocation2 + $0x10] sm:$0xff] 0.0
          %397 = vst [vmem:[#allocation2 + $0x18] sm:$0xff] 0.0
          %398 = vst [vmem:[#allocation2 + $0x20] sm:$0xff] 0.0
          %399 = vst [vmem:[#allocation2 + $0x28] sm:$0xff] 0.0
          %400 = vst [vmem:[#allocation2 + $0x30] sm:$0xff] 0.0
          %401 = vst [vmem:[#allocation2 + $0x38] sm:$0xff] 0.0
          %402 = vst [vmem:[#allocation2 + $0x40] sm:$0xff] 0.0
          %403 = vst [vmem:[#allocation2 + $0x48] sm:$0xff] 0.0
          %404 = vst [vmem:[#allocation2 + $0x50] sm:$0xff] 0.0
          %405 = vst [vmem:[#allocation2 + $0x58] sm:$0xff] 0.0
          %406 = vst [vmem:[#allocation2 + $0x60] sm:$0xff] 0.0
          %407 = vst [vmem:[#allocation2 + $0x68] sm:$0xff] 0.0
          %408 = vst [vmem:[#allocation2 + $0x70] sm:$0xff] 0.0
          %409 = vst [vmem:[#allocation2 + $0x78] sm:$0xff] 0.0
        $region78: #{resnet_forward.13} parent=69 // pred_fallthru
          _
        %v410 = vld [vmem:[#allocation2] sm:$0xff]
        %v411 = vld [vmem:[#allocation2 + $0x8] sm:$0xff]
        %v412 = vld [vmem:[#allocation2 + $0x10] sm:$0xff]
        %v413 = vld [vmem:[#allocation2 + $0x18] sm:$0xff]
        %v414 = vld [vmem:[#allocation2 + $0x20] sm:$0xff]
        %v415 = vld [vmem:[#allocation2 + $0x28] sm:$0xff]
        %v416 = vld [vmem:[#allocation2 + $0x30] sm:$0xff]
        %v417 = vld [vmem:[#allocation2 + $0x38] sm:$0xff]
        %v418 = vld [vmem:[#allocation2 + $0x40] sm:$0xff]
        %v419 = vld [vmem:[#allocation2 + $0x48] sm:$0xff]
        %v420 = vld [vmem:[#allocation2 + $0x50] sm:$0xff]
        %v421 = vld [vmem:[#allocation2 + $0x58] sm:$0xff]
        %v422 = vld [vmem:[#allocation2 + $0x60] sm:$0xff]
        %v423 = vld [vmem:[#allocation2 + $0x68] sm:$0xff]
        %v424 = vld [vmem:[#allocation2 + $0x70] sm:$0xff]
        %v425 = vld [vmem:[#allocation2 + $0x78] sm:$0xff]
        %v426 = vld [vmem:[%s323] sm:$0xff]
        %v427 = vld [vmem:[%s323 + $0x8] sm:$0xff]
        %v428 = vld [vmem:[%s323 + $0x10] sm:$0xff]
        %v429 = vld [vmem:[%s323 + $0x18] sm:$0xff]
        %v430 = vld [vmem:[%s323 + $0x20] sm:$0xff]
        %v431 = vld [vmem:[%s323 + $0x28] sm:$0xff]
        %v432 = vld [vmem:[%s323 + $0x30] sm:$0xff]
        %v433 = vld [vmem:[%s323 + $0x38] sm:$0xff]
        %v434 = vld [vmem:[%s323 + $0x40] sm:$0xff]
        %v435 = vld [vmem:[%s323 + $0x48] sm:$0xff]
        %v436 = vld [vmem:[%s323 + $0x50] sm:$0xff]
        %v437 = vld [vmem:[%s323 + $0x58] sm:$0xff]
        %v438 = vld [vmem:[%s323 + $0x60] sm:$0xff]
        %v439 = vld [vmem:[%s323 + $0x68] sm:$0xff]
        %v440 = vld [vmem:[%s323 + $0x70] sm:$0xff]
        %v441 = vld [vmem:[%s323 + $0x78] sm:$0xff]
        %v442 = vld [vmem:[%s372] sm:$0xf]
        %v443 = vld [vmem:[%s372 + $0x4] sm:$0xf]
        %v444 = vld [vmem:[%s372 + $0x8] sm:$0xf]
        %v445 = vld [vmem:[%s372 + $0xc] sm:$0xf]
        %v446 = vld [vmem:[%s372 + $0x10] sm:$0xf]
        %v447 = vld [vmem:[%s372 + $0x14] sm:$0xf]
        %v448 = vld [vmem:[%s372 + $0x18] sm:$0xf]
        %v449 = vld [vmem:[%s372 + $0x1c] sm:$0xf]
        %v450 = vld [vmem:[%s372 + $0x20] sm:$0xf]
        %v451 = vld [vmem:[%s372 + $0x24] sm:$0xf]
        %v452 = vld [vmem:[%s372 + $0x28] sm:$0xf]
        %v453 = vld [vmem:[%s372 + $0x2c] sm:$0xf]
        %v454 = vld [vmem:[%s372 + $0x30] sm:$0xf]
        %v455 = vld [vmem:[%s372 + $0x34] sm:$0xf]
        %v456 = vld [vmem:[%s372 + $0x38] sm:$0xf]
        %v457 = vld [vmem:[%s372 + $0x3c] sm:$0xf]
        %v458 = vld [vmem:[%s372 + $0x40] sm:$0xf]
        %v459 = vld [vmem:[%s372 + $0x44] sm:$0xf]
        %v460 = vld [vmem:[%s372 + $0x48] sm:$0xf]
        %v461 = vld [vmem:[%s372 + $0x4c] sm:$0xf]
        %v462 = vld [vmem:[%s372 + $0x50] sm:$0xf]
        %v463 = vld [vmem:[%s372 + $0x54] sm:$0xf]
        %v464 = vld [vmem:[%s372 + $0x58] sm:$0xf]
        %v465 = vld [vmem:[%s372 + $0x5c] sm:$0xf]
        %v466 = vld [vmem:[%s372 + $0x60] sm:$0xf]
        %v467 = vld [vmem:[%s372 + $0x64] sm:$0xf]
        %v468 = vld [vmem:[%s372 + $0x68] sm:$0xf]
        %v469 = vld [vmem:[%s372 + $0x6c] sm:$0xf]
        %v470 = vld [vmem:[%s372 + $0x70] sm:$0xf]
        %v471 = vld [vmem:[%s372 + $0x74] sm:$0xf]
        %v472 = vld [vmem:[%s372 + $0x78] sm:$0xf]
        %v473 = vld [vmem:[%s372 + $0x7c] sm:$0xf]
        %v490 = vunpack.c.l.b16 %v426
        %v491 = vunpack.c.h.b16 %v426
        %v492 = vunpack.c.l.b16 %v427
        %v493 = vunpack.c.h.b16 %v427
        %v494 = vunpack.c.l.b16 %v428
        %v495 = vunpack.c.h.b16 %v428
        %v496 = vunpack.c.l.b16 %v429
        %v497 = vunpack.c.h.b16 %v429
        %v498 = vunpack.c.l.b16 %v430
        %v499 = vunpack.c.h.b16 %v430
        %v500 = vunpack.c.l.b16 %v431
        %v501 = vunpack.c.h.b16 %v431
        %v502 = vunpack.c.l.b16 %v432
        %v503 = vunpack.c.h.b16 %v432
        %v504 = vunpack.c.l.b16 %v433
        %v505 = vunpack.c.h.b16 %v433
        %v506 = vunpack.c.l.b16 %v434
        %v507 = vunpack.c.h.b16 %v434
        %v508 = vunpack.c.l.b16 %v435
        %v509 = vunpack.c.h.b16 %v435
        %v510 = vunpack.c.l.b16 %v436
        %v511 = vunpack.c.h.b16 %v436
        %v512 = vunpack.c.l.b16 %v437
        %v513 = vunpack.c.h.b16 %v437
        %v514 = vunpack.c.l.b16 %v438
        %v515 = vunpack.c.h.b16 %v438
        %v516 = vunpack.c.l.b16 %v439
        %v517 = vunpack.c.h.b16 %v439
        %v518 = vunpack.c.l.b16 %v440
        %v519 = vunpack.c.h.b16 %v440
        %v520 = vunpack.c.l.b16 %v441
        %v521 = vunpack.c.h.b16 %v441
        %v522 = vpack.c.b16 %v492, %v490
        %v523 = vpack.c.b16 %v493, %v491
        %v524 = vpack.c.b16 %v496, %v494
        %v525 = vpack.c.b16 %v497, %v495
        %v526 = vpack.c.b16 %v500, %v498
        %v527 = vpack.c.b16 %v501, %v499
        %v528 = vpack.c.b16 %v504, %v502
        %v529 = vpack.c.b16 %v505, %v503
        %v530 = vpack.c.b16 %v508, %v506
        %v531 = vpack.c.b16 %v509, %v507
        %v532 = vpack.c.b16 %v512, %v510
        %v533 = vpack.c.b16 %v513, %v511
        %v534 = vpack.c.b16 %v516, %v514
        %v535 = vpack.c.b16 %v517, %v515
        %v536 = vpack.c.b16 %v520, %v518
        %v537 = vpack.c.b16 %v521, %v519
        %v586 = vunpack.c.l.b16 %v442
        %v587 = vunpack.c.l.b16 %v443
        %v588 = vunpack.c.l.b16 %v444
        %v589 = vunpack.c.l.b16 %v445
        %v590 = vunpack.c.l.b16 %v446
        %v591 = vunpack.c.l.b16 %v447
        %v592 = vunpack.c.l.b16 %v448
        %v593 = vunpack.c.l.b16 %v449
        %v594 = vunpack.c.l.b16 %v450
        %v595 = vunpack.c.l.b16 %v451
        %v596 = vunpack.c.l.b16 %v452
        %v597 = vunpack.c.l.b16 %v453
        %v598 = vunpack.c.l.b16 %v454
        %v599 = vunpack.c.l.b16 %v455
        %v600 = vunpack.c.l.b16 %v456
        %v601 = vunpack.c.l.b16 %v457
        %v602 = vunpack.c.l.b16 %v458
        %v603 = vunpack.c.l.b16 %v459
        %v604 = vunpack.c.l.b16 %v460
        %v605 = vunpack.c.l.b16 %v461
        %v606 = vunpack.c.l.b16 %v462
        %v607 = vunpack.c.l.b16 %v463
        %v608 = vunpack.c.l.b16 %v464
        %v609 = vunpack.c.l.b16 %v465
        %v610 = vunpack.c.l.b16 %v466
        %v611 = vunpack.c.l.b16 %v467
        %v612 = vunpack.c.l.b16 %v468
        %v613 = vunpack.c.l.b16 %v469
        %v614 = vunpack.c.l.b16 %v470
        %v615 = vunpack.c.l.b16 %v471
        %v616 = vunpack.c.l.b16 %v472
        %v617 = vunpack.c.l.b16 %v473
        %v618 = vpack.c.b16 %v587, %v586
        %v619 = vpack.c.b16 %v589, %v588
        %v620 = vpack.c.b16 %v591, %v590
        %v621 = vpack.c.b16 %v593, %v592
        %v622 = vpack.c.b16 %v595, %v594
        %v623 = vpack.c.b16 %v597, %v596
        %v624 = vpack.c.b16 %v599, %v598
        %v625 = vpack.c.b16 %v601, %v600
        %v626 = vpack.c.b16 %v603, %v602
        %v627 = vpack.c.b16 %v605, %v604
        %v628 = vpack.c.b16 %v607, %v606
        %v629 = vpack.c.b16 %v609, %v608
        %v630 = vpack.c.b16 %v611, %v610
        %v631 = vpack.c.b16 %v613, %v612
        %v632 = vpack.c.b16 %v615, %v614
        %v633 = vpack.c.b16 %v617, %v616
        %650 = vmatprep.subr.bf16.mxu0 0
        %651 = vmatpush1.bf16.msra.mxu0 %v618
        %652 = vmatprep.subr.bf16.mxu0 0
        %653 = vmatpush1.bf16.msra.mxu0 %v619
        %654 = vmatprep.subr.bf16.mxu0 0
        %655 = vmatpush1.bf16.msra.mxu0 %v620
        %656 = vmatprep.subr.bf16.mxu0 0
        %657 = vmatpush1.bf16.msra.mxu0 %v621
        %658 = vmatprep.subr.bf16.mxu0 0
        %659 = vmatpush1.bf16.msra.mxu0 %v622
        %660 = vmatprep.subr.bf16.mxu0 0
        %661 = vmatpush1.bf16.msra.mxu0 %v623
        %662 = vmatprep.subr.bf16.mxu0 0
        %663 = vmatpush1.bf16.msra.mxu0 %v624
        %664 = vmatprep.subr.bf16.mxu0 0
        %665 = vmatpush1.bf16.msra.mxu0 %v625
        %666 = vmatprep.subr.bf16.mxu0 0
        %667 = vmatpush1.bf16.msra.mxu0 %v626
        %668 = vmatprep.subr.bf16.mxu0 0
        %669 = vmatpush1.bf16.msra.mxu0 %v627
        %670 = vmatprep.subr.bf16.mxu0 0
        %671 = vmatpush1.bf16.msra.mxu0 %v628
        %672 = vmatprep.subr.bf16.mxu0 0
        %673 = vmatpush1.bf16.msra.mxu0 %v629
        %674 = vmatprep.subr.bf16.mxu0 0
        %675 = vmatpush1.bf16.msra.mxu0 %v630
        %676 = vmatprep.subr.bf16.mxu0 0
        %677 = vmatpush1.bf16.msra.mxu0 %v631
        %678 = vmatprep.subr.bf16.mxu0 0
        %679 = vmatpush1.bf16.msra.mxu0 %v632
        %680 = vmatprep.subr.bf16.mxu0 0
        %681 = vmatpush1.bf16.msra.mxu0 %v633
        %682 = vmatprep.mubr.bf16.mxu0 %v523
        %683 = vmatmul.mubr.bf16.gmra.mrb[0].mxu0 %v522
        %v684 = vpop.f32.mrb[0].mxu0
        %v685 = vadd.f32 0.0, %v684
        %v686 = vpop.f32.mrb[0].mxu0
        %v687 = vpop.f32.mrb[0].mxu0
        %v688 = vadd.f32 0.0, %v687
        %v689 = vpop.f32.mrb[0].mxu0
        %690 = vmatprep.mubr.bf16.mxu0 %v525
        %691 = vmatmul.mubr.bf16.gmra.mrb[0].mxu0 %v524
        %v692 = vpop.f32.mrb[0].mxu0
        %v693 = vadd.f32 0.0, %v692
        %v694 = vpop.f32.mrb[0].mxu0
        %v695 = vpop.f32.mrb[0].mxu0
        %v696 = vadd.f32 0.0, %v695
        %v697 = vpop.f32.mrb[0].mxu0
        %698 = vmatprep.mubr.bf16.mxu0 %v527
        %699 = vmatmul.mubr.bf16.gmra.mrb[0].mxu0 %v526
        %v700 = vpop.f32.mrb[0].mxu0
        %v701 = vadd.f32 0.0, %v700
        %v702 = vpop.f32.mrb[0].mxu0
        %v703 = vpop.f32.mrb[0].mxu0
        %v704 = vadd.f32 0.0, %v703
        %v705 = vpop.f32.mrb[0].mxu0
        %706 = vmatprep.mubr.bf16.mxu0 %v529
        %707 = vmatmul.mubr.bf16.gmra.mrb[0].mxu0 %v528
        %v708 = vpop.f32.mrb[0].mxu0
        %v709 = vadd.f32 0.0, %v708
        %v710 = vpop.f32.mrb[0].mxu0
        %v711 = vpop.f32.mrb[0].mxu0
        %v712 = vadd.f32 0.0, %v711
        %v713 = vpop.f32.mrb[0].mxu0
        %714 = vmatprep.mubr.bf16.mxu0 %v531
        %715 = vmatmul.mubr.bf16.gmra.mrb[0].mxu0 %v530
        %v716 = vpop.f32.mrb[0].mxu0
        %v717 = vadd.f32 0.0, %v716
        %v718 = vpop.f32.mrb[0].mxu0
        %v719 = vpop.f32.mrb[0].mxu0
        %v720 = vadd.f32 0.0, %v719
        %v721 = vpop.f32.mrb[0].mxu0
        %722 = vmatprep.mubr.bf16.mxu0 %v533
        %723 = vmatmul.mubr.bf16.gmra.mrb[0].mxu0 %v532
        %v724 = vpop.f32.mrb[0].mxu0
        %v725 = vadd.f32 0.0, %v724
        %v726 = vpop.f32.mrb[0].mxu0
        %v727 = vpop.f32.mrb[0].mxu0
        %v728 = vadd.f32 0.0, %v727
        %v729 = vpop.f32.mrb[0].mxu0
        %730 = vmatprep.mubr.bf16.mxu0 %v535
        %731 = vmatmul.mubr.bf16.gmra.mrb[0].mxu0 %v534
        %v732 = vpop.f32.mrb[0].mxu0
        %v733 = vadd.f32 0.0, %v732
        %v734 = vpop.f32.mrb[0].mxu0
        %v735 = vpop.f32.mrb[0].mxu0
        %v736 = vadd.f32 0.0, %v735
        %v737 = vpop.f32.mrb[0].mxu0
        %738 = vmatprep.mubr.bf16.mxu0 %v537
        %739 = vmatmul.mubr.bf16.gmra.mrb[0].mxu0 %v536
        %v740 = vpop.f32.mrb[0].mxu0
        %v741 = vadd.f32 0.0, %v740
        %v742 = vpop.f32.mrb[0].mxu0
        %v743 = vpop.f32.mrb[0].mxu0
        %v744 = vadd.f32 0.0, %v743
        %v745 = vpop.f32.mrb[0].mxu0
        %746 = vdwg.mxu0
        %v747 = vadd.f32 %v410, %v685
        %v748 = vadd.f32 %v411, %v688
        %v749 = vadd.f32 %v412, %v693
        %v750 = vadd.f32 %v413, %v696
        %v751 = vadd.f32 %v414, %v701
        %v752 = vadd.f32 %v415, %v704
        %v753 = vadd.f32 %v416, %v709
        %v754 = vadd.f32 %v417, %v712
        %v755 = vadd.f32 %v418, %v717
        %v756 = vadd.f32 %v419, %v720
        %v757 = vadd.f32 %v420, %v725
        %v758 = vadd.f32 %v421, %v728
        %v759 = vadd.f32 %v422, %v733
        %v760 = vadd.f32 %v423, %v736
        %v761 = vadd.f32 %v424, %v741
        %v762 = vadd.f32 %v425, %v744
        %763 = vst [vmem:[#allocation2] sm:$0xff] %v747
        %764 = vst [vmem:[#allocation2 + $0x8] sm:$0xff] %v748
        %765 = vst [vmem:[#allocation2 + $0x10] sm:$0xff] %v749
        %766 = vst [vmem:[#allocation2 + $0x18] sm:$0xff] %v750
        %767 = vst [vmem:[#allocation2 + $0x20] sm:$0xff] %v751
        %768 = vst [vmem:[#allocation2 + $0x28] sm:$0xff] %v752
        %769 = vst [vmem:[#allocation2 + $0x30] sm:$0xff] %v753
        %770 = vst [vmem:[#allocation2 + $0x38] sm:$0xff] %v754
        %771 = vst [vmem:[#allocation2 + $0x40] sm:$0xff] %v755
        %772 = vst [vmem:[#allocation2 + $0x48] sm:$0xff] %v756
        %773 = vst [vmem:[#allocation2 + $0x50] sm:$0xff] %v757
        %774 = vst [vmem:[#allocation2 + $0x58] sm:$0xff] %v758
        %775 = vst [vmem:[#allocation2 + $0x60] sm:$0xff] %v759
        %776 = vst [vmem:[#allocation2 + $0x68] sm:$0xff] %v760
        %777 = vst [vmem:[#allocation2 + $0x70] sm:$0xff] %v761
        %778 = vst [vmem:[#allocation2 + $0x78] sm:$0xff] %v762
        %p779 = scmp.eq.s32.totalorder %s22, 2
        // Predicated region
        $region79: #{resnet_forward.13} parent=69 // pred_check
          %p780 = pneg %p779
        $region80: #{resnet_forward.13} parent=69 // pred_check_branch
          %782 = sbr.rel (%p780) target = $region82
        $region81: #{resnet_forward.13} parent=69 // pred_region
          %v783 = vld [vmem:[#allocation2] sm:$0xff]
          %v784 = vld [vmem:[#allocation2 + $0x8] sm:$0xff]
          %v785 = vld [vmem:[#allocation2 + $0x10] sm:$0xff]
          %v786 = vld [vmem:[#allocation2 + $0x18] sm:$0xff]
          %v787 = vld [vmem:[#allocation2 + $0x20] sm:$0xff]
          %v788 = vld [vmem:[#allocation2 + $0x28] sm:$0xff]
          %v789 = vld [vmem:[#allocation2 + $0x30] sm:$0xff]
          %v790 = vld [vmem:[#allocation2 + $0x38] sm:$0xff]
          %v791 = vld [vmem:[#allocation2 + $0x40] sm:$0xff]
          %v792 = vld [vmem:[#allocation2 + $0x48] sm:$0xff]
          %v793 = vld [vmem:[#allocation2 + $0x50] sm:$0xff]
          %v794 = vld [vmem:[#allocation2 + $0x58] sm:$0xff]
          %v795 = vld [vmem:[#allocation2 + $0x60] sm:$0xff]
          %v796 = vld [vmem:[#allocation2 + $0x68] sm:$0xff]
          %v797 = vld [vmem:[#allocation2 + $0x70] sm:$0xff]
          %v798 = vld [vmem:[#allocation2 + $0x78] sm:$0xff]
          %v799 = vld [vmem:[%s376] sm:$0x1]
          %v801 = vlaneseq
          %v802 = vshrl.u32 %v801, 7
          %v803 = vsub.s32 0, %v802
          %v804 = vrot.slane %v799, %v803
          %v806 = vmul.f32 %v783, %v804
          %v807 = vmul.f32 %v784, %v804
          %v808 = vmul.f32 %v785, %v804
          %v809 = vmul.f32 %v786, %v804
          %v810 = vmul.f32 %v787, %v804
          %v811 = vmul.f32 %v788, %v804
          %v812 = vmul.f32 %v789, %v804
          %v813 = vmul.f32 %v790, %v804
          %v814 = vmul.f32 %v791, %v804
          %v815 = vmul.f32 %v792, %v804
          %v816 = vmul.f32 %v793, %v804
          %v817 = vmul.f32 %v794, %v804
          %v818 = vmul.f32 %v795, %v804
          %v819 = vmul.f32 %v796, %v804
          %v820 = vmul.f32 %v797, %v804
          %v821 = vmul.f32 %v798, %v804
          %v822 = vld [vmem:[%s379] sm:$0x1]
          %v824 = vlaneseq
          %v825 = vshrl.u32 %v824, 7
          %v826 = vsub.s32 0, %v825
          %v827 = vrot.slane %v822, %v826
          %v829 = vadd.f32 %v806, %v827
          %v830 = vadd.f32 %v807, %v827
          %v831 = vadd.f32 %v808, %v827
          %v832 = vadd.f32 %v809, %v827
          %v833 = vadd.f32 %v810, %v827
          %v834 = vadd.f32 %v811, %v827
          %v835 = vadd.f32 %v812, %v827
          %v836 = vadd.f32 %v813, %v827
          %v837 = vadd.f32 %v814, %v827
          %v838 = vadd.f32 %v815, %v827
          %v839 = vadd.f32 %v816, %v827
          %v840 = vadd.f32 %v817, %v827
          %v841 = vadd.f32 %v818, %v827
          %v842 = vadd.f32 %v819, %v827
          %v843 = vadd.f32 %v820, %v827
          %v844 = vadd.f32 %v821, %v827
          %v845 = vmax.f32 %v829, 0.0
          %v846 = vmax.f32 %v830, 0.0
          %v847 = vmax.f32 %v831, 0.0
          %v848 = vmax.f32 %v832, 0.0
          %v849 = vmax.f32 %v833, 0.0
          %v850 = vmax.f32 %v834, 0.0
          %v851 = vmax.f32 %v835, 0.0
          %v852 = vmax.f32 %v836, 0.0
          %v853 = vmax.f32 %v837, 0.0
          %v854 = vmax.f32 %v838, 0.0
          %v855 = vmax.f32 %v839, 0.0
          %v856 = vmax.f32 %v840, 0.0
          %v857 = vmax.f32 %v841, 0.0
          %v858 = vmax.f32 %v842, 0.0
          %v859 = vmax.f32 %v843, 0.0
          %v860 = vmax.f32 %v844, 0.0
          %v861 = vpack.c.bf16 %v846, %v845
          %v862 = vpack.c.bf16 %v848, %v847
          %v863 = vpack.c.bf16 %v850, %v849
          %v864 = vpack.c.bf16 %v852, %v851
          %v865 = vpack.c.bf16 %v854, %v853
          %v866 = vpack.c.bf16 %v856, %v855
          %v867 = vpack.c.bf16 %v858, %v857
          %v868 = vpack.c.bf16 %v860, %v859
          %v877 = vunpack.c.l.b16 %v861
          %v878 = vunpack.c.h.b16 %v861
          %v879 = vunpack.c.l.b16 %v862
          %v880 = vunpack.c.h.b16 %v862
          %v881 = vunpack.c.l.b16 %v863
          %v882 = vunpack.c.h.b16 %v863
          %v883 = vunpack.c.l.b16 %v864
          %v884 = vunpack.c.h.b16 %v864
          %v885 = vunpack.c.l.b16 %v865
          %v886 = vunpack.c.h.b16 %v865
          %v887 = vunpack.c.l.b16 %v866
          %v888 = vunpack.c.h.b16 %v866
          %v889 = vunpack.c.l.b16 %v867
          %v890 = vunpack.c.h.b16 %v867
          %v891 = vunpack.c.l.b16 %v868
          %v892 = vunpack.c.h.b16 %v868
          %v893 = vpack.c.b16 %v877, %v877
          %v894 = vpack.c.b16 %v878, %v878
          %v895 = vpack.c.b16 %v879, %v879
          %v896 = vpack.c.b16 %v880, %v880
          %v897 = vpack.c.b16 %v881, %v881
          %v898 = vpack.c.b16 %v882, %v882
          %v899 = vpack.c.b16 %v883, %v883
          %v900 = vpack.c.b16 %v884, %v884
          %v901 = vpack.c.b16 %v885, %v885
          %v902 = vpack.c.b16 %v886, %v886
          %v903 = vpack.c.b16 %v887, %v887
          %v904 = vpack.c.b16 %v888, %v888
          %v905 = vpack.c.b16 %v889, %v889
          %v906 = vpack.c.b16 %v890, %v890
          %v907 = vpack.c.b16 %v891, %v891
          %v908 = vpack.c.b16 %v892, %v892
          %925 = vst [vmem:[%s387] sm:$0xf] %v893
          %926 = vst [vmem:[%s387 + $0x4] sm:$0xf] %v894
          %927 = vst [vmem:[%s387 + $0x8] sm:$0xf] %v895
          %928 = vst [vmem:[%s387 + $0xc] sm:$0xf] %v896
          %929 = vst [vmem:[%s387 + $0x10] sm:$0xf] %v897
          %930 = vst [vmem:[%s387 + $0x14] sm:$0xf] %v898
          %931 = vst [vmem:[%s387 + $0x18] sm:$0xf] %v899
          %932 = vst [vmem:[%s387 + $0x1c] sm:$0xf] %v900
          %933 = vst [vmem:[%s387 + $0x20] sm:$0xf] %v901
          %934 = vst [vmem:[%s387 + $0x24] sm:$0xf] %v902
          %935 = vst [vmem:[%s387 + $0x28] sm:$0xf] %v903
          %936 = vst [vmem:[%s387 + $0x2c] sm:$0xf] %v904
          %937 = vst [vmem:[%s387 + $0x30] sm:$0xf] %v905
          %938 = vst [vmem:[%s387 + $0x34] sm:$0xf] %v906
          %939 = vst [vmem:[%s387 + $0x38] sm:$0xf] %v907
          %940 = vst [vmem:[%s387 + $0x3c] sm:$0xf] %v908
        $region82: #{resnet_forward.13} parent=69 // pred_fallthru
          _
        %s941 = smul.u32 16, %s20
        %p942 = scmp.lt.s32.totalorder %s941, 15
        %s943 = scalar_select %p942, %s941, 15
        %p944 = scmp.lt.s32.totalorder %s21, 0
        %s945 = scalar_select %p944, %s21, 0
        %s946 = sadd.s32 %s945, %s943
        %s947 = smul.addr %s946, 4
        %s948 = scalar_lea.vmem %s4, %s947
        // Predicated region
        $region83: #{resnet_forward.13} parent=69 // pred_check
          %p949 = pneg %p162
        $region84: #{resnet_forward.13} parent=69 // pred_check_branch
          %951 = sbr.rel (%p949) target = $region86
        $region85: #{resnet_forward.13} parent=69 // pred_region
          %s952 = smul.u32 16, %s20
        $region86: #{resnet_forward.13} parent=69 // pred_fallthru
          _
        // Predicated region
        $region87: #{resnet_forward.13} parent=69 // pred_check
          %p953 = pneg %p162
        $region88: #{resnet_forward.13} parent=69 // pred_check_branch
          %955 = sbr.rel (%p953) target = $region90
        $region89: #{resnet_forward.13} parent=69 // pred_region
          %s956 = smul.u32 16, %s20
          %p957 = scmp.lt.s32.totalorder %s956, 15
          %s958 = scalar_select %p957, %s956, 15
          %p959 = scmp.lt.s32.totalorder %s21, 0
          %s960 = scalar_select %p959, %s21, 0
          %s961 = sadd.s32 %s960, %s958
          %s962 = smul.addr %s961, 4
          %s963 = scalar_lea.vmem %s4, %s962
        $region90: #{resnet_forward.13} parent=69 // pred_fallthru
          _
      $region70: #{resnet_forward.13} parent=5 // pred_fallthru
        _
      %p964 = scmp.le.s32.totalorder 2, %s10
      // Predicated region
      $region91: #{resnet_forward.13} parent=5 // pred_check
        %p965 = pneg %p964
      $region92: #{resnet_forward.13} parent=5 // pred_check_branch
        %967 = sbr.rel (%p965) target = $region94
      $region93: #{resnet_forward.13} parent=5 // pred_region
        %s968 = ssub.s32 %s10, 2
      $region94: #{resnet_forward.13} parent=5 // pred_fallthru
        _
    $region6: #{resnet_forward.13} parent=1 // loop_footer
      %s14 = sadd.s32 1, %s10
    $region7: #{resnet_forward.13} parent=1 // loop_footer_branch
      %9 = sbr.rel target = $region3
    $region8: #{resnet_forward.13} parent=1 // loop_exit
      _

// kernel: resnet_forward.14
$region0: #{resnet_forward.14}
  #allocation0 [shape = 'u32[]', space=smem, size = 0x4, offset = 0x4, fixed_abs, tag = 'smem constant byte address 0x4 - core index']
  #allocation1 [shape = 'u32[144,128]{1,0:T(1,128)}', space=vmem, size = 0x12000, scoped, tag = 'internal scratch']
  #allocation2 [shape = 'f32[128,128]{1,0:T(8,128)}', space=vmem, size = 0x10000, scoped, tag = 'scratch operand']
  %s0 = inlined_call_operand.vmem [shape: bf16[128,768], index: 0, kind: input, shape index: {}]
  %s1 = inlined_call_operand.vmem [shape: bf16[768,128], index: 1, kind: input, shape index: {}]
  %s2 = inlined_call_operand.vmem [shape: f32[1,128], index: 2, kind: input, shape index: {}]
  %s3 = inlined_call_operand.vmem [shape: f32[1,128], index: 3, kind: input, shape index: {}]
  %s4 = inlined_call_operand.vmem [shape: bf16[128,128], index: 4, kind: input, shape index: {}]
  %s5 = inlined_call_operand.vmem [shape: bf16[128,128], index: 5, kind: output, shape index: {}]
  %s6 = sld [smem:[#allocation0]]
  $region99: #{resnet_forward.14} parent=0
    _
  %s8 = ssub.s32 1, %s6
  %s9 = scalar_select 0, %s8, %s6
  $region1: #{resnet_forward.14} parent=0
    #allocation3 [shape = 'u8[131072]{0}', space=vmem, size = 0x20000, scoped, tag = 'input window, operand 0']
    loop: start=0, step=1, limit=5
    $region2: #{resnet_forward.14} parent=1 // loop_pre_header
      _
    $region3: #{resnet_forward.14} parent=1 // loop_header
      %s11 = sphi 0, %s15
      %p12 = scmp.ge.s32.totalorder %s11, 5
      %s18 = sphi 0, %s37
      %s19 = sphi 0, %s33
      %s20 = sphi 0, %s29
      %s21 = sphi 0, %s18
      %s22 = sphi 0, %s19
      %s23 = sphi 0, %s20
      %s24 = sphi 0, %s21
      %s25 = sphi 0, %s22
      %s26 = sphi 0, %s23
      %s42 = sphi 0, %s44
      %s45 = sphi 0, %s42
      %s46 = sphi 0, %s45
      %s62 = sphi 0, %s46
      %s70 = sphi 0, %s72
      %s73 = sphi 0, %s70
      %s74 = sphi 0, %s73
      %s90 = sphi 0, %s74
      %s96 = sphi 0, %s98
      %s99 = sphi 0, %s96
      %s100 = sphi 0, %s99
      %s116 = sphi 0, %s100
      %s122 = sphi 0, %s124
      %s125 = sphi 0, %s122
      %s126 = sphi 0, %s125
      %s142 = sphi 0, %s126
      %s150 = sphi 0, %s152
      %s153 = sphi 0, %s150
      %s154 = sphi 0, %s153
      %s170 = sphi 0, %s154
      %s178 = sphi 0, %s180
      %s181 = sphi 0, %s178
      %s182 = sphi 0, %s181
      %s198 = sphi 0, %s182
    $region4: #{resnet_forward.14} parent=1 // loop_header_branch
      %14 = sbr.rel (%p12) target = $region8
    $region5: #{resnet_forward.14} parent=1 // loop_body
      %s16 = ssub.s32 %s11, 1
      %s17 = ssub.s32 %s11, 2
      %s27 = sadd.s32 1, %s20
      %p28 = scmp.ge.s32.totalorder %s27, 3
      %s29 = scalar_select %p28, 0, %s27
      %s30 = sadd.s32 1, %s19
      %s31 = scalar_select %p28, %s30, %s19
      %p32 = scmp.ge.s32.totalorder %s31, 1
      %s33 = scalar_select %p32, 0, %s31
      %s34 = sadd.s32 1, %s18
      %s35 = scalar_select %p32, %s34, %s18
      %p36 = scmp.ge.s32.totalorder %s35, 1
      %s37 = scalar_select %p36, 0, %s35
      %s38 = ssub.s32 %s18, %s37
      %s39 = ssub.s32 %s20, %s29
      %s40 = sor.u32 %s38, %s39
      %p41 = scmp.eq.s32.totalorder %s40, 0
      %s43 = sadd.s32 %s42, 1
      %s44 = scalar_select %p41, %s42, %s43
      %p47 = pneg %p41
      %p48 = scmp.eq.s32.totalorder %s11, 2
      %p49 = por %p47, %p48
      %p50 = scmp.ne.s32.totalorder %s42, %s45
      %p51 = scmp.eq.s32.totalorder %s11, 0
      %p52 = por %p50, %p51
      %p53 = scmp.ne.s32.totalorder %s42, %s45
      %p54 = scmp.eq.s32.totalorder %s16, 2
      %p55 = por %p53, %p54
      %p56 = scmp.ne.s32.totalorder %s45, %s46
      %p57 = scmp.eq.s32.totalorder %s16, 0
      %p58 = por %p56, %p57
      %p59 = scmp.ne.s32.totalorder %s45, %s46
      %p60 = scmp.eq.s32.totalorder %s17, 2
      %p61 = por %p59, %p60
      %p63 = scmp.ne.s32.totalorder %s46, %s62
      %p64 = scmp.eq.s32.totalorder %s17, 0
      %p65 = por %p63, %p64
      %s66 = ssub.s32 %s20, %s29
      %s67 = ssub.s32 %s19, %s33
      %s68 = sor.u32 %s66, %s67
      %p69 = scmp.eq.s32.totalorder %s68, 0
      %s71 = sadd.s32 %s70, 1
      %s72 = scalar_select %p69, %s70, %s71
      %p75 = pneg %p69
      %p76 = scmp.eq.s32.totalorder %s11, 2
      %p77 = por %p75, %p76
      %p78 = scmp.ne.s32.totalorder %s70, %s73
      %p79 = scmp.eq.s32.totalorder %s11, 0
      %p80 = por %p78, %p79
      %p81 = scmp.ne.s32.totalorder %s70, %s73
      %p82 = scmp.eq.s32.totalorder %s16, 2
      %p83 = por %p81, %p82
      %p84 = scmp.ne.s32.totalorder %s73, %s74
      %p85 = scmp.eq.s32.totalorder %s16, 0
      %p86 = por %p84, %p85
      %p87 = scmp.ne.s32.totalorder %s73, %s74
      %p88 = scmp.eq.s32.totalorder %s17, 2
      %p89 = por %p87, %p88
      %p91 = scmp.ne.s32.totalorder %s74, %s90
      %p92 = scmp.eq.s32.totalorder %s17, 0
      %p93 = por %p91, %p92
      %s94 = ssub.s32 %s19, %s33
      %p95 = scmp.eq.s32.totalorder %s94, 0
      %s97 = sadd.s32 %s96, 1
      %s98 = scalar_select %p95, %s96, %s97
      %p101 = pneg %p95
      %p102 = scmp.eq.s32.totalorder %s11, 2
      %p103 = por %p101, %p102
      %p104 = scmp.ne.s32.totalorder %s96, %s99
      %p105 = scmp.eq.s32.totalorder %s11, 0
      %p106 = por %p104, %p105
      %p107 = scmp.ne.s32.totalorder %s96, %s99
      %p108 = scmp.eq.s32.totalorder %s16, 2
      %p109 = por %p107, %p108
      %p110 = scmp.ne.s32.totalorder %s99, %s100
      %p111 = scmp.eq.s32.totalorder %s16, 0
      %p112 = por %p110, %p111
      %p113 = scmp.ne.s32.totalorder %s99, %s100
      %p114 = scmp.eq.s32.totalorder %s17, 2
      %p115 = por %p113, %p114
      %p117 = scmp.ne.s32.totalorder %s100, %s116
      %p118 = scmp.eq.s32.totalorder %s17, 0
      %p119 = por %p117, %p118
      %s120 = ssub.s32 %s19, %s33
      %p121 = scmp.eq.s32.totalorder %s120, 0
      %s123 = sadd.s32 %s122, 1
      %s124 = scalar_select %p121, %s122, %s123
      %p127 = pneg %p121
      %p128 = scmp.eq.s32.totalorder %s11, 2
      %p129 = por %p127, %p128
      %p130 = scmp.ne.s32.totalorder %s122, %s125
      %p131 = scmp.eq.s32.totalorder %s11, 0
      %p132 = por %p130, %p131
      %p133 = scmp.ne.s32.totalorder %s122, %s125
      %p134 = scmp.eq.s32.totalorder %s16, 2
      %p135 = por %p133, %p134
      %p136 = scmp.ne.s32.totalorder %s125, %s126
      %p137 = scmp.eq.s32.totalorder %s16, 0
      %p138 = por %p136, %p137
      %p139 = scmp.ne.s32.totalorder %s125, %s126
      %p140 = scmp.eq.s32.totalorder %s17, 2
      %p141 = por %p139, %p140
      %p143 = scmp.ne.s32.totalorder %s126, %s142
      %p144 = scmp.eq.s32.totalorder %s17, 0
      %p145 = por %p143, %p144
      %s146 = ssub.s32 %s18, %s37
      %s147 = ssub.s32 %s19, %s33
      %s148 = sor.u32 %s146, %s147
      %p149 = scmp.eq.s32.totalorder %s148, 0
      %s151 = sadd.s32 %s150, 1
      %s152 = scalar_select %p149, %s150, %s151
      %p155 = pneg %p149
      %p156 = scmp.eq.s32.totalorder %s11, 2
      %p157 = por %p155, %p156
      %p158 = scmp.ne.s32.totalorder %s150, %s153
      %p159 = scmp.eq.s32.totalorder %s11, 0
      %p160 = por %p158, %p159
      %p161 = scmp.ne.s32.totalorder %s150, %s153
      %p162 = scmp.eq.s32.totalorder %s16, 2
      %p163 = por %p161, %p162
      %p164 = scmp.ne.s32.totalorder %s153, %s154
      %p165 = scmp.eq.s32.totalorder %s16, 0
      %p166 = por %p164, %p165
      %p167 = scmp.ne.s32.totalorder %s153, %s154
      %p168 = scmp.eq.s32.totalorder %s17, 2
      %p169 = por %p167, %p168
      %p171 = scmp.ne.s32.totalorder %s154, %s170
      %p172 = scmp.eq.s32.totalorder %s17, 0
      %p173 = por %p171, %p172
      %s174 = ssub.s32 %s18, %s37
      %s175 = ssub.s32 %s19, %s33
      %s176 = sor.u32 %s174, %s175
      %p177 = scmp.eq.s32.totalorder %s176, 0
      %s179 = sadd.s32 %s178, 1
      %s180 = scalar_select %p177, %s178, %s179
      %p183 = pneg %p177
      %p184 = scmp.eq.s32.totalorder %s11, 2
      %p185 = por %p183, %p184
      %p186 = scmp.ne.s32.totalorder %s178, %s181
      %p187 = scmp.eq.s32.totalorder %s11, 0
      %p188 = por %p186, %p187
      %p189 = scmp.ne.s32.totalorder %s178, %s181
      %p190 = scmp.eq.s32.totalorder %s16, 2
      %p191 = por %p189, %p190
      %p192 = scmp.ne.s32.totalorder %s181, %s182
      %p193 = scmp.eq.s32.totalorder %s16, 0
      %p194 = por %p192, %p193
      %p195 = scmp.ne.s32.totalorder %s181, %s182
      %p196 = scmp.eq.s32.totalorder %s17, 2
      %p197 = por %p195, %p196
      %p199 = scmp.ne.s32.totalorder %s182, %s198
      %p200 = scmp.eq.s32.totalorder %s17, 0
      %p201 = por %p199, %p200
      %p202 = scmp.le.s32.totalorder 1, %s11
      %p203 = scmp.lt.s32.totalorder %s11, 4
      %p204 = pnand %p202, %p203
      %p205 = pneg %p204
      // Predicated region
      $region9: #{resnet_forward.14} parent=5 // pred_check
        _
      $region10: #{resnet_forward.14} parent=5 // pred_check_branch
        %207 = sbr.rel (%p204) target = $region12
      $region11: #{resnet_forward.14} parent=5 // pred_region
        %s208 = ssub.s32 %s11, 1
        // Predicated region
        $region13: #{resnet_forward.14} parent=11 // pred_check
          %p209 = pneg %p112
        $region14: #{resnet_forward.14} parent=11 // pred_check_branch
          %211 = sbr.rel (%p209) target = $region16
        $region15: #{resnet_forward.14} parent=11 // pred_region
          %p212 = scmp.lt.s32.totalorder %s22, 0
          %s213 = scalar_select %p212, %s22, 0
          %s214 = scalar_lea.vmem %s2, %s213
        $region16: #{resnet_forward.14} parent=11 // pred_fallthru
          _
        // Predicated region
        $region17: #{resnet_forward.14} parent=11 // pred_check
          %p215 = pneg %p138
        $region18: #{resnet_forward.14} parent=11 // pred_check_branch
          %217 = sbr.rel (%p215) target = $region20
        $region19: #{resnet_forward.14} parent=11 // pred_region
          %p218 = scmp.lt.s32.totalorder %s22, 0
          %s219 = scalar_select %p218, %s22, 0
          %s220 = scalar_lea.vmem %s3, %s219
        $region20: #{resnet_forward.14} parent=11 // pred_fallthru
          _
        // Predicated region
        $region21: #{resnet_forward.14} parent=11 // pred_check
          %p221 = pneg %p166
        $region22: #{resnet_forward.14} parent=11 // pred_check_branch
          %223 = sbr.rel (%p221) target = $region24
        $region23: #{resnet_forward.14} parent=11 // pred_region
          %s224 = smul.u32 16, %s21
          %p225 = scmp.lt.s32.totalorder %s224, 15
          %s226 = scalar_select %p225, %s224, 15
          %p227 = scmp.lt.s32.totalorder %s22, 0
          %s228 = scalar_select %p227, %s22, 0
          %s229 = sadd.s32 %s228, %s226
          %s230 = smul.addr %s229, 4
          %s231 = scalar_lea.vmem %s4, %s230
          %s232 = smul.u32 16, %s21
        $region24: #{resnet_forward.14} parent=11 // pred_fallthru
          _
      $region12: #{resnet_forward.14} parent=5 // pred_fallthru
        _
      %p233 = scmp.lt.s32.totalorder %s11, 3
      // Predicated region
      $region25: #{resnet_forward.14} parent=5 // pred_check
        %p234 = pneg %p233
      $region26: #{resnet_forward.14} parent=5 // pred_check_branch
        %236 = sbr.rel (%p234) target = $region28
      $region27: #{resnet_forward.14} parent=5 // pred_region
        // Predicated region
        $region29: #{resnet_forward.14} parent=27 // pred_check
          %p237 = pneg %p52
        $region30: #{resnet_forward.14} parent=27 // pred_check_branch
          %239 = sbr.rel (%p237) target = $region32
        $region31: #{resnet_forward.14} parent=27 // pred_region
          %s240 = sand.u32 %s42, 1
          %s241 = sand.u32 %s42, 1
          %s242 = smul.addr %s241, 128
          %s243 = scalar_lea.vmem [#allocation3], %s242
          %s244 = smul.u32 16, %s18
          %s245 = smul.u32 2, %s20
          %s246 = smul.addr %s244, 6
          %s247 = sadd.s32 %s245, %s246
          %s248 = smul.addr %s247, 4
          %s249 = scalar_lea.vmem %s0, %s248
          // Predicated region
          $region33: #{resnet_forward.14} parent=31 // pred_check
            _
          $region34: #{resnet_forward.14} parent=31 // pred_check_branch
            %251 = sbr.rel (0) target = $region36
          $region35: #{resnet_forward.14} parent=31 // pred_region
            // Predicated region
            $region37: #{resnet_forward.14} parent=35 // pred_check
              _
            $region38: #{resnet_forward.14} parent=35 // pred_check_branch
              %253 = sbr.rel (0) target = $region40
            $region39: #{resnet_forward.14} parent=35 // pred_region
              // Predicated region
              $region52: #{resnet_forward.14} parent=39 // pred_check
                _
              $region53: #{resnet_forward.14} parent=39 // pred_check_branch
                %298 = sbr.rel (0) target = $region55
              $region54: #{resnet_forward.14} parent=39 // pred_region
                loop: start=0, step=1, limit=1
                $region56: #{resnet_forward.14} parent=54 // loop_pre_header
                  _
                $region57: #{resnet_forward.14} parent=54 // loop_header
                  %s300 = sphi 0, %s304
                  %p301 = scmp.ge.s32.totalorder %s300, 1
                  %s305 = sphi %s249, %s249
                  %s306 = sphi %s243, %s243
                $region58: #{resnet_forward.14} parent=54 // loop_header_branch
                  %303 = sbr.rel (%p301) target = $region62
                $region59: #{resnet_forward.14} parent=54 // loop_body
                  %v307 = vld [vmem:[%s305] sm:$0xff]
                  %308 = vst [vmem:[%s306] sm:$0xff] %v307
                  %v309 = vld [vmem:[%s305 + $0x18] sm:$0xff]
                  %310 = vst [vmem:[%s306 + $0x8] sm:$0xff] %v309
                  %v311 = vld [vmem:[%s305 + $0x30] sm:$0xff]
                  %312 = vst [vmem:[%s306 + $0x10] sm:$0xff] %v311
                  %v313 = vld [vmem:[%s305 + $0x48] sm:$0xff]
                  %314 = vst [vmem:[%s306 + $0x18] sm:$0xff] %v313
                  %v315 = vld [vmem:[%s305 + $0x60] sm:$0xff]
                  %316 = vst [vmem:[%s306 + $0x20] sm:$0xff] %v315
                  %v317 = vld [vmem:[%s305 + $0x78] sm:$0xff]
                  %318 = vst [vmem:[%s306 + $0x28] sm:$0xff] %v317
                  %v319 = vld [vmem:[%s305 + $0x90] sm:$0xff]
                  %320 = vst [vmem:[%s306 + $0x30] sm:$0xff] %v319
                  %v321 = vld [vmem:[%s305 + $0xa8] sm:$0xff]
                  %322 = vst [vmem:[%s306 + $0x38] sm:$0xff] %v321
                  %v323 = vld [vmem:[%s305 + $0xc0] sm:$0xff]
                  %324 = vst [vmem:[%s306 + $0x40] sm:$0xff] %v323
                  %v325 = vld [vmem:[%s305 + $0xd8] sm:$0xff]
                  %326 = vst [vmem:[%s306 + $0x48] sm:$0xff] %v325
                  %v327 = vld [vmem:[%s305 + $0xf0] sm:$0xff]
                  %328 = vst [vmem:[%s306 + $0x50] sm:$0xff] %v327
                  %v329 = vld [vmem:[%s305 + $0x108] sm:$0xff]
                  %330 = vst [vmem:[%s306 + $0x58] sm:$0xff] %v329
                  %v331 = vld [vmem:[%s305 + $0x120] sm:$0xff]
                  %332 = vst [vmem:[%s306 + $0x60] sm:$0xff] %v331
                  %v333 = vld [vmem:[%s305 + $0x138] sm:$0xff]
                  %334 = vst [vmem:[%s306 + $0x68] sm:$0xff] %v333
                  %v335 = vld [vmem:[%s305 + $0x150] sm:$0xff]
                  %336 = vst [vmem:[%s306 + $0x70] sm:$0xff] %v335
                  %v337 = vld [vmem:[%s305 + $0x168] sm:$0xff]
                  %338 = vst [vmem:[%s306 + $0x78] sm:$0xff] %v337
                $region60: #{resnet_forward.14} parent=54 // loop_footer
                  %s304 = sadd.s32 1, %s300
                $region61: #{resnet_forward.14} parent=54 // loop_footer_branch
                  %299 = sbr.rel target = $region57
                $region62: #{resnet_forward.14} parent=54 // loop_exit
                  _
              $region55: #{resnet_forward.14} parent=39 // pred_fallthru
                _
              // Predicated region
              $region63: #{resnet_forward.14} parent=39 // pred_check
                _
              $region64: #{resnet_forward.14} parent=39 // pred_check_branch
                %340 = sbr.rel target = $region66
              $region65: #{resnet_forward.14} parent=39 // pred_region
                _
              $region66: #{resnet_forward.14} parent=39 // pred_fallthru
                _
            $region40: #{resnet_forward.14} parent=35 // pred_fallthru
              _
            // Predicated region
            $region41: #{resnet_forward.14} parent=35 // pred_check
              _
            $region42: #{resnet_forward.14} parent=35 // pred_check_branch
              %255 = sbr.rel target = $region44
            $region43: #{resnet_forward.14} parent=35 // pred_region
              loop: start=0, step=1, limit=1
              $region45: #{resnet_forward.14} parent=43 // loop_pre_header
                _
              $region46: #{resnet_forward.14} parent=43 // loop_header
                %s258 = sphi 0, %s262
                %p259 = scmp.ge.s32.totalorder %s258, 1
                %s263 = sphi %s249, %s249
                %s264 = sphi %s243, %s243
              $region47: #{resnet_forward.14} parent=43 // loop_header_branch
                %261 = sbr.rel (%p259) target = $region51
              $region48: #{resnet_forward.14} parent=43 // loop_body
                %v265 = vld [vmem:[%s263] sm:$0xff]
                %266 = vst [vmem:[%s264] sm:$0xff] %v265
                %v267 = vld [vmem:[%s263 + $0x18] sm:$0xff]
                %268 = vst [vmem:[%s264 + $0x8] sm:$0xff] %v267
                %v269 = vld [vmem:[%s263 + $0x30] sm:$0xff]
                %270 = vst [vmem:[%s264 + $0x10] sm:$0xff] %v269
                %v271 = vld [vmem:[%s263 + $0x48] sm:$0xff]
                %272 = vst [vmem:[%s264 + $0x18] sm:$0xff] %v271
                %v273 = vld [vmem:[%s263 + $0x60] sm:$0xff]
                %274 = vst [vmem:[%s264 + $0x20] sm:$0xff] %v273
                %v275 = vld [vmem:[%s263 + $0x78] sm:$0xff]
                %276 = vst [vmem:[%s264 + $0x28] sm:$0xff] %v275
                %v277 = vld [vmem:[%s263 + $0x90] sm:$0xff]
                %278 = vst [vmem:[%s264 + $0x30] sm:$0xff] %v277
                %v279 = vld [vmem:[%s263 + $0xa8] sm:$0xff]
                %280 = vst [vmem:[%s264 + $0x38] sm:$0xff] %v279
                %v281 = vld [vmem:[%s263 + $0xc0] sm:$0xff]
                %282 = vst [vmem:[%s264 + $0x40] sm:$0xff] %v281
                %v283 = vld [vmem:[%s263 + $0xd8] sm:$0xff]
                %284 = vst [vmem:[%s264 + $0x48] sm:$0xff] %v283
                %v285 = vld [vmem:[%s263 + $0xf0] sm:$0xff]
                %286 = vst [vmem:[%s264 + $0x50] sm:$0xff] %v285
                %v287 = vld [vmem:[%s263 + $0x108] sm:$0xff]
                %288 = vst [vmem:[%s264 + $0x58] sm:$0xff] %v287
                %v289 = vld [vmem:[%s263 + $0x120] sm:$0xff]
                %290 = vst [vmem:[%s264 + $0x60] sm:$0xff] %v289
                %v291 = vld [vmem:[%s263 + $0x138] sm:$0xff]
                %292 = vst [vmem:[%s264 + $0x68] sm:$0xff] %v291
                %v293 = vld [vmem:[%s263 + $0x150] sm:$0xff]
                %294 = vst [vmem:[%s264 + $0x70] sm:$0xff] %v293
                %v295 = vld [vmem:[%s263 + $0x168] sm:$0xff]
                %296 = vst [vmem:[%s264 + $0x78] sm:$0xff] %v295
              $region49: #{resnet_forward.14} parent=43 // loop_footer
                %s262 = sadd.s32 1, %s258
              $region50: #{resnet_forward.14} parent=43 // loop_footer_branch
                %257 = sbr.rel target = $region46
              $region51: #{resnet_forward.14} parent=43 // loop_exit
                _
            $region44: #{resnet_forward.14} parent=35 // pred_fallthru
              _
          $region36: #{resnet_forward.14} parent=31 // pred_fallthru
            _
          %341 = vnop
        $region32: #{resnet_forward.14} parent=27 // pred_fallthru
          _
        // Predicated region
        $region67: #{resnet_forward.14} parent=27 // pred_check
          %p342 = pneg %p80
        $region68: #{resnet_forward.14} parent=27 // pred_check_branch
          %344 = sbr.rel (%p342) target = $region70
        $region69: #{resnet_forward.14} parent=27 // pred_region
          %s345 = smul.u32 32, %s20
          %p346 = scmp.lt.s32.totalorder %s345, 95
          %s347 = scalar_select %p346, %s345, 95
          %p348 = scmp.lt.s32.totalorder %s19, 0
          %s349 = scalar_select %p348, %s19, 0
          %s350 = sadd.s32 %s349, %s347
          %s351 = smul.addr %s350, 4
          %s352 = scalar_lea.vmem %s1, %s351
          %s353 = smul.u32 32, %s20
        $region70: #{resnet_forward.14} parent=27 // pred_fallthru
          _
      $region28: #{resnet_forward.14} parent=5 // pred_fallthru
        _
      %p354 = scmp.le.s32.totalorder 1, %s11
      %p355 = scmp.lt.s32.totalorder %s11, 4
      %p356 = pnand %p354, %p355
      %p357 = pneg %p356
      // Predicated region
      $region71: #{resnet_forward.14} parent=5 // pred_check
        _
      $region72: #{resnet_forward.14} parent=5 // pred_check_branch
        %359 = sbr.rel (%p356) target = $region74
      $region73: #{resnet_forward.14} parent=5 // pred_region
        %s360 = ssub.s32 %s11, 1
        %s361 = sand.u32 %s45, 1
        %s362 = sand.u32 %s45, 1
        %s363 = smul.addr %s362, 128
        %s364 = scalar_lea.vmem [#allocation3], %s363
        // Predicated region
        $region75: #{resnet_forward.14} parent=73 // pred_check
          %p365 = pneg %p58
        $region76: #{resnet_forward.14} parent=73 // pred_check_branch
          %367 = sbr.rel (%p365) target = $region78
        $region77: #{resnet_forward.14} parent=73 // pred_region
          _
        $region78: #{resnet_forward.14} parent=73 // pred_fallthru
          _
        %s368 = sand.u32 %s45, 1
        %s369 = sand.u32 %s45, 1
        %s370 = smul.addr %s369, 128
        %s371 = scalar_lea.vmem [#allocation3], %s370
        %p372 = pneg %p58
        %p373 = pneg %p55
        %s374 = smul.u32 32, %s23
        %p375 = scmp.lt.s32.totalorder %s374, 95
        %s376 = scalar_select %p375, %s374, 95
        %p377 = scmp.lt.s32.totalorder %s22, 0
        %s378 = scalar_select %p377, %s22, 0
        %s379 = sadd.s32 %s378, %s376
        %s380 = smul.addr %s379, 4
        %s381 = scalar_lea.vmem %s1, %s380
        %p382 = pneg %p86
        %p383 = pneg %p83
        %p384 = scmp.lt.s32.totalorder %s22, 0
        %s385 = scalar_select %p384, %s22, 0
        %s386 = scalar_lea.vmem %s2, %s385
        %p387 = pneg %p112
        %p388 = pneg %p109
        %p389 = scmp.lt.s32.totalorder %s22, 0
        %s390 = scalar_select %p389, %s22, 0
        %s391 = scalar_lea.vmem %s3, %s390
        %p392 = pneg %p138
        %p393 = pneg %p135
        %s394 = smul.u32 16, %s21
        %p395 = scmp.lt.s32.totalorder %s394, 15
        %s396 = scalar_select %p395, %s394, 15
        %p397 = scmp.lt.s32.totalorder %s22, 0
        %s398 = scalar_select %p397, %s22, 0
        %s399 = sadd.s32 %s398, %s396
        %s400 = smul.addr %s399, 4
        %s401 = scalar_lea.vmem %s4, %s400
        %p402 = pneg %p166
        %p403 = pneg %p163
        %p404 = pneg %p194
        %p405 = pneg %p191
        %s406 = smul.u32 16, %s21
        %p407 = scmp.lt.s32.totalorder %s406, 15
        %s408 = scalar_select %p407, %s406, 15
        %p409 = scmp.lt.s32.totalorder %s22, 0
        %s410 = scalar_select %p409, %s22, 0
        %s411 = sadd.s32 %s410, %s408
        %s412 = smul.addr %s411, 4
        %s413 = scalar_lea.vmem %s5, %s412
        %s414 = smul.u32 16, %s21
        %s415 = smul.u32 2, %s23
        %s416 = smul.u32 32, %s23
        %p417 = scmp.lt.s32.totalorder %s416, 95
        %s418 = scalar_select %p417, %s416, 95
        %p419 = scmp.lt.s32.totalorder %s22, 0
        %s420 = scalar_select %p419, %s22, 0
        %s421 = sadd.s32 %s420, %s418
        %s422 = smul.addr %s421, 4
        %s423 = scalar_lea.vmem %s1, %s422
        %s424 = smul.u32 32, %s23
        %p425 = scmp.lt.s32.totalorder %s22, 0
        %s426 = scalar_select %p425, %s22, 0
        %s427 = scalar_lea.vmem %s2, %s426
        %p428 = scmp.lt.s32.totalorder %s22, 0
        %s429 = scalar_select %p428, %s22, 0
        %s430 = scalar_lea.vmem %s3, %s429
        %s431 = smul.u32 16, %s21
        %p432 = scmp.lt.s32.totalorder %s431, 15
        %s433 = scalar_select %p432, %s431, 15
        %p434 = scmp.lt.s32.totalorder %s22, 0
        %s435 = scalar_select %p434, %s22, 0
        %s436 = sadd.s32 %s435, %s433
        %s437 = smul.addr %s436, 4
        %s438 = scalar_lea.vmem %s4, %s437
        %s439 = smul.u32 16, %s21
        %s440 = smul.u32 16, %s21
        %p441 = scmp.lt.s32.totalorder %s440, 15
        %s442 = scalar_select %p441, %s440, 15
        %p443 = scmp.lt.s32.totalorder %s22, 0
        %s444 = scalar_select %p443, %s22, 0
        %s445 = sadd.s32 %s444, %s442
        %s446 = smul.addr %s445, 4
        %s447 = scalar_lea.vmem %s5, %s446
        %s448 = smul.u32 16, %s21
        %p450 = scmp.eq.s32.totalorder %s23, 0
        // Predicated region
        $region79: #{resnet_forward.14} parent=73 // pred_check
          %p451 = pneg %p450
        $region80: #{resnet_forward.14} parent=73 // pred_check_branch
          %453 = sbr.rel (%p451) target = $region82
        $region81: #{resnet_forward.14} parent=73 // pred_region
          %454 = vst [vmem:[#allocation2] sm:$0xff] 0.0
          %455 = vst [vmem:[#allocation2 + $0x8] sm:$0xff] 0.0
          %456 = vst [vmem:[#allocation2 + $0x10] sm:$0xff] 0.0
          %457 = vst [vmem:[#allocation2 + $0x18] sm:$0xff] 0.0
          %458 = vst [vmem:[#allocation2 + $0x20] sm:$0xff] 0.0
          %459 = vst [vmem:[#allocation2 + $0x28] sm:$0xff] 0.0
          %460 = vst [vmem:[#allocation2 + $0x30] sm:$0xff] 0.0
          %461 = vst [vmem:[#allocation2 + $0x38] sm:$0xff] 0.0
          %462 = vst [vmem:[#allocation2 + $0x40] sm:$0xff] 0.0
          %463 = vst [vmem:[#allocation2 + $0x48] sm:$0xff] 0.0
          %464 = vst [vmem:[#allocation2 + $0x50] sm:$0xff] 0.0
          %465 = vst [vmem:[#allocation2 + $0x58] sm:$0xff] 0.0
          %466 = vst [vmem:[#allocation2 + $0x60] sm:$0xff] 0.0
          %467 = vst [vmem:[#allocation2 + $0x68] sm:$0xff] 0.0
          %468 = vst [vmem:[#allocation2 + $0x70] sm:$0xff] 0.0
          %469 = vst [vmem:[#allocation2 + $0x78] sm:$0xff] 0.0
        $region82: #{resnet_forward.14} parent=73 // pred_fallthru
          _
        %v470 = vld [vmem:[#allocation2] sm:$0xff]
        %v471 = vld [vmem:[#allocation2 + $0x8] sm:$0xff]
        %v472 = vld [vmem:[#allocation2 + $0x10] sm:$0xff]
        %v473 = vld [vmem:[#allocation2 + $0x18] sm:$0xff]
        %v474 = vld [vmem:[#allocation2 + $0x20] sm:$0xff]
        %v475 = vld [vmem:[#allocation2 + $0x28] sm:$0xff]
        %v476 = vld [vmem:[#allocation2 + $0x30] sm:$0xff]
        %v477 = vld [vmem:[#allocation2 + $0x38] sm:$0xff]
        %v478 = vld [vmem:[#allocation2 + $0x40] sm:$0xff]
        %v479 = vld [vmem:[#allocation2 + $0x48] sm:$0xff]
        %v480 = vld [vmem:[#allocation2 + $0x50] sm:$0xff]
        %v481 = vld [vmem:[#allocation2 + $0x58] sm:$0xff]
        %v482 = vld [vmem:[#allocation2 + $0x60] sm:$0xff]
        %v483 = vld [vmem:[#allocation2 + $0x68] sm:$0xff]
        %v484 = vld [vmem:[#allocation2 + $0x70] sm:$0xff]
        %v485 = vld [vmem:[#allocation2 + $0x78] sm:$0xff]
        %v486 = vld [vmem:[%s364] sm:$0xff]
        %v487 = vld [vmem:[%s364 + $0x8] sm:$0xff]
        %v488 = vld [vmem:[%s364 + $0x10] sm:$0xff]
        %v489 = vld [vmem:[%s364 + $0x18] sm:$0xff]
        %v490 = vld [vmem:[%s364 + $0x20] sm:$0xff]
        %v491 = vld [vmem:[%s364 + $0x28] sm:$0xff]
        %v492 = vld [vmem:[%s364 + $0x30] sm:$0xff]
        %v493 = vld [vmem:[%s364 + $0x38] sm:$0xff]
        %v494 = vld [vmem:[%s364 + $0x40] sm:$0xff]
        %v495 = vld [vmem:[%s364 + $0x48] sm:$0xff]
        %v496 = vld [vmem:[%s364 + $0x50] sm:$0xff]
        %v497 = vld [vmem:[%s364 + $0x58] sm:$0xff]
        %v498 = vld [vmem:[%s364 + $0x60] sm:$0xff]
        %v499 = vld [vmem:[%s364 + $0x68] sm:$0xff]
        %v500 = vld [vmem:[%s364 + $0x70] sm:$0xff]
        %v501 = vld [vmem:[%s364 + $0x78] sm:$0xff]
        %v502 = vld [vmem:[%s423] sm:$0xf]
        %v503 = vld [vmem:[%s423 + $0x4] sm:$0xf]
        %v504 = vld [vmem:[%s423 + $0x8] sm:$0xf]
        %v505 = vld [vmem:[%s423 + $0xc] sm:$0xf]
        %v506 = vld [vmem:[%s423 + $0x10] sm:$0xf]
        %v507 = vld [vmem:[%s423 + $0x14] sm:$0xf]
        %v508 = vld [vmem:[%s423 + $0x18] sm:$0xf]
        %v509 = vld [vmem:[%s423 + $0x1c] sm:$0xf]
        %v510 = vld [vmem:[%s423 + $0x20] sm:$0xf]
        %v511 = vld [vmem:[%s423 + $0x24] sm:$0xf]
        %v512 = vld [vmem:[%s423 + $0x28] sm:$0xf]
        %v513 = vld [vmem:[%s423 + $0x2c] sm:$0xf]
        %v514 = vld [vmem:[%s423 + $0x30] sm:$0xf]
        %v515 = vld [vmem:[%s423 + $0x34] sm:$0xf]
        %v516 = vld [vmem:[%s423 + $0x38] sm:$0xf]
        %v517 = vld [vmem:[%s423 + $0x3c] sm:$0xf]
        %v518 = vld [vmem:[%s423 + $0x40] sm:$0xf]
        %v519 = vld [vmem:[%s423 + $0x44] sm:$0xf]
        %v520 = vld [vmem:[%s423 + $0x48] sm:$0xf]
        %v521 = vld [vmem:[%s423 + $0x4c] sm:$0xf]
        %v522 = vld [vmem:[%s423 + $0x50] sm:$0xf]
        %v523 = vld [vmem:[%s423 + $0x54] sm:$0xf]
        %v524 = vld [vmem:[%s423 + $0x58] sm:$0xf]
        %v525 = vld [vmem:[%s423 + $0x5c] sm:$0xf]
        %v526 = vld [vmem:[%s423 + $0x60] sm:$0xf]
        %v527 = vld [vmem:[%s423 + $0x64] sm:$0xf]
        %v528 = vld [vmem:[%s423 + $0x68] sm:$0xf]
        %v529 = vld [vmem:[%s423 + $0x6c] sm:$0xf]
        %v530 = vld [vmem:[%s423 + $0x70] sm:$0xf]
        %v531 = vld [vmem:[%s423 + $0x74] sm:$0xf]
        %v532 = vld [vmem:[%s423 + $0x78] sm:$0xf]
        %v533 = vld [vmem:[%s423 + $0x7c] sm:$0xf]
        %v550 = vunpack.c.l.b16 %v486
        %v551 = vunpack.c.h.b16 %v486
        %v552 = vunpack.c.l.b16 %v487
        %v553 = vunpack.c.h.b16 %v487
        %v554 = vunpack.c.l.b16 %v488
        %v555 = vunpack.c.h.b16 %v488
        %v556 = vunpack.c.l.b16 %v489
        %v557 = vunpack.c.h.b16 %v489
        %v558 = vunpack.c.l.b16 %v490
        %v559 = vunpack.c.h.b16 %v490
        %v560 = vunpack.c.l.b16 %v491
        %v561 = vunpack.c.h.b16 %v491
        %v562 = vunpack.c.l.b16 %v492
        %v563 = vunpack.c.h.b16 %v492
        %v564 = vunpack.c.l.b16 %v493
        %v565 = vunpack.c.h.b16 %v493
        %v566 = vunpack.c.l.b16 %v494
        %v567 = vunpack.c.h.b16 %v494
        %v568 = vunpack.c.l.b16 %v495
        %v569 = vunpack.c.h.b16 %v495
        %v570 = vunpack.c.l.b16 %v496
        %v571 = vunpack.c.h.b16 %v496
        %v572 = vunpack.c.l.b16 %v497
        %v573 = vunpack.c.h.b16 %v497
        %v574 = vunpack.c.l.b16 %v498
        %v575 = vunpack.c.h.b16 %v498
        %v576 = vunpack.c.l.b16 %v499
        %v577 = vunpack.c.h.b16 %v499
        %v578 = vunpack.c.l.b16 %v500
        %v579 = vunpack.c.h.b16 %v500
        %v580 = vunpack.c.l.b16 %v501
        %v581 = vunpack.c.h.b16 %v501
        %v582 = vpack.c.b16 %v552, %v550
        %v583 = vpack.c.b16 %v553, %v551
        %v584 = vpack.c.b16 %v556, %v554
        %v585 = vpack.c.b16 %v557, %v555
        %v586 = vpack.c.b16 %v560, %v558
        %v587 = vpack.c.b16 %v561, %v559
        %v588 = vpack.c.b16 %v564, %v562
        %v589 = vpack.c.b16 %v565, %v563
        %v590 = vpack.c.b16 %v568, %v566
        %v591 = vpack.c.b16 %v569, %v567
        %v592 = vpack.c.b16 %v572, %v570
        %v593 = vpack.c.b16 %v573, %v571
        %v594 = vpack.c.b16 %v576, %v574
        %v595 = vpack.c.b16 %v577, %v575
        %v596 = vpack.c.b16 %v580, %v578
        %v597 = vpack.c.b16 %v581, %v579
        %v646 = vunpack.c.l.b16 %v502
        %v647 = vunpack.c.l.b16 %v503
        %v648 = vunpack.c.l.b16 %v504
        %v649 = vunpack.c.l.b16 %v505
        %v650 = vunpack.c.l.b16 %v506
        %v651 = vunpack.c.l.b16 %v507
        %v652 = vunpack.c.l.b16 %v508
        %v653 = vunpack.c.l.b16 %v509
        %v654 = vunpack.c.l.b16 %v510
        %v655 = vunpack.c.l.b16 %v511
        %v656 = vunpack.c.l.b16 %v512
        %v657 = vunpack.c.l.b16 %v513
        %v658 = vunpack.c.l.b16 %v514
        %v659 = vunpack.c.l.b16 %v515
        %v660 = vunpack.c.l.b16 %v516
        %v661 = vunpack.c.l.b16 %v517
        %v662 = vunpack.c.l.b16 %v518
        %v663 = vunpack.c.l.b16 %v519
        %v664 = vunpack.c.l.b16 %v520
        %v665 = vunpack.c.l.b16 %v521
        %v666 = vunpack.c.l.b16 %v522
        %v667 = vunpack.c.l.b16 %v523
        %v668 = vunpack.c.l.b16 %v524
        %v669 = vunpack.c.l.b16 %v525
        %v670 = vunpack.c.l.b16 %v526
        %v671 = vunpack.c.l.b16 %v527
        %v672 = vunpack.c.l.b16 %v528
        %v673 = vunpack.c.l.b16 %v529
        %v674 = vunpack.c.l.b16 %v530
        %v675 = vunpack.c.l.b16 %v531
        %v676 = vunpack.c.l.b16 %v532
        %v677 = vunpack.c.l.b16 %v533
        %v678 = vpack.c.b16 %v647, %v646
        %v679 = vpack.c.b16 %v649, %v648
        %v680 = vpack.c.b16 %v651, %v650
        %v681 = vpack.c.b16 %v653, %v652
        %v682 = vpack.c.b16 %v655, %v654
        %v683 = vpack.c.b16 %v657, %v656
        %v684 = vpack.c.b16 %v659, %v658
        %v685 = vpack.c.b16 %v661, %v660
        %v686 = vpack.c.b16 %v663, %v662
        %v687 = vpack.c.b16 %v665, %v664
        %v688 = vpack.c.b16 %v667, %v666
        %v689 = vpack.c.b16 %v669, %v668
        %v690 = vpack.c.b16 %v671, %v670
        %v691 = vpack.c.b16 %v673, %v672
        %v692 = vpack.c.b16 %v675, %v674
        %v693 = vpack.c.b16 %v677, %v676
        %710 = vmatprep.subr.bf16.mxu0 0
        %711 = vmatpush1.bf16.msra.mxu0 %v678
        %712 = vmatprep.subr.bf16.mxu0 0
        %713 = vmatpush1.bf16.msra.mxu0 %v679
        %714 = vmatprep.subr.bf16.mxu0 0
        %715 = vmatpush1.bf16.msra.mxu0 %v680
        %716 = vmatprep.subr.bf16.mxu0 0
        %717 = vmatpush1.bf16.msra.mxu0 %v681
        %718 = vmatprep.subr.bf16.mxu0 0
        %719 = vmatpush1.bf16.msra.mxu0 %v682
        %720 = vmatprep.subr.bf16.mxu0 0
        %721 = vmatpush1.bf16.msra.mxu0 %v683
        %722 = vmatprep.subr.bf16.mxu0 0
        %723 = vmatpush1.bf16.msra.mxu0 %v684
        %724 = vmatprep.subr.bf16.mxu0 0
        %725 = vmatpush1.bf16.msra.mxu0 %v685
        %726 = vmatprep.subr.bf16.mxu0 0
        %727 = vmatpush1.bf16.msra.mxu0 %v686
        %728 = vmatprep.subr.bf16.mxu0 0
        %729 = vmatpush1.bf16.msra.mxu0 %v687
        %730 = vmatprep.subr.bf16.mxu0 0
        %731 = vmatpush1.bf16.msra.mxu0 %v688
        %732 = vmatprep.subr.bf16.mxu0 0
        %733 = vmatpush1.bf16.msra.mxu0 %v689
        %734 = vmatprep.subr.bf16.mxu0 0
        %735 = vmatpush1.bf16.msra.mxu0 %v690
        %736 = vmatprep.subr.bf16.mxu0 0
        %737 = vmatpush1.bf16.msra.mxu0 %v691
        %738 = vmatprep.subr.bf16.mxu0 0
        %739 = vmatpush1.bf16.msra.mxu0 %v692
        %740 = vmatprep.subr.bf16.mxu0 0
        %741 = vmatpush1.bf16.msra.mxu0 %v693
        %742 = vmatprep.mubr.bf16.mxu0 %v583
        %743 = vmatmul.mubr.bf16.gmra.mrb[0].mxu0 %v582
        %v744 = vpop.f32.mrb[0].mxu0
        %v745 = vadd.f32 0.0, %v744
        %v746 = vpop.f32.mrb[0].mxu0
        %v747 = vpop.f32.mrb[0].mxu0
        %v748 = vadd.f32 0.0, %v747
        %v749 = vpop.f32.mrb[0].mxu0
        %750 = vmatprep.mubr.bf16.mxu0 %v585
        %751 = vmatmul.mubr.bf16.gmra.mrb[0].mxu0 %v584
        %v752 = vpop.f32.mrb[0].mxu0
        %v753 = vadd.f32 0.0, %v752
        %v754 = vpop.f32.mrb[0].mxu0
        %v755 = vpop.f32.mrb[0].mxu0
        %v756 = vadd.f32 0.0, %v755
        %v757 = vpop.f32.mrb[0].mxu0
        %758 = vmatprep.mubr.bf16.mxu0 %v587
        %759 = vmatmul.mubr.bf16.gmra.mrb[0].mxu0 %v586
        %v760 = vpop.f32.mrb[0].mxu0
        %v761 = vadd.f32 0.0, %v760
        %v762 = vpop.f32.mrb[0].mxu0
        %v763 = vpop.f32.mrb[0].mxu0
        %v764 = vadd.f32 0.0, %v763
        %v765 = vpop.f32.mrb[0].mxu0
        %766 = vmatprep.mubr.bf16.mxu0 %v589
        %767 = vmatmul.mubr.bf16.gmra.mrb[0].mxu0 %v588
        %v768 = vpop.f32.mrb[0].mxu0
        %v769 = vadd.f32 0.0, %v768
        %v770 = vpop.f32.mrb[0].mxu0
        %v771 = vpop.f32.mrb[0].mxu0
        %v772 = vadd.f32 0.0, %v771
        %v773 = vpop.f32.mrb[0].mxu0
        %774 = vmatprep.mubr.bf16.mxu0 %v591
        %775 = vmatmul.mubr.bf16.gmra.mrb[0].mxu0 %v590
        %v776 = vpop.f32.mrb[0].mxu0
        %v777 = vadd.f32 0.0, %v776
        %v778 = vpop.f32.mrb[0].mxu0
        %v779 = vpop.f32.mrb[0].mxu0
        %v780 = vadd.f32 0.0, %v779
        %v781 = vpop.f32.mrb[0].mxu0
        %782 = vmatprep.mubr.bf16.mxu0 %v593
        %783 = vmatmul.mubr.bf16.gmra.mrb[0].mxu0 %v592
        %v784 = vpop.f32.mrb[0].mxu0
        %v785 = vadd.f32 0.0, %v784
        %v786 = vpop.f32.mrb[0].mxu0
        %v787 = vpop.f32.mrb[0].mxu0
        %v788 = vadd.f32 0.0, %v787
        %v789 = vpop.f32.mrb[0].mxu0
        %790 = vmatprep.mubr.bf16.mxu0 %v595
        %791 = vmatmul.mubr.bf16.gmra.mrb[0].mxu0 %v594
        %v792 = vpop.f32.mrb[0].mxu0
        %v793 = vadd.f32 0.0, %v792
        %v794 = vpop.f32.mrb[0].mxu0
        %v795 = vpop.f32.mrb[0].mxu0
        %v796 = vadd.f32 0.0, %v795
        %v797 = vpop.f32.mrb[0].mxu0
        %798 = vmatprep.mubr.bf16.mxu0 %v597
        %799 = vmatmul.mubr.bf16.gmra.mrb[0].mxu0 %v596
        %v800 = vpop.f32.mrb[0].mxu0
        %v801 = vadd.f32 0.0, %v800
        %v802 = vpop.f32.mrb[0].mxu0
        %v803 = vpop.f32.mrb[0].mxu0
        %v804 = vadd.f32 0.0, %v803
        %v805 = vpop.f32.mrb[0].mxu0
        %806 = vdwg.mxu0
        %v807 = vadd.f32 %v470, %v745
        %v808 = vadd.f32 %v471, %v748
        %v809 = vadd.f32 %v472, %v753
        %v810 = vadd.f32 %v473, %v756
        %v811 = vadd.f32 %v474, %v761
        %v812 = vadd.f32 %v475, %v764
        %v813 = vadd.f32 %v476, %v769
        %v814 = vadd.f32 %v477, %v772
        %v815 = vadd.f32 %v478, %v777
        %v816 = vadd.f32 %v479, %v780
        %v817 = vadd.f32 %v480, %v785
        %v818 = vadd.f32 %v481, %v788
        %v819 = vadd.f32 %v482, %v793
        %v820 = vadd.f32 %v483, %v796
        %v821 = vadd.f32 %v484, %v801
        %v822 = vadd.f32 %v485, %v804
        %823 = vst [vmem:[#allocation2] sm:$0xff] %v807
        %824 = vst [vmem:[#allocation2 + $0x8] sm:$0xff] %v808
        %825 = vst [vmem:[#allocation2 + $0x10] sm:$0xff] %v809
        %826 = vst [vmem:[#allocation2 + $0x18] sm:$0xff] %v810
        %827 = vst [vmem:[#allocation2 + $0x20] sm:$0xff] %v811
        %828 = vst [vmem:[#allocation2 + $0x28] sm:$0xff] %v812
        %829 = vst [vmem:[#allocation2 + $0x30] sm:$0xff] %v813
        %830 = vst [vmem:[#allocation2 + $0x38] sm:$0xff] %v814
        %831 = vst [vmem:[#allocation2 + $0x40] sm:$0xff] %v815
        %832 = vst [vmem:[#allocation2 + $0x48] sm:$0xff] %v816
        %833 = vst [vmem:[#allocation2 + $0x50] sm:$0xff] %v817
        %834 = vst [vmem:[#allocation2 + $0x58] sm:$0xff] %v818
        %835 = vst [vmem:[#allocation2 + $0x60] sm:$0xff] %v819
        %836 = vst [vmem:[#allocation2 + $0x68] sm:$0xff] %v820
        %837 = vst [vmem:[#allocation2 + $0x70] sm:$0xff] %v821
        %838 = vst [vmem:[#allocation2 + $0x78] sm:$0xff] %v822
        %p839 = scmp.eq.s32.totalorder %s23, 2
        // Predicated region
        $region83: #{resnet_forward.14} parent=73 // pred_check
          %p840 = pneg %p839
        $region84: #{resnet_forward.14} parent=73 // pred_check_branch
          %842 = sbr.rel (%p840) target = $region86
        $region85: #{resnet_forward.14} parent=73 // pred_region
          %v843 = vld [vmem:[#allocation2] sm:$0xff]
          %v844 = vld [vmem:[#allocation2 + $0x8] sm:$0xff]
          %v845 = vld [vmem:[#allocation2 + $0x10] sm:$0xff]
          %v846 = vld [vmem:[#allocation2 + $0x18] sm:$0xff]
          %v847 = vld [vmem:[#allocation2 + $0x20] sm:$0xff]
          %v848 = vld [vmem:[#allocation2 + $0x28] sm:$0xff]
          %v849 = vld [vmem:[#allocation2 + $0x30] sm:$0xff]
          %v850 = vld [vmem:[#allocation2 + $0x38] sm:$0xff]
          %v851 = vld [vmem:[#allocation2 + $0x40] sm:$0xff]
          %v852 = vld [vmem:[#allocation2 + $0x48] sm:$0xff]
          %v853 = vld [vmem:[#allocation2 + $0x50] sm:$0xff]
          %v854 = vld [vmem:[#allocation2 + $0x58] sm:$0xff]
          %v855 = vld [vmem:[#allocation2 + $0x60] sm:$0xff]
          %v856 = vld [vmem:[#allocation2 + $0x68] sm:$0xff]
          %v857 = vld [vmem:[#allocation2 + $0x70] sm:$0xff]
          %v858 = vld [vmem:[#allocation2 + $0x78] sm:$0xff]
          %v859 = vld [vmem:[%s427] sm:$0x1]
          %v861 = vlaneseq
          %v862 = vshrl.u32 %v861, 7
          %v863 = vsub.s32 0, %v862
          %v864 = vrot.slane %v859, %v863
          %v866 = vmul.f32 %v843, %v864
          %v867 = vmul.f32 %v844, %v864
          %v868 = vmul.f32 %v845, %v864
          %v869 = vmul.f32 %v846, %v864
          %v870 = vmul.f32 %v847, %v864
          %v871 = vmul.f32 %v848, %v864
          %v872 = vmul.f32 %v849, %v864
          %v873 = vmul.f32 %v850, %v864
          %v874 = vmul.f32 %v851, %v864
          %v875 = vmul.f32 %v852, %v864
          %v876 = vmul.f32 %v853, %v864
          %v877 = vmul.f32 %v854, %v864
          %v878 = vmul.f32 %v855, %v864
          %v879 = vmul.f32 %v856, %v864
          %v880 = vmul.f32 %v857, %v864
          %v881 = vmul.f32 %v858, %v864
          %v882 = vld [vmem:[%s430] sm:$0x1]
          %v884 = vlaneseq
          %v885 = vshrl.u32 %v884, 7
          %v886 = vsub.s32 0, %v885
          %v887 = vrot.slane %v882, %v886
          %v889 = vadd.f32 %v866, %v887
          %v890 = vadd.f32 %v867, %v887
          %v891 = vadd.f32 %v868, %v887
          %v892 = vadd.f32 %v869, %v887
          %v893 = vadd.f32 %v870, %v887
          %v894 = vadd.f32 %v871, %v887
          %v895 = vadd.f32 %v872, %v887
          %v896 = vadd.f32 %v873, %v887
          %v897 = vadd.f32 %v874, %v887
          %v898 = vadd.f32 %v875, %v887
          %v899 = vadd.f32 %v876, %v887
          %v900 = vadd.f32 %v877, %v887
          %v901 = vadd.f32 %v878, %v887
          %v902 = vadd.f32 %v879, %v887
          %v903 = vadd.f32 %v880, %v887
          %v904 = vadd.f32 %v881, %v887
          %v905 = vld [vmem:[%s438] sm:$0xf]
          %v906 = vld [vmem:[%s438 + $0x4] sm:$0xf]
          %v907 = vld [vmem:[%s438 + $0x8] sm:$0xf]
          %v908 = vld [vmem:[%s438 + $0xc] sm:$0xf]
          %v909 = vld [vmem:[%s438 + $0x10] sm:$0xf]
          %v910 = vld [vmem:[%s438 + $0x14] sm:$0xf]
          %v911 = vld [vmem:[%s438 + $0x18] sm:$0xf]
          %v912 = vld [vmem:[%s438 + $0x1c] sm:$0xf]
          %v913 = vld [vmem:[%s438 + $0x20] sm:$0xf]
          %v914 = vld [vmem:[%s438 + $0x24] sm:$0xf]
          %v915 = vld [vmem:[%s438 + $0x28] sm:$0xf]
          %v916 = vld [vmem:[%s438 + $0x2c] sm:$0xf]
          %v917 = vld [vmem:[%s438 + $0x30] sm:$0xf]
          %v918 = vld [vmem:[%s438 + $0x34] sm:$0xf]
          %v919 = vld [vmem:[%s438 + $0x38] sm:$0xf]
          %v920 = vld [vmem:[%s438 + $0x3c] sm:$0xf]
          %v921 = vunpack.c.l.bf16 %v905
          %v922 = vunpack.c.l.bf16 %v906
          %v923 = vunpack.c.l.bf16 %v907
          %v924 = vunpack.c.l.bf16 %v908
          %v925 = vunpack.c.l.bf16 %v909
          %v926 = vunpack.c.l.bf16 %v910
          %v927 = vunpack.c.l.bf16 %v911
          %v928 = vunpack.c.l.bf16 %v912
          %v929 = vunpack.c.l.bf16 %v913
          %v930 = vunpack.c.l.bf16 %v914
          %v931 = vunpack.c.l.bf16 %v915
          %v932 = vunpack.c.l.bf16 %v916
          %v933 = vunpack.c.l.bf16 %v917
          %v934 = vunpack.c.l.bf16 %v918
          %v935 = vunpack.c.l.bf16 %v919
          %v936 = vunpack.c.l.bf16 %v920
          %v937 = vadd.f32 %v889, %v921
          %v938 = vadd.f32 %v890, %v922
          %v939 = vadd.f32 %v891, %v923
          %v940 = vadd.f32 %v892, %v924
          %v941 = vadd.f32 %v893, %v925
          %v942 = vadd.f32 %v894, %v926
          %v943 = vadd.f32 %v895, %v927
          %v944 = vadd.f32 %v896, %v928
          %v945 = vadd.f32 %v897, %v929
          %v946 = vadd.f32 %v898, %v930
          %v947 = vadd.f32 %v899, %v931
          %v948 = vadd.f32 %v900, %v932
          %v949 = vadd.f32 %v901, %v933
          %v950 = vadd.f32 %v902, %v934
          %v951 = vadd.f32 %v903, %v935
          %v952 = vadd.f32 %v904, %v936
          %v953 = vmax.f32 %v937, 0.0
          %v954 = vmax.f32 %v938, 0.0
          %v955 = vmax.f32 %v939, 0.0
          %v956 = vmax.f32 %v940, 0.0
          %v957 = vmax.f32 %v941, 0.0
          %v958 = vmax.f32 %v942, 0.0
          %v959 = vmax.f32 %v943, 0.0
          %v960 = vmax.f32 %v944, 0.0
          %v961 = vmax.f32 %v945, 0.0
          %v962 = vmax.f32 %v946, 0.0
          %v963 = vmax.f32 %v947, 0.0
          %v964 = vmax.f32 %v948, 0.0
          %v965 = vmax.f32 %v949, 0.0
          %v966 = vmax.f32 %v950, 0.0
          %v967 = vmax.f32 %v951, 0.0
          %v968 = vmax.f32 %v952, 0.0
          %v969 = vpack.c.bf16 %v954, %v953
          %v970 = vpack.c.bf16 %v956, %v955
          %v971 = vpack.c.bf16 %v958, %v957
          %v972 = vpack.c.bf16 %v960, %v959
          %v973 = vpack.c.bf16 %v962, %v961
          %v974 = vpack.c.bf16 %v964, %v963
          %v975 = vpack.c.bf16 %v966, %v965
          %v976 = vpack.c.bf16 %v968, %v967
          %v985 = vunpack.c.l.b16 %v969
          %v986 = vunpack.c.h.b16 %v969
          %v987 = vunpack.c.l.b16 %v970
          %v988 = vunpack.c.h.b16 %v970
          %v989 = vunpack.c.l.b16 %v971
          %v990 = vunpack.c.h.b16 %v971
          %v991 = vunpack.c.l.b16 %v972
          %v992 = vunpack.c.h.b16 %v972
          %v993 = vunpack.c.l.b16 %v973
          %v994 = vunpack.c.h.b16 %v973
          %v995 = vunpack.c.l.b16 %v974
          %v996 = vunpack.c.h.b16 %v974
          %v997 = vunpack.c.l.b16 %v975
          %v998 = vunpack.c.h.b16 %v975
          %v999 = vunpack.c.l.b16 %v976
          %v1000 = vunpack.c.h.b16 %v976
          %v1001 = vpack.c.b16 %v985, %v985
          %v1002 = vpack.c.b16 %v986, %v986
          %v1003 = vpack.c.b16 %v987, %v987
          %v1004 = vpack.c.b16 %v988, %v988
          %v1005 = vpack.c.b16 %v989, %v989
          %v1006 = vpack.c.b16 %v990, %v990
          %v1007 = vpack.c.b16 %v991, %v991
          %v1008 = vpack.c.b16 %v992, %v992
          %v1009 = vpack.c.b16 %v993, %v993
          %v1010 = vpack.c.b16 %v994, %v994
          %v1011 = vpack.c.b16 %v995, %v995
          %v1012 = vpack.c.b16 %v996, %v996
          %v1013 = vpack.c.b16 %v997, %v997
          %v1014 = vpack.c.b16 %v998, %v998
          %v1015 = vpack.c.b16 %v999, %v999
          %v1016 = vpack.c.b16 %v1000, %v1000
          %1033 = vst [vmem:[%s447] sm:$0xf] %v1001
          %1034 = vst [vmem:[%s447 + $0x4] sm:$0xf] %v1002
          %1035 = vst [vmem:[%s447 + $0x8] sm:$0xf] %v1003
          %1036 = vst [vmem:[%s447 + $0xc] sm:$0xf] %v1004
          %1037 = vst [vmem:[%s447 + $0x10] sm:$0xf] %v1005
          %1038 = vst [vmem:[%s447 + $0x14] sm:$0xf] %v1006
          %1039 = vst [vmem:[%s447 + $0x18] sm:$0xf] %v1007
          %1040 = vst [vmem:[%s447 + $0x1c] sm:$0xf] %v1008
          %1041 = vst [vmem:[%s447 + $0x20] sm:$0xf] %v1009
          %1042 = vst [vmem:[%s447 + $0x24] sm:$0xf] %v1010
          %1043 = vst [vmem:[%s447 + $0x28] sm:$0xf] %v1011
          %1044 = vst [vmem:[%s447 + $0x2c] sm:$0xf] %v1012
          %1045 = vst [vmem:[%s447 + $0x30] sm:$0xf] %v1013
          %1046 = vst [vmem:[%s447 + $0x34] sm:$0xf] %v1014
          %1047 = vst [vmem:[%s447 + $0x38] sm:$0xf] %v1015
          %1048 = vst [vmem:[%s447 + $0x3c] sm:$0xf] %v1016
        $region86: #{resnet_forward.14} parent=73 // pred_fallthru
          _
        %s1049 = smul.u32 16, %s21
        %p1050 = scmp.lt.s32.totalorder %s1049, 15
        %s1051 = scalar_select %p1050, %s1049, 15
        %p1052 = scmp.lt.s32.totalorder %s22, 0
        %s1053 = scalar_select %p1052, %s22, 0
        %s1054 = sadd.s32 %s1053, %s1051
        %s1055 = smul.addr %s1054, 4
        %s1056 = scalar_lea.vmem %s5, %s1055
        // Predicated region
        $region87: #{resnet_forward.14} parent=73 // pred_check
          %p1057 = pneg %p191
        $region88: #{resnet_forward.14} parent=73 // pred_check_branch
          %1059 = sbr.rel (%p1057) target = $region90
        $region89: #{resnet_forward.14} parent=73 // pred_region
          %s1060 = smul.u32 16, %s21
        $region90: #{resnet_forward.14} parent=73 // pred_fallthru
          _
        // Predicated region
        $region91: #{resnet_forward.14} parent=73 // pred_check
          %p1061 = pneg %p191
        $region92: #{resnet_forward.14} parent=73 // pred_check_branch
          %1063 = sbr.rel (%p1061) target = $region94
        $region93: #{resnet_forward.14} parent=73 // pred_region
          %s1064 = smul.u32 16, %s21
          %p1065 = scmp.lt.s32.totalorder %s1064, 15
          %s1066 = scalar_select %p1065, %s1064, 15
          %p1067 = scmp.lt.s32.totalorder %s22, 0
          %s1068 = scalar_select %p1067, %s22, 0
          %s1069 = sadd.s32 %s1068, %s1066
          %s1070 = smul.addr %s1069, 4
          %s1071 = scalar_lea.vmem %s5, %s1070
        $region94: #{resnet_forward.14} parent=73 // pred_fallthru
          _
      $region74: #{resnet_forward.14} parent=5 // pred_fallthru
        _
      %p1072 = scmp.le.s32.totalorder 2, %s11
      // Predicated region
      $region95: #{resnet_forward.14} parent=5 // pred_check
        %p1073 = pneg %p1072
      $region96: #{resnet_forward.14} parent=5 // pred_check_branch
        %1075 = sbr.rel (%p1073) target = $region98
      $region97: #{resnet_forward.14} parent=5 // pred_region
        %s1076 = ssub.s32 %s11, 2
      $region98: #{resnet_forward.14} parent=5 // pred_fallthru
        _
    $region6: #{resnet_forward.14} parent=1 // loop_footer
      %s15 = sadd.s32 1, %s11
    $region7: #{resnet_forward.14} parent=1 // loop_footer_branch
      %10 = sbr.rel target = $region3
    $region8: #{resnet_forward.14} parent=1 // loop_exit
      _

// kernel: resnet_forward.16
$region0: #{resnet_forward.16}
  #allocation0 [shape = 'u32[]', space=smem, size = 0x4, offset = 0x4, fixed_abs, tag = 'smem constant byte address 0x4 - core index']
  #allocation1 [shape = 'u32[144,128]{1,0:T(1,128)}', space=vmem, size = 0x12000, scoped, tag = 'internal scratch']
  #allocation2 [shape = 'f32[32,128]{1,0:T(8,128)}', space=vmem, size = 0x4000, scoped, tag = 'scratch operand']
  %s0 = inlined_call_operand.vmem [shape: bf16[32,768], index: 0, kind: input, shape index: {}]
  %s1 = inlined_call_operand.vmem [shape: bf16[768,128], index: 1, kind: input, shape index: {}]
  %s2 = inlined_call_operand.vmem [shape: f32[1,128], index: 2, kind: input, shape index: {}]
  %s3 = inlined_call_operand.vmem [shape: f32[1,128], index: 3, kind: input, shape index: {}]
  %s4 = inlined_call_operand.vmem [shape: bf16[32,128], index: 4, kind: output, shape index: {}]
  %s5 = sld [smem:[#allocation0]]
  $region95: #{resnet_forward.16} parent=0
    _
  %s7 = ssub.s32 1, %s5
  %s8 = scalar_select 0, %s7, %s5
  $region1: #{resnet_forward.16} parent=0
    #allocation3 [shape = 'u8[32768]{0}', space=vmem, size = 0x8000, scoped, tag = 'input window, operand 0']
    loop: start=0, step=1, limit=5
    $region2: #{resnet_forward.16} parent=1 // loop_pre_header
      _
    $region3: #{resnet_forward.16} parent=1 // loop_header
      %s10 = sphi 0, %s14
      %p11 = scmp.ge.s32.totalorder %s10, 5
      %s17 = sphi 0, %s36
      %s18 = sphi 0, %s32
      %s19 = sphi 0, %s28
      %s20 = sphi 0, %s17
      %s21 = sphi 0, %s18
      %s22 = sphi 0, %s19
      %s23 = sphi 0, %s20
      %s24 = sphi 0, %s21
      %s25 = sphi 0, %s22
      %s41 = sphi 0, %s43
      %s44 = sphi 0, %s41
      %s45 = sphi 0, %s44
      %s61 = sphi 0, %s45
      %s69 = sphi 0, %s71
      %s72 = sphi 0, %s69
      %s73 = sphi 0, %s72
      %s89 = sphi 0, %s73
      %s95 = sphi 0, %s97
      %s98 = sphi 0, %s95
      %s99 = sphi 0, %s98
      %s115 = sphi 0, %s99
      %s121 = sphi 0, %s123
      %s124 = sphi 0, %s121
      %s125 = sphi 0, %s124
      %s141 = sphi 0, %s125
      %s149 = sphi 0, %s151
      %s152 = sphi 0, %s149
      %s153 = sphi 0, %s152
      %s169 = sphi 0, %s153
    $region4: #{resnet_forward.16} parent=1 // loop_header_branch
      %13 = sbr.rel (%p11) target = $region8
    $region5: #{resnet_forward.16} parent=1 // loop_body
      %s15 = ssub.s32 %s10, 1
      %s16 = ssub.s32 %s10, 2
      %s26 = sadd.s32 1, %s19
      %p27 = scmp.ge.s32.totalorder %s26, 3
      %s28 = scalar_select %p27, 0, %s26
      %s29 = sadd.s32 1, %s18
      %s30 = scalar_select %p27, %s29, %s18
      %p31 = scmp.ge.s32.totalorder %s30, 1
      %s32 = scalar_select %p31, 0, %s30
      %s33 = sadd.s32 1, %s17
      %s34 = scalar_select %p31, %s33, %s17
      %p35 = scmp.ge.s32.totalorder %s34, 1
      %s36 = scalar_select %p35, 0, %s34
      %s37 = ssub.s32 %s17, %s36
      %s38 = ssub.s32 %s19, %s28
      %s39 = sor.u32 %s37, %s38
      %p40 = scmp.eq.s32.totalorder %s39, 0
      %s42 = sadd.s32 %s41, 1
      %s43 = scalar_select %p40, %s41, %s42
      %p46 = pneg %p40
      %p47 = scmp.eq.s32.totalorder %s10, 2
      %p48 = por %p46, %p47
      %p49 = scmp.ne.s32.totalorder %s41, %s44
      %p50 = scmp.eq.s32.totalorder %s10, 0
      %p51 = por %p49, %p50
      %p52 = scmp.ne.s32.totalorder %s41, %s44
      %p53 = scmp.eq.s32.totalorder %s15, 2
      %p54 = por %p52, %p53
      %p55 = scmp.ne.s32.totalorder %s44, %s45
      %p56 = scmp.eq.s32.totalorder %s15, 0
      %p57 = por %p55, %p56
      %p58 = scmp.ne.s32.totalorder %s44, %s45
      %p59 = scmp.eq.s32.totalorder %s16, 2
      %p60 = por %p58, %p59
      %p62 = scmp.ne.s32.totalorder %s45, %s61
      %p63 = scmp.eq.s32.totalorder %s16, 0
      %p64 = por %p62, %p63
      %s65 = ssub.s32 %s19, %s28
      %s66 = ssub.s32 %s18, %s32
      %s67 = sor.u32 %s65, %s66
      %p68 = scmp.eq.s32.totalorder %s67, 0
      %s70 = sadd.s32 %s69, 1
      %s71 = scalar_select %p68, %s69, %s70
      %p74 = pneg %p68
      %p75 = scmp.eq.s32.totalorder %s10, 2
      %p76 = por %p74, %p75
      %p77 = scmp.ne.s32.totalorder %s69, %s72
      %p78 = scmp.eq.s32.totalorder %s10, 0
      %p79 = por %p77, %p78
      %p80 = scmp.ne.s32.totalorder %s69, %s72
      %p81 = scmp.eq.s32.totalorder %s15, 2
      %p82 = por %p80, %p81
      %p83 = scmp.ne.s32.totalorder %s72, %s73
      %p84 = scmp.eq.s32.totalorder %s15, 0
      %p85 = por %p83, %p84
      %p86 = scmp.ne.s32.totalorder %s72, %s73
      %p87 = scmp.eq.s32.totalorder %s16, 2
      %p88 = por %p86, %p87
      %p90 = scmp.ne.s32.totalorder %s73, %s89
      %p91 = scmp.eq.s32.totalorder %s16, 0
      %p92 = por %p90, %p91
      %s93 = ssub.s32 %s18, %s32
      %p94 = scmp.eq.s32.totalorder %s93, 0
      %s96 = sadd.s32 %s95, 1
      %s97 = scalar_select %p94, %s95, %s96
      %p100 = pneg %p94
      %p101 = scmp.eq.s32.totalorder %s10, 2
      %p102 = por %p100, %p101
      %p103 = scmp.ne.s32.totalorder %s95, %s98
      %p104 = scmp.eq.s32.totalorder %s10, 0
      %p105 = por %p103, %p104
      %p106 = scmp.ne.s32.totalorder %s95, %s98
      %p107 = scmp.eq.s32.totalorder %s15, 2
      %p108 = por %p106, %p107
      %p109 = scmp.ne.s32.totalorder %s98, %s99
      %p110 = scmp.eq.s32.totalorder %s15, 0
      %p111 = por %p109, %p110
      %p112 = scmp.ne.s32.totalorder %s98, %s99
      %p113 = scmp.eq.s32.totalorder %s16, 2
      %p114 = por %p112, %p113
      %p116 = scmp.ne.s32.totalorder %s99, %s115
      %p117 = scmp.eq.s32.totalorder %s16, 0
      %p118 = por %p116, %p117
      %s119 = ssub.s32 %s18, %s32
      %p120 = scmp.eq.s32.totalorder %s119, 0
      %s122 = sadd.s32 %s121, 1
      %s123 = scalar_select %p120, %s121, %s122
      %p126 = pneg %p120
      %p127 = scmp.eq.s32.totalorder %s10, 2
      %p128 = por %p126, %p127
      %p129 = scmp.ne.s32.totalorder %s121, %s124
      %p130 = scmp.eq.s32.totalorder %s10, 0
      %p131 = por %p129, %p130
      %p132 = scmp.ne.s32.totalorder %s121, %s124
      %p133 = scmp.eq.s32.totalorder %s15, 2
      %p134 = por %p132, %p133
      %p135 = scmp.ne.s32.totalorder %s124, %s125
      %p136 = scmp.eq.s32.totalorder %s15, 0
      %p137 = por %p135, %p136
      %p138 = scmp.ne.s32.totalorder %s124, %s125
      %p139 = scmp.eq.s32.totalorder %s16, 2
      %p140 = por %p138, %p139
      %p142 = scmp.ne.s32.totalorder %s125, %s141
      %p143 = scmp.eq.s32.totalorder %s16, 0
      %p144 = por %p142, %p143
      %s145 = ssub.s32 %s17, %s36
      %s146 = ssub.s32 %s18, %s32
      %s147 = sor.u32 %s145, %s146
      %p148 = scmp.eq.s32.totalorder %s147, 0
      %s150 = sadd.s32 %s149, 1
      %s151 = scalar_select %p148, %s149, %s150
      %p154 = pneg %p148
      %p155 = scmp.eq.s32.totalorder %s10, 2
      %p156 = por %p154, %p155
      %p157 = scmp.ne.s32.totalorder %s149, %s152
      %p158 = scmp.eq.s32.totalorder %s10, 0
      %p159 = por %p157, %p158
      %p160 = scmp.ne.s32.totalorder %s149, %s152
      %p161 = scmp.eq.s32.totalorder %s15, 2
      %p162 = por %p160, %p161
      %p163 = scmp.ne.s32.totalorder %s152, %s153
      %p164 = scmp.eq.s32.totalorder %s15, 0
      %p165 = por %p163, %p164
      %p166 = scmp.ne.s32.totalorder %s152, %s153
      %p167 = scmp.eq.s32.totalorder %s16, 2
      %p168 = por %p166, %p167
      %p170 = scmp.ne.s32.totalorder %s153, %s169
      %p171 = scmp.eq.s32.totalorder %s16, 0
      %p172 = por %p170, %p171
      %p173 = scmp.le.s32.totalorder 1, %s10
      %p174 = scmp.lt.s32.totalorder %s10, 4
      %p175 = pnand %p173, %p174
      %p176 = pneg %p175
      // Predicated region
      $region9: #{resnet_forward.16} parent=5 // pred_check
        _
      $region10: #{resnet_forward.16} parent=5 // pred_check_branch
        %178 = sbr.rel (%p175) target = $region12
      $region11: #{resnet_forward.16} parent=5 // pred_region
        %s179 = ssub.s32 %s10, 1
        // Predicated region
        $region13: #{resnet_forward.16} parent=11 // pred_check
          %p180 = pneg %p111
        $region14: #{resnet_forward.16} parent=11 // pred_check_branch
          %182 = sbr.rel (%p180) target = $region16
        $region15: #{resnet_forward.16} parent=11 // pred_region
          %p183 = scmp.lt.s32.totalorder %s21, 0
          %s184 = scalar_select %p183, %s21, 0
          %s185 = scalar_lea.vmem %s2, %s184
        $region16: #{resnet_forward.16} parent=11 // pred_fallthru
          _
        // Predicated region
        $region17: #{resnet_forward.16} parent=11 // pred_check
          %p186 = pneg %p137
        $region18: #{resnet_forward.16} parent=11 // pred_check_branch
          %188 = sbr.rel (%p186) target = $region20
        $region19: #{resnet_forward.16} parent=11 // pred_region
          %p189 = scmp.lt.s32.totalorder %s21, 0
          %s190 = scalar_select %p189, %s21, 0
          %s191 = scalar_lea.vmem %s3, %s190
        $region20: #{resnet_forward.16} parent=11 // pred_fallthru
          _
      $region12: #{resnet_forward.16} parent=5 // pred_fallthru
        _
      %p192 = scmp.lt.s32.totalorder %s10, 3
      // Predicated region
      $region21: #{resnet_forward.16} parent=5 // pred_check
        %p193 = pneg %p192
      $region22: #{resnet_forward.16} parent=5 // pred_check_branch
        %195 = sbr.rel (%p193) target = $region24
      $region23: #{resnet_forward.16} parent=5 // pred_region
        // Predicated region
        $region25: #{resnet_forward.16} parent=23 // pred_check
          %p196 = pneg %p51
        $region26: #{resnet_forward.16} parent=23 // pred_check_branch
          %198 = sbr.rel (%p196) target = $region28
        $region27: #{resnet_forward.16} parent=23 // pred_region
          %s199 = sand.u32 %s41, 1
          %s200 = sand.u32 %s41, 1
          %s201 = smul.addr %s200, 32
          %s202 = scalar_lea.vmem [#allocation3], %s201
          %s203 = smul.u32 4, %s17
          %s204 = smul.u32 2, %s19
          %s205 = smul.addr %s203, 6
          %s206 = sadd.s32 %s204, %s205
          %s207 = smul.addr %s206, 4
          %s208 = scalar_lea.vmem %s0, %s207
          // Predicated region
          $region29: #{resnet_forward.16} parent=27 // pred_check
            _
          $region30: #{resnet_forward.16} parent=27 // pred_check_branch
            %210 = sbr.rel (0) target = $region32
          $region31: #{resnet_forward.16} parent=27 // pred_region
            // Predicated region
            $region33: #{resnet_forward.16} parent=31 // pred_check
              _
            $region34: #{resnet_forward.16} parent=31 // pred_check_branch
              %212 = sbr.rel (0) target = $region36
            $region35: #{resnet_forward.16} parent=31 // pred_region
              // Predicated region
              $region48: #{resnet_forward.16} parent=35 // pred_check
                _
              $region49: #{resnet_forward.16} parent=35 // pred_check_branch
                %233 = sbr.rel (0) target = $region51
              $region50: #{resnet_forward.16} parent=35 // pred_region
                loop: start=0, step=1, limit=1
                $region52: #{resnet_forward.16} parent=50 // loop_pre_header
                  _
                $region53: #{resnet_forward.16} parent=50 // loop_header
                  %s235 = sphi 0, %s239
                  %p236 = scmp.ge.s32.totalorder %s235, 1
                  %s240 = sphi %s208, %s208
                  %s241 = sphi %s202, %s202
                $region54: #{resnet_forward.16} parent=50 // loop_header_branch
                  %238 = sbr.rel (%p236) target = $region58
                $region55: #{resnet_forward.16} parent=50 // loop_body
                  %v242 = vld [vmem:[%s240] sm:$0xff]
                  %243 = vst [vmem:[%s241] sm:$0xff] %v242
                  %v244 = vld [vmem:[%s240 + $0x18] sm:$0xff]
                  %245 = vst [vmem:[%s241 + $0x8] sm:$0xff] %v244
                  %v246 = vld [vmem:[%s240 + $0x30] sm:$0xff]
                  %247 = vst [vmem:[%s241 + $0x10] sm:$0xff] %v246
                  %v248 = vld [vmem:[%s240 + $0x48] sm:$0xff]
                  %249 = vst [vmem:[%s241 + $0x18] sm:$0xff] %v248
                $region56: #{resnet_forward.16} parent=50 // loop_footer
                  %s239 = sadd.s32 1, %s235
                $region57: #{resnet_forward.16} parent=50 // loop_footer_branch
                  %234 = sbr.rel target = $region53
                $region58: #{resnet_forward.16} parent=50 // loop_exit
                  _
              $region51: #{resnet_forward.16} parent=35 // pred_fallthru
                _
              // Predicated region
              $region59: #{resnet_forward.16} parent=35 // pred_check
                _
              $region60: #{resnet_forward.16} parent=35 // pred_check_branch
                %251 = sbr.rel target = $region62
              $region61: #{resnet_forward.16} parent=35 // pred_region
                _
              $region62: #{resnet_forward.16} parent=35 // pred_fallthru
                _
            $region36: #{resnet_forward.16} parent=31 // pred_fallthru
              _
            // Predicated region
            $region37: #{resnet_forward.16} parent=31 // pred_check
              _
            $region38: #{resnet_forward.16} parent=31 // pred_check_branch
              %214 = sbr.rel target = $region40
            $region39: #{resnet_forward.16} parent=31 // pred_region
              loop: start=0, step=1, limit=1
              $region41: #{resnet_forward.16} parent=39 // loop_pre_header
                _
              $region42: #{resnet_forward.16} parent=39 // loop_header
                %s217 = sphi 0, %s221
                %p218 = scmp.ge.s32.totalorder %s217, 1
                %s222 = sphi %s208, %s208
                %s223 = sphi %s202, %s202
              $region43: #{resnet_forward.16} parent=39 // loop_header_branch
                %220 = sbr.rel (%p218) target = $region47
              $region44: #{resnet_forward.16} parent=39 // loop_body
                %v224 = vld [vmem:[%s222] sm:$0xff]
                %225 = vst [vmem:[%s223] sm:$0xff] %v224
                %v226 = vld [vmem:[%s222 + $0x18] sm:$0xff]
                %227 = vst [vmem:[%s223 + $0x8] sm:$0xff] %v226
                %v228 = vld [vmem:[%s222 + $0x30] sm:$0xff]
                %229 = vst [vmem:[%s223 + $0x10] sm:$0xff] %v228
                %v230 = vld [vmem:[%s222 + $0x48] sm:$0xff]
                %231 = vst [vmem:[%s223 + $0x18] sm:$0xff] %v230
              $region45: #{resnet_forward.16} parent=39 // loop_footer
                %s221 = sadd.s32 1, %s217
              $region46: #{resnet_forward.16} parent=39 // loop_footer_branch
                %216 = sbr.rel target = $region42
              $region47: #{resnet_forward.16} parent=39 // loop_exit
                _
            $region40: #{resnet_forward.16} parent=31 // pred_fallthru
              _
          $region32: #{resnet_forward.16} parent=27 // pred_fallthru
            _
          %252 = vnop
        $region28: #{resnet_forward.16} parent=23 // pred_fallthru
          _
        // Predicated region
        $region63: #{resnet_forward.16} parent=23 // pred_check
          %p253 = pneg %p79
        $region64: #{resnet_forward.16} parent=23 // pred_check_branch
          %255 = sbr.rel (%p253) target = $region66
        $region65: #{resnet_forward.16} parent=23 // pred_region
          %s256 = smul.u32 32, %s19
          %p257 = scmp.lt.s32.totalorder %s256, 95
          %s258 = scalar_select %p257, %s256, 95
          %p259 = scmp.lt.s32.totalorder %s18, 0
          %s260 = scalar_select %p259, %s18, 0
          %s261 = sadd.s32 %s260, %s258
          %s262 = smul.addr %s261, 4
          %s263 = scalar_lea.vmem %s1, %s262
          %s264 = smul.u32 32, %s19
        $region66: #{resnet_forward.16} parent=23 // pred_fallthru
          _
      $region24: #{resnet_forward.16} parent=5 // pred_fallthru
        _
      %p265 = scmp.le.s32.totalorder 1, %s10
      %p266 = scmp.lt.s32.totalorder %s10, 4
      %p267 = pnand %p265, %p266
      %p268 = pneg %p267
      // Predicated region
      $region67: #{resnet_forward.16} parent=5 // pred_check
        _
      $region68: #{resnet_forward.16} parent=5 // pred_check_branch
        %270 = sbr.rel (%p267) target = $region70
      $region69: #{resnet_forward.16} parent=5 // pred_region
        %s271 = ssub.s32 %s10, 1
        %s272 = sand.u32 %s44, 1
        %s273 = sand.u32 %s44, 1
        %s274 = smul.addr %s273, 32
        %s275 = scalar_lea.vmem [#allocation3], %s274
        // Predicated region
        $region71: #{resnet_forward.16} parent=69 // pred_check
          %p276 = pneg %p57
        $region72: #{resnet_forward.16} parent=69 // pred_check_branch
          %278 = sbr.rel (%p276) target = $region74
        $region73: #{resnet_forward.16} parent=69 // pred_region
          _
        $region74: #{resnet_forward.16} parent=69 // pred_fallthru
          _
        %s279 = sand.u32 %s44, 1
        %s280 = sand.u32 %s44, 1
        %s281 = smul.addr %s280, 32
        %s282 = scalar_lea.vmem [#allocation3], %s281
        %p283 = pneg %p57
        %p284 = pneg %p54
        %s285 = smul.u32 32, %s22
        %p286 = scmp.lt.s32.totalorder %s285, 95
        %s287 = scalar_select %p286, %s285, 95
        %p288 = scmp.lt.s32.totalorder %s21, 0
        %s289 = scalar_select %p288, %s21, 0
        %s290 = sadd.s32 %s289, %s287
        %s291 = smul.addr %s290, 4
        %s292 = scalar_lea.vmem %s1, %s291
        %p293 = pneg %p85
        %p294 = pneg %p82
        %p295 = scmp.lt.s32.totalorder %s21, 0
        %s296 = scalar_select %p295, %s21, 0
        %s297 = scalar_lea.vmem %s2, %s296
        %p298 = pneg %p111
        %p299 = pneg %p108
        %p300 = scmp.lt.s32.totalorder %s21, 0
        %s301 = scalar_select %p300, %s21, 0
        %s302 = scalar_lea.vmem %s3, %s301
        %p303 = pneg %p137
        %p304 = pneg %p134
        %p305 = pneg %p165
        %p306 = pneg %p162
        %s307 = smul.u32 4, %s20
        %p308 = scmp.lt.s32.totalorder %s307, 3
        %s309 = scalar_select %p308, %s307, 3
        %p310 = scmp.lt.s32.totalorder %s21, 0
        %s311 = scalar_select %p310, %s21, 0
        %s312 = sadd.s32 %s311, %s309
        %s313 = smul.addr %s312, 4
        %s314 = scalar_lea.vmem %s4, %s313
        %s315 = smul.u32 4, %s20
        %s316 = smul.u32 2, %s22
        %s317 = smul.u32 32, %s22
        %p318 = scmp.lt.s32.totalorder %s317, 95
        %s319 = scalar_select %p318, %s317, 95
        %p320 = scmp.lt.s32.totalorder %s21, 0
        %s321 = scalar_select %p320, %s21, 0
        %s322 = sadd.s32 %s321, %s319
        %s323 = smul.addr %s322, 4
        %s324 = scalar_lea.vmem %s1, %s323
        %s325 = smul.u32 32, %s22
        %p326 = scmp.lt.s32.totalorder %s21, 0
        %s327 = scalar_select %p326, %s21, 0
        %s328 = scalar_lea.vmem %s2, %s327
        %p329 = scmp.lt.s32.totalorder %s21, 0
        %s330 = scalar_select %p329, %s21, 0
        %s331 = scalar_lea.vmem %s3, %s330
        %s332 = smul.u32 4, %s20
        %p333 = scmp.lt.s32.totalorder %s332, 3
        %s334 = scalar_select %p333, %s332, 3
        %p335 = scmp.lt.s32.totalorder %s21, 0
        %s336 = scalar_select %p335, %s21, 0
        %s337 = sadd.s32 %s336, %s334
        %s338 = smul.addr %s337, 4
        %s339 = scalar_lea.vmem %s4, %s338
        %s340 = smul.u32 4, %s20
        %p342 = scmp.eq.s32.totalorder %s22, 0
        // Predicated region
        $region75: #{resnet_forward.16} parent=69 // pred_check
          %p343 = pneg %p342
        $region76: #{resnet_forward.16} parent=69 // pred_check_branch
          %345 = sbr.rel (%p343) target = $region78
        $region77: #{resnet_forward.16} parent=69 // pred_region
          %346 = vst [vmem:[#allocation2] sm:$0xff] 0.0
          %347 = vst [vmem:[#allocation2 + $0x8] sm:$0xff] 0.0
          %348 = vst [vmem:[#allocation2 + $0x10] sm:$0xff] 0.0
          %349 = vst [vmem:[#allocation2 + $0x18] sm:$0xff] 0.0
        $region78: #{resnet_forward.16} parent=69 // pred_fallthru
          _
        %v350 = vld [vmem:[#allocation2] sm:$0xff]
        %v351 = vld [vmem:[#allocation2 + $0x8] sm:$0xff]
        %v352 = vld [vmem:[#allocation2 + $0x10] sm:$0xff]
        %v353 = vld [vmem:[#allocation2 + $0x18] sm:$0xff]
        %v354 = vld [vmem:[%s275] sm:$0xff]
        %v355 = vld [vmem:[%s275 + $0x8] sm:$0xff]
        %v356 = vld [vmem:[%s275 + $0x10] sm:$0xff]
        %v357 = vld [vmem:[%s275 + $0x18] sm:$0xff]
        %v358 = vld [vmem:[%s324] sm:$0xf]
        %v359 = vld [vmem:[%s324 + $0x4] sm:$0xf]
        %v360 = vld [vmem:[%s324 + $0x8] sm:$0xf]
        %v361 = vld [vmem:[%s324 + $0xc] sm:$0xf]
        %v362 = vld [vmem:[%s324 + $0x10] sm:$0xf]
        %v363 = vld [vmem:[%s324 + $0x14] sm:$0xf]
        %v364 = vld [vmem:[%s324 + $0x18] sm:$0xf]
        %v365 = vld [vmem:[%s324 + $0x1c] sm:$0xf]
        %v366 = vld [vmem:[%s324 + $0x20] sm:$0xf]
        %v367 = vld [vmem:[%s324 + $0x24] sm:$0xf]
        %v368 = vld [vmem:[%s324 + $0x28] sm:$0xf]
        %v369 = vld [vmem:[%s324 + $0x2c] sm:$0xf]
        %v370 = vld [vmem:[%s324 + $0x30] sm:$0xf]
        %v371 = vld [vmem:[%s324 + $0x34] sm:$0xf]
        %v372 = vld [vmem:[%s324 + $0x38] sm:$0xf]
        %v373 = vld [vmem:[%s324 + $0x3c] sm:$0xf]
        %v374 = vld [vmem:[%s324 + $0x40] sm:$0xf]
        %v375 = vld [vmem:[%s324 + $0x44] sm:$0xf]
        %v376 = vld [vmem:[%s324 + $0x48] sm:$0xf]
        %v377 = vld [vmem:[%s324 + $0x4c] sm:$0xf]
        %v378 = vld [vmem:[%s324 + $0x50] sm:$0xf]
        %v379 = vld [vmem:[%s324 + $0x54] sm:$0xf]
        %v380 = vld [vmem:[%s324 + $0x58] sm:$0xf]
        %v381 = vld [vmem:[%s324 + $0x5c] sm:$0xf]
        %v382 = vld [vmem:[%s324 + $0x60] sm:$0xf]
        %v383 = vld [vmem:[%s324 + $0x64] sm:$0xf]
        %v384 = vld [vmem:[%s324 + $0x68] sm:$0xf]
        %v385 = vld [vmem:[%s324 + $0x6c] sm:$0xf]
        %v386 = vld [vmem:[%s324 + $0x70] sm:$0xf]
        %v387 = vld [vmem:[%s324 + $0x74] sm:$0xf]
        %v388 = vld [vmem:[%s324 + $0x78] sm:$0xf]
        %v389 = vld [vmem:[%s324 + $0x7c] sm:$0xf]
        %v394 = vunpack.c.l.b16 %v354
        %v395 = vunpack.c.h.b16 %v354
        %v396 = vunpack.c.l.b16 %v355
        %v397 = vunpack.c.h.b16 %v355
        %v398 = vunpack.c.l.b16 %v356
        %v399 = vunpack.c.h.b16 %v356
        %v400 = vunpack.c.l.b16 %v357
        %v401 = vunpack.c.h.b16 %v357
        %v402 = vpack.c.b16 %v396, %v394
        %v403 = vpack.c.b16 %v397, %v395
        %v404 = vpack.c.b16 %v400, %v398
        %v405 = vpack.c.b16 %v401, %v399
        %v442 = vunpack.c.l.b16 %v358
        %v443 = vunpack.c.l.b16 %v359
        %v444 = vunpack.c.l.b16 %v360
        %v445 = vunpack.c.l.b16 %v361
        %v446 = vunpack.c.l.b16 %v362
        %v447 = vunpack.c.l.b16 %v363
        %v448 = vunpack.c.l.b16 %v364
        %v449 = vunpack.c.l.b16 %v365
        %v450 = vunpack.c.l.b16 %v366
        %v451 = vunpack.c.l.b16 %v367
        %v452 = vunpack.c.l.b16 %v368
        %v453 = vunpack.c.l.b16 %v369
        %v454 = vunpack.c.l.b16 %v370
        %v455 = vunpack.c.l.b16 %v371
        %v456 = vunpack.c.l.b16 %v372
        %v457 = vunpack.c.l.b16 %v373
        %v458 = vunpack.c.l.b16 %v374
        %v459 = vunpack.c.l.b16 %v375
        %v460 = vunpack.c.l.b16 %v376
        %v461 = vunpack.c.l.b16 %v377
        %v462 = vunpack.c.l.b16 %v378
        %v463 = vunpack.c.l.b16 %v379
        %v464 = vunpack.c.l.b16 %v380
        %v465 = vunpack.c.l.b16 %v381
        %v466 = vunpack.c.l.b16 %v382
        %v467 = vunpack.c.l.b16 %v383
        %v468 = vunpack.c.l.b16 %v384
        %v469 = vunpack.c.l.b16 %v385
        %v470 = vunpack.c.l.b16 %v386
        %v471 = vunpack.c.l.b16 %v387
        %v472 = vunpack.c.l.b16 %v388
        %v473 = vunpack.c.l.b16 %v389
        %v474 = vpack.c.b16 %v443, %v442
        %v475 = vpack.c.b16 %v445, %v444
        %v476 = vpack.c.b16 %v447, %v446
        %v477 = vpack.c.b16 %v449, %v448
        %v478 = vpack.c.b16 %v451, %v450
        %v479 = vpack.c.b16 %v453, %v452
        %v480 = vpack.c.b16 %v455, %v454
        %v481 = vpack.c.b16 %v457, %v456
        %v482 = vpack.c.b16 %v459, %v458
        %v483 = vpack.c.b16 %v461, %v460
        %v484 = vpack.c.b16 %v463, %v462
        %v485 = vpack.c.b16 %v465, %v464
        %v486 = vpack.c.b16 %v467, %v466
        %v487 = vpack.c.b16 %v469, %v468
        %v488 = vpack.c.b16 %v471, %v470
        %v489 = vpack.c.b16 %v473, %v472
        %506 = vmatprep.subr.bf16.mxu0 0
        %507 = vmatpush1.bf16.msra.mxu0 %v474
        %508 = vmatprep.subr.bf16.mxu0 0
        %509 = vmatpush1.bf16.msra.mxu0 %v475
        %510 = vmatprep.subr.bf16.mxu0 0
        %511 = vmatpush1.bf16.msra.mxu0 %v476
        %512 = vmatprep.subr.bf16.mxu0 0
        %513 = vmatpush1.bf16.msra.mxu0 %v477
        %514 = vmatprep.subr.bf16.mxu0 0
        %515 = vmatpush1.bf16.msra.mxu0 %v478
        %516 = vmatprep.subr.bf16.mxu0 0
        %517 = vmatpush1.bf16.msra.mxu0 %v479
        %518 = vmatprep.subr.bf16.mxu0 0
        %519 = vmatpush1.bf16.msra.mxu0 %v480
        %520 = vmatprep.subr.bf16.mxu0 0
        %521 = vmatpush1.bf16.msra.mxu0 %v481
        %522 = vmatprep.subr.bf16.mxu0 0
        %523 = vmatpush1.bf16.msra.mxu0 %v482
        %524 = vmatprep.subr.bf16.mxu0 0
        %525 = vmatpush1.bf16.msra.mxu0 %v483
        %526 = vmatprep.subr.bf16.mxu0 0
        %527 = vmatpush1.bf16.msra.mxu0 %v484
        %528 = vmatprep.subr.bf16.mxu0 0
        %529 = vmatpush1.bf16.msra.mxu0 %v485
        %530 = vmatprep.subr.bf16.mxu0 0
        %531 = vmatpush1.bf16.msra.mxu0 %v486
        %532 = vmatprep.subr.bf16.mxu0 0
        %533 = vmatpush1.bf16.msra.mxu0 %v487
        %534 = vmatprep.subr.bf16.mxu0 0
        %535 = vmatpush1.bf16.msra.mxu0 %v488
        %536 = vmatprep.subr.bf16.mxu0 0
        %537 = vmatpush1.bf16.msra.mxu0 %v489
        %538 = vmatprep.mubr.bf16.mxu0 %v403
        %539 = vmatmul.mubr.bf16.gmra.mrb[0].mxu0 %v402
        %v540 = vpop.f32.mrb[0].mxu0
        %v541 = vadd.f32 0.0, %v540
        %v542 = vpop.f32.mrb[0].mxu0
        %v543 = vpop.f32.mrb[0].mxu0
        %v544 = vadd.f32 0.0, %v543
        %v545 = vpop.f32.mrb[0].mxu0
        %546 = vmatprep.mubr.bf16.mxu0 %v405
        %547 = vmatmul.mubr.bf16.gmra.mrb[0].mxu0 %v404
        %v548 = vpop.f32.mrb[0].mxu0
        %v549 = vadd.f32 0.0, %v548
        %v550 = vpop.f32.mrb[0].mxu0
        %v551 = vpop.f32.mrb[0].mxu0
        %v552 = vadd.f32 0.0, %v551
        %v553 = vpop.f32.mrb[0].mxu0
        %554 = vdwg.mxu0
        %v555 = vadd.f32 %v350, %v541
        %v556 = vadd.f32 %v351, %v544
        %v557 = vadd.f32 %v352, %v549
        %v558 = vadd.f32 %v353, %v552
        %559 = vst [vmem:[#allocation2] sm:$0xff] %v555
        %560 = vst [vmem:[#allocation2 + $0x8] sm:$0xff] %v556
        %561 = vst [vmem:[#allocation2 + $0x10] sm:$0xff] %v557
        %562 = vst [vmem:[#allocation2 + $0x18] sm:$0xff] %v558
        %p563 = scmp.eq.s32.totalorder %s22, 2
        // Predicated region
        $region79: #{resnet_forward.16} parent=69 // pred_check
          %p564 = pneg %p563
        $region80: #{resnet_forward.16} parent=69 // pred_check_branch
          %566 = sbr.rel (%p564) target = $region82
        $region81: #{resnet_forward.16} parent=69 // pred_region
          %v567 = vld [vmem:[#allocation2] sm:$0xff]
          %v568 = vld [vmem:[#allocation2 + $0x8] sm:$0xff]
          %v569 = vld [vmem:[#allocation2 + $0x10] sm:$0xff]
          %v570 = vld [vmem:[#allocation2 + $0x18] sm:$0xff]
          %v571 = vld [vmem:[%s328] sm:$0x1]
          %v573 = vlaneseq
          %v574 = vshrl.u32 %v573, 7
          %v575 = vsub.s32 0, %v574
          %v576 = vrot.slane %v571, %v575
          %v578 = vmul.f32 %v567, %v576
          %v579 = vmul.f32 %v568, %v576
          %v580 = vmul.f32 %v569, %v576
          %v581 = vmul.f32 %v570, %v576
          %v582 = vld [vmem:[%s331] sm:$0x1]
          %v584 = vlaneseq
          %v585 = vshrl.u32 %v584, 7
          %v586 = vsub.s32 0, %v585
          %v587 = vrot.slane %v582, %v586
          %v589 = vadd.f32 %v578, %v587
          %v590 = vadd.f32 %v579, %v587
          %v591 = vadd.f32 %v580, %v587
          %v592 = vadd.f32 %v581, %v587
          %v593 = vmax.f32 %v589, 0.0
          %v594 = vmax.f32 %v590, 0.0
          %v595 = vmax.f32 %v591, 0.0
          %v596 = vmax.f32 %v592, 0.0
          %v597 = vpack.c.bf16 %v594, %v593
          %v598 = vpack.c.bf16 %v596, %v595
          %v601 = vunpack.c.l.b16 %v597
          %v602 = vunpack.c.h.b16 %v597
          %v603 = vunpack.c.l.b16 %v598
          %v604 = vunpack.c.h.b16 %v598
          %v605 = vpack.c.b16 %v601, %v601
          %v606 = vpack.c.b16 %v602, %v602
          %v607 = vpack.c.b16 %v603, %v603
          %v608 = vpack.c.b16 %v604, %v604
          %613 = vst [vmem:[%s339] sm:$0xf] %v605
          %614 = vst [vmem:[%s339 + $0x4] sm:$0xf] %v606
          %615 = vst [vmem:[%s339 + $0x8] sm:$0xf] %v607
          %616 = vst [vmem:[%s339 + $0xc] sm:$0xf] %v608
        $region82: #{resnet_forward.16} parent=69 // pred_fallthru
          _
        %s617 = smul.u32 4, %s20
        %p618 = scmp.lt.s32.totalorder %s617, 3
        %s619 = scalar_select %p618, %s617, 3
        %p620 = scmp.lt.s32.totalorder %s21, 0
        %s621 = scalar_select %p620, %s21, 0
        %s622 = sadd.s32 %s621, %s619
        %s623 = smul.addr %s622, 4
        %s624 = scalar_lea.vmem %s4, %s623
        // Predicated region
        $region83: #{resnet_forward.16} parent=69 // pred_check
          %p625 = pneg %p162
        $region84: #{resnet_forward.16} parent=69 // pred_check_branch
          %627 = sbr.rel (%p625) target = $region86
        $region85: #{resnet_forward.16} parent=69 // pred_region
          %s628 = smul.u32 4, %s20
        $region86: #{resnet_forward.16} parent=69 // pred_fallthru
          _
        // Predicated region
        $region87: #{resnet_forward.16} parent=69 // pred_check
          %p629 = pneg %p162
        $region88: #{resnet_forward.16} parent=69 // pred_check_branch
          %631 = sbr.rel (%p629) target = $region90
        $region89: #{resnet_forward.16} parent=69 // pred_region
          %s632 = smul.u32 4, %s20
          %p633 = scmp.lt.s32.totalorder %s632, 3
          %s634 = scalar_select %p633, %s632, 3
          %p635 = scmp.lt.s32.totalorder %s21, 0
          %s636 = scalar_select %p635, %s21, 0
          %s637 = sadd.s32 %s636, %s634
          %s638 = smul.addr %s637, 4
          %s639 = scalar_lea.vmem %s4, %s638
        $region90: #{resnet_forward.16} parent=69 // pred_fallthru
          _
      $region70: #{resnet_forward.16} parent=5 // pred_fallthru
        _
      %p640 = scmp.le.s32.totalorder 2, %s10
      // Predicated region
      $region91: #{resnet_forward.16} parent=5 // pred_check
        %p641 = pneg %p640
      $region92: #{resnet_forward.16} parent=5 // pred_check_branch
        %643 = sbr.rel (%p641) target = $region94
      $region93: #{resnet_forward.16} parent=5 // pred_region
        %s644 = ssub.s32 %s10, 2
      $region94: #{resnet_forward.16} parent=5 // pred_fallthru
        _
    $region6: #{resnet_forward.16} parent=1 // loop_footer
      %s14 = sadd.s32 1, %s10
    $region7: #{resnet_forward.16} parent=1 // loop_footer_branch
      %9 = sbr.rel target = $region3
    $region8: #{resnet_forward.16} parent=1 // loop_exit
      _

// kernel: resnet_forward.15
$region0: #{resnet_forward.15}
  #allocation0 [shape = 'u32[]', space=smem, size = 0x4, offset = 0x4, fixed_abs, tag = 'smem constant byte address 0x4 - core index']
  #allocation1 [shape = 'u32[144,128]{1,0:T(1,128)}', space=vmem, size = 0x12000, scoped, tag = 'internal scratch']
  #allocation2 [shape = 'f32[32,128]{1,0:T(8,128)}', space=vmem, size = 0x4000, scoped, tag = 'scratch operand']
  %s0 = inlined_call_operand.vmem [shape: bf16[32,128], index: 0, kind: input, shape index: {}]
  %s1 = inlined_call_operand.vmem [shape: bf16[128,128], index: 1, kind: input, shape index: {}]
  %s2 = inlined_call_operand.vmem [shape: f32[1,128], index: 2, kind: input, shape index: {}]
  %s3 = inlined_call_operand.vmem [shape: f32[1,128], index: 3, kind: input, shape index: {}]
  %s4 = inlined_call_operand.vmem [shape: bf16[32,128], index: 4, kind: output, shape index: {}]
  %s5 = sld [smem:[#allocation0]]
  $region34: #{resnet_forward.15} parent=0
    _
  %s7 = ssub.s32 1, %s5
  %s8 = scalar_select 0, %s7, %s5
  // Predicated region
  $region2: #{resnet_forward.15} parent=0 // pred_check
    _
  $region3: #{resnet_forward.15} parent=0 // pred_check_branch
    %10 = sbr.rel (0) target = $region5
  $region4: #{resnet_forward.15} parent=0 // pred_region
    _
  $region5: #{resnet_forward.15} parent=0 // pred_fallthru
    _
  // Predicated region
  $region6: #{resnet_forward.15} parent=0 // pred_check
    _
  $region7: #{resnet_forward.15} parent=0 // pred_check_branch
    %12 = sbr.rel (0) target = $region9
  $region8: #{resnet_forward.15} parent=0 // pred_region
    _
  $region9: #{resnet_forward.15} parent=0 // pred_fallthru
    _
  // Predicated region
  $region10: #{resnet_forward.15} parent=0 // pred_check
    _
  $region11: #{resnet_forward.15} parent=0 // pred_check_branch
    %14 = sbr.rel (0) target = $region13
  $region12: #{resnet_forward.15} parent=0 // pred_region
    _
  $region13: #{resnet_forward.15} parent=0 // pred_fallthru
    _
  // Predicated region
  $region14: #{resnet_forward.15} parent=0 // pred_check
    _
  $region15: #{resnet_forward.15} parent=0 // pred_check_branch
    %16 = sbr.rel (0) target = $region17
  $region16: #{resnet_forward.15} parent=0 // pred_region
    _
  $region17: #{resnet_forward.15} parent=0 // pred_fallthru
    _
  %p18 = scmp.eq.s32.totalorder 0, 0
  // Predicated region
  $region18: #{resnet_forward.15} parent=0 // pred_check
    %p19 = pneg %p18
  $region19: #{resnet_forward.15} parent=0 // pred_check_branch
    %21 = sbr.rel (%p19) target = $region21
  $region20: #{resnet_forward.15} parent=0 // pred_region
    %22 = vst [vmem:[#allocation2] sm:$0xff] 0.0
    %23 = vst [vmem:[#allocation2 + $0x8] sm:$0xff] 0.0
    %24 = vst [vmem:[#allocation2 + $0x10] sm:$0xff] 0.0
    %25 = vst [vmem:[#allocation2 + $0x18] sm:$0xff] 0.0
  $region21: #{resnet_forward.15} parent=0 // pred_fallthru
    _
  %v26 = vld [vmem:[#allocation2] sm:$0xff]
  %v27 = vld [vmem:[#allocation2 + $0x8] sm:$0xff]
  %v28 = vld [vmem:[#allocation2 + $0x10] sm:$0xff]
  %v29 = vld [vmem:[#allocation2 + $0x18] sm:$0xff]
  %v30 = vld [vmem:[%s0] sm:$0xf]
  %v31 = vld [vmem:[%s0 + $0x4] sm:$0xf]
  %v32 = vld [vmem:[%s0 + $0x8] sm:$0xf]
  %v33 = vld [vmem:[%s0 + $0xc] sm:$0xf]
  %v34 = vld [vmem:[%s1] sm:$0xf]
  %v35 = vld [vmem:[%s1 + $0x4] sm:$0xf]
  %v36 = vld [vmem:[%s1 + $0x8] sm:$0xf]
  %v37 = vld [vmem:[%s1 + $0xc] sm:$0xf]
  %v38 = vld [vmem:[%s1 + $0x10] sm:$0xf]
  %v39 = vld [vmem:[%s1 + $0x14] sm:$0xf]
  %v40 = vld [vmem:[%s1 + $0x18] sm:$0xf]
  %v41 = vld [vmem:[%s1 + $0x1c] sm:$0xf]
  %v42 = vld [vmem:[%s1 + $0x20] sm:$0xf]
  %v43 = vld [vmem:[%s1 + $0x24] sm:$0xf]
  %v44 = vld [vmem:[%s1 + $0x28] sm:$0xf]
  %v45 = vld [vmem:[%s1 + $0x2c] sm:$0xf]
  %v46 = vld [vmem:[%s1 + $0x30] sm:$0xf]
  %v47 = vld [vmem:[%s1 + $0x34] sm:$0xf]
  %v48 = vld [vmem:[%s1 + $0x38] sm:$0xf]
  %v49 = vld [vmem:[%s1 + $0x3c] sm:$0xf]
  %v54 = vunpack.c.l.b16 %v30
  %v55 = vunpack.c.l.b16 %v31
  %v56 = vunpack.c.l.b16 %v32
  %v57 = vunpack.c.l.b16 %v33
  %v58 = vpack.c.b16 %v55, %v54
  %v59 = vpack.c.b16 %v57, %v56
  %v78 = vunpack.c.l.b16 %v34
  %v79 = vunpack.c.l.b16 %v35
  %v80 = vunpack.c.l.b16 %v36
  %v81 = vunpack.c.l.b16 %v37
  %v82 = vunpack.c.l.b16 %v38
  %v83 = vunpack.c.l.b16 %v39
  %v84 = vunpack.c.l.b16 %v40
  %v85 = vunpack.c.l.b16 %v41
  %v86 = vunpack.c.l.b16 %v42
  %v87 = vunpack.c.l.b16 %v43
  %v88 = vunpack.c.l.b16 %v44
  %v89 = vunpack.c.l.b16 %v45
  %v90 = vunpack.c.l.b16 %v46
  %v91 = vunpack.c.l.b16 %v47
  %v92 = vunpack.c.l.b16 %v48
  %v93 = vunpack.c.l.b16 %v49
  %v94 = vpack.c.b16 %v79, %v78
  %v95 = vpack.c.b16 %v81, %v80
  %v96 = vpack.c.b16 %v83, %v82
  %v97 = vpack.c.b16 %v85, %v84
  %v98 = vpack.c.b16 %v87, %v86
  %v99 = vpack.c.b16 %v89, %v88
  %v100 = vpack.c.b16 %v91, %v90
  %v101 = vpack.c.b16 %v93, %v92
  %110 = vmatprep.subr.bf16.mxu0 0
  %111 = vmatpush1.bf16.msra.mxu0 %v94
  %112 = vmatprep.subr.bf16.mxu0 0
  %113 = vmatpush1.bf16.msra.mxu0 %v95
  %114 = vmatprep.subr.bf16.mxu0 0
  %115 = vmatpush1.bf16.msra.mxu0 %v96
  %116 = vmatprep.subr.bf16.mxu0 0
  %117 = vmatpush1.bf16.msra.mxu0 %v97
  %118 = vmatprep.subr.bf16.mxu0 0
  %119 = vmatpush1.bf16.msra.mxu0 %v98
  %120 = vmatprep.subr.bf16.mxu0 0
  %121 = vmatpush1.bf16.msra.mxu0 %v99
  %122 = vmatprep.subr.bf16.mxu0 0
  %123 = vmatpush1.bf16.msra.mxu0 %v100
  %124 = vmatprep.subr.bf16.mxu0 0
  %125 = vmatpush1.bf16.msra.mxu0 %v101
  %126 = vmatprep.subr.bf16.mxu0 0
  %127 = vmatpush1.bf16.msra.mxu0 0
  %128 = vmatprep.subr.bf16.mxu0 0
  %129 = vmatpush1.bf16.msra.mxu0 0
  %130 = vmatprep.subr.bf16.mxu0 0
  %131 = vmatpush1.bf16.msra.mxu0 0
  %132 = vmatprep.subr.bf16.mxu0 0
  %133 = vmatpush1.bf16.msra.mxu0 0
  %134 = vmatprep.subr.bf16.mxu0 0
  %135 = vmatpush1.bf16.msra.mxu0 0
  %136 = vmatprep.subr.bf16.mxu0 0
  %137 = vmatpush1.bf16.msra.mxu0 0
  %138 = vmatprep.subr.bf16.mxu0 0
  %139 = vmatpush1.bf16.msra.mxu0 0
  %140 = vmatprep.subr.bf16.mxu0 0
  %141 = vmatpush1.bf16.msra.mxu0 0
  %142 = vmatprep.mubr.bf16.mxu0 0
  %143 = vmatmul.mubr.bf16.gmra.mrb[0].mxu0 %v58
  %v144 = vpop.f32.mrb[0].mxu0
  %v145 = vadd.f32 0.0, %v144
  %v146 = vpop.f32.mrb[0].mxu0
  %v147 = vpop.f32.mrb[0].mxu0
  %v148 = vadd.f32 0.0, %v147
  %v149 = vpop.f32.mrb[0].mxu0
  %150 = vmatprep.mubr.bf16.mxu0 0
  %151 = vmatmul.mubr.bf16.gmra.mrb[0].mxu0 %v59
  %v152 = vpop.f32.mrb[0].mxu0
  %v153 = vadd.f32 0.0, %v152
  %v154 = vpop.f32.mrb[0].mxu0
  %v155 = vpop.f32.mrb[0].mxu0
  %v156 = vadd.f32 0.0, %v155
  %v157 = vpop.f32.mrb[0].mxu0
  %158 = vdwg.mxu0
  %v159 = vadd.f32 %v26, %v145
  %v160 = vadd.f32 %v27, %v148
  %v161 = vadd.f32 %v28, %v153
  %v162 = vadd.f32 %v29, %v156
  %163 = vst [vmem:[#allocation2] sm:$0xff] %v159
  %164 = vst [vmem:[#allocation2 + $0x8] sm:$0xff] %v160
  %165 = vst [vmem:[#allocation2 + $0x10] sm:$0xff] %v161
  %166 = vst [vmem:[#allocation2 + $0x18] sm:$0xff] %v162
  // Predicated region
  $region22: #{resnet_forward.15} parent=0 // pred_check
    %p167 = pneg %p18
  $region23: #{resnet_forward.15} parent=0 // pred_check_branch
    %169 = sbr.rel (%p167) target = $region25
  $region24: #{resnet_forward.15} parent=0 // pred_region
    %v170 = vld [vmem:[#allocation2] sm:$0xff]
    %v171 = vld [vmem:[#allocation2 + $0x8] sm:$0xff]
    %v172 = vld [vmem:[#allocation2 + $0x10] sm:$0xff]
    %v173 = vld [vmem:[#allocation2 + $0x18] sm:$0xff]
    %v174 = vld [vmem:[%s2] sm:$0x1]
    %v176 = vlaneseq
    %v177 = vshrl.u32 %v176, 7
    %v178 = vsub.s32 0, %v177
    %v179 = vrot.slane %v174, %v178
    %v181 = vmul.f32 %v170, %v179
    %v182 = vmul.f32 %v171, %v179
    %v183 = vmul.f32 %v172, %v179
    %v184 = vmul.f32 %v173, %v179
    %v185 = vld [vmem:[%s3] sm:$0x1]
    %v187 = vlaneseq
    %v188 = vshrl.u32 %v187, 7
    %v189 = vsub.s32 0, %v188
    %v190 = vrot.slane %v185, %v189
    %v192 = vadd.f32 %v181, %v190
    %v193 = vadd.f32 %v182, %v190
    %v194 = vadd.f32 %v183, %v190
    %v195 = vadd.f32 %v184, %v190
    %v196 = vpack.c.bf16 %v193, %v192
    %v197 = vpack.c.bf16 %v195, %v194
    %v200 = vunpack.c.l.b16 %v196
    %v201 = vunpack.c.h.b16 %v196
    %v202 = vunpack.c.l.b16 %v197
    %v203 = vunpack.c.h.b16 %v197
    %v204 = vpack.c.b16 %v200, %v200
    %v205 = vpack.c.b16 %v201, %v201
    %v206 = vpack.c.b16 %v202, %v202
    %v207 = vpack.c.b16 %v203, %v203
    %212 = vst [vmem:[%s4] sm:$0xf] %v204
    %213 = vst [vmem:[%s4 + $0x4] sm:$0xf] %v205
    %214 = vst [vmem:[%s4 + $0x8] sm:$0xf] %v206
    %215 = vst [vmem:[%s4 + $0xc] sm:$0xf] %v207
  $region25: #{resnet_forward.15} parent=0 // pred_fallthru
    _
  // Predicated region
  $region26: #{resnet_forward.15} parent=0 // pred_check
    _
  $region27: #{resnet_forward.15} parent=0 // pred_check_branch
    %217 = sbr.rel (0) target = $region29
  $region28: #{resnet_forward.15} parent=0 // pred_region
    _
  $region29: #{resnet_forward.15} parent=0 // pred_fallthru
    _
  // Predicated region
  $region30: #{resnet_forward.15} parent=0 // pred_check
    _
  $region31: #{resnet_forward.15} parent=0 // pred_check_branch
    %219 = sbr.rel (0) target = $region33
  $region32: #{resnet_forward.15} parent=0 // pred_region
    _
  $region33: #{resnet_forward.15} parent=0 // pred_fallthru
    _

// kernel: resnet_forward.17
$region0: #{resnet_forward.17}
  #allocation0 [shape = 'u32[]', space=smem, size = 0x4, offset = 0x4, fixed_abs, tag = 'smem constant byte address 0x4 - core index']
  #allocation1 [shape = 'u32[144,128]{1,0:T(1,128)}', space=vmem, size = 0x12000, scoped, tag = 'internal scratch']
  #allocation2 [shape = 'f32[32,128]{1,0:T(8,128)}', space=vmem, size = 0x4000, scoped, tag = 'scratch operand']
  %s0 = inlined_call_operand.vmem [shape: bf16[32,1280], index: 0, kind: input, shape index: {}]
  %s1 = inlined_call_operand.vmem [shape: bf16[1280,128], index: 1, kind: input, shape index: {}]
  %s2 = inlined_call_operand.vmem [shape: f32[1,128], index: 2, kind: input, shape index: {}]
  %s3 = inlined_call_operand.vmem [shape: f32[1,128], index: 3, kind: input, shape index: {}]
  %s4 = inlined_call_operand.vmem [shape: bf16[32,128], index: 4, kind: input, shape index: {}]
  %s5 = inlined_call_operand.vmem [shape: bf16[32,128], index: 5, kind: output, shape index: {}]
  %s6 = sld [smem:[#allocation0]]
  $region99: #{resnet_forward.17} parent=0
    _
  %s8 = ssub.s32 1, %s6
  %s9 = scalar_select 0, %s8, %s6
  $region1: #{resnet_forward.17} parent=0
    #allocation3 [shape = 'u8[32768]{0}', space=vmem, size = 0x8000, scoped, tag = 'input window, operand 0']
    loop: start=0, step=1, limit=7
    $region2: #{resnet_forward.17} parent=1 // loop_pre_header
      _
    $region3: #{resnet_forward.17} parent=1 // loop_header
      %s11 = sphi 0, %s15
      %p12 = scmp.ge.s32.totalorder %s11, 7
      %s18 = sphi 0, %s37
      %s19 = sphi 0, %s33
      %s20 = sphi 0, %s29
      %s21 = sphi 0, %s18
      %s22 = sphi 0, %s19
      %s23 = sphi 0, %s20
      %s24 = sphi 0, %s21
      %s25 = sphi 0, %s22
      %s26 = sphi 0, %s23
      %s42 = sphi 0, %s44
      %s45 = sphi 0, %s42
      %s46 = sphi 0, %s45
      %s62 = sphi 0, %s46
      %s70 = sphi 0, %s72
      %s73 = sphi 0, %s70
      %s74 = sphi 0, %s73
      %s90 = sphi 0, %s74
      %s96 = sphi 0, %s98
      %s99 = sphi 0, %s96
      %s100 = sphi 0, %s99
      %s116 = sphi 0, %s100
      %s122 = sphi 0, %s124
      %s125 = sphi 0, %s122
      %s126 = sphi 0, %s125
      %s142 = sphi 0, %s126
      %s150 = sphi 0, %s152
      %s153 = sphi 0, %s150
      %s154 = sphi 0, %s153
      %s170 = sphi 0, %s154
      %s178 = sphi 0, %s180
      %s181 = sphi 0, %s178
      %s182 = sphi 0, %s181
      %s198 = sphi 0, %s182
    $region4: #{resnet_forward.17} parent=1 // loop_header_branch
      %14 = sbr.rel (%p12) target = $region8
    $region5: #{resnet_forward.17} parent=1 // loop_body
      %s16 = ssub.s32 %s11, 1
      %s17 = ssub.s32 %s11, 2
      %s27 = sadd.s32 1, %s20
      %p28 = scmp.ge.s32.totalorder %s27, 5
      %s29 = scalar_select %p28, 0, %s27
      %s30 = sadd.s32 1, %s19
      %s31 = scalar_select %p28, %s30, %s19
      %p32 = scmp.ge.s32.totalorder %s31, 1
      %s33 = scalar_select %p32, 0, %s31
      %s34 = sadd.s32 1, %s18
      %s35 = scalar_select %p32, %s34, %s18
      %p36 = scmp.ge.s32.totalorder %s35, 1
      %s37 = scalar_select %p36, 0, %s35
      %s38 = ssub.s32 %s18, %s37
      %s39 = ssub.s32 %s20, %s29
      %s40 = sor.u32 %s38, %s39
      %p41 = scmp.eq.s32.totalorder %s40, 0
      %s43 = sadd.s32 %s42, 1
      %s44 = scalar_select %p41, %s42, %s43
      %p47 = pneg %p41
      %p48 = scmp.eq.s32.totalorder %s11, 4
      %p49 = por %p47, %p48
      %p50 = scmp.ne.s32.totalorder %s42, %s45
      %p51 = scmp.eq.s32.totalorder %s11, 0
      %p52 = por %p50, %p51
      %p53 = scmp.ne.s32.totalorder %s42, %s45
      %p54 = scmp.eq.s32.totalorder %s16, 4
      %p55 = por %p53, %p54
      %p56 = scmp.ne.s32.totalorder %s45, %s46
      %p57 = scmp.eq.s32.totalorder %s16, 0
      %p58 = por %p56, %p57
      %p59 = scmp.ne.s32.totalorder %s45, %s46
      %p60 = scmp.eq.s32.totalorder %s17, 4
      %p61 = por %p59, %p60
      %p63 = scmp.ne.s32.totalorder %s46, %s62
      %p64 = scmp.eq.s32.totalorder %s17, 0
      %p65 = por %p63, %p64
      %s66 = ssub.s32 %s20, %s29
      %s67 = ssub.s32 %s19, %s33
      %s68 = sor.u32 %s66, %s67
      %p69 = scmp.eq.s32.totalorder %s68, 0
      %s71 = sadd.s32 %s70, 1
      %s72 = scalar_select %p69, %s70, %s71
      %p75 = pneg %p69
      %p76 = scmp.eq.s32.totalorder %s11, 4
      %p77 = por %p75, %p76
      %p78 = scmp.ne.s32.totalorder %s70, %s73
      %p79 = scmp.eq.s32.totalorder %s11, 0
      %p80 = por %p78, %p79
      %p81 = scmp.ne.s32.totalorder %s70, %s73
      %p82 = scmp.eq.s32.totalorder %s16, 4
      %p83 = por %p81, %p82
      %p84 = scmp.ne.s32.totalorder %s73, %s74
      %p85 = scmp.eq.s32.totalorder %s16, 0
      %p86 = por %p84, %p85
      %p87 = scmp.ne.s32.totalorder %s73, %s74
      %p88 = scmp.eq.s32.totalorder %s17, 4
      %p89 = por %p87, %p88
      %p91 = scmp.ne.s32.totalorder %s74, %s90
      %p92 = scmp.eq.s32.totalorder %s17, 0
      %p93 = por %p91, %p92
      %s94 = ssub.s32 %s19, %s33
      %p95 = scmp.eq.s32.totalorder %s94, 0
      %s97 = sadd.s32 %s96, 1
      %s98 = scalar_select %p95, %s96, %s97
      %p101 = pneg %p95
      %p102 = scmp.eq.s32.totalorder %s11, 4
      %p103 = por %p101, %p102
      %p104 = scmp.ne.s32.totalorder %s96, %s99
      %p105 = scmp.eq.s32.totalorder %s11, 0
      %p106 = por %p104, %p105
      %p107 = scmp.ne.s32.totalorder %s96, %s99
      %p108 = scmp.eq.s32.totalorder %s16, 4
      %p109 = por %p107, %p108
      %p110 = scmp.ne.s32.totalorder %s99, %s100
      %p111 = scmp.eq.s32.totalorder %s16, 0
      %p112 = por %p110, %p111
      %p113 = scmp.ne.s32.totalorder %s99, %s100
      %p114 = scmp.eq.s32.totalorder %s17, 4
      %p115 = por %p113, %p114
      %p117 = scmp.ne.s32.totalorder %s100, %s116
      %p118 = scmp.eq.s32.totalorder %s17, 0
      %p119 = por %p117, %p118
      %s120 = ssub.s32 %s19, %s33
      %p121 = scmp.eq.s32.totalorder %s120, 0
      %s123 = sadd.s32 %s122, 1
      %s124 = scalar_select %p121, %s122, %s123
      %p127 = pneg %p121
      %p128 = scmp.eq.s32.totalorder %s11, 4
      %p129 = por %p127, %p128
      %p130 = scmp.ne.s32.totalorder %s122, %s125
      %p131 = scmp.eq.s32.totalorder %s11, 0
      %p132 = por %p130, %p131
      %p133 = scmp.ne.s32.totalorder %s122, %s125
      %p134 = scmp.eq.s32.totalorder %s16, 4
      %p135 = por %p133, %p134
      %p136 = scmp.ne.s32.totalorder %s125, %s126
      %p137 = scmp.eq.s32.totalorder %s16, 0
      %p138 = por %p136, %p137
      %p139 = scmp.ne.s32.totalorder %s125, %s126
      %p140 = scmp.eq.s32.totalorder %s17, 4
      %p141 = por %p139, %p140
      %p143 = scmp.ne.s32.totalorder %s126, %s142
      %p144 = scmp.eq.s32.totalorder %s17, 0
      %p145 = por %p143, %p144
      %s146 = ssub.s32 %s18, %s37
      %s147 = ssub.s32 %s19, %s33
      %s148 = sor.u32 %s146, %s147
      %p149 = scmp.eq.s32.totalorder %s148, 0
      %s151 = sadd.s32 %s150, 1
      %s152 = scalar_select %p149, %s150, %s151
      %p155 = pneg %p149
      %p156 = scmp.eq.s32.totalorder %s11, 4
      %p157 = por %p155, %p156
      %p158 = scmp.ne.s32.totalorder %s150, %s153
      %p159 = scmp.eq.s32.totalorder %s11, 0
      %p160 = por %p158, %p159
      %p161 = scmp.ne.s32.totalorder %s150, %s153
      %p162 = scmp.eq.s32.totalorder %s16, 4
      %p163 = por %p161, %p162
      %p164 = scmp.ne.s32.totalorder %s153, %s154
      %p165 = scmp.eq.s32.totalorder %s16, 0
      %p166 = por %p164, %p165
      %p167 = scmp.ne.s32.totalorder %s153, %s154
      %p168 = scmp.eq.s32.totalorder %s17, 4
      %p169 = por %p167, %p168
      %p171 = scmp.ne.s32.totalorder %s154, %s170
      %p172 = scmp.eq.s32.totalorder %s17, 0
      %p173 = por %p171, %p172
      %s174 = ssub.s32 %s18, %s37
      %s175 = ssub.s32 %s19, %s33
      %s176 = sor.u32 %s174, %s175
      %p177 = scmp.eq.s32.totalorder %s176, 0
      %s179 = sadd.s32 %s178, 1
      %s180 = scalar_select %p177, %s178, %s179
      %p183 = pneg %p177
      %p184 = scmp.eq.s32.totalorder %s11, 4
      %p185 = por %p183, %p184
      %p186 = scmp.ne.s32.totalorder %s178, %s181
      %p187 = scmp.eq.s32.totalorder %s11, 0
      %p188 = por %p186, %p187
      %p189 = scmp.ne.s32.totalorder %s178, %s181
      %p190 = scmp.eq.s32.totalorder %s16, 4
      %p191 = por %p189, %p190
      %p192 = scmp.ne.s32.totalorder %s181, %s182
      %p193 = scmp.eq.s32.totalorder %s16, 0
      %p194 = por %p192, %p193
      %p195 = scmp.ne.s32.totalorder %s181, %s182
      %p196 = scmp.eq.s32.totalorder %s17, 4
      %p197 = por %p195, %p196
      %p199 = scmp.ne.s32.totalorder %s182, %s198
      %p200 = scmp.eq.s32.totalorder %s17, 0
      %p201 = por %p199, %p200
      %p202 = scmp.le.s32.totalorder 1, %s11
      %p203 = scmp.lt.s32.totalorder %s11, 6
      %p204 = pnand %p202, %p203
      %p205 = pneg %p204
      // Predicated region
      $region9: #{resnet_forward.17} parent=5 // pred_check
        _
      $region10: #{resnet_forward.17} parent=5 // pred_check_branch
        %207 = sbr.rel (%p204) target = $region12
      $region11: #{resnet_forward.17} parent=5 // pred_region
        %s208 = ssub.s32 %s11, 1
        // Predicated region
        $region13: #{resnet_forward.17} parent=11 // pred_check
          %p209 = pneg %p112
        $region14: #{resnet_forward.17} parent=11 // pred_check_branch
          %211 = sbr.rel (%p209) target = $region16
        $region15: #{resnet_forward.17} parent=11 // pred_region
          %p212 = scmp.lt.s32.totalorder %s22, 0
          %s213 = scalar_select %p212, %s22, 0
          %s214 = scalar_lea.vmem %s2, %s213
        $region16: #{resnet_forward.17} parent=11 // pred_fallthru
          _
        // Predicated region
        $region17: #{resnet_forward.17} parent=11 // pred_check
          %p215 = pneg %p138
        $region18: #{resnet_forward.17} parent=11 // pred_check_branch
          %217 = sbr.rel (%p215) target = $region20
        $region19: #{resnet_forward.17} parent=11 // pred_region
          %p218 = scmp.lt.s32.totalorder %s22, 0
          %s219 = scalar_select %p218, %s22, 0
          %s220 = scalar_lea.vmem %s3, %s219
        $region20: #{resnet_forward.17} parent=11 // pred_fallthru
          _
        // Predicated region
        $region21: #{resnet_forward.17} parent=11 // pred_check
          %p221 = pneg %p166
        $region22: #{resnet_forward.17} parent=11 // pred_check_branch
          %223 = sbr.rel (%p221) target = $region24
        $region23: #{resnet_forward.17} parent=11 // pred_region
          %s224 = smul.u32 4, %s21
          %p225 = scmp.lt.s32.totalorder %s224, 3
          %s226 = scalar_select %p225, %s224, 3
          %p227 = scmp.lt.s32.totalorder %s22, 0
          %s228 = scalar_select %p227, %s22, 0
          %s229 = sadd.s32 %s228, %s226
          %s230 = smul.addr %s229, 4
          %s231 = scalar_lea.vmem %s4, %s230
          %s232 = smul.u32 4, %s21
        $region24: #{resnet_forward.17} parent=11 // pred_fallthru
          _
      $region12: #{resnet_forward.17} parent=5 // pred_fallthru
        _
      %p233 = scmp.lt.s32.totalorder %s11, 5
      // Predicated region
      $region25: #{resnet_forward.17} parent=5 // pred_check
        %p234 = pneg %p233
      $region26: #{resnet_forward.17} parent=5 // pred_check_branch
        %236 = sbr.rel (%p234) target = $region28
      $region27: #{resnet_forward.17} parent=5 // pred_region
        // Predicated region
        $region29: #{resnet_forward.17} parent=27 // pred_check
          %p237 = pneg %p52
        $region30: #{resnet_forward.17} parent=27 // pred_check_branch
          %239 = sbr.rel (%p237) target = $region32
        $region31: #{resnet_forward.17} parent=27 // pred_region
          %s240 = sand.u32 %s42, 1
          %s241 = sand.u32 %s42, 1
          %s242 = smul.addr %s241, 32
          %s243 = scalar_lea.vmem [#allocation3], %s242
          %s244 = smul.u32 4, %s18
          %s245 = smul.u32 2, %s20
          %s246 = smul.addr %s244, 10
          %s247 = sadd.s32 %s245, %s246
          %s248 = smul.addr %s247, 4
          %s249 = scalar_lea.vmem %s0, %s248
          // Predicated region
          $region33: #{resnet_forward.17} parent=31 // pred_check
            _
          $region34: #{resnet_forward.17} parent=31 // pred_check_branch
            %251 = sbr.rel (0) target = $region36
          $region35: #{resnet_forward.17} parent=31 // pred_region
            // Predicated region
            $region37: #{resnet_forward.17} parent=35 // pred_check
              _
            $region38: #{resnet_forward.17} parent=35 // pred_check_branch
              %253 = sbr.rel (0) target = $region40
            $region39: #{resnet_forward.17} parent=35 // pred_region
              // Predicated region
              $region52: #{resnet_forward.17} parent=39 // pred_check
                _
              $region53: #{resnet_forward.17} parent=39 // pred_check_branch
                %274 = sbr.rel (0) target = $region55
              $region54: #{resnet_forward.17} parent=39 // pred_region
                loop: start=0, step=1, limit=1
                $region56: #{resnet_forward.17} parent=54 // loop_pre_header
                  _
                $region57: #{resnet_forward.17} parent=54 // loop_header
                  %s276 = sphi 0, %s280
                  %p277 = scmp.ge.s32.totalorder %s276, 1
                  %s281 = sphi %s249, %s249
                  %s282 = sphi %s243, %s243
                $region58: #{resnet_forward.17} parent=54 // loop_header_branch
                  %279 = sbr.rel (%p277) target = $region62
                $region59: #{resnet_forward.17} parent=54 // loop_body
                  %v283 = vld [vmem:[%s281] sm:$0xff]
                  %284 = vst [vmem:[%s282] sm:$0xff] %v283
                  %v285 = vld [vmem:[%s281 + $0x28] sm:$0xff]
                  %286 = vst [vmem:[%s282 + $0x8] sm:$0xff] %v285
                  %v287 = vld [vmem:[%s281 + $0x50] sm:$0xff]
                  %288 = vst [vmem:[%s282 + $0x10] sm:$0xff] %v287
                  %v289 = vld [vmem:[%s281 + $0x78] sm:$0xff]
                  %290 = vst [vmem:[%s282 + $0x18] sm:$0xff] %v289
                $region60: #{resnet_forward.17} parent=54 // loop_footer
                  %s280 = sadd.s32 1, %s276
                $region61: #{resnet_forward.17} parent=54 // loop_footer_branch
                  %275 = sbr.rel target = $region57
                $region62: #{resnet_forward.17} parent=54 // loop_exit
                  _
              $region55: #{resnet_forward.17} parent=39 // pred_fallthru
                _
              // Predicated region
              $region63: #{resnet_forward.17} parent=39 // pred_check
                _
              $region64: #{resnet_forward.17} parent=39 // pred_check_branch
                %292 = sbr.rel target = $region66
              $region65: #{resnet_forward.17} parent=39 // pred_region
                _
              $region66: #{resnet_forward.17} parent=39 // pred_fallthru
                _
            $region40: #{resnet_forward.17} parent=35 // pred_fallthru
              _
            // Predicated region
            $region41: #{resnet_forward.17} parent=35 // pred_check
              _
            $region42: #{resnet_forward.17} parent=35 // pred_check_branch
              %255 = sbr.rel target = $region44
            $region43: #{resnet_forward.17} parent=35 // pred_region
              loop: start=0, step=1, limit=1
              $region45: #{resnet_forward.17} parent=43 // loop_pre_header
                _
              $region46: #{resnet_forward.17} parent=43 // loop_header
                %s258 = sphi 0, %s262
                %p259 = scmp.ge.s32.totalorder %s258, 1
                %s263 = sphi %s249, %s249
                %s264 = sphi %s243, %s243
              $region47: #{resnet_forward.17} parent=43 // loop_header_branch
                %261 = sbr.rel (%p259) target = $region51
              $region48: #{resnet_forward.17} parent=43 // loop_body
                %v265 = vld [vmem:[%s263] sm:$0xff]
                %266 = vst [vmem:[%s264] sm:$0xff] %v265
                %v267 = vld [vmem:[%s263 + $0x28] sm:$0xff]
                %268 = vst [vmem:[%s264 + $0x8] sm:$0xff] %v267
                %v269 = vld [vmem:[%s263 + $0x50] sm:$0xff]
                %270 = vst [vmem:[%s264 + $0x10] sm:$0xff] %v269
                %v271 = vld [vmem:[%s263 + $0x78] sm:$0xff]
                %272 = vst [vmem:[%s264 + $0x18] sm:$0xff] %v271
              $region49: #{resnet_forward.17} parent=43 // loop_footer
                %s262 = sadd.s32 1, %s258
              $region50: #{resnet_forward.17} parent=43 // loop_footer_branch
                %257 = sbr.rel target = $region46
              $region51: #{resnet_forward.17} parent=43 // loop_exit
                _
            $region44: #{resnet_forward.17} parent=35 // pred_fallthru
              _
          $region36: #{resnet_forward.17} parent=31 // pred_fallthru
            _
          %293 = vnop
        $region32: #{resnet_forward.17} parent=27 // pred_fallthru
          _
        // Predicated region
        $region67: #{resnet_forward.17} parent=27 // pred_check
          %p294 = pneg %p80
        $region68: #{resnet_forward.17} parent=27 // pred_check_branch
          %296 = sbr.rel (%p294) target = $region70
        $region69: #{resnet_forward.17} parent=27 // pred_region
          %s297 = smul.u32 32, %s20
          %p298 = scmp.lt.s32.totalorder %s297, 159
          %s299 = scalar_select %p298, %s297, 159
          %p300 = scmp.lt.s32.totalorder %s19, 0
          %s301 = scalar_select %p300, %s19, 0
          %s302 = sadd.s32 %s301, %s299
          %s303 = smul.addr %s302, 4
          %s304 = scalar_lea.vmem %s1, %s303
          %s305 = smul.u32 32, %s20
        $region70: #{resnet_forward.17} parent=27 // pred_fallthru
          _
      $region28: #{resnet_forward.17} parent=5 // pred_fallthru
        _
      %p306 = scmp.le.s32.totalorder 1, %s11
      %p307 = scmp.lt.s32.totalorder %s11, 6
      %p308 = pnand %p306, %p307
      %p309 = pneg %p308
      // Predicated region
      $region71: #{resnet_forward.17} parent=5 // pred_check
        _
      $region72: #{resnet_forward.17} parent=5 // pred_check_branch
        %311 = sbr.rel (%p308) target = $region74
      $region73: #{resnet_forward.17} parent=5 // pred_region
        %s312 = ssub.s32 %s11, 1
        %s313 = sand.u32 %s45, 1
        %s314 = sand.u32 %s45, 1
        %s315 = smul.addr %s314, 32
        %s316 = scalar_lea.vmem [#allocation3], %s315
        // Predicated region
        $region75: #{resnet_forward.17} parent=73 // pred_check
          %p317 = pneg %p58
        $region76: #{resnet_forward.17} parent=73 // pred_check_branch
          %319 = sbr.rel (%p317) target = $region78
        $region77: #{resnet_forward.17} parent=73 // pred_region
          _
        $region78: #{resnet_forward.17} parent=73 // pred_fallthru
          _
        %s320 = sand.u32 %s45, 1
        %s321 = sand.u32 %s45, 1
        %s322 = smul.addr %s321, 32
        %s323 = scalar_lea.vmem [#allocation3], %s322
        %p324 = pneg %p58
        %p325 = pneg %p55
        %s326 = smul.u32 32, %s23
        %p327 = scmp.lt.s32.totalorder %s326, 159
        %s328 = scalar_select %p327, %s326, 159
        %p329 = scmp.lt.s32.totalorder %s22, 0
        %s330 = scalar_select %p329, %s22, 0
        %s331 = sadd.s32 %s330, %s328
        %s332 = smul.addr %s331, 4
        %s333 = scalar_lea.vmem %s1, %s332
        %p334 = pneg %p86
        %p335 = pneg %p83
        %p336 = scmp.lt.s32.totalorder %s22, 0
        %s337 = scalar_select %p336, %s22, 0
        %s338 = scalar_lea.vmem %s2, %s337
        %p339 = pneg %p112
        %p340 = pneg %p109
        %p341 = scmp.lt.s32.totalorder %s22, 0
        %s342 = scalar_select %p341, %s22, 0
        %s343 = scalar_lea.vmem %s3, %s342
        %p344 = pneg %p138
        %p345 = pneg %p135
        %s346 = smul.u32 4, %s21
        %p347 = scmp.lt.s32.totalorder %s346, 3
        %s348 = scalar_select %p347, %s346, 3
        %p349 = scmp.lt.s32.totalorder %s22, 0
        %s350 = scalar_select %p349, %s22, 0
        %s351 = sadd.s32 %s350, %s348
        %s352 = smul.addr %s351, 4
        %s353 = scalar_lea.vmem %s4, %s352
        %p354 = pneg %p166
        %p355 = pneg %p163
        %p356 = pneg %p194
        %p357 = pneg %p191
        %s358 = smul.u32 4, %s21
        %p359 = scmp.lt.s32.totalorder %s358, 3
        %s360 = scalar_select %p359, %s358, 3
        %p361 = scmp.lt.s32.totalorder %s22, 0
        %s362 = scalar_select %p361, %s22, 0
        %s363 = sadd.s32 %s362, %s360
        %s364 = smul.addr %s363, 4
        %s365 = scalar_lea.vmem %s5, %s364
        %s366 = smul.u32 4, %s21
        %s367 = smul.u32 2, %s23
        %s368 = smul.u32 32, %s23
        %p369 = scmp.lt.s32.totalorder %s368, 159
        %s370 = scalar_select %p369, %s368, 159
        %p371 = scmp.lt.s32.totalorder %s22, 0
        %s372 = scalar_select %p371, %s22, 0
        %s373 = sadd.s32 %s372, %s370
        %s374 = smul.addr %s373, 4
        %s375 = scalar_lea.vmem %s1, %s374
        %s376 = smul.u32 32, %s23
        %p377 = scmp.lt.s32.totalorder %s22, 0
        %s378 = scalar_select %p377, %s22, 0
        %s379 = scalar_lea.vmem %s2, %s378
        %p380 = scmp.lt.s32.totalorder %s22, 0
        %s381 = scalar_select %p380, %s22, 0
        %s382 = scalar_lea.vmem %s3, %s381
        %s383 = smul.u32 4, %s21
        %p384 = scmp.lt.s32.totalorder %s383, 3
        %s385 = scalar_select %p384, %s383, 3
        %p386 = scmp.lt.s32.totalorder %s22, 0
        %s387 = scalar_select %p386, %s22, 0
        %s388 = sadd.s32 %s387, %s385
        %s389 = smul.addr %s388, 4
        %s390 = scalar_lea.vmem %s4, %s389
        %s391 = smul.u32 4, %s21
        %s392 = smul.u32 4, %s21
        %p393 = scmp.lt.s32.totalorder %s392, 3
        %s394 = scalar_select %p393, %s392, 3
        %p395 = scmp.lt.s32.totalorder %s22, 0
        %s396 = scalar_select %p395, %s22, 0
        %s397 = sadd.s32 %s396, %s394
        %s398 = smul.addr %s397, 4
        %s399 = scalar_lea.vmem %s5, %s398
        %s400 = smul.u32 4, %s21
        %p402 = scmp.eq.s32.totalorder %s23, 0
        // Predicated region
        $region79: #{resnet_forward.17} parent=73 // pred_check
          %p403 = pneg %p402
        $region80: #{resnet_forward.17} parent=73 // pred_check_branch
          %405 = sbr.rel (%p403) target = $region82
        $region81: #{resnet_forward.17} parent=73 // pred_region
          %406 = vst [vmem:[#allocation2] sm:$0xff] 0.0
          %407 = vst [vmem:[#allocation2 + $0x8] sm:$0xff] 0.0
          %408 = vst [vmem:[#allocation2 + $0x10] sm:$0xff] 0.0
          %409 = vst [vmem:[#allocation2 + $0x18] sm:$0xff] 0.0
        $region82: #{resnet_forward.17} parent=73 // pred_fallthru
          _
        %v410 = vld [vmem:[#allocation2] sm:$0xff]
        %v411 = vld [vmem:[#allocation2 + $0x8] sm:$0xff]
        %v412 = vld [vmem:[#allocation2 + $0x10] sm:$0xff]
        %v413 = vld [vmem:[#allocation2 + $0x18] sm:$0xff]
        %v414 = vld [vmem:[%s316] sm:$0xff]
        %v415 = vld [vmem:[%s316 + $0x8] sm:$0xff]
        %v416 = vld [vmem:[%s316 + $0x10] sm:$0xff]
        %v417 = vld [vmem:[%s316 + $0x18] sm:$0xff]
        %v418 = vld [vmem:[%s375] sm:$0xf]
        %v419 = vld [vmem:[%s375 + $0x4] sm:$0xf]
        %v420 = vld [vmem:[%s375 + $0x8] sm:$0xf]
        %v421 = vld [vmem:[%s375 + $0xc] sm:$0xf]
        %v422 = vld [vmem:[%s375 + $0x10] sm:$0xf]
        %v423 = vld [vmem:[%s375 + $0x14] sm:$0xf]
        %v424 = vld [vmem:[%s375 + $0x18] sm:$0xf]
        %v425 = vld [vmem:[%s375 + $0x1c] sm:$0xf]
        %v426 = vld [vmem:[%s375 + $0x20] sm:$0xf]
        %v427 = vld [vmem:[%s375 + $0x24] sm:$0xf]
        %v428 = vld [vmem:[%s375 + $0x28] sm:$0xf]
        %v429 = vld [vmem:[%s375 + $0x2c] sm:$0xf]
        %v430 = vld [vmem:[%s375 + $0x30] sm:$0xf]
        %v431 = vld [vmem:[%s375 + $0x34] sm:$0xf]
        %v432 = vld [vmem:[%s375 + $0x38] sm:$0xf]
        %v433 = vld [vmem:[%s375 + $0x3c] sm:$0xf]
        %v434 = vld [vmem:[%s375 + $0x40] sm:$0xf]
        %v435 = vld [vmem:[%s375 + $0x44] sm:$0xf]
        %v436 = vld [vmem:[%s375 + $0x48] sm:$0xf]
        %v437 = vld [vmem:[%s375 + $0x4c] sm:$0xf]
        %v438 = vld [vmem:[%s375 + $0x50] sm:$0xf]
        %v439 = vld [vmem:[%s375 + $0x54] sm:$0xf]
        %v440 = vld [vmem:[%s375 + $0x58] sm:$0xf]
        %v441 = vld [vmem:[%s375 + $0x5c] sm:$0xf]
        %v442 = vld [vmem:[%s375 + $0x60] sm:$0xf]
        %v443 = vld [vmem:[%s375 + $0x64] sm:$0xf]
        %v444 = vld [vmem:[%s375 + $0x68] sm:$0xf]
        %v445 = vld [vmem:[%s375 + $0x6c] sm:$0xf]
        %v446 = vld [vmem:[%s375 + $0x70] sm:$0xf]
        %v447 = vld [vmem:[%s375 + $0x74] sm:$0xf]
        %v448 = vld [vmem:[%s375 + $0x78] sm:$0xf]
        %v449 = vld [vmem:[%s375 + $0x7c] sm:$0xf]
        %v454 = vunpack.c.l.b16 %v414
        %v455 = vunpack.c.h.b16 %v414
        %v456 = vunpack.c.l.b16 %v415
        %v457 = vunpack.c.h.b16 %v415
        %v458 = vunpack.c.l.b16 %v416
        %v459 = vunpack.c.h.b16 %v416
        %v460 = vunpack.c.l.b16 %v417
        %v461 = vunpack.c.h.b16 %v417
        %v462 = vpack.c.b16 %v456, %v454
        %v463 = vpack.c.b16 %v457, %v455
        %v464 = vpack.c.b16 %v460, %v458
        %v465 = vpack.c.b16 %v461, %v459
        %v502 = vunpack.c.l.b16 %v418
        %v503 = vunpack.c.l.b16 %v419
        %v504 = vunpack.c.l.b16 %v420
        %v505 = vunpack.c.l.b16 %v421
        %v506 = vunpack.c.l.b16 %v422
        %v507 = vunpack.c.l.b16 %v423
        %v508 = vunpack.c.l.b16 %v424
        %v509 = vunpack.c.l.b16 %v425
        %v510 = vunpack.c.l.b16 %v426
        %v511 = vunpack.c.l.b16 %v427
        %v512 = vunpack.c.l.b16 %v428
        %v513 = vunpack.c.l.b16 %v429
        %v514 = vunpack.c.l.b16 %v430
        %v515 = vunpack.c.l.b16 %v431
        %v516 = vunpack.c.l.b16 %v432
        %v517 = vunpack.c.l.b16 %v433
        %v518 = vunpack.c.l.b16 %v434
        %v519 = vunpack.c.l.b16 %v435
        %v520 = vunpack.c.l.b16 %v436
        %v521 = vunpack.c.l.b16 %v437
        %v522 = vunpack.c.l.b16 %v438
        %v523 = vunpack.c.l.b16 %v439
        %v524 = vunpack.c.l.b16 %v440
        %v525 = vunpack.c.l.b16 %v441
        %v526 = vunpack.c.l.b16 %v442
        %v527 = vunpack.c.l.b16 %v443
        %v528 = vunpack.c.l.b16 %v444
        %v529 = vunpack.c.l.b16 %v445
        %v530 = vunpack.c.l.b16 %v446
        %v531 = vunpack.c.l.b16 %v447
        %v532 = vunpack.c.l.b16 %v448
        %v533 = vunpack.c.l.b16 %v449
        %v534 = vpack.c.b16 %v503, %v502
        %v535 = vpack.c.b16 %v505, %v504
        %v536 = vpack.c.b16 %v507, %v506
        %v537 = vpack.c.b16 %v509, %v508
        %v538 = vpack.c.b16 %v511, %v510
        %v539 = vpack.c.b16 %v513, %v512
        %v540 = vpack.c.b16 %v515, %v514
        %v541 = vpack.c.b16 %v517, %v516
        %v542 = vpack.c.b16 %v519, %v518
        %v543 = vpack.c.b16 %v521, %v520
        %v544 = vpack.c.b16 %v523, %v522
        %v545 = vpack.c.b16 %v525, %v524
        %v546 = vpack.c.b16 %v527, %v526
        %v547 = vpack.c.b16 %v529, %v528
        %v548 = vpack.c.b16 %v531, %v530
        %v549 = vpack.c.b16 %v533, %v532
        %566 = vmatprep.subr.bf16.mxu0 0
        %567 = vmatpush1.bf16.msra.mxu0 %v534
        %568 = vmatprep.subr.bf16.mxu0 0
        %569 = vmatpush1.bf16.msra.mxu0 %v535
        %570 = vmatprep.subr.bf16.mxu0 0
        %571 = vmatpush1.bf16.msra.mxu0 %v536
        %572 = vmatprep.subr.bf16.mxu0 0
        %573 = vmatpush1.bf16.msra.mxu0 %v537
        %574 = vmatprep.subr.bf16.mxu0 0
        %575 = vmatpush1.bf16.msra.mxu0 %v538
        %576 = vmatprep.subr.bf16.mxu0 0
        %577 = vmatpush1.bf16.msra.mxu0 %v539
        %578 = vmatprep.subr.bf16.mxu0 0
        %579 = vmatpush1.bf16.msra.mxu0 %v540
        %580 = vmatprep.subr.bf16.mxu0 0
        %581 = vmatpush1.bf16.msra.mxu0 %v541
        %582 = vmatprep.subr.bf16.mxu0 0
        %583 = vmatpush1.bf16.msra.mxu0 %v542
        %584 = vmatprep.subr.bf16.mxu0 0
        %585 = vmatpush1.bf16.msra.mxu0 %v543
        %586 = vmatprep.subr.bf16.mxu0 0
        %587 = vmatpush1.bf16.msra.mxu0 %v544
        %588 = vmatprep.subr.bf16.mxu0 0
        %589 = vmatpush1.bf16.msra.mxu0 %v545
        %590 = vmatprep.subr.bf16.mxu0 0
        %591 = vmatpush1.bf16.msra.mxu0 %v546
        %592 = vmatprep.subr.bf16.mxu0 0
        %593 = vmatpush1.bf16.msra.mxu0 %v547
        %594 = vmatprep.subr.bf16.mxu0 0
        %595 = vmatpush1.bf16.msra.mxu0 %v548
        %596 = vmatprep.subr.bf16.mxu0 0
        %597 = vmatpush1.bf16.msra.mxu0 %v549
        %598 = vmatprep.mubr.bf16.mxu0 %v463
        %599 = vmatmul.mubr.bf16.gmra.mrb[0].mxu0 %v462
        %v600 = vpop.f32.mrb[0].mxu0
        %v601 = vadd.f32 0.0, %v600
        %v602 = vpop.f32.mrb[0].mxu0
        %v603 = vpop.f32.mrb[0].mxu0
        %v604 = vadd.f32 0.0, %v603
        %v605 = vpop.f32.mrb[0].mxu0
        %606 = vmatprep.mubr.bf16.mxu0 %v465
        %607 = vmatmul.mubr.bf16.gmra.mrb[0].mxu0 %v464
        %v608 = vpop.f32.mrb[0].mxu0
        %v609 = vadd.f32 0.0, %v608
        %v610 = vpop.f32.mrb[0].mxu0
        %v611 = vpop.f32.mrb[0].mxu0
        %v612 = vadd.f32 0.0, %v611
        %v613 = vpop.f32.mrb[0].mxu0
        %614 = vdwg.mxu0
        %v615 = vadd.f32 %v410, %v601
        %v616 = vadd.f32 %v411, %v604
        %v617 = vadd.f32 %v412, %v609
        %v618 = vadd.f32 %v413, %v612
        %619 = vst [vmem:[#allocation2] sm:$0xff] %v615
        %620 = vst [vmem:[#allocation2 + $0x8] sm:$0xff] %v616
        %621 = vst [vmem:[#allocation2 + $0x10] sm:$0xff] %v617
        %622 = vst [vmem:[#allocation2 + $0x18] sm:$0xff] %v618
        %p623 = scmp.eq.s32.totalorder %s23, 4
        // Predicated region
        $region83: #{resnet_forward.17} parent=73 // pred_check
          %p624 = pneg %p623
        $region84: #{resnet_forward.17} parent=73 // pred_check_branch
          %626 = sbr.rel (%p624) target = $region86
        $region85: #{resnet_forward.17} parent=73 // pred_region
          %v627 = vld [vmem:[#allocation2] sm:$0xff]
          %v628 = vld [vmem:[#allocation2 + $0x8] sm:$0xff]
          %v629 = vld [vmem:[#allocation2 + $0x10] sm:$0xff]
          %v630 = vld [vmem:[#allocation2 + $0x18] sm:$0xff]
          %v631 = vld [vmem:[%s379] sm:$0x1]
          %v633 = vlaneseq
          %v634 = vshrl.u32 %v633, 7
          %v635 = vsub.s32 0, %v634
          %v636 = vrot.slane %v631, %v635
          %v638 = vmul.f32 %v627, %v636
          %v639 = vmul.f32 %v628, %v636
          %v640 = vmul.f32 %v629, %v636
          %v641 = vmul.f32 %v630, %v636
          %v642 = vld [vmem:[%s382] sm:$0x1]
          %v644 = vlaneseq
          %v645 = vshrl.u32 %v644, 7
          %v646 = vsub.s32 0, %v645
          %v647 = vrot.slane %v642, %v646
          %v649 = vadd.f32 %v638, %v647
          %v650 = vadd.f32 %v639, %v647
          %v651 = vadd.f32 %v640, %v647
          %v652 = vadd.f32 %v641, %v647
          %v653 = vld [vmem:[%s390] sm:$0xf]
          %v654 = vld [vmem:[%s390 + $0x4] sm:$0xf]
          %v655 = vld [vmem:[%s390 + $0x8] sm:$0xf]
          %v656 = vld [vmem:[%s390 + $0xc] sm:$0xf]
          %v657 = vunpack.c.l.bf16 %v653
          %v658 = vunpack.c.l.bf16 %v654
          %v659 = vunpack.c.l.bf16 %v655
          %v660 = vunpack.c.l.bf16 %v656
          %v661 = vadd.f32 %v649, %v657
          %v662 = vadd.f32 %v650, %v658
          %v663 = vadd.f32 %v651, %v659
          %v664 = vadd.f32 %v652, %v660
          %v665 = vmax.f32 %v661, 0.0
          %v666 = vmax.f32 %v662, 0.0
          %v667 = vmax.f32 %v663, 0.0
          %v668 = vmax.f32 %v664, 0.0
          %v669 = vpack.c.bf16 %v666, %v665
          %v670 = vpack.c.bf16 %v668, %v667
          %v673 = vunpack.c.l.b16 %v669
          %v674 = vunpack.c.h.b16 %v669
          %v675 = vunpack.c.l.b16 %v670
          %v676 = vunpack.c.h.b16 %v670
          %v677 = vpack.c.b16 %v673, %v673
          %v678 = vpack.c.b16 %v674, %v674
          %v679 = vpack.c.b16 %v675, %v675
          %v680 = vpack.c.b16 %v676, %v676
          %685 = vst [vmem:[%s399] sm:$0xf] %v677
          %686 = vst [vmem:[%s399 + $0x4] sm:$0xf] %v678
          %687 = vst [vmem:[%s399 + $0x8] sm:$0xf] %v679
          %688 = vst [vmem:[%s399 + $0xc] sm:$0xf] %v680
        $region86: #{resnet_forward.17} parent=73 // pred_fallthru
          _
        %s689 = smul.u32 4, %s21
        %p690 = scmp.lt.s32.totalorder %s689, 3
        %s691 = scalar_select %p690, %s689, 3
        %p692 = scmp.lt.s32.totalorder %s22, 0
        %s693 = scalar_select %p692, %s22, 0
        %s694 = sadd.s32 %s693, %s691
        %s695 = smul.addr %s694, 4
        %s696 = scalar_lea.vmem %s5, %s695
        // Predicated region
        $region87: #{resnet_forward.17} parent=73 // pred_check
          %p697 = pneg %p191
        $region88: #{resnet_forward.17} parent=73 // pred_check_branch
          %699 = sbr.rel (%p697) target = $region90
        $region89: #{resnet_forward.17} parent=73 // pred_region
          %s700 = smul.u32 4, %s21
        $region90: #{resnet_forward.17} parent=73 // pred_fallthru
          _
        // Predicated region
        $region91: #{resnet_forward.17} parent=73 // pred_check
          %p701 = pneg %p191
        $region92: #{resnet_forward.17} parent=73 // pred_check_branch
          %703 = sbr.rel (%p701) target = $region94
        $region93: #{resnet_forward.17} parent=73 // pred_region
          %s704 = smul.u32 4, %s21
          %p705 = scmp.lt.s32.totalorder %s704, 3
          %s706 = scalar_select %p705, %s704, 3
          %p707 = scmp.lt.s32.totalorder %s22, 0
          %s708 = scalar_select %p707, %s22, 0
          %s709 = sadd.s32 %s708, %s706
          %s710 = smul.addr %s709, 4
          %s711 = scalar_lea.vmem %s5, %s710
        $region94: #{resnet_forward.17} parent=73 // pred_fallthru
          _
      $region74: #{resnet_forward.17} parent=5 // pred_fallthru
        _
      %p712 = scmp.le.s32.totalorder 2, %s11
      // Predicated region
      $region95: #{resnet_forward.17} parent=5 // pred_check
        %p713 = pneg %p712
      $region96: #{resnet_forward.17} parent=5 // pred_check_branch
        %715 = sbr.rel (%p713) target = $region98
      $region97: #{resnet_forward.17} parent=5 // pred_region
        %s716 = ssub.s32 %s11, 2
      $region98: #{resnet_forward.17} parent=5 // pred_fallthru
        _
    $region6: #{resnet_forward.17} parent=1 // loop_footer
      %s15 = sadd.s32 1, %s11
    $region7: #{resnet_forward.17} parent=1 // loop_footer_branch
      %10 = sbr.rel target = $region3
    $region8: #{resnet_forward.17} parent=1 // loop_exit
      _

// kernel: resnet_forward.19
$region0: #{resnet_forward.19}
  #allocation0 [shape = 'u32[]', space=smem, size = 0x4, offset = 0x4, fixed_abs, tag = 'smem constant byte address 0x4 - core index']
  #allocation1 [shape = 'u32[144,128]{1,0:T(1,128)}', space=vmem, size = 0x12000, scoped, tag = 'internal scratch']
  #allocation2 [shape = 'f32[8,256]{1,0:T(8,128)}', space=vmem, size = 0x2000, scoped, tag = 'scratch operand']
  %s0 = inlined_call_operand.vmem [shape: bf16[8,1280], index: 0, kind: input, shape index: {}]
  %s1 = inlined_call_operand.vmem [shape: bf16[1280,256], index: 1, kind: input, shape index: {}]
  %s2 = inlined_call_operand.vmem [shape: f32[1,256], index: 2, kind: input, shape index: {}]
  %s3 = inlined_call_operand.vmem [shape: f32[1,256], index: 3, kind: input, shape index: {}]
  %s4 = inlined_call_operand.vmem [shape: bf16[8,256], index: 4, kind: output, shape index: {}]
  %s5 = sld [smem:[#allocation0]]
  $region57: #{resnet_forward.19} parent=0
    _
  %s7 = ssub.s32 1, %s5
  %s8 = scalar_select 0, %s7, %s5
  loop: start=0, step=1, limit=7
  $region2: #{resnet_forward.19} parent=0 // loop_pre_header
    _
  $region3: #{resnet_forward.19} parent=0 // loop_header
    %s10 = sphi 0, %s14
    %p11 = scmp.ge.s32.totalorder %s10, 7
    %s17 = sphi 0, %s36
    %s18 = sphi 0, %s32
    %s19 = sphi 0, %s28
    %s20 = sphi 0, %s17
    %s21 = sphi 0, %s18
    %s22 = sphi 0, %s19
    %s23 = sphi 0, %s20
    %s24 = sphi 0, %s21
    %s25 = sphi 0, %s22
    %s41 = sphi 0, %s43
    %s44 = sphi 0, %s41
    %s45 = sphi 0, %s44
    %s61 = sphi 0, %s45
    %s69 = sphi 0, %s71
    %s72 = sphi 0, %s69
    %s73 = sphi 0, %s72
    %s89 = sphi 0, %s73
    %s95 = sphi 0, %s97
    %s98 = sphi 0, %s95
    %s99 = sphi 0, %s98
    %s115 = sphi 0, %s99
    %s121 = sphi 0, %s123
    %s124 = sphi 0, %s121
    %s125 = sphi 0, %s124
    %s141 = sphi 0, %s125
    %s149 = sphi 0, %s151
    %s152 = sphi 0, %s149
    %s153 = sphi 0, %s152
    %s169 = sphi 0, %s153
  $region4: #{resnet_forward.19} parent=0 // loop_header_branch
    %13 = sbr.rel (%p11) target = $region8
  $region5: #{resnet_forward.19} parent=0 // loop_body
    %s15 = ssub.s32 %s10, 1
    %s16 = ssub.s32 %s10, 2
    %s26 = sadd.s32 1, %s19
    %p27 = scmp.ge.s32.totalorder %s26, 5
    %s28 = scalar_select %p27, 0, %s26
    %s29 = sadd.s32 1, %s18
    %s30 = scalar_select %p27, %s29, %s18
    %p31 = scmp.ge.s32.totalorder %s30, 1
    %s32 = scalar_select %p31, 0, %s30
    %s33 = sadd.s32 1, %s17
    %s34 = scalar_select %p31, %s33, %s17
    %p35 = scmp.ge.s32.totalorder %s34, 1
    %s36 = scalar_select %p35, 0, %s34
    %s37 = ssub.s32 %s17, %s36
    %s38 = ssub.s32 %s19, %s28
    %s39 = sor.u32 %s37, %s38
    %p40 = scmp.eq.s32.totalorder %s39, 0
    %s42 = sadd.s32 %s41, 1
    %s43 = scalar_select %p40, %s41, %s42
    %p46 = pneg %p40
    %p47 = scmp.eq.s32.totalorder %s10, 4
    %p48 = por %p46, %p47
    %p49 = scmp.ne.s32.totalorder %s41, %s44
    %p50 = scmp.eq.s32.totalorder %s10, 0
    %p51 = por %p49, %p50
    %p52 = scmp.ne.s32.totalorder %s41, %s44
    %p53 = scmp.eq.s32.totalorder %s15, 4
    %p54 = por %p52, %p53
    %p55 = scmp.ne.s32.totalorder %s44, %s45
    %p56 = scmp.eq.s32.totalorder %s15, 0
    %p57 = por %p55, %p56
    %p58 = scmp.ne.s32.totalorder %s44, %s45
    %p59 = scmp.eq.s32.totalorder %s16, 4
    %p60 = por %p58, %p59
    %p62 = scmp.ne.s32.totalorder %s45, %s61
    %p63 = scmp.eq.s32.totalorder %s16, 0
    %p64 = por %p62, %p63
    %s65 = ssub.s32 %s19, %s28
    %s66 = ssub.s32 %s18, %s32
    %s67 = sor.u32 %s65, %s66
    %p68 = scmp.eq.s32.totalorder %s67, 0
    %s70 = sadd.s32 %s69, 1
    %s71 = scalar_select %p68, %s69, %s70
    %p74 = pneg %p68
    %p75 = scmp.eq.s32.totalorder %s10, 4
    %p76 = por %p74, %p75
    %p77 = scmp.ne.s32.totalorder %s69, %s72
    %p78 = scmp.eq.s32.totalorder %s10, 0
    %p79 = por %p77, %p78
    %p80 = scmp.ne.s32.totalorder %s69, %s72
    %p81 = scmp.eq.s32.totalorder %s15, 4
    %p82 = por %p80, %p81
    %p83 = scmp.ne.s32.totalorder %s72, %s73
    %p84 = scmp.eq.s32.totalorder %s15, 0
    %p85 = por %p83, %p84
    %p86 = scmp.ne.s32.totalorder %s72, %s73
    %p87 = scmp.eq.s32.totalorder %s16, 4
    %p88 = por %p86, %p87
    %p90 = scmp.ne.s32.totalorder %s73, %s89
    %p91 = scmp.eq.s32.totalorder %s16, 0
    %p92 = por %p90, %p91
    %s93 = ssub.s32 %s18, %s32
    %p94 = scmp.eq.s32.totalorder %s93, 0
    %s96 = sadd.s32 %s95, 1
    %s97 = scalar_select %p94, %s95, %s96
    %p100 = pneg %p94
    %p101 = scmp.eq.s32.totalorder %s10, 4
    %p102 = por %p100, %p101
    %p103 = scmp.ne.s32.totalorder %s95, %s98
    %p104 = scmp.eq.s32.totalorder %s10, 0
    %p105 = por %p103, %p104
    %p106 = scmp.ne.s32.totalorder %s95, %s98
    %p107 = scmp.eq.s32.totalorder %s15, 4
    %p108 = por %p106, %p107
    %p109 = scmp.ne.s32.totalorder %s98, %s99
    %p110 = scmp.eq.s32.totalorder %s15, 0
    %p111 = por %p109, %p110
    %p112 = scmp.ne.s32.totalorder %s98, %s99
    %p113 = scmp.eq.s32.totalorder %s16, 4
    %p114 = por %p112, %p113
    %p116 = scmp.ne.s32.totalorder %s99, %s115
    %p117 = scmp.eq.s32.totalorder %s16, 0
    %p118 = por %p116, %p117
    %s119 = ssub.s32 %s18, %s32
    %p120 = scmp.eq.s32.totalorder %s119, 0
    %s122 = sadd.s32 %s121, 1
    %s123 = scalar_select %p120, %s121, %s122
    %p126 = pneg %p120
    %p127 = scmp.eq.s32.totalorder %s10, 4
    %p128 = por %p126, %p127
    %p129 = scmp.ne.s32.totalorder %s121, %s124
    %p130 = scmp.eq.s32.totalorder %s10, 0
    %p131 = por %p129, %p130
    %p132 = scmp.ne.s32.totalorder %s121, %s124
    %p133 = scmp.eq.s32.totalorder %s15, 4
    %p134 = por %p132, %p133
    %p135 = scmp.ne.s32.totalorder %s124, %s125
    %p136 = scmp.eq.s32.totalorder %s15, 0
    %p137 = por %p135, %p136
    %p138 = scmp.ne.s32.totalorder %s124, %s125
    %p139 = scmp.eq.s32.totalorder %s16, 4
    %p140 = por %p138, %p139
    %p142 = scmp.ne.s32.totalorder %s125, %s141
    %p143 = scmp.eq.s32.totalorder %s16, 0
    %p144 = por %p142, %p143
    %s145 = ssub.s32 %s17, %s36
    %s146 = ssub.s32 %s18, %s32
    %s147 = sor.u32 %s145, %s146
    %p148 = scmp.eq.s32.totalorder %s147, 0
    %s150 = sadd.s32 %s149, 1
    %s151 = scalar_select %p148, %s149, %s150
    %p154 = pneg %p148
    %p155 = scmp.eq.s32.totalorder %s10, 4
    %p156 = por %p154, %p155
    %p157 = scmp.ne.s32.totalorder %s149, %s152
    %p158 = scmp.eq.s32.totalorder %s10, 0
    %p159 = por %p157, %p158
    %p160 = scmp.ne.s32.totalorder %s149, %s152
    %p161 = scmp.eq.s32.totalorder %s15, 4
    %p162 = por %p160, %p161
    %p163 = scmp.ne.s32.totalorder %s152, %s153
    %p164 = scmp.eq.s32.totalorder %s15, 0
    %p165 = por %p163, %p164
    %p166 = scmp.ne.s32.totalorder %s152, %s153
    %p167 = scmp.eq.s32.totalorder %s16, 4
    %p168 = por %p166, %p167
    %p170 = scmp.ne.s32.totalorder %s153, %s169
    %p171 = scmp.eq.s32.totalorder %s16, 0
    %p172 = por %p170, %p171
    %p173 = scmp.le.s32.totalorder 1, %s10
    %p174 = scmp.lt.s32.totalorder %s10, 6
    %p175 = pnand %p173, %p174
    %p176 = pneg %p175
    // Predicated region
    $region9: #{resnet_forward.19} parent=5 // pred_check
      _
    $region10: #{resnet_forward.19} parent=5 // pred_check_branch
      %178 = sbr.rel (%p175) target = $region12
    $region11: #{resnet_forward.19} parent=5 // pred_region
      %s179 = ssub.s32 %s10, 1
      // Predicated region
      $region13: #{resnet_forward.19} parent=11 // pred_check
        %p180 = pneg %p111
      $region14: #{resnet_forward.19} parent=11 // pred_check_branch
        %182 = sbr.rel (%p180) target = $region16
      $region15: #{resnet_forward.19} parent=11 // pred_region
        %s183 = smul.u32 2, %s21
        %p184 = scmp.lt.s32.totalorder %s183, 1
        %s185 = scalar_select %p184, %s183, 1
        %s186 = scalar_lea.vmem %s2, %s185
        %s187 = smul.u32 2, %s21
      $region16: #{resnet_forward.19} parent=11 // pred_fallthru
        _
      // Predicated region
      $region17: #{resnet_forward.19} parent=11 // pred_check
        %p188 = pneg %p137
      $region18: #{resnet_forward.19} parent=11 // pred_check_branch
        %190 = sbr.rel (%p188) target = $region20
      $region19: #{resnet_forward.19} parent=11 // pred_region
        %s191 = smul.u32 2, %s21
        %p192 = scmp.lt.s32.totalorder %s191, 1
        %s193 = scalar_select %p192, %s191, 1
        %s194 = scalar_lea.vmem %s3, %s193
        %s195 = smul.u32 2, %s21
      $region20: #{resnet_forward.19} parent=11 // pred_fallthru
        _
    $region12: #{resnet_forward.19} parent=5 // pred_fallthru
      _
    %p196 = scmp.lt.s32.totalorder %s10, 5
    // Predicated region
    $region21: #{resnet_forward.19} parent=5 // pred_check
      %p197 = pneg %p196
    $region22: #{resnet_forward.19} parent=5 // pred_check_branch
      %199 = sbr.rel (%p197) target = $region24
    $region23: #{resnet_forward.19} parent=5 // pred_region
      // Predicated region
      $region25: #{resnet_forward.19} parent=23 // pred_check
        %p200 = pneg %p51
      $region26: #{resnet_forward.19} parent=23 // pred_check_branch
        %202 = sbr.rel (%p200) target = $region28
      $region27: #{resnet_forward.19} parent=23 // pred_region
        %s203 = smul.u32 2, %s19
        %p204 = scmp.lt.s32.totalorder %s17, 0
        %s205 = scalar_select %p204, %s17, 0
        %p206 = scmp.lt.s32.totalorder %s203, 9
        %s207 = scalar_select %p206, %s203, 9
        %s208 = smul.addr %s205, 10
        %s209 = sadd.s32 %s207, %s208
        %s210 = smul.addr %s209, 4
        %s211 = scalar_lea.vmem %s0, %s210
        %s212 = smul.u32 2, %s19
      $region28: #{resnet_forward.19} parent=23 // pred_fallthru
        _
      // Predicated region
      $region29: #{resnet_forward.19} parent=23 // pred_check
        %p213 = pneg %p79
      $region30: #{resnet_forward.19} parent=23 // pred_check_branch
        %215 = sbr.rel (%p213) target = $region32
      $region31: #{resnet_forward.19} parent=23 // pred_region
        %s216 = smul.u32 32, %s19
        %s217 = smul.u32 2, %s18
        %p218 = scmp.lt.s32.totalorder %s216, 159
        %s219 = scalar_select %p218, %s216, 159
        %p220 = scmp.lt.s32.totalorder %s217, 1
        %s221 = scalar_select %p220, %s217, 1
        %s222 = smul.addr %s219, 2
        %s223 = sadd.s32 %s221, %s222
        %s224 = smul.addr %s223, 4
        %s225 = scalar_lea.vmem %s1, %s224
        %s226 = smul.u32 32, %s19
        %s227 = smul.u32 2, %s18
      $region32: #{resnet_forward.19} parent=23 // pred_fallthru
        _
    $region24: #{resnet_forward.19} parent=5 // pred_fallthru
      _
    %p228 = scmp.le.s32.totalorder 1, %s10
    %p229 = scmp.lt.s32.totalorder %s10, 6
    %p230 = pnand %p228, %p229
    %p231 = pneg %p230
    // Predicated region
    $region33: #{resnet_forward.19} parent=5 // pred_check
      _
    $region34: #{resnet_forward.19} parent=5 // pred_check_branch
      %233 = sbr.rel (%p230) target = $region36
    $region35: #{resnet_forward.19} parent=5 // pred_region
      %s234 = ssub.s32 %s10, 1
      %s235 = smul.u32 2, %s22
      %p236 = scmp.lt.s32.totalorder %s20, 0
      %s237 = scalar_select %p236, %s20, 0
      %p238 = scmp.lt.s32.totalorder %s235, 9
      %s239 = scalar_select %p238, %s235, 9
      %s240 = smul.addr %s237, 10
      %s241 = sadd.s32 %s239, %s240
      %s242 = smul.addr %s241, 4
      %s243 = scalar_lea.vmem %s0, %s242
      %p244 = pneg %p57
      %p245 = pneg %p54
      %s246 = smul.u32 32, %s22
      %s247 = smul.u32 2, %s21
      %p248 = scmp.lt.s32.totalorder %s246, 159
      %s249 = scalar_select %p248, %s246, 159
      %p250 = scmp.lt.s32.totalorder %s247, 1
      %s251 = scalar_select %p250, %s247, 1
      %s252 = smul.addr %s249, 2
      %s253 = sadd.s32 %s251, %s252
      %s254 = smul.addr %s253, 4
      %s255 = scalar_lea.vmem %s1, %s254
      %p256 = pneg %p85
      %p257 = pneg %p82
      %s258 = smul.u32 2, %s21
      %p259 = scmp.lt.s32.totalorder %s258, 1
      %s260 = scalar_select %p259, %s258, 1
      %s261 = scalar_lea.vmem %s2, %s260
      %p262 = pneg %p111
      %p263 = pneg %p108
      %s264 = smul.u32 2, %s21
      %p265 = scmp.lt.s32.totalorder %s264, 1
      %s266 = scalar_select %p265, %s264, 1
      %s267 = scalar_lea.vmem %s3, %s266
      %p268 = pneg %p137
      %p269 = pneg %p134
      %p270 = pneg %p165
      %p271 = pneg %p162
      %s272 = smul.u32 2, %s21
      %p273 = scmp.lt.s32.totalorder %s20, 0
      %s274 = scalar_select %p273, %s20, 0
      %p275 = scmp.lt.s32.totalorder %s272, 1
      %s276 = scalar_select %p275, %s272, 1
      %s277 = smul.addr %s274, 2
      %s278 = sadd.s32 %s276, %s277
      %s279 = smul.addr %s278, 4
      %s280 = scalar_lea.vmem %s4, %s279
      %s281 = smul.u32 2, %s22
      %p282 = scmp.lt.s32.totalorder %s20, 0
      %s283 = scalar_select %p282, %s20, 0
      %p284 = scmp.lt.s32.totalorder %s281, 9
      %s285 = scalar_select %p284, %s281, 9
      %s286 = smul.addr %s283, 10
      %s287 = sadd.s32 %s285, %s286
      %s288 = smul.addr %s287, 4
      %s289 = scalar_lea.vmem %s0, %s288
      %s290 = smul.u32 2, %s22
      %s291 = smul.u32 32, %s22
      %s292 = smul.u32 2, %s21
      %p293 = scmp.lt.s32.totalorder %s291, 159
      %s294 = scalar_select %p293, %s291, 159
      %p295 = scmp.lt.s32.totalorder %s292, 1
      %s296 = scalar_select %p295, %s292, 1
      %s297 = smul.addr %s294, 2
      %s298 = sadd.s32 %s296, %s297
      %s299 = smul.addr %s298, 4
      %s300 = scalar_lea.vmem %s1, %s299
      %s301 = smul.u32 32, %s22
      %s302 = smul.u32 2, %s21
      %s303 = smul.u32 2, %s21
      %p304 = scmp.lt.s32.totalorder %s303, 1
      %s305 = scalar_select %p304, %s303, 1
      %s306 = scalar_lea.vmem %s2, %s305
      %s307 = smul.u32 2, %s21
      %s308 = smul.u32 2, %s21
      %p309 = scmp.lt.s32.totalorder %s308, 1
      %s310 = scalar_select %p309, %s308, 1
      %s311 = scalar_lea.vmem %s3, %s310
      %s312 = smul.u32 2, %s21
      %s313 = smul.u32 2, %s21
      %p314 = scmp.lt.s32.totalorder %s20, 0
      %s315 = scalar_select %p314, %s20, 0
      %p316 = scmp.lt.s32.totalorder %s313, 1
      %s317 = scalar_select %p316, %s313, 1
      %s318 = smul.addr %s315, 2
      %s319 = sadd.s32 %s317, %s318
      %s320 = smul.addr %s319, 4
      %s321 = scalar_lea.vmem %s4, %s320
      %s322 = smul.u32 2, %s21
      %p323 = scmp.eq.s32.totalorder %s22, 0
      // Predicated region
      $region37: #{resnet_forward.19} parent=35 // pred_check
        %p324 = pneg %p323
      $region38: #{resnet_forward.19} parent=35 // pred_check_branch
        %326 = sbr.rel (%p324) target = $region40
      $region39: #{resnet_forward.19} parent=35 // pred_region
        %327 = vst [vmem:[#allocation2] sm:$0xff] 0.0
        %328 = vst [vmem:[#allocation2 + $0x8] sm:$0xff] 0.0
      $region40: #{resnet_forward.19} parent=35 // pred_fallthru
        _
      %v329 = vld [vmem:[#allocation2] sm:$0xff]
      %v330 = vld [vmem:[#allocation2 + $0x8] sm:$0xff]
      %v331 = vld [vmem:[%s289] sm:$0xff]
      %v332 = vld [vmem:[%s300] sm:$0xff]
      %v333 = vld [vmem:[%s300 + $0x8] sm:$0xff]
      %v334 = vld [vmem:[%s300 + $0x10] sm:$0xff]
      %v335 = vld [vmem:[%s300 + $0x18] sm:$0xff]
      %v336 = vld [vmem:[%s300 + $0x20] sm:$0xff]
      %v337 = vld [vmem:[%s300 + $0x28] sm:$0xff]
      %v338 = vld [vmem:[%s300 + $0x30] sm:$0xff]
      %v339 = vld [vmem:[%s300 + $0x38] sm:$0xff]
      %v340 = vld [vmem:[%s300 + $0x40] sm:$0xff]
      %v341 = vld [vmem:[%s300 + $0x48] sm:$0xff]
      %v342 = vld [vmem:[%s300 + $0x50] sm:$0xff]
      %v343 = vld [vmem:[%s300 + $0x58] sm:$0xff]
      %v344 = vld [vmem:[%s300 + $0x60] sm:$0xff]
      %v345 = vld [vmem:[%s300 + $0x68] sm:$0xff]
      %v346 = vld [vmem:[%s300 + $0x70] sm:$0xff]
      %v347 = vld [vmem:[%s300 + $0x78] sm:$0xff]
      %v348 = vld [vmem:[%s300 + $0x80] sm:$0xff]
      %v349 = vld [vmem:[%s300 + $0x88] sm:$0xff]
      %v350 = vld [vmem:[%s300 + $0x90] sm:$0xff]
      %v351 = vld [vmem:[%s300 + $0x98] sm:$0xff]
      %v352 = vld [vmem:[%s300 + $0xa0] sm:$0xff]
      %v353 = vld [vmem:[%s300 + $0xa8] sm:$0xff]
      %v354 = vld [vmem:[%s300 + $0xb0] sm:$0xff]
      %v355 = vld [vmem:[%s300 + $0xb8] sm:$0xff]
      %v356 = vld [vmem:[%s300 + $0xc0] sm:$0xff]
      %v357 = vld [vmem:[%s300 + $0xc8] sm:$0xff]
      %v358 = vld [vmem:[%s300 + $0xd0] sm:$0xff]
      %v359 = vld [vmem:[%s300 + $0xd8] sm:$0xff]
      %v360 = vld [vmem:[%s300 + $0xe0] sm:$0xff]
      %v361 = vld [vmem:[%s300 + $0xe8] sm:$0xff]
      %v362 = vld [vmem:[%s300 + $0xf0] sm:$0xff]
      %v363 = vld [vmem:[%s300 + $0xf8] sm:$0xff]
      %v365 = vunpack.c.l.b16 %v331
      %v366 = vunpack.c.h.b16 %v331
      %v367 = vpack.c.b16 %v365, %v365
      %v368 = vpack.c.b16 %v366, %v366
      %v403 = vunpack.c.l.b16 %v332
      %v404 = vunpack.c.h.b16 %v332
      %v405 = vunpack.c.l.b16 %v333
      %v406 = vunpack.c.h.b16 %v333
      %v407 = vunpack.c.l.b16 %v334
      %v408 = vunpack.c.h.b16 %v334
      %v409 = vunpack.c.l.b16 %v335
      %v410 = vunpack.c.h.b16 %v335
      %v411 = vunpack.c.l.b16 %v336
      %v412 = vunpack.c.h.b16 %v336
      %v413 = vunpack.c.l.b16 %v337
      %v414 = vunpack.c.h.b16 %v337
      %v415 = vunpack.c.l.b16 %v338
      %v416 = vunpack.c.h.b16 %v338
      %v417 = vunpack.c.l.b16 %v339
      %v418 = vunpack.c.h.b16 %v339
      %v419 = vunpack.c.l.b16 %v340
      %v420 = vunpack.c.h.b16 %v340
      %v421 = vunpack.c.l.b16 %v341
      %v422 = vunpack.c.h.b16 %v341
      %v423 = vunpack.c.l.b16 %v342
      %v424 = vunpack.c.h.b16 %v342
      %v425 = vunpack.c.l.b16 %v343
      %v426 = vunpack.c.h.b16 %v343
      %v427 = vunpack.c.l.b16 %v344
      %v428 = vunpack.c.h.b16 %v344
      %v429 = vunpack.c.l.b16 %v345
      %v430 = vunpack.c.h.b16 %v345
      %v431 = vunpack.c.l.b16 %v346
      %v432 = vunpack.c.h.b16 %v346
      %v433 = vunpack.c.l.b16 %v347
      %v434 = vunpack.c.h.b16 %v347
      %v435 = vunpack.c.l.b16 %v348
      %v436 = vunpack.c.h.b16 %v348
      %v437 = vunpack.c.l.b16 %v349
      %v438 = vunpack.c.h.b16 %v349
      %v439 = vunpack.c.l.b16 %v350
      %v440 = vunpack.c.h.b16 %v350
      %v441 = vunpack.c.l.b16 %v351
      %v442 = vunpack.c.h.b16 %v351
      %v443 = vunpack.c.l.b16 %v352
      %v444 = vunpack.c.h.b16 %v352
      %v445 = vunpack.c.l.b16 %v353
      %v446 = vunpack.c.h.b16 %v353
      %v447 = vunpack.c.l.b16 %v354
      %v448 = vunpack.c.h.b16 %v354
      %v449 = vunpack.c.l.b16 %v355
      %v450 = vunpack.c.h.b16 %v355
      %v451 = vunpack.c.l.b16 %v356
      %v452 = vunpack.c.h.b16 %v356
      %v453 = vunpack.c.l.b16 %v357
      %v454 = vunpack.c.h.b16 %v357
      %v455 = vunpack.c.l.b16 %v358
      %v456 = vunpack.c.h.b16 %v358
      %v457 = vunpack.c.l.b16 %v359
      %v458 = vunpack.c.h.b16 %v359
      %v459 = vunpack.c.l.b16 %v360
      %v460 = vunpack.c.h.b16 %v360
      %v461 = vunpack.c.l.b16 %v361
      %v462 = vunpack.c.h.b16 %v361
      %v463 = vunpack.c.l.b16 %v362
      %v464 = vunpack.c.h.b16 %v362
      %v465 = vunpack.c.l.b16 %v363
      %v466 = vunpack.c.h.b16 %v363
      %v467 = vpack.c.b16 %v405, %v403
      %v468 = vpack.c.b16 %v406, %v404
      %v469 = vpack.c.b16 %v409, %v407
      %v470 = vpack.c.b16 %v410, %v408
      %v471 = vpack.c.b16 %v413, %v411
      %v472 = vpack.c.b16 %v414, %v412
      %v473 = vpack.c.b16 %v417, %v415
      %v474 = vpack.c.b16 %v418, %v416
      %v475 = vpack.c.b16 %v421, %v419
      %v476 = vpack.c.b16 %v422, %v420
      %v477 = vpack.c.b16 %v425, %v423
      %v478 = vpack.c.b16 %v426, %v424
      %v479 = vpack.c.b16 %v429, %v427
      %v480 = vpack.c.b16 %v430, %v428
      %v481 = vpack.c.b16 %v433, %v431
      %v482 = vpack.c.b16 %v434, %v432
      %v483 = vpack.c.b16 %v437, %v435
      %v484 = vpack.c.b16 %v438, %v436
      %v485 = vpack.c.b16 %v441, %v439
      %v486 = vpack.c.b16 %v442, %v440
      %v487 = vpack.c.b16 %v445, %v443
      %v488 = vpack.c.b16 %v446, %v444
      %v489 = vpack.c.b16 %v449, %v447
      %v490 = vpack.c.b16 %v450, %v448
      %v491 = vpack.c.b16 %v453, %v451
      %v492 = vpack.c.b16 %v454, %v452
      %v493 = vpack.c.b16 %v457, %v455
      %v494 = vpack.c.b16 %v458, %v456
      %v495 = vpack.c.b16 %v461, %v459
      %v496 = vpack.c.b16 %v462, %v460
      %v497 = vpack.c.b16 %v465, %v463
      %v498 = vpack.c.b16 %v466, %v464
      %531 = vmatprep.subr.bf16.mxu0 %v468
      %532 = vmatpush1.bf16.msra.mxu0 %v467
      %533 = vmatprep.subr.bf16.mxu0 %v470
      %534 = vmatpush1.bf16.msra.mxu0 %v469
      %535 = vmatprep.subr.bf16.mxu0 %v472
      %536 = vmatpush1.bf16.msra.mxu0 %v471
      %537 = vmatprep.subr.bf16.mxu0 %v474
      %538 = vmatpush1.bf16.msra.mxu0 %v473
      %539 = vmatprep.subr.bf16.mxu0 %v476
      %540 = vmatpush1.bf16.msra.mxu0 %v475
      %541 = vmatprep.subr.bf16.mxu0 %v478
      %542 = vmatpush1.bf16.msra.mxu0 %v477
      %543 = vmatprep.subr.bf16.mxu0 %v480
      %544 = vmatpush1.bf16.msra.mxu0 %v479
      %545 = vmatprep.subr.bf16.mxu0 %v482
      %546 = vmatpush1.bf16.msra.mxu0 %v481
      %547 = vmatprep.subr.bf16.mxu0 %v484
      %548 = vmatpush1.bf16.msra.mxu0 %v483
      %549 = vmatprep.subr.bf16.mxu0 %v486
      %550 = vmatpush1.bf16.msra.mxu0 %v485
      %551 = vmatprep.subr.bf16.mxu0 %v488
      %552 = vmatpush1.bf16.msra.mxu0 %v487
      %553 = vmatprep.subr.bf16.mxu0 %v490
      %554 = vmatpush1.bf16.msra.mxu0 %v489
      %555 = vmatprep.subr.bf16.mxu0 %v492
      %556 = vmatpush1.bf16.msra.mxu0 %v491
      %557 = vmatprep.subr.bf16.mxu0 %v494
      %558 = vmatpush1.bf16.msra.mxu0 %v493
      %559 = vmatprep.subr.bf16.mxu0 %v496
      %560 = vmatpush1.bf16.msra.mxu0 %v495
      %561 = vmatprep.subr.bf16.mxu0 %v498
      %562 = vmatpush1.bf16.msra.mxu0 %v497
      %563 = vmatprep.mubr.bf16.mxu0 %v368
      %564 = vmatmul.mubr.bf16.gmra.mrb[0].mxu0 %v367
      %v565 = vpop.f32.mrb[0].mxu0
      %v566 = vadd.f32 0.0, %v565
      %v567 = vpop.f32.mrb[0].mxu0
      %v568 = vadd.f32 0.0, %v567
      %v569 = vpop.f32.mrb[0].mxu0
      %v570 = vpop.f32.mrb[0].mxu0
      %571 = vdwg.mxu0
      %v572 = vadd.f32 %v329, %v566
      %v573 = vadd.f32 %v330, %v568
      %574 = vst [vmem:[#allocation2] sm:$0xff] %v572
      %575 = vst [vmem:[#allocation2 + $0x8] sm:$0xff] %v573
      %p576 = scmp.eq.s32.totalorder %s22, 4
      // Predicated region
      $region41: #{resnet_forward.19} parent=35 // pred_check
        %p577 = pneg %p576
      $region42: #{resnet_forward.19} parent=35 // pred_check_branch
        %579 = sbr.rel (%p577) target = $region44
      $region43: #{resnet_forward.19} parent=35 // pred_region
        %v580 = vld [vmem:[#allocation2] sm:$0xff]
        %v581 = vld [vmem:[#allocation2 + $0x8] sm:$0xff]
        %v582 = vld [vmem:[%s306] sm:$0x3]
        %v584 = vlaneseq
        %v585 = vshrl.u32 %v584, 7
        %v586 = vsub.s32 0, %v585
        %v587 = vrot.slane %v582, %v586
        %v588 = vlaneseq
        %v589 = vshrl.u32 %v588, 7
        %v590 = vsub.s32 1, %v589
        %v591 = vrot.slane %v582, %v590
        %v594 = vmul.f32 %v580, %v587
        %v595 = vmul.f32 %v581, %v591
        %v596 = vld [vmem:[%s311] sm:$0x3]
        %v598 = vlaneseq
        %v599 = vshrl.u32 %v598, 7
        %v600 = vsub.s32 0, %v599
        %v601 = vrot.slane %v596, %v600
        %v602 = vlaneseq
        %v603 = vshrl.u32 %v602, 7
        %v604 = vsub.s32 1, %v603
        %v605 = vrot.slane %v596, %v604
        %v608 = vadd.f32 %v594, %v601
        %v609 = vadd.f32 %v595, %v605
        %v610 = vmax.f32 %v608, 0.0
        %v611 = vmax.f32 %v609, 0.0
        %v612 = vpack.c.bf16 %v610, %v610
        %v613 = vpack.c.bf16 %v611, %v611
        %v616 = vunpack.c.l.b16 %v612
        %v617 = vunpack.c.l.b16 %v613
        %v618 = vpack.c.b16 %v617, %v616
        %620 = vst [vmem:[%s321] sm:$0xff] %v618
      $region44: #{resnet_forward.19} parent=35 // pred_fallthru
        _
      %s621 = smul.u32 2, %s21
      %p622 = scmp.lt.s32.totalorder %s20, 0
      %s623 = scalar_select %p622, %s20, 0
      %p624 = scmp.lt.s32.totalorder %s621, 1
      %s625 = scalar_select %p624, %s621, 1
      %s626 = smul.addr %s623, 2
      %s627 = sadd.s32 %s625, %s626
      %s628 = smul.addr %s627, 4
      %s629 = scalar_lea.vmem %s4, %s628
      // Predicated region
      $region45: #{resnet_forward.19} parent=35 // pred_check
        %p630 = pneg %p162
      $region46: #{resnet_forward.19} parent=35 // pred_check_branch
        %632 = sbr.rel (%p630) target = $region48
      $region47: #{resnet_forward.19} parent=35 // pred_region
        %s633 = smul.u32 2, %s21
      $region48: #{resnet_forward.19} parent=35 // pred_fallthru
        _
      // Predicated region
      $region49: #{resnet_forward.19} parent=35 // pred_check
        %p634 = pneg %p162
      $region50: #{resnet_forward.19} parent=35 // pred_check_branch
        %636 = sbr.rel (%p634) target = $region52
      $region51: #{resnet_forward.19} parent=35 // pred_region
        %s637 = smul.u32 2, %s21
        %p638 = scmp.lt.s32.totalorder %s20, 0
        %s639 = scalar_select %p638, %s20, 0
        %p640 = scmp.lt.s32.totalorder %s637, 1
        %s641 = scalar_select %p640, %s637, 1
        %s642 = smul.addr %s639, 2
        %s643 = sadd.s32 %s641, %s642
        %s644 = smul.addr %s643, 4
        %s645 = scalar_lea.vmem %s4, %s644
      $region52: #{resnet_forward.19} parent=35 // pred_fallthru
        _
    $region36: #{resnet_forward.19} parent=5 // pred_fallthru
      _
    %p646 = scmp.le.s32.totalorder 2, %s10
    // Predicated region
    $region53: #{resnet_forward.19} parent=5 // pred_check
      %p647 = pneg %p646
    $region54: #{resnet_forward.19} parent=5 // pred_check_branch
      %649 = sbr.rel (%p647) target = $region56
    $region55: #{resnet_forward.19} parent=5 // pred_region
      %s650 = ssub.s32 %s10, 2
    $region56: #{resnet_forward.19} parent=5 // pred_fallthru
      _
  $region6: #{resnet_forward.19} parent=0 // loop_footer
    %s14 = sadd.s32 1, %s10
  $region7: #{resnet_forward.19} parent=0 // loop_footer_branch
    %9 = sbr.rel target = $region3
  $region8: #{resnet_forward.19} parent=0 // loop_exit
    _

// kernel: resnet_forward.18
$region0: #{resnet_forward.18}
  #allocation0 [shape = 'u32[]', space=smem, size = 0x4, offset = 0x4, fixed_abs, tag = 'smem constant byte address 0x4 - core index']
  #allocation1 [shape = 'u32[144,128]{1,0:T(1,128)}', space=vmem, size = 0x12000, scoped, tag = 'internal scratch']
  #allocation2 [shape = 'f32[8,256]{1,0:T(8,128)}', space=vmem, size = 0x2000, scoped, tag = 'scratch operand']
  %s0 = inlined_call_operand.vmem [shape: bf16[8,128], index: 0, kind: input, shape index: {}]
  %s1 = inlined_call_operand.vmem [shape: bf16[128,256], index: 1, kind: input, shape index: {}]
  %s2 = inlined_call_operand.vmem [shape: f32[1,256], index: 2, kind: input, shape index: {}]
  %s3 = inlined_call_operand.vmem [shape: f32[1,256], index: 3, kind: input, shape index: {}]
  %s4 = inlined_call_operand.vmem [shape: bf16[8,256], index: 4, kind: output, shape index: {}]
  %s5 = sld [smem:[#allocation0]]
  $region34: #{resnet_forward.18} parent=0
    _
  %s7 = ssub.s32 1, %s5
  %s8 = scalar_select 0, %s7, %s5
  // Predicated region
  $region2: #{resnet_forward.18} parent=0 // pred_check
    _
  $region3: #{resnet_forward.18} parent=0 // pred_check_branch
    %10 = sbr.rel (0) target = $region5
  $region4: #{resnet_forward.18} parent=0 // pred_region
    _
  $region5: #{resnet_forward.18} parent=0 // pred_fallthru
    _
  // Predicated region
  $region6: #{resnet_forward.18} parent=0 // pred_check
    _
  $region7: #{resnet_forward.18} parent=0 // pred_check_branch
    %12 = sbr.rel (0) target = $region9
  $region8: #{resnet_forward.18} parent=0 // pred_region
    _
  $region9: #{resnet_forward.18} parent=0 // pred_fallthru
    _
  // Predicated region
  $region10: #{resnet_forward.18} parent=0 // pred_check
    _
  $region11: #{resnet_forward.18} parent=0 // pred_check_branch
    %14 = sbr.rel (0) target = $region13
  $region12: #{resnet_forward.18} parent=0 // pred_region
    _
  $region13: #{resnet_forward.18} parent=0 // pred_fallthru
    _
  // Predicated region
  $region14: #{resnet_forward.18} parent=0 // pred_check
    _
  $region15: #{resnet_forward.18} parent=0 // pred_check_branch
    %16 = sbr.rel (0) target = $region17
  $region16: #{resnet_forward.18} parent=0 // pred_region
    _
  $region17: #{resnet_forward.18} parent=0 // pred_fallthru
    _
  %p18 = scmp.eq.s32.totalorder 0, 0
  // Predicated region
  $region18: #{resnet_forward.18} parent=0 // pred_check
    %p19 = pneg %p18
  $region19: #{resnet_forward.18} parent=0 // pred_check_branch
    %21 = sbr.rel (%p19) target = $region21
  $region20: #{resnet_forward.18} parent=0 // pred_region
    %22 = vst [vmem:[#allocation2] sm:$0xff] 0.0
    %23 = vst [vmem:[#allocation2 + $0x8] sm:$0xff] 0.0
  $region21: #{resnet_forward.18} parent=0 // pred_fallthru
    _
  %v24 = vld [vmem:[#allocation2] sm:$0xff]
  %v25 = vld [vmem:[#allocation2 + $0x8] sm:$0xff]
  %v26 = vld [vmem:[%s0] sm:$0xf]
  %v27 = vld [vmem:[%s1] sm:$0xff]
  %v28 = vld [vmem:[%s1 + $0x8] sm:$0xff]
  %v29 = vld [vmem:[%s1 + $0x10] sm:$0xff]
  %v30 = vld [vmem:[%s1 + $0x18] sm:$0xff]
  %v31 = vld [vmem:[%s1 + $0x20] sm:$0xff]
  %v32 = vld [vmem:[%s1 + $0x28] sm:$0xff]
  %v33 = vld [vmem:[%s1 + $0x30] sm:$0xff]
  %v34 = vld [vmem:[%s1 + $0x38] sm:$0xff]
  %v35 = vld [vmem:[%s1 + $0x40] sm:$0xff]
  %v36 = vld [vmem:[%s1 + $0x48] sm:$0xff]
  %v37 = vld [vmem:[%s1 + $0x50] sm:$0xff]
  %v38 = vld [vmem:[%s1 + $0x58] sm:$0xff]
  %v39 = vld [vmem:[%s1 + $0x60] sm:$0xff]
  %v40 = vld [vmem:[%s1 + $0x68] sm:$0xff]
  %v41 = vld [vmem:[%s1 + $0x70] sm:$0xff]
  %v42 = vld [vmem:[%s1 + $0x78] sm:$0xff]
  %v59 = vunpack.c.l.b16 %v27
  %v60 = vunpack.c.h.b16 %v27
  %v61 = vunpack.c.l.b16 %v28
  %v62 = vunpack.c.h.b16 %v28
  %v63 = vunpack.c.l.b16 %v29
  %v64 = vunpack.c.h.b16 %v29
  %v65 = vunpack.c.l.b16 %v30
  %v66 = vunpack.c.h.b16 %v30
  %v67 = vunpack.c.l.b16 %v31
  %v68 = vunpack.c.h.b16 %v31
  %v69 = vunpack.c.l.b16 %v32
  %v70 = vunpack.c.h.b16 %v32
  %v71 = vunpack.c.l.b16 %v33
  %v72 = vunpack.c.h.b16 %v33
  %v73 = vunpack.c.l.b16 %v34
  %v74 = vunpack.c.h.b16 %v34
  %v75 = vunpack.c.l.b16 %v35
  %v76 = vunpack.c.h.b16 %v35
  %v77 = vunpack.c.l.b16 %v36
  %v78 = vunpack.c.h.b16 %v36
  %v79 = vunpack.c.l.b16 %v37
  %v80 = vunpack.c.h.b16 %v37
  %v81 = vunpack.c.l.b16 %v38
  %v82 = vunpack.c.h.b16 %v38
  %v83 = vunpack.c.l.b16 %v39
  %v84 = vunpack.c.h.b16 %v39
  %v85 = vunpack.c.l.b16 %v40
  %v86 = vunpack.c.h.b16 %v40
  %v87 = vunpack.c.l.b16 %v41
  %v88 = vunpack.c.h.b16 %v41
  %v89 = vunpack.c.l.b16 %v42
  %v90 = vunpack.c.h.b16 %v42
  %v91 = vpack.c.b16 %v61, %v59
  %v92 = vpack.c.b16 %v62, %v60
  %v93 = vpack.c.b16 %v65, %v63
  %v94 = vpack.c.b16 %v66, %v64
  %v95 = vpack.c.b16 %v69, %v67
  %v96 = vpack.c.b16 %v70, %v68
  %v97 = vpack.c.b16 %v73, %v71
  %v98 = vpack.c.b16 %v74, %v72
  %v99 = vpack.c.b16 %v77, %v75
  %v100 = vpack.c.b16 %v78, %v76
  %v101 = vpack.c.b16 %v81, %v79
  %v102 = vpack.c.b16 %v82, %v80
  %v103 = vpack.c.b16 %v85, %v83
  %v104 = vpack.c.b16 %v86, %v84
  %v105 = vpack.c.b16 %v89, %v87
  %v106 = vpack.c.b16 %v90, %v88
  %123 = vmatprep.subr.bf16.mxu0 %v92
  %124 = vmatpush1.bf16.msra.mxu0 %v91
  %125 = vmatprep.subr.bf16.mxu0 %v94
  %126 = vmatpush1.bf16.msra.mxu0 %v93
  %127 = vmatprep.subr.bf16.mxu0 %v96
  %128 = vmatpush1.bf16.msra.mxu0 %v95
  %129 = vmatprep.subr.bf16.mxu0 %v98
  %130 = vmatpush1.bf16.msra.mxu0 %v97
  %131 = vmatprep.subr.bf16.mxu0 %v100
  %132 = vmatpush1.bf16.msra.mxu0 %v99
  %133 = vmatprep.subr.bf16.mxu0 %v102
  %134 = vmatpush1.bf16.msra.mxu0 %v101
  %135 = vmatprep.subr.bf16.mxu0 %v104
  %136 = vmatpush1.bf16.msra.mxu0 %v103
  %137 = vmatprep.subr.bf16.mxu0 %v106
  %138 = vmatpush1.bf16.msra.mxu0 %v105
  %139 = vmatprep.subr.bf16.mxu0 0
  %140 = vmatpush1.bf16.msra.mxu0 0
  %141 = vmatprep.subr.bf16.mxu0 0
  %142 = vmatpush1.bf16.msra.mxu0 0
  %143 = vmatprep.subr.bf16.mxu0 0
  %144 = vmatpush1.bf16.msra.mxu0 0
  %145 = vmatprep.subr.bf16.mxu0 0
  %146 = vmatpush1.bf16.msra.mxu0 0
  %147 = vmatprep.subr.bf16.mxu0 0
  %148 = vmatpush1.bf16.msra.mxu0 0
  %149 = vmatprep.subr.bf16.mxu0 0
  %150 = vmatpush1.bf16.msra.mxu0 0
  %151 = vmatprep.subr.bf16.mxu0 0
  %152 = vmatpush1.bf16.msra.mxu0 0
  %153 = vmatprep.subr.bf16.mxu0 0
  %154 = vmatpush1.bf16.msra.mxu0 0
  %155 = vmatprep.mubr.bf16.mxu0 0
  %156 = vmatmul.mubr.bf16.gmra.mrb[0].mxu0 %v26
  %v157 = vpop.f32.mrb[0].mxu0
  %v158 = vadd.f32 0.0, %v157
  %v159 = vpop.f32.mrb[0].mxu0
  %v160 = vadd.f32 0.0, %v159
  %v161 = vpop.f32.mrb[0].mxu0
  %v162 = vpop.f32.mrb[0].mxu0
  %163 = vdwg.mxu0
  %v164 = vadd.f32 %v24, %v158
  %v165 = vadd.f32 %v25, %v160
  %166 = vst [vmem:[#allocation2] sm:$0xff] %v164
  %167 = vst [vmem:[#allocation2 + $0x8] sm:$0xff] %v165
  // Predicated region
  $region22: #{resnet_forward.18} parent=0 // pred_check
    %p168 = pneg %p18
  $region23: #{resnet_forward.18} parent=0 // pred_check_branch
    %170 = sbr.rel (%p168) target = $region25
  $region24: #{resnet_forward.18} parent=0 // pred_region
    %v171 = vld [vmem:[#allocation2] sm:$0xff]
    %v172 = vld [vmem:[#allocation2 + $0x8] sm:$0xff]
    %v173 = vld [vmem:[%s2] sm:$0x3]
    %v175 = vlaneseq
    %v176 = vshrl.u32 %v175, 7
    %v177 = vsub.s32 0, %v176
    %v178 = vrot.slane %v173, %v177
    %v179 = vlaneseq
    %v180 = vshrl.u32 %v179, 7
    %v181 = vsub.s32 1, %v180
    %v182 = vrot.slane %v173, %v181
    %v185 = vmul.f32 %v171, %v178
    %v186 = vmul.f32 %v172, %v182
    %v187 = vld [vmem:[%s3] sm:$0x3]
    %v189 = vlaneseq
    %v190 = vshrl.u32 %v189, 7
    %v191 = vsub.s32 0, %v190
    %v192 = vrot.slane %v187, %v191
    %v193 = vlaneseq
    %v194 = vshrl.u32 %v193, 7
    %v195 = vsub.s32 1, %v194
    %v196 = vrot.slane %v187, %v195
    %v199 = vadd.f32 %v185, %v192
    %v200 = vadd.f32 %v186, %v196
    %v201 = vpack.c.bf16 %v199, %v199
    %v202 = vpack.c.bf16 %v200, %v200
    %v205 = vunpack.c.l.b16 %v201
    %v206 = vunpack.c.l.b16 %v202
    %v207 = vpack.c.b16 %v206, %v205
    %209 = vst [vmem:[%s4] sm:$0xff] %v207
  $region25: #{resnet_forward.18} parent=0 // pred_fallthru
    _
  // Predicated region
  $region26: #{resnet_forward.18} parent=0 // pred_check
    _
  $region27: #{resnet_forward.18} parent=0 // pred_check_branch
    %211 = sbr.rel (0) target = $region29
  $region28: #{resnet_forward.18} parent=0 // pred_region
    _
  $region29: #{resnet_forward.18} parent=0 // pred_fallthru
    _
  // Predicated region
  $region30: #{resnet_forward.18} parent=0 // pred_check
    _
  $region31: #{resnet_forward.18} parent=0 // pred_check_branch
    %213 = sbr.rel (0) target = $region33
  $region32: #{resnet_forward.18} parent=0 // pred_region
    _
  $region33: #{resnet_forward.18} parent=0 // pred_fallthru
    _

// kernel: resnet_forward.20
$region0: #{resnet_forward.20}
  #allocation0 [shape = 'u32[]', space=smem, size = 0x4, offset = 0x4, fixed_abs, tag = 'smem constant byte address 0x4 - core index']
  #allocation1 [shape = 'u32[144,128]{1,0:T(1,128)}', space=vmem, size = 0x12000, scoped, tag = 'internal scratch']
  #allocation2 [shape = 'f32[8,256]{1,0:T(8,128)}', space=vmem, size = 0x2000, scoped, tag = 'scratch operand']
  %s0 = inlined_call_operand.vmem [shape: bf16[8,2304], index: 0, kind: input, shape index: {}]
  %s1 = inlined_call_operand.vmem [shape: bf16[2304,256], index: 1, kind: input, shape index: {}]
  %s2 = inlined_call_operand.vmem [shape: f32[1,256], index: 2, kind: input, shape index: {}]
  %s3 = inlined_call_operand.vmem [shape: f32[1,256], index: 3, kind: input, shape index: {}]
  %s4 = inlined_call_operand.vmem [shape: bf16[8,256], index: 4, kind: input, shape index: {}]
  %s5 = inlined_call_operand.vmem [shape: bf16[8,256], index: 5, kind: output, shape index: {}]
  %s6 = sld [smem:[#allocation0]]
  $region61: #{resnet_forward.20} parent=0
    _
  %s8 = ssub.s32 1, %s6
  %s9 = scalar_select 0, %s8, %s6
  loop: start=0, step=1, limit=11
  $region2: #{resnet_forward.20} parent=0 // loop_pre_header
    _
  $region3: #{resnet_forward.20} parent=0 // loop_header
    %s11 = sphi 0, %s15
    %p12 = scmp.ge.s32.totalorder %s11, 11
    %s18 = sphi 0, %s37
    %s19 = sphi 0, %s33
    %s20 = sphi 0, %s29
    %s21 = sphi 0, %s18
    %s22 = sphi 0, %s19
    %s23 = sphi 0, %s20
    %s24 = sphi 0, %s21
    %s25 = sphi 0, %s22
    %s26 = sphi 0, %s23
    %s42 = sphi 0, %s44
    %s45 = sphi 0, %s42
    %s46 = sphi 0, %s45
    %s62 = sphi 0, %s46
    %s70 = sphi 0, %s72
    %s73 = sphi 0, %s70
    %s74 = sphi 0, %s73
    %s90 = sphi 0, %s74
    %s96 = sphi 0, %s98
    %s99 = sphi 0, %s96
    %s100 = sphi 0, %s99
    %s116 = sphi 0, %s100
    %s122 = sphi 0, %s124
    %s125 = sphi 0, %s122
    %s126 = sphi 0, %s125
    %s142 = sphi 0, %s126
    %s150 = sphi 0, %s152
    %s153 = sphi 0, %s150
    %s154 = sphi 0, %s153
    %s170 = sphi 0, %s154
    %s178 = sphi 0, %s180
    %s181 = sphi 0, %s178
    %s182 = sphi 0, %s181
    %s198 = sphi 0, %s182
  $region4: #{resnet_forward.20} parent=0 // loop_header_branch
    %14 = sbr.rel (%p12) target = $region8
  $region5: #{resnet_forward.20} parent=0 // loop_body
    %s16 = ssub.s32 %s11, 1
    %s17 = ssub.s32 %s11, 2
    %s27 = sadd.s32 1, %s20
    %p28 = scmp.ge.s32.totalorder %s27, 9
    %s29 = scalar_select %p28, 0, %s27
    %s30 = sadd.s32 1, %s19
    %s31 = scalar_select %p28, %s30, %s19
    %p32 = scmp.ge.s32.totalorder %s31, 1
    %s33 = scalar_select %p32, 0, %s31
    %s34 = sadd.s32 1, %s18
    %s35 = scalar_select %p32, %s34, %s18
    %p36 = scmp.ge.s32.totalorder %s35, 1
    %s37 = scalar_select %p36, 0, %s35
    %s38 = ssub.s32 %s18, %s37
    %s39 = ssub.s32 %s20, %s29
    %s40 = sor.u32 %s38, %s39
    %p41 = scmp.eq.s32.totalorder %s40, 0
    %s43 = sadd.s32 %s42, 1
    %s44 = scalar_select %p41, %s42, %s43
    %p47 = pneg %p41
    %p48 = scmp.eq.s32.totalorder %s11, 8
    %p49 = por %p47, %p48
    %p50 = scmp.ne.s32.totalorder %s42, %s45
    %p51 = scmp.eq.s32.totalorder %s11, 0
    %p52 = por %p50, %p51
    %p53 = scmp.ne.s32.totalorder %s42, %s45
    %p54 = scmp.eq.s32.totalorder %s16, 8
    %p55 = por %p53, %p54
    %p56 = scmp.ne.s32.totalorder %s45, %s46
    %p57 = scmp.eq.s32.totalorder %s16, 0
    %p58 = por %p56, %p57
    %p59 = scmp.ne.s32.totalorder %s45, %s46
    %p60 = scmp.eq.s32.totalorder %s17, 8
    %p61 = por %p59, %p60
    %p63 = scmp.ne.s32.totalorder %s46, %s62
    %p64 = scmp.eq.s32.totalorder %s17, 0
    %p65 = por %p63, %p64
    %s66 = ssub.s32 %s20, %s29
    %s67 = ssub.s32 %s19, %s33
    %s68 = sor.u32 %s66, %s67
    %p69 = scmp.eq.s32.totalorder %s68, 0
    %s71 = sadd.s32 %s70, 1
    %s72 = scalar_select %p69, %s70, %s71
    %p75 = pneg %p69
    %p76 = scmp.eq.s32.totalorder %s11, 8
    %p77 = por %p75, %p76
    %p78 = scmp.ne.s32.totalorder %s70, %s73
    %p79 = scmp.eq.s32.totalorder %s11, 0
    %p80 = por %p78, %p79
    %p81 = scmp.ne.s32.totalorder %s70, %s73
    %p82 = scmp.eq.s32.totalorder %s16, 8
    %p83 = por %p81, %p82
    %p84 = scmp.ne.s32.totalorder %s73, %s74
    %p85 = scmp.eq.s32.totalorder %s16, 0
    %p86 = por %p84, %p85
    %p87 = scmp.ne.s32.totalorder %s73, %s74
    %p88 = scmp.eq.s32.totalorder %s17, 8
    %p89 = por %p87, %p88
    %p91 = scmp.ne.s32.totalorder %s74, %s90
    %p92 = scmp.eq.s32.totalorder %s17, 0
    %p93 = por %p91, %p92
    %s94 = ssub.s32 %s19, %s33
    %p95 = scmp.eq.s32.totalorder %s94, 0
    %s97 = sadd.s32 %s96, 1
    %s98 = scalar_select %p95, %s96, %s97
    %p101 = pneg %p95
    %p102 = scmp.eq.s32.totalorder %s11, 8
    %p103 = por %p101, %p102
    %p104 = scmp.ne.s32.totalorder %s96, %s99
    %p105 = scmp.eq.s32.totalorder %s11, 0
    %p106 = por %p104, %p105
    %p107 = scmp.ne.s32.totalorder %s96, %s99
    %p108 = scmp.eq.s32.totalorder %s16, 8
    %p109 = por %p107, %p108
    %p110 = scmp.ne.s32.totalorder %s99, %s100
    %p111 = scmp.eq.s32.totalorder %s16, 0
    %p112 = por %p110, %p111
    %p113 = scmp.ne.s32.totalorder %s99, %s100
    %p114 = scmp.eq.s32.totalorder %s17, 8
    %p115 = por %p113, %p114
    %p117 = scmp.ne.s32.totalorder %s100, %s116
    %p118 = scmp.eq.s32.totalorder %s17, 0
    %p119 = por %p117, %p118
    %s120 = ssub.s32 %s19, %s33
    %p121 = scmp.eq.s32.totalorder %s120, 0
    %s123 = sadd.s32 %s122, 1
    %s124 = scalar_select %p121, %s122, %s123
    %p127 = pneg %p121
    %p128 = scmp.eq.s32.totalorder %s11, 8
    %p129 = por %p127, %p128
    %p130 = scmp.ne.s32.totalorder %s122, %s125
    %p131 = scmp.eq.s32.totalorder %s11, 0
    %p132 = por %p130, %p131
    %p133 = scmp.ne.s32.totalorder %s122, %s125
    %p134 = scmp.eq.s32.totalorder %s16, 8
    %p135 = por %p133, %p134
    %p136 = scmp.ne.s32.totalorder %s125, %s126
    %p137 = scmp.eq.s32.totalorder %s16, 0
    %p138 = por %p136, %p137
    %p139 = scmp.ne.s32.totalorder %s125, %s126
    %p140 = scmp.eq.s32.totalorder %s17, 8
    %p141 = por %p139, %p140
    %p143 = scmp.ne.s32.totalorder %s126, %s142
    %p144 = scmp.eq.s32.totalorder %s17, 0
    %p145 = por %p143, %p144
    %s146 = ssub.s32 %s18, %s37
    %s147 = ssub.s32 %s19, %s33
    %s148 = sor.u32 %s146, %s147
    %p149 = scmp.eq.s32.totalorder %s148, 0
    %s151 = sadd.s32 %s150, 1
    %s152 = scalar_select %p149, %s150, %s151
    %p155 = pneg %p149
    %p156 = scmp.eq.s32.totalorder %s11, 8
    %p157 = por %p155, %p156
    %p158 = scmp.ne.s32.totalorder %s150, %s153
    %p159 = scmp.eq.s32.totalorder %s11, 0
    %p160 = por %p158, %p159
    %p161 = scmp.ne.s32.totalorder %s150, %s153
    %p162 = scmp.eq.s32.totalorder %s16, 8
    %p163 = por %p161, %p162
    %p164 = scmp.ne.s32.totalorder %s153, %s154
    %p165 = scmp.eq.s32.totalorder %s16, 0
    %p166 = por %p164, %p165
    %p167 = scmp.ne.s32.totalorder %s153, %s154
    %p168 = scmp.eq.s32.totalorder %s17, 8
    %p169 = por %p167, %p168
    %p171 = scmp.ne.s32.totalorder %s154, %s170
    %p172 = scmp.eq.s32.totalorder %s17, 0
    %p173 = por %p171, %p172
    %s174 = ssub.s32 %s18, %s37
    %s175 = ssub.s32 %s19, %s33
    %s176 = sor.u32 %s174, %s175
    %p177 = scmp.eq.s32.totalorder %s176, 0
    %s179 = sadd.s32 %s178, 1
    %s180 = scalar_select %p177, %s178, %s179
    %p183 = pneg %p177
    %p184 = scmp.eq.s32.totalorder %s11, 8
    %p185 = por %p183, %p184
    %p186 = scmp.ne.s32.totalorder %s178, %s181
    %p187 = scmp.eq.s32.totalorder %s11, 0
    %p188 = por %p186, %p187
    %p189 = scmp.ne.s32.totalorder %s178, %s181
    %p190 = scmp.eq.s32.totalorder %s16, 8
    %p191 = por %p189, %p190
    %p192 = scmp.ne.s32.totalorder %s181, %s182
    %p193 = scmp.eq.s32.totalorder %s16, 0
    %p194 = por %p192, %p193
    %p195 = scmp.ne.s32.totalorder %s181, %s182
    %p196 = scmp.eq.s32.totalorder %s17, 8
    %p197 = por %p195, %p196
    %p199 = scmp.ne.s32.totalorder %s182, %s198
    %p200 = scmp.eq.s32.totalorder %s17, 0
    %p201 = por %p199, %p200
    %p202 = scmp.le.s32.totalorder 1, %s11
    %p203 = scmp.lt.s32.totalorder %s11, 10
    %p204 = pnand %p202, %p203
    %p205 = pneg %p204
    // Predicated region
    $region9: #{resnet_forward.20} parent=5 // pred_check
      _
    $region10: #{resnet_forward.20} parent=5 // pred_check_branch
      %207 = sbr.rel (%p204) target = $region12
    $region11: #{resnet_forward.20} parent=5 // pred_region
      %s208 = ssub.s32 %s11, 1
      // Predicated region
      $region13: #{resnet_forward.20} parent=11 // pred_check
        %p209 = pneg %p112
      $region14: #{resnet_forward.20} parent=11 // pred_check_branch
        %211 = sbr.rel (%p209) target = $region16
      $region15: #{resnet_forward.20} parent=11 // pred_region
        %s212 = smul.u32 2, %s22
        %p213 = scmp.lt.s32.totalorder %s212, 1
        %s214 = scalar_select %p213, %s212, 1
        %s215 = scalar_lea.vmem %s2, %s214
        %s216 = smul.u32 2, %s22
      $region16: #{resnet_forward.20} parent=11 // pred_fallthru
        _
      // Predicated region
      $region17: #{resnet_forward.20} parent=11 // pred_check
        %p217 = pneg %p138
      $region18: #{resnet_forward.20} parent=11 // pred_check_branch
        %219 = sbr.rel (%p217) target = $region20
      $region19: #{resnet_forward.20} parent=11 // pred_region
        %s220 = smul.u32 2, %s22
        %p221 = scmp.lt.s32.totalorder %s220, 1
        %s222 = scalar_select %p221, %s220, 1
        %s223 = scalar_lea.vmem %s3, %s222
        %s224 = smul.u32 2, %s22
      $region20: #{resnet_forward.20} parent=11 // pred_fallthru
        _
      // Predicated region
      $region21: #{resnet_forward.20} parent=11 // pred_check
        %p225 = pneg %p166
      $region22: #{resnet_forward.20} parent=11 // pred_check_branch
        %227 = sbr.rel (%p225) target = $region24
      $region23: #{resnet_forward.20} parent=11 // pred_region
        %s228 = smul.u32 2, %s22
        %p229 = scmp.lt.s32.totalorder %s21, 0
        %s230 = scalar_select %p229, %s21, 0
        %p231 = scmp.lt.s32.totalorder %s228, 1
        %s232 = scalar_select %p231, %s228, 1
        %s233 = smul.addr %s230, 2
        %s234 = sadd.s32 %s232, %s233
        %s235 = smul.addr %s234, 4
        %s236 = scalar_lea.vmem %s4, %s235
        %s237 = smul.u32 2, %s22
      $region24: #{resnet_forward.20} parent=11 // pred_fallthru
        _
    $region12: #{resnet_forward.20} parent=5 // pred_fallthru
      _
    %p238 = scmp.lt.s32.totalorder %s11, 9
    // Predicated region
    $region25: #{resnet_forward.20} parent=5 // pred_check
      %p239 = pneg %p238
    $region26: #{resnet_forward.20} parent=5 // pred_check_branch
      %241 = sbr.rel (%p239) target = $region28
    $region27: #{resnet_forward.20} parent=5 // pred_region
      // Predicated region
      $region29: #{resnet_forward.20} parent=27 // pred_check
        %p242 = pneg %p52
      $region30: #{resnet_forward.20} parent=27 // pred_check_branch
        %244 = sbr.rel (%p242) target = $region32
      $region31: #{resnet_forward.20} parent=27 // pred_region
        %s245 = smul.u32 2, %s20
        %p246 = scmp.lt.s32.totalorder %s18, 0
        %s247 = scalar_select %p246, %s18, 0
        %p248 = scmp.lt.s32.totalorder %s245, 17
        %s249 = scalar_select %p248, %s245, 17
        %s250 = smul.addr %s247, 18
        %s251 = sadd.s32 %s249, %s250
        %s252 = smul.addr %s251, 4
        %s253 = scalar_lea.vmem %s0, %s252
        %s254 = smul.u32 2, %s20
      $region32: #{resnet_forward.20} parent=27 // pred_fallthru
        _
      // Predicated region
      $region33: #{resnet_forward.20} parent=27 // pred_check
        %p255 = pneg %p80
      $region34: #{resnet_forward.20} parent=27 // pred_check_branch
        %257 = sbr.rel (%p255) target = $region36
      $region35: #{resnet_forward.20} parent=27 // pred_region
        %s258 = smul.u32 32, %s20
        %s259 = smul.u32 2, %s19
        %p260 = scmp.lt.s32.totalorder %s258, 287
        %s261 = scalar_select %p260, %s258, 287
        %p262 = scmp.lt.s32.totalorder %s259, 1
        %s263 = scalar_select %p262, %s259, 1
        %s264 = smul.addr %s261, 2
        %s265 = sadd.s32 %s263, %s264
        %s266 = smul.addr %s265, 4
        %s267 = scalar_lea.vmem %s1, %s266
        %s268 = smul.u32 32, %s20
        %s269 = smul.u32 2, %s19
      $region36: #{resnet_forward.20} parent=27 // pred_fallthru
        _
    $region28: #{resnet_forward.20} parent=5 // pred_fallthru
      _
    %p270 = scmp.le.s32.totalorder 1, %s11
    %p271 = scmp.lt.s32.totalorder %s11, 10
    %p272 = pnand %p270, %p271
    %p273 = pneg %p272
    // Predicated region
    $region37: #{resnet_forward.20} parent=5 // pred_check
      _
    $region38: #{resnet_forward.20} parent=5 // pred_check_branch
      %275 = sbr.rel (%p272) target = $region40
    $region39: #{resnet_forward.20} parent=5 // pred_region
      %s276 = ssub.s32 %s11, 1
      %s277 = smul.u32 2, %s23
      %p278 = scmp.lt.s32.totalorder %s21, 0
      %s279 = scalar_select %p278, %s21, 0
      %p280 = scmp.lt.s32.totalorder %s277, 17
      %s281 = scalar_select %p280, %s277, 17
      %s282 = smul.addr %s279, 18
      %s283 = sadd.s32 %s281, %s282
      %s284 = smul.addr %s283, 4
      %s285 = scalar_lea.vmem %s0, %s284
      %p286 = pneg %p58
      %p287 = pneg %p55
      %s288 = smul.u32 32, %s23
      %s289 = smul.u32 2, %s22
      %p290 = scmp.lt.s32.totalorder %s288, 287
      %s291 = scalar_select %p290, %s288, 287
      %p292 = scmp.lt.s32.totalorder %s289, 1
      %s293 = scalar_select %p292, %s289, 1
      %s294 = smul.addr %s291, 2
      %s295 = sadd.s32 %s293, %s294
      %s296 = smul.addr %s295, 4
      %s297 = scalar_lea.vmem %s1, %s296
      %p298 = pneg %p86
      %p299 = pneg %p83
      %s300 = smul.u32 2, %s22
      %p301 = scmp.lt.s32.totalorder %s300, 1
      %s302 = scalar_select %p301, %s300, 1
      %s303 = scalar_lea.vmem %s2, %s302
      %p304 = pneg %p112
      %p305 = pneg %p109
      %s306 = smul.u32 2, %s22
      %p307 = scmp.lt.s32.totalorder %s306, 1
      %s308 = scalar_select %p307, %s306, 1
      %s309 = scalar_lea.vmem %s3, %s308
      %p310 = pneg %p138
      %p311 = pneg %p135
      %s312 = smul.u32 2, %s22
      %p313 = scmp.lt.s32.totalorder %s21, 0
      %s314 = scalar_select %p313, %s21, 0
      %p315 = scmp.lt.s32.totalorder %s312, 1
      %s316 = scalar_select %p315, %s312, 1
      %s317 = smul.addr %s314, 2
      %s318 = sadd.s32 %s316, %s317
      %s319 = smul.addr %s318, 4
      %s320 = scalar_lea.vmem %s4, %s319
      %p321 = pneg %p166
      %p322 = pneg %p163
      %p323 = pneg %p194
      %p324 = pneg %p191
      %s325 = smul.u32 2, %s22
      %p326 = scmp.lt.s32.totalorder %s21, 0
      %s327 = scalar_select %p326, %s21, 0
      %p328 = scmp.lt.s32.totalorder %s325, 1
      %s329 = scalar_select %p328, %s325, 1
      %s330 = smul.addr %s327, 2
      %s331 = sadd.s32 %s329, %s330
      %s332 = smul.addr %s331, 4
      %s333 = scalar_lea.vmem %s5, %s332
      %s334 = smul.u32 2, %s23
      %p335 = scmp.lt.s32.totalorder %s21, 0
      %s336 = scalar_select %p335, %s21, 0
      %p337 = scmp.lt.s32.totalorder %s334, 17
      %s338 = scalar_select %p337, %s334, 17
      %s339 = smul.addr %s336, 18
      %s340 = sadd.s32 %s338, %s339
      %s341 = smul.addr %s340, 4
      %s342 = scalar_lea.vmem %s0, %s341
      %s343 = smul.u32 2, %s23
      %s344 = smul.u32 32, %s23
      %s345 = smul.u32 2, %s22
      %p346 = scmp.lt.s32.totalorder %s344, 287
      %s347 = scalar_select %p346, %s344, 287
      %p348 = scmp.lt.s32.totalorder %s345, 1
      %s349 = scalar_select %p348, %s345, 1
      %s350 = smul.addr %s347, 2
      %s351 = sadd.s32 %s349, %s350
      %s352 = smul.addr %s351, 4
      %s353 = scalar_lea.vmem %s1, %s352
      %s354 = smul.u32 32, %s23
      %s355 = smul.u32 2, %s22
      %s356 = smul.u32 2, %s22
      %p357 = scmp.lt.s32.totalorder %s356, 1
      %s358 = scalar_select %p357, %s356, 1
      %s359 = scalar_lea.vmem %s2, %s358
      %s360 = smul.u32 2, %s22
      %s361 = smul.u32 2, %s22
      %p362 = scmp.lt.s32.totalorder %s361, 1
      %s363 = scalar_select %p362, %s361, 1
      %s364 = scalar_lea.vmem %s3, %s363
      %s365 = smul.u32 2, %s22
      %s366 = smul.u32 2, %s22
      %p367 = scmp.lt.s32.totalorder %s21, 0
      %s368 = scalar_select %p367, %s21, 0
      %p369 = scmp.lt.s32.totalorder %s366, 1
      %s370 = scalar_select %p369, %s366, 1
      %s371 = smul.addr %s368, 2
      %s372 = sadd.s32 %s370, %s371
      %s373 = smul.addr %s372, 4
      %s374 = scalar_lea.vmem %s4, %s373
      %s375 = smul.u32 2, %s22
      %s376 = smul.u32 2, %s22
      %p377 = scmp.lt.s32.totalorder %s21, 0
      %s378 = scalar_select %p377, %s21, 0
      %p379 = scmp.lt.s32.totalorder %s376, 1
      %s380 = scalar_select %p379, %s376, 1
      %s381 = smul.addr %s378, 2
      %s382 = sadd.s32 %s380, %s381
      %s383 = smul.addr %s382, 4
      %s384 = scalar_lea.vmem %s5, %s383
      %s385 = smul.u32 2, %s22
      %p386 = scmp.eq.s32.totalorder %s23, 0
      // Predicated region
      $region41: #{resnet_forward.20} parent=39 // pred_check
        %p387 = pneg %p386
      $region42: #{resnet_forward.20} parent=39 // pred_check_branch
        %389 = sbr.rel (%p387) target = $region44
      $region43: #{resnet_forward.20} parent=39 // pred_region
        %390 = vst [vmem:[#allocation2] sm:$0xff] 0.0
        %391 = vst [vmem:[#allocation2 + $0x8] sm:$0xff] 0.0
      $region44: #{resnet_forward.20} parent=39 // pred_fallthru
        _
      %v392 = vld [vmem:[#allocation2] sm:$0xff]
      %v393 = vld [vmem:[#allocation2 + $0x8] sm:$0xff]
      %v394 = vld [vmem:[%s342] sm:$0xff]
      %v395 = vld [vmem:[%s353] sm:$0xff]
      %v396 = vld [vmem:[%s353 + $0x8] sm:$0xff]
      %v397 = vld [vmem:[%s353 + $0x10] sm:$0xff]
      %v398 = vld [vmem:[%s353 + $0x18] sm:$0xff]
      %v399 = vld [vmem:[%s353 + $0x20] sm:$0xff]
      %v400 = vld [vmem:[%s353 + $0x28] sm:$0xff]
      %v401 = vld [vmem:[%s353 + $0x30] sm:$0xff]
      %v402 = vld [vmem:[%s353 + $0x38] sm:$0xff]
      %v403 = vld [vmem:[%s353 + $0x40] sm:$0xff]
      %v404 = vld [vmem:[%s353 + $0x48] sm:$0xff]
      %v405 = vld [vmem:[%s353 + $0x50] sm:$0xff]
      %v406 = vld [vmem:[%s353 + $0x58] sm:$0xff]
      %v407 = vld [vmem:[%s353 + $0x60] sm:$0xff]
      %v408 = vld [vmem:[%s353 + $0x68] sm:$0xff]
      %v409 = vld [vmem:[%s353 + $0x70] sm:$0xff]
      %v410 = vld [vmem:[%s353 + $0x78] sm:$0xff]
      %v411 = vld [vmem:[%s353 + $0x80] sm:$0xff]
      %v412 = vld [vmem:[%s353 + $0x88] sm:$0xff]
      %v413 = vld [vmem:[%s353 + $0x90] sm:$0xff]
      %v414 = vld [vmem:[%s353 + $0x98] sm:$0xff]
      %v415 = vld [vmem:[%s353 + $0xa0] sm:$0xff]
      %v416 = vld [vmem:[%s353 + $0xa8] sm:$0xff]
      %v417 = vld [vmem:[%s353 + $0xb0] sm:$0xff]
      %v418 = vld [vmem:[%s353 + $0xb8] sm:$0xff]
      %v419 = vld [vmem:[%s353 + $0xc0] sm:$0xff]
      %v420 = vld [vmem:[%s353 + $0xc8] sm:$0xff]
      %v421 = vld [vmem:[%s353 + $0xd0] sm:$0xff]
      %v422 = vld [vmem:[%s353 + $0xd8] sm:$0xff]
      %v423 = vld [vmem:[%s353 + $0xe0] sm:$0xff]
      %v424 = vld [vmem:[%s353 + $0xe8] sm:$0xff]
      %v425 = vld [vmem:[%s353 + $0xf0] sm:$0xff]
      %v426 = vld [vmem:[%s353 + $0xf8] sm:$0xff]
      %v428 = vunpack.c.l.b16 %v394
      %v429 = vunpack.c.h.b16 %v394
      %v430 = vpack.c.b16 %v428, %v428
      %v431 = vpack.c.b16 %v429, %v429
      %v466 = vunpack.c.l.b16 %v395
      %v467 = vunpack.c.h.b16 %v395
      %v468 = vunpack.c.l.b16 %v396
      %v469 = vunpack.c.h.b16 %v396
      %v470 = vunpack.c.l.b16 %v397
      %v471 = vunpack.c.h.b16 %v397
      %v472 = vunpack.c.l.b16 %v398
      %v473 = vunpack.c.h.b16 %v398
      %v474 = vunpack.c.l.b16 %v399
      %v475 = vunpack.c.h.b16 %v399
      %v476 = vunpack.c.l.b16 %v400
      %v477 = vunpack.c.h.b16 %v400
      %v478 = vunpack.c.l.b16 %v401
      %v479 = vunpack.c.h.b16 %v401
      %v480 = vunpack.c.l.b16 %v402
      %v481 = vunpack.c.h.b16 %v402
      %v482 = vunpack.c.l.b16 %v403
      %v483 = vunpack.c.h.b16 %v403
      %v484 = vunpack.c.l.b16 %v404
      %v485 = vunpack.c.h.b16 %v404
      %v486 = vunpack.c.l.b16 %v405
      %v487 = vunpack.c.h.b16 %v405
      %v488 = vunpack.c.l.b16 %v406
      %v489 = vunpack.c.h.b16 %v406
      %v490 = vunpack.c.l.b16 %v407
      %v491 = vunpack.c.h.b16 %v407
      %v492 = vunpack.c.l.b16 %v408
      %v493 = vunpack.c.h.b16 %v408
      %v494 = vunpack.c.l.b16 %v409
      %v495 = vunpack.c.h.b16 %v409
      %v496 = vunpack.c.l.b16 %v410
      %v497 = vunpack.c.h.b16 %v410
      %v498 = vunpack.c.l.b16 %v411
      %v499 = vunpack.c.h.b16 %v411
      %v500 = vunpack.c.l.b16 %v412
      %v501 = vunpack.c.h.b16 %v412
      %v502 = vunpack.c.l.b16 %v413
      %v503 = vunpack.c.h.b16 %v413
      %v504 = vunpack.c.l.b16 %v414
      %v505 = vunpack.c.h.b16 %v414
      %v506 = vunpack.c.l.b16 %v415
      %v507 = vunpack.c.h.b16 %v415
      %v508 = vunpack.c.l.b16 %v416
      %v509 = vunpack.c.h.b16 %v416
      %v510 = vunpack.c.l.b16 %v417
      %v511 = vunpack.c.h.b16 %v417
      %v512 = vunpack.c.l.b16 %v418
      %v513 = vunpack.c.h.b16 %v418
      %v514 = vunpack.c.l.b16 %v419
      %v515 = vunpack.c.h.b16 %v419
      %v516 = vunpack.c.l.b16 %v420
      %v517 = vunpack.c.h.b16 %v420
      %v518 = vunpack.c.l.b16 %v421
      %v519 = vunpack.c.h.b16 %v421
      %v520 = vunpack.c.l.b16 %v422
      %v521 = vunpack.c.h.b16 %v422
      %v522 = vunpack.c.l.b16 %v423
      %v523 = vunpack.c.h.b16 %v423
      %v524 = vunpack.c.l.b16 %v424
      %v525 = vunpack.c.h.b16 %v424
      %v526 = vunpack.c.l.b16 %v425
      %v527 = vunpack.c.h.b16 %v425
      %v528 = vunpack.c.l.b16 %v426
      %v529 = vunpack.c.h.b16 %v426
      %v530 = vpack.c.b16 %v468, %v466
      %v531 = vpack.c.b16 %v469, %v467
      %v532 = vpack.c.b16 %v472, %v470
      %v533 = vpack.c.b16 %v473, %v471
      %v534 = vpack.c.b16 %v476, %v474
      %v535 = vpack.c.b16 %v477, %v475
      %v536 = vpack.c.b16 %v480, %v478
      %v537 = vpack.c.b16 %v481, %v479
      %v538 = vpack.c.b16 %v484, %v482
      %v539 = vpack.c.b16 %v485, %v483
      %v540 = vpack.c.b16 %v488, %v486
      %v541 = vpack.c.b16 %v489, %v487
      %v542 = vpack.c.b16 %v492, %v490
      %v543 = vpack.c.b16 %v493, %v491
      %v544 = vpack.c.b16 %v496, %v494
      %v545 = vpack.c.b16 %v497, %v495
      %v546 = vpack.c.b16 %v500, %v498
      %v547 = vpack.c.b16 %v501, %v499
      %v548 = vpack.c.b16 %v504, %v502
      %v549 = vpack.c.b16 %v505, %v503
      %v550 = vpack.c.b16 %v508, %v506
      %v551 = vpack.c.b16 %v509, %v507
      %v552 = vpack.c.b16 %v512, %v510
      %v553 = vpack.c.b16 %v513, %v511
      %v554 = vpack.c.b16 %v516, %v514
      %v555 = vpack.c.b16 %v517, %v515
      %v556 = vpack.c.b16 %v520, %v518
      %v557 = vpack.c.b16 %v521, %v519
      %v558 = vpack.c.b16 %v524, %v522
      %v559 = vpack.c.b16 %v525, %v523
      %v560 = vpack.c.b16 %v528, %v526
      %v561 = vpack.c.b16 %v529, %v527
      %594 = vmatprep.subr.bf16.mxu0 %v531
      %595 = vmatpush1.bf16.msra.mxu0 %v530
      %596 = vmatprep.subr.bf16.mxu0 %v533
      %597 = vmatpush1.bf16.msra.mxu0 %v532
      %598 = vmatprep.subr.bf16.mxu0 %v535
      %599 = vmatpush1.bf16.msra.mxu0 %v534
      %600 = vmatprep.subr.bf16.mxu0 %v537
      %601 = vmatpush1.bf16.msra.mxu0 %v536
      %602 = vmatprep.subr.bf16.mxu0 %v539
      %603 = vmatpush1.bf16.msra.mxu0 %v538
      %604 = vmatprep.subr.bf16.mxu0 %v541
      %605 = vmatpush1.bf16.msra.mxu0 %v540
      %606 = vmatprep.subr.bf16.mxu0 %v543
      %607 = vmatpush1.bf16.msra.mxu0 %v542
      %608 = vmatprep.subr.bf16.mxu0 %v545
      %609 = vmatpush1.bf16.msra.mxu0 %v544
      %610 = vmatprep.subr.bf16.mxu0 %v547
      %611 = vmatpush1.bf16.msra.mxu0 %v546
      %612 = vmatprep.subr.bf16.mxu0 %v549
      %613 = vmatpush1.bf16.msra.mxu0 %v548
      %614 = vmatprep.subr.bf16.mxu0 %v551
      %615 = vmatpush1.bf16.msra.mxu0 %v550
      %616 = vmatprep.subr.bf16.mxu0 %v553
      %617 = vmatpush1.bf16.msra.mxu0 %v552
      %618 = vmatprep.subr.bf16.mxu0 %v555
      %619 = vmatpush1.bf16.msra.mxu0 %v554
      %620 = vmatprep.subr.bf16.mxu0 %v557
      %621 = vmatpush1.bf16.msra.mxu0 %v556
      %622 = vmatprep.subr.bf16.mxu0 %v559
      %623 = vmatpush1.bf16.msra.mxu0 %v558
      %624 = vmatprep.subr.bf16.mxu0 %v561
      %625 = vmatpush1.bf16.msra.mxu0 %v560
      %626 = vmatprep.mubr.bf16.mxu0 %v431
      %627 = vmatmul.mubr.bf16.gmra.mrb[0].mxu0 %v430
      %v628 = vpop.f32.mrb[0].mxu0
      %v629 = vadd.f32 0.0, %v628
      %v630 = vpop.f32.mrb[0].mxu0
      %v631 = vadd.f32 0.0, %v630
      %v632 = vpop.f32.mrb[0].mxu0
      %v633 = vpop.f32.mrb[0].mxu0
      %634 = vdwg.mxu0
      %v635 = vadd.f32 %v392, %v629
      %v636 = vadd.f32 %v393, %v631
      %637 = vst [vmem:[#allocation2] sm:$0xff] %v635
      %638 = vst [vmem:[#allocation2 + $0x8] sm:$0xff] %v636
      %p639 = scmp.eq.s32.totalorder %s23, 8
      // Predicated region
      $region45: #{resnet_forward.20} parent=39 // pred_check
        %p640 = pneg %p639
      $region46: #{resnet_forward.20} parent=39 // pred_check_branch
        %642 = sbr.rel (%p640) target = $region48
      $region47: #{resnet_forward.20} parent=39 // pred_region
        %v643 = vld [vmem:[#allocation2] sm:$0xff]
        %v644 = vld [vmem:[#allocation2 + $0x8] sm:$0xff]
        %v645 = vld [vmem:[%s359] sm:$0x3]
        %v647 = vlaneseq
        %v648 = vshrl.u32 %v647, 7
        %v649 = vsub.s32 0, %v648
        %v650 = vrot.slane %v645, %v649
        %v651 = vlaneseq
        %v652 = vshrl.u32 %v651, 7
        %v653 = vsub.s32 1, %v652
        %v654 = vrot.slane %v645, %v653
        %v657 = vmul.f32 %v643, %v650
        %v658 = vmul.f32 %v644, %v654
        %v659 = vld [vmem:[%s364] sm:$0x3]
        %v661 = vlaneseq
        %v662 = vshrl.u32 %v661, 7
        %v663 = vsub.s32 0, %v662
        %v664 = vrot.slane %v659, %v663
        %v665 = vlaneseq
        %v666 = vshrl.u32 %v665, 7
        %v667 = vsub.s32 1, %v666
        %v668 = vrot.slane %v659, %v667
        %v671 = vadd.f32 %v657, %v664
        %v672 = vadd.f32 %v658, %v668
        %v673 = vld [vmem:[%s374] sm:$0xff]
        %v674 = vunpack.c.l.bf16 %v673
        %v675 = vunpack.c.h.bf16 %v673
        %v676 = vadd.f32 %v671, %v674
        %v677 = vadd.f32 %v672, %v675
        %v678 = vmax.f32 %v676, 0.0
        %v679 = vmax.f32 %v677, 0.0
        %v680 = vpack.c.bf16 %v678, %v678
        %v681 = vpack.c.bf16 %v679, %v679
        %v684 = vunpack.c.l.b16 %v680
        %v685 = vunpack.c.l.b16 %v681
        %v686 = vpack.c.b16 %v685, %v684
        %688 = vst [vmem:[%s384] sm:$0xff] %v686
      $region48: #{resnet_forward.20} parent=39 // pred_fallthru
        _
      %s689 = smul.u32 2, %s22
      %p690 = scmp.lt.s32.totalorder %s21, 0
      %s691 = scalar_select %p690, %s21, 0
      %p692 = scmp.lt.s32.totalorder %s689, 1
      %s693 = scalar_select %p692, %s689, 1
      %s694 = smul.addr %s691, 2
      %s695 = sadd.s32 %s693, %s694
      %s696 = smul.addr %s695, 4
      %s697 = scalar_lea.vmem %s5, %s696
      // Predicated region
      $region49: #{resnet_forward.20} parent=39 // pred_check
        %p698 = pneg %p191
      $region50: #{resnet_forward.20} parent=39 // pred_check_branch
        %700 = sbr.rel (%p698) target = $region52
      $region51: #{resnet_forward.20} parent=39 // pred_region
        %s701 = smul.u32 2, %s22
      $region52: #{resnet_forward.20} parent=39 // pred_fallthru
        _
      // Predicated region
      $region53: #{resnet_forward.20} parent=39 // pred_check
        %p702 = pneg %p191
      $region54: #{resnet_forward.20} parent=39 // pred_check_branch
        %704 = sbr.rel (%p702) target = $region56
      $region55: #{resnet_forward.20} parent=39 // pred_region
        %s705 = smul.u32 2, %s22
        %p706 = scmp.lt.s32.totalorder %s21, 0
        %s707 = scalar_select %p706, %s21, 0
        %p708 = scmp.lt.s32.totalorder %s705, 1
        %s709 = scalar_select %p708, %s705, 1
        %s710 = smul.addr %s707, 2
        %s711 = sadd.s32 %s709, %s710
        %s712 = smul.addr %s711, 4
        %s713 = scalar_lea.vmem %s5, %s712
      $region56: #{resnet_forward.20} parent=39 // pred_fallthru
        _
    $region40: #{resnet_forward.20} parent=5 // pred_fallthru
      _
    %p714 = scmp.le.s32.totalorder 2, %s11
    // Predicated region
    $region57: #{resnet_forward.20} parent=5 // pred_check
      %p715 = pneg %p714
    $region58: #{resnet_forward.20} parent=5 // pred_check_branch
      %717 = sbr.rel (%p715) target = $region60
    $region59: #{resnet_forward.20} parent=5 // pred_region
      %s718 = ssub.s32 %s11, 2
    $region60: #{resnet_forward.20} parent=5 // pred_fallthru
      _
  $region6: #{resnet_forward.20} parent=0 // loop_footer
    %s15 = sadd.s32 1, %s11
  $region7: #{resnet_forward.20} parent=0 // loop_footer_branch
    %10 = sbr.rel target = $region3
  $region8: #{resnet_forward.20} parent=0 // loop_exit
    _

// kernel: resnet_forward.22
$region0: #{resnet_forward.22}
  #allocation0 [shape = 'u32[]', space=smem, size = 0x4, offset = 0x4, fixed_abs, tag = 'smem constant byte address 0x4 - core index']
  #allocation1 [shape = 'u32[144,128]{1,0:T(1,128)}', space=vmem, size = 0x12000, scoped, tag = 'internal scratch']
  #allocation2 [shape = 'f32[8,256]{1,0:T(8,128)}', space=vmem, size = 0x2000, scoped, tag = 'scratch operand']
  %s0 = inlined_call_operand.vmem [shape: bf16[8,2304], index: 0, kind: input, shape index: {}]
  %s1 = inlined_call_operand.vmem [shape: bf16[2304,512], index: 1, kind: input, shape index: {}]
  %s2 = inlined_call_operand.vmem [shape: f32[1,512], index: 2, kind: input, shape index: {}]
  %s3 = inlined_call_operand.vmem [shape: f32[1,512], index: 3, kind: input, shape index: {}]
  %s4 = inlined_call_operand.vmem [shape: bf16[8,512], index: 4, kind: output, shape index: {}]
  %s5 = sld [smem:[#allocation0]]
  $region95: #{resnet_forward.22} parent=0
    _
  %s7 = ssub.s32 1, %s5
  %s8 = scalar_select 0, %s7, %s5
  $region1: #{resnet_forward.22} parent=0
    #allocation3 [shape = 'u8[262144]{0}', space=vmem, size = 0x40000, scoped, tag = 'input window, operand 1']
    loop: start=0, step=1, limit=20
    $region2: #{resnet_forward.22} parent=1 // loop_pre_header
      _
    $region3: #{resnet_forward.22} parent=1 // loop_header
      %s10 = sphi 0, %s14
      %p11 = scmp.ge.s32.totalorder %s10, 20
      %s17 = sphi 0, %s36
      %s18 = sphi 0, %s32
      %s19 = sphi 0, %s28
      %s20 = sphi 0, %s17
      %s21 = sphi 0, %s18
      %s22 = sphi 0, %s19
      %s23 = sphi 0, %s20
      %s24 = sphi 0, %s21
      %s25 = sphi 0, %s22
      %s41 = sphi 0, %s43
      %s44 = sphi 0, %s41
      %s45 = sphi 0, %s44
      %s61 = sphi 0, %s45
      %s69 = sphi 0, %s71
      %s72 = sphi 0, %s69
      %s73 = sphi 0, %s72
      %s89 = sphi 0, %s73
      %s95 = sphi 0, %s97
      %s98 = sphi 0, %s95
      %s99 = sphi 0, %s98
      %s115 = sphi 0, %s99
      %s121 = sphi 0, %s123
      %s124 = sphi 0, %s121
      %s125 = sphi 0, %s124
      %s141 = sphi 0, %s125
      %s149 = sphi 0, %s151
      %s152 = sphi 0, %s149
      %s153 = sphi 0, %s152
      %s169 = sphi 0, %s153
    $region4: #{resnet_forward.22} parent=1 // loop_header_branch
      %13 = sbr.rel (%p11) target = $region8
    $region5: #{resnet_forward.22} parent=1 // loop_body
      %s15 = ssub.s32 %s10, 1
      %s16 = ssub.s32 %s10, 2
      %s26 = sadd.s32 1, %s19
      %p27 = scmp.ge.s32.totalorder %s26, 9
      %s28 = scalar_select %p27, 0, %s26
      %s29 = sadd.s32 1, %s18
      %s30 = scalar_select %p27, %s29, %s18
      %p31 = scmp.ge.s32.totalorder %s30, 2
      %s32 = scalar_select %p31, 0, %s30
      %s33 = sadd.s32 1, %s17
      %s34 = scalar_select %p31, %s33, %s17
      %p35 = scmp.ge.s32.totalorder %s34, 1
      %s36 = scalar_select %p35, 0, %s34
      %s37 = ssub.s32 %s17, %s36
      %s38 = ssub.s32 %s19, %s28
      %s39 = sor.u32 %s37, %s38
      %p40 = scmp.eq.s32.totalorder %s39, 0
      %s42 = sadd.s32 %s41, 1
      %s43 = scalar_select %p40, %s41, %s42
      %p46 = pneg %p40
      %p47 = scmp.eq.s32.totalorder %s10, 17
      %p48 = por %p46, %p47
      %p49 = scmp.ne.s32.totalorder %s41, %s44
      %p50 = scmp.eq.s32.totalorder %s10, 0
      %p51 = por %p49, %p50
      %p52 = scmp.ne.s32.totalorder %s41, %s44
      %p53 = scmp.eq.s32.totalorder %s15, 17
      %p54 = por %p52, %p53
      %p55 = scmp.ne.s32.totalorder %s44, %s45
      %p56 = scmp.eq.s32.totalorder %s15, 0
      %p57 = por %p55, %p56
      %p58 = scmp.ne.s32.totalorder %s44, %s45
      %p59 = scmp.eq.s32.totalorder %s16, 17
      %p60 = por %p58, %p59
      %p62 = scmp.ne.s32.totalorder %s45, %s61
      %p63 = scmp.eq.s32.totalorder %s16, 0
      %p64 = por %p62, %p63
      %s65 = ssub.s32 %s19, %s28
      %s66 = ssub.s32 %s18, %s32
      %s67 = sor.u32 %s65, %s66
      %p68 = scmp.eq.s32.totalorder %s67, 0
      %s70 = sadd.s32 %s69, 1
      %s71 = scalar_select %p68, %s69, %s70
      %p74 = pneg %p68
      %p75 = scmp.eq.s32.totalorder %s10, 17
      %p76 = por %p74, %p75
      %p77 = scmp.ne.s32.totalorder %s69, %s72
      %p78 = scmp.eq.s32.totalorder %s10, 0
      %p79 = por %p77, %p78
      %p80 = scmp.ne.s32.totalorder %s69, %s72
      %p81 = scmp.eq.s32.totalorder %s15, 17
      %p82 = por %p80, %p81
      %p83 = scmp.ne.s32.totalorder %s72, %s73
      %p84 = scmp.eq.s32.totalorder %s15, 0
      %p85 = por %p83, %p84
      %p86 = scmp.ne.s32.totalorder %s72, %s73
      %p87 = scmp.eq.s32.totalorder %s16, 17
      %p88 = por %p86, %p87
      %p90 = scmp.ne.s32.totalorder %s73, %s89
      %p91 = scmp.eq.s32.totalorder %s16, 0
      %p92 = por %p90, %p91
      %s93 = ssub.s32 %s18, %s32
      %p94 = scmp.eq.s32.totalorder %s93, 0
      %s96 = sadd.s32 %s95, 1
      %s97 = scalar_select %p94, %s95, %s96
      %p100 = pneg %p94
      %p101 = scmp.eq.s32.totalorder %s10, 17
      %p102 = por %p100, %p101
      %p103 = scmp.ne.s32.totalorder %s95, %s98
      %p104 = scmp.eq.s32.totalorder %s10, 0
      %p105 = por %p103, %p104
      %p106 = scmp.ne.s32.totalorder %s95, %s98
      %p107 = scmp.eq.s32.totalorder %s15, 17
      %p108 = por %p106, %p107
      %p109 = scmp.ne.s32.totalorder %s98, %s99
      %p110 = scmp.eq.s32.totalorder %s15, 0
      %p111 = por %p109, %p110
      %p112 = scmp.ne.s32.totalorder %s98, %s99
      %p113 = scmp.eq.s32.totalorder %s16, 17
      %p114 = por %p112, %p113
      %p116 = scmp.ne.s32.totalorder %s99, %s115
      %p117 = scmp.eq.s32.totalorder %s16, 0
      %p118 = por %p116, %p117
      %s119 = ssub.s32 %s18, %s32
      %p120 = scmp.eq.s32.totalorder %s119, 0
      %s122 = sadd.s32 %s121, 1
      %s123 = scalar_select %p120, %s121, %s122
      %p126 = pneg %p120
      %p127 = scmp.eq.s32.totalorder %s10, 17
      %p128 = por %p126, %p127
      %p129 = scmp.ne.s32.totalorder %s121, %s124
      %p130 = scmp.eq.s32.totalorder %s10, 0
      %p131 = por %p129, %p130
      %p132 = scmp.ne.s32.totalorder %s121, %s124
      %p133 = scmp.eq.s32.totalorder %s15, 17
      %p134 = por %p132, %p133
      %p135 = scmp.ne.s32.totalorder %s124, %s125
      %p136 = scmp.eq.s32.totalorder %s15, 0
      %p137 = por %p135, %p136
      %p138 = scmp.ne.s32.totalorder %s124, %s125
      %p139 = scmp.eq.s32.totalorder %s16, 17
      %p140 = por %p138, %p139
      %p142 = scmp.ne.s32.totalorder %s125, %s141
      %p143 = scmp.eq.s32.totalorder %s16, 0
      %p144 = por %p142, %p143
      %s145 = ssub.s32 %s17, %s36
      %s146 = ssub.s32 %s18, %s32
      %s147 = sor.u32 %s145, %s146
      %p148 = scmp.eq.s32.totalorder %s147, 0
      %s150 = sadd.s32 %s149, 1
      %s151 = scalar_select %p148, %s149, %s150
      %p154 = pneg %p148
      %p155 = scmp.eq.s32.totalorder %s10, 17
      %p156 = por %p154, %p155
      %p157 = scmp.ne.s32.totalorder %s149, %s152
      %p158 = scmp.eq.s32.totalorder %s10, 0
      %p159 = por %p157, %p158
      %p160 = scmp.ne.s32.totalorder %s149, %s152
      %p161 = scmp.eq.s32.totalorder %s15, 17
      %p162 = por %p160, %p161
      %p163 = scmp.ne.s32.totalorder %s152, %s153
      %p164 = scmp.eq.s32.totalorder %s15, 0
      %p165 = por %p163, %p164
      %p166 = scmp.ne.s32.totalorder %s152, %s153
      %p167 = scmp.eq.s32.totalorder %s16, 17
      %p168 = por %p166, %p167
      %p170 = scmp.ne.s32.totalorder %s153, %s169
      %p171 = scmp.eq.s32.totalorder %s16, 0
      %p172 = por %p170, %p171
      %p173 = scmp.le.s32.totalorder 1, %s10
      %p174 = scmp.lt.s32.totalorder %s10, 19
      %p175 = pnand %p173, %p174
      %p176 = pneg %p175
      // Predicated region
      $region9: #{resnet_forward.22} parent=5 // pred_check
        _
      $region10: #{resnet_forward.22} parent=5 // pred_check_branch
        %178 = sbr.rel (%p175) target = $region12
      $region11: #{resnet_forward.22} parent=5 // pred_region
        %s179 = ssub.s32 %s10, 1
      $region12: #{resnet_forward.22} parent=5 // pred_fallthru
        _
      %p180 = scmp.lt.s32.totalorder %s10, 18
      // Predicated region
      $region13: #{resnet_forward.22} parent=5 // pred_check
        %p181 = pneg %p180
      $region14: #{resnet_forward.22} parent=5 // pred_check_branch
        %183 = sbr.rel (%p181) target = $region16
      $region15: #{resnet_forward.22} parent=5 // pred_region
        // Predicated region
        $region17: #{resnet_forward.22} parent=15 // pred_check
          %p184 = pneg %p51
        $region18: #{resnet_forward.22} parent=15 // pred_check_branch
          %186 = sbr.rel (%p184) target = $region20
        $region19: #{resnet_forward.22} parent=15 // pred_region
          %s187 = smul.u32 2, %s19
          %p188 = scmp.lt.s32.totalorder %s17, 0
          %s189 = scalar_select %p188, %s17, 0
          %p190 = scmp.lt.s32.totalorder %s187, 17
          %s191 = scalar_select %p190, %s187, 17
          %s192 = smul.addr %s189, 18
          %s193 = sadd.s32 %s191, %s192
          %s194 = smul.addr %s193, 4
          %s195 = scalar_lea.vmem %s0, %s194
          %s196 = smul.u32 2, %s19
        $region20: #{resnet_forward.22} parent=15 // pred_fallthru
          _
        // Predicated region
        $region21: #{resnet_forward.22} parent=15 // pred_check
          %p197 = pneg %p79
        $region22: #{resnet_forward.22} parent=15 // pred_check_branch
          %199 = sbr.rel (%p197) target = $region24
        $region23: #{resnet_forward.22} parent=15 // pred_region
          %s200 = sand.u32 %s69, 1
          %s201 = sand.u32 %s69, 1
          %s202 = smul.addr %s201, 256
          %s203 = scalar_lea.vmem [#allocation3], %s202
          %s204 = smul.u32 32, %s19
          %s205 = smul.u32 2, %s18
          %s206 = smul.addr %s204, 4
          %s207 = sadd.s32 %s205, %s206
          %s208 = smul.addr %s207, 4
          %s209 = scalar_lea.vmem %s1, %s208
          // Predicated region
          $region25: #{resnet_forward.22} parent=23 // pred_check
            _
          $region26: #{resnet_forward.22} parent=23 // pred_check_branch
            %211 = sbr.rel (0) target = $region28
          $region27: #{resnet_forward.22} parent=23 // pred_region
            // Predicated region
            $region29: #{resnet_forward.22} parent=27 // pred_check
              _
            $region30: #{resnet_forward.22} parent=27 // pred_check_branch
              %213 = sbr.rel (0) target = $region32
            $region31: #{resnet_forward.22} parent=27 // pred_region
              // Predicated region
              $region44: #{resnet_forward.22} parent=31 // pred_check
                _
              $region45: #{resnet_forward.22} parent=31 // pred_check_branch
                %290 = sbr.rel (0) target = $region47
              $region46: #{resnet_forward.22} parent=31 // pred_region
                loop: start=0, step=1, limit=1
                $region48: #{resnet_forward.22} parent=46 // loop_pre_header
                  _
                $region49: #{resnet_forward.22} parent=46 // loop_header
                  %s292 = sphi 0, %s296
                  %p293 = scmp.ge.s32.totalorder %s292, 1
                  %s297 = sphi %s209, %s209
                  %s298 = sphi %s203, %s203
                $region50: #{resnet_forward.22} parent=46 // loop_header_branch
                  %295 = sbr.rel (%p293) target = $region54
                $region51: #{resnet_forward.22} parent=46 // loop_body
                  %v299 = vld [vmem:[%s297] sm:$0xff]
                  %300 = vst [vmem:[%s298] sm:$0xff] %v299
                  %v301 = vld [vmem:[%s297 + $0x10] sm:$0xff]
                  %302 = vst [vmem:[%s298 + $0x8] sm:$0xff] %v301
                  %v303 = vld [vmem:[%s297 + $0x20] sm:$0xff]
                  %304 = vst [vmem:[%s298 + $0x10] sm:$0xff] %v303
                  %v305 = vld [vmem:[%s297 + $0x30] sm:$0xff]
                  %306 = vst [vmem:[%s298 + $0x18] sm:$0xff] %v305
                  %v307 = vld [vmem:[%s297 + $0x40] sm:$0xff]
                  %308 = vst [vmem:[%s298 + $0x20] sm:$0xff] %v307
                  %v309 = vld [vmem:[%s297 + $0x50] sm:$0xff]
                  %310 = vst [vmem:[%s298 + $0x28] sm:$0xff] %v309
                  %v311 = vld [vmem:[%s297 + $0x60] sm:$0xff]
                  %312 = vst [vmem:[%s298 + $0x30] sm:$0xff] %v311
                  %v313 = vld [vmem:[%s297 + $0x70] sm:$0xff]
                  %314 = vst [vmem:[%s298 + $0x38] sm:$0xff] %v313
                  %v315 = vld [vmem:[%s297 + $0x80] sm:$0xff]
                  %316 = vst [vmem:[%s298 + $0x40] sm:$0xff] %v315
                  %v317 = vld [vmem:[%s297 + $0x90] sm:$0xff]
                  %318 = vst [vmem:[%s298 + $0x48] sm:$0xff] %v317
                  %v319 = vld [vmem:[%s297 + $0xa0] sm:$0xff]
                  %320 = vst [vmem:[%s298 + $0x50] sm:$0xff] %v319
                  %v321 = vld [vmem:[%s297 + $0xb0] sm:$0xff]
                  %322 = vst [vmem:[%s298 + $0x58] sm:$0xff] %v321
                  %v323 = vld [vmem:[%s297 + $0xc0] sm:$0xff]
                  %324 = vst [vmem:[%s298 + $0x60] sm:$0xff] %v323
                  %v325 = vld [vmem:[%s297 + $0xd0] sm:$0xff]
                  %326 = vst [vmem:[%s298 + $0x68] sm:$0xff] %v325
                  %v327 = vld [vmem:[%s297 + $0xe0] sm:$0xff]
                  %328 = vst [vmem:[%s298 + $0x70] sm:$0xff] %v327
                  %v329 = vld [vmem:[%s297 + $0xf0] sm:$0xff]
                  %330 = vst [vmem:[%s298 + $0x78] sm:$0xff] %v329
                  %v331 = vld [vmem:[%s297 + $0x100] sm:$0xff]
                  %332 = vst [vmem:[%s298 + $0x80] sm:$0xff] %v331
                  %v333 = vld [vmem:[%s297 + $0x110] sm:$0xff]
                  %334 = vst [vmem:[%s298 + $0x88] sm:$0xff] %v333
                  %v335 = vld [vmem:[%s297 + $0x120] sm:$0xff]
                  %336 = vst [vmem:[%s298 + $0x90] sm:$0xff] %v335
                  %v337 = vld [vmem:[%s297 + $0x130] sm:$0xff]
                  %338 = vst [vmem:[%s298 + $0x98] sm:$0xff] %v337
                  %v339 = vld [vmem:[%s297 + $0x140] sm:$0xff]
                  %340 = vst [vmem:[%s298 + $0xa0] sm:$0xff] %v339
                  %v341 = vld [vmem:[%s297 + $0x150] sm:$0xff]
                  %342 = vst [vmem:[%s298 + $0xa8] sm:$0xff] %v341
                  %v343 = vld [vmem:[%s297 + $0x160] sm:$0xff]
                  %344 = vst [vmem:[%s298 + $0xb0] sm:$0xff] %v343
                  %v345 = vld [vmem:[%s297 + $0x170] sm:$0xff]
                  %346 = vst [vmem:[%s298 + $0xb8] sm:$0xff] %v345
                  %v347 = vld [vmem:[%s297 + $0x180] sm:$0xff]
                  %348 = vst [vmem:[%s298 + $0xc0] sm:$0xff] %v347
                  %v349 = vld [vmem:[%s297 + $0x190] sm:$0xff]
                  %350 = vst [vmem:[%s298 + $0xc8] sm:$0xff] %v349
                  %v351 = vld [vmem:[%s297 + $0x1a0] sm:$0xff]
                  %352 = vst [vmem:[%s298 + $0xd0] sm:$0xff] %v351
                  %v353 = vld [vmem:[%s297 + $0x1b0] sm:$0xff]
                  %354 = vst [vmem:[%s298 + $0xd8] sm:$0xff] %v353
                  %v355 = vld [vmem:[%s297 + $0x1c0] sm:$0xff]
                  %356 = vst [vmem:[%s298 + $0xe0] sm:$0xff] %v355
                  %v357 = vld [vmem:[%s297 + $0x1d0] sm:$0xff]
                  %358 = vst [vmem:[%s298 + $0xe8] sm:$0xff] %v357
                  %v359 = vld [vmem:[%s297 + $0x1e0] sm:$0xff]
                  %360 = vst [vmem:[%s298 + $0xf0] sm:$0xff] %v359
                  %v361 = vld [vmem:[%s297 + $0x1f0] sm:$0xff]
                  %362 = vst [vmem:[%s298 + $0xf8] sm:$0xff] %v361
                $region52: #{resnet_forward.22} parent=46 // loop_footer
                  %s296 = sadd.s32 1, %s292
                $region53: #{resnet_forward.22} parent=46 // loop_footer_branch
                  %291 = sbr.rel target = $region49
                $region54: #{resnet_forward.22} parent=46 // loop_exit
                  _
              $region47: #{resnet_forward.22} parent=31 // pred_fallthru
                _
              // Predicated region
              $region55: #{resnet_forward.22} parent=31 // pred_check
                _
              $region56: #{resnet_forward.22} parent=31 // pred_check_branch
                %364 = sbr.rel target = $region58
              $region57: #{resnet_forward.22} parent=31 // pred_region
                _
              $region58: #{resnet_forward.22} parent=31 // pred_fallthru
                _
            $region32: #{resnet_forward.22} parent=27 // pred_fallthru
              _
            // Predicated region
            $region33: #{resnet_forward.22} parent=27 // pred_check
              _
            $region34: #{resnet_forward.22} parent=27 // pred_check_branch
              %215 = sbr.rel target = $region36
            $region35: #{resnet_forward.22} parent=27 // pred_region
              loop: start=0, step=1, limit=1
              $region37: #{resnet_forward.22} parent=35 // loop_pre_header
                _
              $region38: #{resnet_forward.22} parent=35 // loop_header
                %s218 = sphi 0, %s222
                %p219 = scmp.ge.s32.totalorder %s218, 1
                %s223 = sphi %s209, %s209
                %s224 = sphi %s203, %s203
              $region39: #{resnet_forward.22} parent=35 // loop_header_branch
                %221 = sbr.rel (%p219) target = $region43
              $region40: #{resnet_forward.22} parent=35 // loop_body
                %v225 = vld [vmem:[%s223] sm:$0xff]
                %226 = vst [vmem:[%s224] sm:$0xff] %v225
                %v227 = vld [vmem:[%s223 + $0x10] sm:$0xff]
                %228 = vst [vmem:[%s224 + $0x8] sm:$0xff] %v227
                %v229 = vld [vmem:[%s223 + $0x20] sm:$0xff]
                %230 = vst [vmem:[%s224 + $0x10] sm:$0xff] %v229
                %v231 = vld [vmem:[%s223 + $0x30] sm:$0xff]
                %232 = vst [vmem:[%s224 + $0x18] sm:$0xff] %v231
                %v233 = vld [vmem:[%s223 + $0x40] sm:$0xff]
                %234 = vst [vmem:[%s224 + $0x20] sm:$0xff] %v233
                %v235 = vld [vmem:[%s223 + $0x50] sm:$0xff]
                %236 = vst [vmem:[%s224 + $0x28] sm:$0xff] %v235
                %v237 = vld [vmem:[%s223 + $0x60] sm:$0xff]
                %238 = vst [vmem:[%s224 + $0x30] sm:$0xff] %v237
                %v239 = vld [vmem:[%s223 + $0x70] sm:$0xff]
                %240 = vst [vmem:[%s224 + $0x38] sm:$0xff] %v239
                %v241 = vld [vmem:[%s223 + $0x80] sm:$0xff]
                %242 = vst [vmem:[%s224 + $0x40] sm:$0xff] %v241
                %v243 = vld [vmem:[%s223 + $0x90] sm:$0xff]
                %244 = vst [vmem:[%s224 + $0x48] sm:$0xff] %v243
                %v245 = vld [vmem:[%s223 + $0xa0] sm:$0xff]
                %246 = vst [vmem:[%s224 + $0x50] sm:$0xff] %v245
                %v247 = vld [vmem:[%s223 + $0xb0] sm:$0xff]
                %248 = vst [vmem:[%s224 + $0x58] sm:$0xff] %v247
                %v249 = vld [vmem:[%s223 + $0xc0] sm:$0xff]
                %250 = vst [vmem:[%s224 + $0x60] sm:$0xff] %v249
                %v251 = vld [vmem:[%s223 + $0xd0] sm:$0xff]
                %252 = vst [vmem:[%s224 + $0x68] sm:$0xff] %v251
                %v253 = vld [vmem:[%s223 + $0xe0] sm:$0xff]
                %254 = vst [vmem:[%s224 + $0x70] sm:$0xff] %v253
                %v255 = vld [vmem:[%s223 + $0xf0] sm:$0xff]
                %256 = vst [vmem:[%s224 + $0x78] sm:$0xff] %v255
                %v257 = vld [vmem:[%s223 + $0x100] sm:$0xff]
                %258 = vst [vmem:[%s224 + $0x80] sm:$0xff] %v257
                %v259 = vld [vmem:[%s223 + $0x110] sm:$0xff]
                %260 = vst [vmem:[%s224 + $0x88] sm:$0xff] %v259
                %v261 = vld [vmem:[%s223 + $0x120] sm:$0xff]
                %262 = vst [vmem:[%s224 + $0x90] sm:$0xff] %v261
                %v263 = vld [vmem:[%s223 + $0x130] sm:$0xff]
                %264 = vst [vmem:[%s224 + $0x98] sm:$0xff] %v263
                %v265 = vld [vmem:[%s223 + $0x140] sm:$0xff]
                %266 = vst [vmem:[%s224 + $0xa0] sm:$0xff] %v265
                %v267 = vld [vmem:[%s223 + $0x150] sm:$0xff]
                %268 = vst [vmem:[%s224 + $0xa8] sm:$0xff] %v267
                %v269 = vld [vmem:[%s223 + $0x160] sm:$0xff]
                %270 = vst [vmem:[%s224 + $0xb0] sm:$0xff] %v269
                %v271 = vld [vmem:[%s223 + $0x170] sm:$0xff]
                %272 = vst [vmem:[%s224 + $0xb8] sm:$0xff] %v271
                %v273 = vld [vmem:[%s223 + $0x180] sm:$0xff]
                %274 = vst [vmem:[%s224 + $0xc0] sm:$0xff] %v273
                %v275 = vld [vmem:[%s223 + $0x190] sm:$0xff]
                %276 = vst [vmem:[%s224 + $0xc8] sm:$0xff] %v275
                %v277 = vld [vmem:[%s223 + $0x1a0] sm:$0xff]
                %278 = vst [vmem:[%s224 + $0xd0] sm:$0xff] %v277
                %v279 = vld [vmem:[%s223 + $0x1b0] sm:$0xff]
                %280 = vst [vmem:[%s224 + $0xd8] sm:$0xff] %v279
                %v281 = vld [vmem:[%s223 + $0x1c0] sm:$0xff]
                %282 = vst [vmem:[%s224 + $0xe0] sm:$0xff] %v281
                %v283 = vld [vmem:[%s223 + $0x1d0] sm:$0xff]
                %284 = vst [vmem:[%s224 + $0xe8] sm:$0xff] %v283
                %v285 = vld [vmem:[%s223 + $0x1e0] sm:$0xff]
                %286 = vst [vmem:[%s224 + $0xf0] sm:$0xff] %v285
                %v287 = vld [vmem:[%s223 + $0x1f0] sm:$0xff]
                %288 = vst [vmem:[%s224 + $0xf8] sm:$0xff] %v287
              $region41: #{resnet_forward.22} parent=35 // loop_footer
                %s222 = sadd.s32 1, %s218
              $region42: #{resnet_forward.22} parent=35 // loop_footer_branch
                %217 = sbr.rel target = $region38
              $region43: #{resnet_forward.22} parent=35 // loop_exit
                _
            $region36: #{resnet_forward.22} parent=27 // pred_fallthru
              _
          $region28: #{resnet_forward.22} parent=23 // pred_fallthru
            _
          %365 = vnop
        $region24: #{resnet_forward.22} parent=15 // pred_fallthru
          _
        // Predicated region
        $region59: #{resnet_forward.22} parent=15 // pred_check
          %p366 = pneg %p105
        $region60: #{resnet_forward.22} parent=15 // pred_check_branch
          %368 = sbr.rel (%p366) target = $region62
        $region61: #{resnet_forward.22} parent=15 // pred_region
          %s369 = smul.u32 2, %s18
          %p370 = scmp.lt.s32.totalorder %s369, 3
          %s371 = scalar_select %p370, %s369, 3
          %s372 = scalar_lea.vmem %s2, %s371
          %s373 = smul.u32 2, %s18
        $region62: #{resnet_forward.22} parent=15 // pred_fallthru
          _
        // Predicated region
        $region63: #{resnet_forward.22} parent=15 // pred_check
          %p374 = pneg %p131
        $region64: #{resnet_forward.22} parent=15 // pred_check_branch
          %376 = sbr.rel (%p374) target = $region66
        $region65: #{resnet_forward.22} parent=15 // pred_region
          %s377 = smul.u32 2, %s18
          %p378 = scmp.lt.s32.totalorder %s377, 3
          %s379 = scalar_select %p378, %s377, 3
          %s380 = scalar_lea.vmem %s3, %s379
          %s381 = smul.u32 2, %s18
        $region66: #{resnet_forward.22} parent=15 // pred_fallthru
          _
      $region16: #{resnet_forward.22} parent=5 // pred_fallthru
        _
      %p382 = scmp.le.s32.totalorder 1, %s10
      %p383 = scmp.lt.s32.totalorder %s10, 19
      %p384 = pnand %p382, %p383
      %p385 = pneg %p384
      // Predicated region
      $region67: #{resnet_forward.22} parent=5 // pred_check
        _
      $region68: #{resnet_forward.22} parent=5 // pred_check_branch
        %387 = sbr.rel (%p384) target = $region70
      $region69: #{resnet_forward.22} parent=5 // pred_region
        %s388 = ssub.s32 %s10, 1
        %s389 = sand.u32 %s72, 1
        %s390 = sand.u32 %s72, 1
        %s391 = smul.addr %s390, 256
        %s392 = scalar_lea.vmem [#allocation3], %s391
        // Predicated region
        $region71: #{resnet_forward.22} parent=69 // pred_check
          %p393 = pneg %p85
        $region72: #{resnet_forward.22} parent=69 // pred_check_branch
          %395 = sbr.rel (%p393) target = $region74
        $region73: #{resnet_forward.22} parent=69 // pred_region
          _
        $region74: #{resnet_forward.22} parent=69 // pred_fallthru
          _
        %s396 = smul.u32 2, %s22
        %p397 = scmp.lt.s32.totalorder %s20, 0
        %s398 = scalar_select %p397, %s20, 0
        %p399 = scmp.lt.s32.totalorder %s396, 17
        %s400 = scalar_select %p399, %s396, 17
        %s401 = smul.addr %s398, 18
        %s402 = sadd.s32 %s400, %s401
        %s403 = smul.addr %s402, 4
        %s404 = scalar_lea.vmem %s0, %s403
        %p405 = pneg %p57
        %p406 = pneg %p54
        %s407 = sand.u32 %s72, 1
        %s408 = sand.u32 %s72, 1
        %s409 = smul.addr %s408, 256
        %s410 = scalar_lea.vmem [#allocation3], %s409
        %p411 = pneg %p85
        %p412 = pneg %p82
        %s413 = smul.u32 2, %s21
        %p414 = scmp.lt.s32.totalorder %s413, 3
        %s415 = scalar_select %p414, %s413, 3
        %s416 = scalar_lea.vmem %s2, %s415
        %p417 = pneg %p111
        %p418 = pneg %p108
        %s419 = smul.u32 2, %s21
        %p420 = scmp.lt.s32.totalorder %s419, 3
        %s421 = scalar_select %p420, %s419, 3
        %s422 = scalar_lea.vmem %s3, %s421
        %p423 = pneg %p137
        %p424 = pneg %p134
        %p425 = pneg %p165
        %p426 = pneg %p162
        %s427 = smul.u32 2, %s21
        %p428 = scmp.lt.s32.totalorder %s20, 0
        %s429 = scalar_select %p428, %s20, 0
        %p430 = scmp.lt.s32.totalorder %s427, 3
        %s431 = scalar_select %p430, %s427, 3
        %s432 = smul.addr %s429, 4
        %s433 = sadd.s32 %s431, %s432
        %s434 = smul.addr %s433, 4
        %s435 = scalar_lea.vmem %s4, %s434
        %s436 = smul.u32 2, %s22
        %p437 = scmp.lt.s32.totalorder %s20, 0
        %s438 = scalar_select %p437, %s20, 0
        %p439 = scmp.lt.s32.totalorder %s436, 17
        %s440 = scalar_select %p439, %s436, 17
        %s441 = smul.addr %s438, 18
        %s442 = sadd.s32 %s440, %s441
        %s443 = smul.addr %s442, 4
        %s444 = scalar_lea.vmem %s0, %s443
        %s445 = smul.u32 2, %s22
        %s446 = smul.u32 32, %s22
        %s447 = smul.u32 2, %s21
        %s448 = smul.u32 2, %s21
        %p449 = scmp.lt.s32.totalorder %s448, 3
        %s450 = scalar_select %p449, %s448, 3
        %s451 = scalar_lea.vmem %s2, %s450
        %s452 = smul.u32 2, %s21
        %s453 = smul.u32 2, %s21
        %p454 = scmp.lt.s32.totalorder %s453, 3
        %s455 = scalar_select %p454, %s453, 3
        %s456 = scalar_lea.vmem %s3, %s455
        %s457 = smul.u32 2, %s21
        %s458 = smul.u32 2, %s21
        %p459 = scmp.lt.s32.totalorder %s20, 0
        %s460 = scalar_select %p459, %s20, 0
        %p461 = scmp.lt.s32.totalorder %s458, 3
        %s462 = scalar_select %p461, %s458, 3
        %s463 = smul.addr %s460, 4
        %s464 = sadd.s32 %s462, %s463
        %s465 = smul.addr %s464, 4
        %s466 = scalar_lea.vmem %s4, %s465
        %s467 = smul.u32 2, %s21
        %p468 = scmp.eq.s32.totalorder %s22, 0
        // Predicated region
        $region75: #{resnet_forward.22} parent=69 // pred_check
          %p469 = pneg %p468
        $region76: #{resnet_forward.22} parent=69 // pred_check_branch
          %471 = sbr.rel (%p469) target = $region78
        $region77: #{resnet_forward.22} parent=69 // pred_region
          %472 = vst [vmem:[#allocation2] sm:$0xff] 0.0
          %473 = vst [vmem:[#allocation2 + $0x8] sm:$0xff] 0.0
        $region78: #{resnet_forward.22} parent=69 // pred_fallthru
          _
        %v474 = vld [vmem:[#allocation2] sm:$0xff]
        %v475 = vld [vmem:[#allocation2 + $0x8] sm:$0xff]
        %v476 = vld [vmem:[%s444] sm:$0xff]
        %v477 = vld [vmem:[%s392] sm:$0xff]
        %v478 = vld [vmem:[%s392 + $0x8] sm:$0xff]
        %v479 = vld [vmem:[%s392 + $0x10] sm:$0xff]
        %v480 = vld [vmem:[%s392 + $0x18] sm:$0xff]
        %v481 = vld [vmem:[%s392 + $0x20] sm:$0xff]
        %v482 = vld [vmem:[%s392 + $0x28] sm:$0xff]
        %v483 = vld [vmem:[%s392 + $0x30] sm:$0xff]
        %v484 = vld [vmem:[%s392 + $0x38] sm:$0xff]
        %v485 = vld [vmem:[%s392 + $0x40] sm:$0xff]
        %v486 = vld [vmem:[%s392 + $0x48] sm:$0xff]
        %v487 = vld [vmem:[%s392 + $0x50] sm:$0xff]
        %v488 = vld [vmem:[%s392 + $0x58] sm:$0xff]
        %v489 = vld [vmem:[%s392 + $0x60] sm:$0xff]
        %v490 = vld [vmem:[%s392 + $0x68] sm:$0xff]
        %v491 = vld [vmem:[%s392 + $0x70] sm:$0xff]
        %v492 = vld [vmem:[%s392 + $0x78] sm:$0xff]
        %v493 = vld [vmem:[%s392 + $0x80] sm:$0xff]
        %v494 = vld [vmem:[%s392 + $0x88] sm:$0xff]
        %v495 = vld [vmem:[%s392 + $0x90] sm:$0xff]
        %v496 = vld [vmem:[%s392 + $0x98] sm:$0xff]
        %v497 = vld [vmem:[%s392 + $0xa0] sm:$0xff]
        %v498 = vld [vmem:[%s392 + $0xa8] sm:$0xff]
        %v499 = vld [vmem:[%s392 + $0xb0] sm:$0xff]
        %v500 = vld [vmem:[%s392 + $0xb8] sm:$0xff]
        %v501 = vld [vmem:[%s392 + $0xc0] sm:$0xff]
        %v502 = vld [vmem:[%s392 + $0xc8] sm:$0xff]
        %v503 = vld [vmem:[%s392 + $0xd0] sm:$0xff]
        %v504 = vld [vmem:[%s392 + $0xd8] sm:$0xff]
        %v505 = vld [vmem:[%s392 + $0xe0] sm:$0xff]
        %v506 = vld [vmem:[%s392 + $0xe8] sm:$0xff]
        %v507 = vld [vmem:[%s392 + $0xf0] sm:$0xff]
        %v508 = vld [vmem:[%s392 + $0xf8] sm:$0xff]
        %v510 = vunpack.c.l.b16 %v476
        %v511 = vunpack.c.h.b16 %v476
        %v512 = vpack.c.b16 %v510, %v510
        %v513 = vpack.c.b16 %v511, %v511
        %v548 = vunpack.c.l.b16 %v477
        %v549 = vunpack.c.h.b16 %v477
        %v550 = vunpack.c.l.b16 %v478
        %v551 = vunpack.c.h.b16 %v478
        %v552 = vunpack.c.l.b16 %v479
        %v553 = vunpack.c.h.b16 %v479
        %v554 = vunpack.c.l.b16 %v480
        %v555 = vunpack.c.h.b16 %v480
        %v556 = vunpack.c.l.b16 %v481
        %v557 = vunpack.c.h.b16 %v481
        %v558 = vunpack.c.l.b16 %v482
        %v559 = vunpack.c.h.b16 %v482
        %v560 = vunpack.c.l.b16 %v483
        %v561 = vunpack.c.h.b16 %v483
        %v562 = vunpack.c.l.b16 %v484
        %v563 = vunpack.c.h.b16 %v484
        %v564 = vunpack.c.l.b16 %v485
        %v565 = vunpack.c.h.b16 %v485
        %v566 = vunpack.c.l.b16 %v486
        %v567 = vunpack.c.h.b16 %v486
        %v568 = vunpack.c.l.b16 %v487
        %v569 = vunpack.c.h.b16 %v487
        %v570 = vunpack.c.l.b16 %v488
        %v571 = vunpack.c.h.b16 %v488
        %v572 = vunpack.c.l.b16 %v489
        %v573 = vunpack.c.h.b16 %v489
        %v574 = vunpack.c.l.b16 %v490
        %v575 = vunpack.c.h.b16 %v490
        %v576 = vunpack.c.l.b16 %v491
        %v577 = vunpack.c.h.b16 %v491
        %v578 = vunpack.c.l.b16 %v492
        %v579 = vunpack.c.h.b16 %v492
        %v580 = vunpack.c.l.b16 %v493
        %v581 = vunpack.c.h.b16 %v493
        %v582 = vunpack.c.l.b16 %v494
        %v583 = vunpack.c.h.b16 %v494
        %v584 = vunpack.c.l.b16 %v495
        %v585 = vunpack.c.h.b16 %v495
        %v586 = vunpack.c.l.b16 %v496
        %v587 = vunpack.c.h.b16 %v496
        %v588 = vunpack.c.l.b16 %v497
        %v589 = vunpack.c.h.b16 %v497
        %v590 = vunpack.c.l.b16 %v498
        %v591 = vunpack.c.h.b16 %v498
        %v592 = vunpack.c.l.b16 %v499
        %v593 = vunpack.c.h.b16 %v499
        %v594 = vunpack.c.l.b16 %v500
        %v595 = vunpack.c.h.b16 %v500
        %v596 = vunpack.c.l.b16 %v501
        %v597 = vunpack.c.h.b16 %v501
        %v598 = vunpack.c.l.b16 %v502
        %v599 = vunpack.c.h.b16 %v502
        %v600 = vunpack.c.l.b16 %v503
        %v601 = vunpack.c.h.b16 %v503
        %v602 = vunpack.c.l.b16 %v504
        %v603 = vunpack.c.h.b16 %v504
        %v604 = vunpack.c.l.b16 %v505
        %v605 = vunpack.c.h.b16 %v505
        %v606 = vunpack.c.l.b16 %v506
        %v607 = vunpack.c.h.b16 %v506
        %v608 = vunpack.c.l.b16 %v507
        %v609 = vunpack.c.h.b16 %v507
        %v610 = vunpack.c.l.b16 %v508
        %v611 = vunpack.c.h.b16 %v508
        %v612 = vpack.c.b16 %v550, %v548
        %v613 = vpack.c.b16 %v551, %v549
        %v614 = vpack.c.b16 %v554, %v552
        %v615 = vpack.c.b16 %v555, %v553
        %v616 = vpack.c.b16 %v558, %v556
        %v617 = vpack.c.b16 %v559, %v557
        %v618 = vpack.c.b16 %v562, %v560
        %v619 = vpack.c.b16 %v563, %v561
        %v620 = vpack.c.b16 %v566, %v564
        %v621 = vpack.c.b16 %v567, %v565
        %v622 = vpack.c.b16 %v570, %v568
        %v623 = vpack.c.b16 %v571, %v569
        %v624 = vpack.c.b16 %v574, %v572
        %v625 = vpack.c.b16 %v575, %v573
        %v626 = vpack.c.b16 %v578, %v576
        %v627 = vpack.c.b16 %v579, %v577
        %v628 = vpack.c.b16 %v582, %v580
        %v629 = vpack.c.b16 %v583, %v581
        %v630 = vpack.c.b16 %v586, %v584
        %v631 = vpack.c.b16 %v587, %v585
        %v632 = vpack.c.b16 %v590, %v588
        %v633 = vpack.c.b16 %v591, %v589
        %v634 = vpack.c.b16 %v594, %v592
        %v635 = vpack.c.b16 %v595, %v593
        %v636 = vpack.c.b16 %v598, %v596
        %v637 = vpack.c.b16 %v599, %v597
        %v638 = vpack.c.b16 %v602, %v600
        %v639 = vpack.c.b16 %v603, %v601
        %v640 = vpack.c.b16 %v606, %v604
        %v641 = vpack.c.b16 %v607, %v605
        %v642 = vpack.c.b16 %v610, %v608
        %v643 = vpack.c.b16 %v611, %v609
        %676 = vmatprep.subr.bf16.mxu0 %v613
        %677 = vmatpush1.bf16.msra.mxu0 %v612
        %678 = vmatprep.subr.bf16.mxu0 %v615
        %679 = vmatpush1.bf16.msra.mxu0 %v614
        %680 = vmatprep.subr.bf16.mxu0 %v617
        %681 = vmatpush1.bf16.msra.mxu0 %v616
        %682 = vmatprep.subr.bf16.mxu0 %v619
        %683 = vmatpush1.bf16.msra.mxu0 %v618
        %684 = vmatprep.subr.bf16.mxu0 %v621
        %685 = vmatpush1.bf16.msra.mxu0 %v620
        %686 = vmatprep.subr.bf16.mxu0 %v623
        %687 = vmatpush1.bf16.msra.mxu0 %v622
        %688 = vmatprep.subr.bf16.mxu0 %v625
        %689 = vmatpush1.bf16.msra.mxu0 %v624
        %690 = vmatprep.subr.bf16.mxu0 %v627
        %691 = vmatpush1.bf16.msra.mxu0 %v626
        %692 = vmatprep.subr.bf16.mxu0 %v629
        %693 = vmatpush1.bf16.msra.mxu0 %v628
        %694 = vmatprep.subr.bf16.mxu0 %v631
        %695 = vmatpush1.bf16.msra.mxu0 %v630
        %696 = vmatprep.subr.bf16.mxu0 %v633
        %697 = vmatpush1.bf16.msra.mxu0 %v632
        %698 = vmatprep.subr.bf16.mxu0 %v635
        %699 = vmatpush1.bf16.msra.mxu0 %v634
        %700 = vmatprep.subr.bf16.mxu0 %v637
        %701 = vmatpush1.bf16.msra.mxu0 %v636
        %702 = vmatprep.subr.bf16.mxu0 %v639
        %703 = vmatpush1.bf16.msra.mxu0 %v638
        %704 = vmatprep.subr.bf16.mxu0 %v641
        %705 = vmatpush1.bf16.msra.mxu0 %v640
        %706 = vmatprep.subr.bf16.mxu0 %v643
        %707 = vmatpush1.bf16.msra.mxu0 %v642
        %708 = vmatprep.mubr.bf16.mxu0 %v513
        %709 = vmatmul.mubr.bf16.gmra.mrb[0].mxu0 %v512
        %v710 = vpop.f32.mrb[0].mxu0
        %v711 = vadd.f32 0.0, %v710
        %v712 = vpop.f32.mrb[0].mxu0
        %v713 = vadd.f32 0.0, %v712
        %v714 = vpop.f32.mrb[0].mxu0
        %v715 = vpop.f32.mrb[0].mxu0
        %716 = vdwg.mxu0
        %v717 = vadd.f32 %v474, %v711
        %v718 = vadd.f32 %v475, %v713
        %719 = vst [vmem:[#allocation2] sm:$0xff] %v717
        %720 = vst [vmem:[#allocation2 + $0x8] sm:$0xff] %v718
        %p721 = scmp.eq.s32.totalorder %s22, 8
        // Predicated region
        $region79: #{resnet_forward.22} parent=69 // pred_check
          %p722 = pneg %p721
        $region80: #{resnet_forward.22} parent=69 // pred_check_branch
          %724 = sbr.rel (%p722) target = $region82
        $region81: #{resnet_forward.22} parent=69 // pred_region
          %v725 = vld [vmem:[#allocation2] sm:$0xff]
          %v726 = vld [vmem:[#allocation2 + $0x8] sm:$0xff]
          %v727 = vld [vmem:[%s451] sm:$0x3]
          %v729 = vlaneseq
          %v730 = vshrl.u32 %v729, 7
          %v731 = vsub.s32 0, %v730
          %v732 = vrot.slane %v727, %v731
          %v733 = vlaneseq
          %v734 = vshrl.u32 %v733, 7
          %v735 = vsub.s32 1, %v734
          %v736 = vrot.slane %v727, %v735
          %v739 = vmul.f32 %v725, %v732
          %v740 = vmul.f32 %v726, %v736
          %v741 = vld [vmem:[%s456] sm:$0x3]
          %v743 = vlaneseq
          %v744 = vshrl.u32 %v743, 7
          %v745 = vsub.s32 0, %v744
          %v746 = vrot.slane %v741, %v745
          %v747 = vlaneseq
          %v748 = vshrl.u32 %v747, 7
          %v749 = vsub.s32 1, %v748
          %v750 = vrot.slane %v741, %v749
          %v753 = vadd.f32 %v739, %v746
          %v754 = vadd.f32 %v740, %v750
          %v755 = vmax.f32 %v753, 0.0
          %v756 = vmax.f32 %v754, 0.0
          %v757 = vpack.c.bf16 %v755, %v755
          %v758 = vpack.c.bf16 %v756, %v756
          %v761 = vunpack.c.l.b16 %v757
          %v762 = vunpack.c.l.b16 %v758
          %v763 = vpack.c.b16 %v762, %v761
          %765 = vst [vmem:[%s466] sm:$0xff] %v763
        $region82: #{resnet_forward.22} parent=69 // pred_fallthru
          _
        %s766 = smul.u32 2, %s21
        %p767 = scmp.lt.s32.totalorder %s20, 0
        %s768 = scalar_select %p767, %s20, 0
        %p769 = scmp.lt.s32.totalorder %s766, 3
        %s770 = scalar_select %p769, %s766, 3
        %s771 = smul.addr %s768, 4
        %s772 = sadd.s32 %s770, %s771
        %s773 = smul.addr %s772, 4
        %s774 = scalar_lea.vmem %s4, %s773
        // Predicated region
        $region83: #{resnet_forward.22} parent=69 // pred_check
          %p775 = pneg %p162
        $region84: #{resnet_forward.22} parent=69 // pred_check_branch
          %777 = sbr.rel (%p775) target = $region86
        $region85: #{resnet_forward.22} parent=69 // pred_region
          %s778 = smul.u32 2, %s21
        $region86: #{resnet_forward.22} parent=69 // pred_fallthru
          _
      $region70: #{resnet_forward.22} parent=5 // pred_fallthru
        _
      %p779 = scmp.le.s32.totalorder 2, %s10
      // Predicated region
      $region87: #{resnet_forward.22} parent=5 // pred_check
        %p780 = pneg %p779
      $region88: #{resnet_forward.22} parent=5 // pred_check_branch
        %782 = sbr.rel (%p780) target = $region90
      $region89: #{resnet_forward.22} parent=5 // pred_region
        %s783 = ssub.s32 %s10, 2
        // Predicated region
        $region91: #{resnet_forward.22} parent=89 // pred_check
          %p784 = pneg %p168
        $region92: #{resnet_forward.22} parent=89 // pred_check_branch
          %786 = sbr.rel (%p784) target = $region94
        $region93: #{resnet_forward.22} parent=89 // pred_region
          %s787 = smul.u32 2, %s24
          %p788 = scmp.lt.s32.totalorder %s23, 0
          %s789 = scalar_select %p788, %s23, 0
          %p790 = scmp.lt.s32.totalorder %s787, 3
          %s791 = scalar_select %p790, %s787, 3
          %s792 = smul.addr %s789, 4
          %s793 = sadd.s32 %s791, %s792
          %s794 = smul.addr %s793, 4
          %s795 = scalar_lea.vmem %s4, %s794
        $region94: #{resnet_forward.22} parent=89 // pred_fallthru
          _
      $region90: #{resnet_forward.22} parent=5 // pred_fallthru
        _
    $region6: #{resnet_forward.22} parent=1 // loop_footer
      %s14 = sadd.s32 1, %s10
    $region7: #{resnet_forward.22} parent=1 // loop_footer_branch
      %9 = sbr.rel target = $region3
    $region8: #{resnet_forward.22} parent=1 // loop_exit
      _

// kernel: resnet_forward.21
$region0: #{resnet_forward.21}
  #allocation0 [shape = 'u32[]', space=smem, size = 0x4, offset = 0x4, fixed_abs, tag = 'smem constant byte address 0x4 - core index']
  #allocation1 [shape = 'u32[144,128]{1,0:T(1,128)}', space=vmem, size = 0x12000, scoped, tag = 'internal scratch']
  #allocation2 [shape = 'f32[8,256]{1,0:T(8,128)}', space=vmem, size = 0x2000, scoped, tag = 'scratch operand']
  %s0 = inlined_call_operand.vmem [shape: bf16[8,256], index: 0, kind: input, shape index: {}]
  %s1 = inlined_call_operand.vmem [shape: bf16[256,512], index: 1, kind: input, shape index: {}]
  %s2 = inlined_call_operand.vmem [shape: f32[1,512], index: 2, kind: input, shape index: {}]
  %s3 = inlined_call_operand.vmem [shape: f32[1,512], index: 3, kind: input, shape index: {}]
  %s4 = inlined_call_operand.vmem [shape: bf16[8,512], index: 4, kind: output, shape index: {}]
  %s5 = sld [smem:[#allocation0]]
  $region95: #{resnet_forward.21} parent=0
    _
  %s7 = ssub.s32 1, %s5
  %s8 = scalar_select 0, %s7, %s5
  $region1: #{resnet_forward.21} parent=0
    #allocation3 [shape = 'u8[262144]{0}', space=vmem, size = 0x40000, scoped, tag = 'input window, operand 1']
    loop: start=0, step=1, limit=4
    $region2: #{resnet_forward.21} parent=1 // loop_pre_header
      _
    $region3: #{resnet_forward.21} parent=1 // loop_header
      %s10 = sphi 0, %s14
      %p11 = scmp.ge.s32.totalorder %s10, 4
      %s17 = sphi 0, %s36
      %s18 = sphi 0, %s32
      %s19 = sphi 0, %s28
      %s20 = sphi 0, %s17
      %s21 = sphi 0, %s18
      %s22 = sphi 0, %s19
      %s23 = sphi 0, %s20
      %s24 = sphi 0, %s21
      %s25 = sphi 0, %s22
      %s41 = sphi 0, %s43
      %s44 = sphi 0, %s41
      %s45 = sphi 0, %s44
      %s61 = sphi 0, %s45
      %s69 = sphi 0, %s71
      %s72 = sphi 0, %s69
      %s73 = sphi 0, %s72
      %s89 = sphi 0, %s73
      %s95 = sphi 0, %s97
      %s98 = sphi 0, %s95
      %s99 = sphi 0, %s98
      %s115 = sphi 0, %s99
      %s121 = sphi 0, %s123
      %s124 = sphi 0, %s121
      %s125 = sphi 0, %s124
      %s141 = sphi 0, %s125
      %s149 = sphi 0, %s151
      %s152 = sphi 0, %s149
      %s153 = sphi 0, %s152
      %s169 = sphi 0, %s153
    $region4: #{resnet_forward.21} parent=1 // loop_header_branch
      %13 = sbr.rel (%p11) target = $region8
    $region5: #{resnet_forward.21} parent=1 // loop_body
      %s15 = ssub.s32 %s10, 1
      %s16 = ssub.s32 %s10, 2
      %s26 = sadd.s32 1, %s19
      %p27 = scmp.ge.s32.totalorder %s26, 1
      %s28 = scalar_select %p27, 0, %s26
      %s29 = sadd.s32 1, %s18
      %s30 = scalar_select %p27, %s29, %s18
      %p31 = scmp.ge.s32.totalorder %s30, 2
      %s32 = scalar_select %p31, 0, %s30
      %s33 = sadd.s32 1, %s17
      %s34 = scalar_select %p31, %s33, %s17
      %p35 = scmp.ge.s32.totalorder %s34, 1
      %s36 = scalar_select %p35, 0, %s34
      %s37 = ssub.s32 %s17, %s36
      %s38 = ssub.s32 %s19, %s28
      %s39 = sor.u32 %s37, %s38
      %p40 = scmp.eq.s32.totalorder %s39, 0
      %s42 = sadd.s32 %s41, 1
      %s43 = scalar_select %p40, %s41, %s42
      %p46 = pneg %p40
      %p47 = scmp.eq.s32.totalorder %s10, 1
      %p48 = por %p46, %p47
      %p49 = scmp.ne.s32.totalorder %s41, %s44
      %p50 = scmp.eq.s32.totalorder %s10, 0
      %p51 = por %p49, %p50
      %p52 = scmp.ne.s32.totalorder %s41, %s44
      %p53 = scmp.eq.s32.totalorder %s15, 1
      %p54 = por %p52, %p53
      %p55 = scmp.ne.s32.totalorder %s44, %s45
      %p56 = scmp.eq.s32.totalorder %s15, 0
      %p57 = por %p55, %p56
      %p58 = scmp.ne.s32.totalorder %s44, %s45
      %p59 = scmp.eq.s32.totalorder %s16, 1
      %p60 = por %p58, %p59
      %p62 = scmp.ne.s32.totalorder %s45, %s61
      %p63 = scmp.eq.s32.totalorder %s16, 0
      %p64 = por %p62, %p63
      %s65 = ssub.s32 %s19, %s28
      %s66 = ssub.s32 %s18, %s32
      %s67 = sor.u32 %s65, %s66
      %p68 = scmp.eq.s32.totalorder %s67, 0
      %s70 = sadd.s32 %s69, 1
      %s71 = scalar_select %p68, %s69, %s70
      %p74 = pneg %p68
      %p75 = scmp.eq.s32.totalorder %s10, 1
      %p76 = por %p74, %p75
      %p77 = scmp.ne.s32.totalorder %s69, %s72
      %p78 = scmp.eq.s32.totalorder %s10, 0
      %p79 = por %p77, %p78
      %p80 = scmp.ne.s32.totalorder %s69, %s72
      %p81 = scmp.eq.s32.totalorder %s15, 1
      %p82 = por %p80, %p81
      %p83 = scmp.ne.s32.totalorder %s72, %s73
      %p84 = scmp.eq.s32.totalorder %s15, 0
      %p85 = por %p83, %p84
      %p86 = scmp.ne.s32.totalorder %s72, %s73
      %p87 = scmp.eq.s32.totalorder %s16, 1
      %p88 = por %p86, %p87
      %p90 = scmp.ne.s32.totalorder %s73, %s89
      %p91 = scmp.eq.s32.totalorder %s16, 0
      %p92 = por %p90, %p91
      %s93 = ssub.s32 %s18, %s32
      %p94 = scmp.eq.s32.totalorder %s93, 0
      %s96 = sadd.s32 %s95, 1
      %s97 = scalar_select %p94, %s95, %s96
      %p100 = pneg %p94
      %p101 = scmp.eq.s32.totalorder %s10, 1
      %p102 = por %p100, %p101
      %p103 = scmp.ne.s32.totalorder %s95, %s98
      %p104 = scmp.eq.s32.totalorder %s10, 0
      %p105 = por %p103, %p104
      %p106 = scmp.ne.s32.totalorder %s95, %s98
      %p107 = scmp.eq.s32.totalorder %s15, 1
      %p108 = por %p106, %p107
      %p109 = scmp.ne.s32.totalorder %s98, %s99
      %p110 = scmp.eq.s32.totalorder %s15, 0
      %p111 = por %p109, %p110
      %p112 = scmp.ne.s32.totalorder %s98, %s99
      %p113 = scmp.eq.s32.totalorder %s16, 1
      %p114 = por %p112, %p113
      %p116 = scmp.ne.s32.totalorder %s99, %s115
      %p117 = scmp.eq.s32.totalorder %s16, 0
      %p118 = por %p116, %p117
      %s119 = ssub.s32 %s18, %s32
      %p120 = scmp.eq.s32.totalorder %s119, 0
      %s122 = sadd.s32 %s121, 1
      %s123 = scalar_select %p120, %s121, %s122
      %p126 = pneg %p120
      %p127 = scmp.eq.s32.totalorder %s10, 1
      %p128 = por %p126, %p127
      %p129 = scmp.ne.s32.totalorder %s121, %s124
      %p130 = scmp.eq.s32.totalorder %s10, 0
      %p131 = por %p129, %p130
      %p132 = scmp.ne.s32.totalorder %s121, %s124
      %p133 = scmp.eq.s32.totalorder %s15, 1
      %p134 = por %p132, %p133
      %p135 = scmp.ne.s32.totalorder %s124, %s125
      %p136 = scmp.eq.s32.totalorder %s15, 0
      %p137 = por %p135, %p136
      %p138 = scmp.ne.s32.totalorder %s124, %s125
      %p139 = scmp.eq.s32.totalorder %s16, 1
      %p140 = por %p138, %p139
      %p142 = scmp.ne.s32.totalorder %s125, %s141
      %p143 = scmp.eq.s32.totalorder %s16, 0
      %p144 = por %p142, %p143
      %s145 = ssub.s32 %s17, %s36
      %s146 = ssub.s32 %s18, %s32
      %s147 = sor.u32 %s145, %s146
      %p148 = scmp.eq.s32.totalorder %s147, 0
      %s150 = sadd.s32 %s149, 1
      %s151 = scalar_select %p148, %s149, %s150
      %p154 = pneg %p148
      %p155 = scmp.eq.s32.totalorder %s10, 1
      %p156 = por %p154, %p155
      %p157 = scmp.ne.s32.totalorder %s149, %s152
      %p158 = scmp.eq.s32.totalorder %s10, 0
      %p159 = por %p157, %p158
      %p160 = scmp.ne.s32.totalorder %s149, %s152
      %p161 = scmp.eq.s32.totalorder %s15, 1
      %p162 = por %p160, %p161
      %p163 = scmp.ne.s32.totalorder %s152, %s153
      %p164 = scmp.eq.s32.totalorder %s15, 0
      %p165 = por %p163, %p164
      %p166 = scmp.ne.s32.totalorder %s152, %s153
      %p167 = scmp.eq.s32.totalorder %s16, 1
      %p168 = por %p166, %p167
      %p170 = scmp.ne.s32.totalorder %s153, %s169
      %p171 = scmp.eq.s32.totalorder %s16, 0
      %p172 = por %p170, %p171
      %p173 = scmp.le.s32.totalorder 1, %s10
      %p174 = scmp.lt.s32.totalorder %s10, 3
      %p175 = pnand %p173, %p174
      %p176 = pneg %p175
      // Predicated region
      $region9: #{resnet_forward.21} parent=5 // pred_check
        _
      $region10: #{resnet_forward.21} parent=5 // pred_check_branch
        %178 = sbr.rel (%p175) target = $region12
      $region11: #{resnet_forward.21} parent=5 // pred_region
        %s179 = ssub.s32 %s10, 1
        // Predicated region
        $region13: #{resnet_forward.21} parent=11 // pred_check
          %p180 = pneg %p57
        $region14: #{resnet_forward.21} parent=11 // pred_check_branch
          %182 = sbr.rel (%p180) target = $region16
        $region15: #{resnet_forward.21} parent=11 // pred_region
          %s183 = smul.u32 2, %s22
          %p184 = scmp.lt.s32.totalorder %s20, 0
          %s185 = scalar_select %p184, %s20, 0
          %p186 = scmp.lt.s32.totalorder %s183, 1
          %s187 = scalar_select %p186, %s183, 1
          %s188 = smul.addr %s185, 2
          %s189 = sadd.s32 %s187, %s188
          %s190 = smul.addr %s189, 4
          %s191 = scalar_lea.vmem %s0, %s190
          %s192 = smul.u32 2, %s22
        $region16: #{resnet_forward.21} parent=11 // pred_fallthru
          _
      $region12: #{resnet_forward.21} parent=5 // pred_fallthru
        _
      %p193 = scmp.lt.s32.totalorder %s10, 2
      // Predicated region
      $region17: #{resnet_forward.21} parent=5 // pred_check
        %p194 = pneg %p193
      $region18: #{resnet_forward.21} parent=5 // pred_check_branch
        %196 = sbr.rel (%p194) target = $region20
      $region19: #{resnet_forward.21} parent=5 // pred_region
        // Predicated region
        $region21: #{resnet_forward.21} parent=19 // pred_check
          %p197 = pneg %p79
        $region22: #{resnet_forward.21} parent=19 // pred_check_branch
          %199 = sbr.rel (%p197) target = $region24
        $region23: #{resnet_forward.21} parent=19 // pred_region
          %s200 = sand.u32 %s69, 1
          %s201 = sand.u32 %s69, 1
          %s202 = smul.addr %s201, 256
          %s203 = scalar_lea.vmem [#allocation3], %s202
          %s204 = smul.u32 32, %s19
          %s205 = smul.u32 2, %s18
          %s206 = smul.addr %s204, 4
          %s207 = sadd.s32 %s205, %s206
          %s208 = smul.addr %s207, 4
          %s209 = scalar_lea.vmem %s1, %s208
          // Predicated region
          $region25: #{resnet_forward.21} parent=23 // pred_check
            _
          $region26: #{resnet_forward.21} parent=23 // pred_check_branch
            %211 = sbr.rel (0) target = $region28
          $region27: #{resnet_forward.21} parent=23 // pred_region
            // Predicated region
            $region29: #{resnet_forward.21} parent=27 // pred_check
              _
            $region30: #{resnet_forward.21} parent=27 // pred_check_branch
              %213 = sbr.rel (0) target = $region32
            $region31: #{resnet_forward.21} parent=27 // pred_region
              // Predicated region
              $region44: #{resnet_forward.21} parent=31 // pred_check
                _
              $region45: #{resnet_forward.21} parent=31 // pred_check_branch
                %290 = sbr.rel (0) target = $region47
              $region46: #{resnet_forward.21} parent=31 // pred_region
                loop: start=0, step=1, limit=1
                $region48: #{resnet_forward.21} parent=46 // loop_pre_header
                  _
                $region49: #{resnet_forward.21} parent=46 // loop_header
                  %s292 = sphi 0, %s296
                  %p293 = scmp.ge.s32.totalorder %s292, 1
                  %s297 = sphi %s209, %s209
                  %s298 = sphi %s203, %s203
                $region50: #{resnet_forward.21} parent=46 // loop_header_branch
                  %295 = sbr.rel (%p293) target = $region54
                $region51: #{resnet_forward.21} parent=46 // loop_body
                  %v299 = vld [vmem:[%s297] sm:$0xff]
                  %300 = vst [vmem:[%s298] sm:$0xff] %v299
                  %v301 = vld [vmem:[%s297 + $0x10] sm:$0xff]
                  %302 = vst [vmem:[%s298 + $0x8] sm:$0xff] %v301
                  %v303 = vld [vmem:[%s297 + $0x20] sm:$0xff]
                  %304 = vst [vmem:[%s298 + $0x10] sm:$0xff] %v303
                  %v305 = vld [vmem:[%s297 + $0x30] sm:$0xff]
                  %306 = vst [vmem:[%s298 + $0x18] sm:$0xff] %v305
                  %v307 = vld [vmem:[%s297 + $0x40] sm:$0xff]
                  %308 = vst [vmem:[%s298 + $0x20] sm:$0xff] %v307
                  %v309 = vld [vmem:[%s297 + $0x50] sm:$0xff]
                  %310 = vst [vmem:[%s298 + $0x28] sm:$0xff] %v309
                  %v311 = vld [vmem:[%s297 + $0x60] sm:$0xff]
                  %312 = vst [vmem:[%s298 + $0x30] sm:$0xff] %v311
                  %v313 = vld [vmem:[%s297 + $0x70] sm:$0xff]
                  %314 = vst [vmem:[%s298 + $0x38] sm:$0xff] %v313
                  %v315 = vld [vmem:[%s297 + $0x80] sm:$0xff]
                  %316 = vst [vmem:[%s298 + $0x40] sm:$0xff] %v315
                  %v317 = vld [vmem:[%s297 + $0x90] sm:$0xff]
                  %318 = vst [vmem:[%s298 + $0x48] sm:$0xff] %v317
                  %v319 = vld [vmem:[%s297 + $0xa0] sm:$0xff]
                  %320 = vst [vmem:[%s298 + $0x50] sm:$0xff] %v319
                  %v321 = vld [vmem:[%s297 + $0xb0] sm:$0xff]
                  %322 = vst [vmem:[%s298 + $0x58] sm:$0xff] %v321
                  %v323 = vld [vmem:[%s297 + $0xc0] sm:$0xff]
                  %324 = vst [vmem:[%s298 + $0x60] sm:$0xff] %v323
                  %v325 = vld [vmem:[%s297 + $0xd0] sm:$0xff]
                  %326 = vst [vmem:[%s298 + $0x68] sm:$0xff] %v325
                  %v327 = vld [vmem:[%s297 + $0xe0] sm:$0xff]
                  %328 = vst [vmem:[%s298 + $0x70] sm:$0xff] %v327
                  %v329 = vld [vmem:[%s297 + $0xf0] sm:$0xff]
                  %330 = vst [vmem:[%s298 + $0x78] sm:$0xff] %v329
                  %v331 = vld [vmem:[%s297 + $0x100] sm:$0xff]
                  %332 = vst [vmem:[%s298 + $0x80] sm:$0xff] %v331
                  %v333 = vld [vmem:[%s297 + $0x110] sm:$0xff]
                  %334 = vst [vmem:[%s298 + $0x88] sm:$0xff] %v333
                  %v335 = vld [vmem:[%s297 + $0x120] sm:$0xff]
                  %336 = vst [vmem:[%s298 + $0x90] sm:$0xff] %v335
                  %v337 = vld [vmem:[%s297 + $0x130] sm:$0xff]
                  %338 = vst [vmem:[%s298 + $0x98] sm:$0xff] %v337
                  %v339 = vld [vmem:[%s297 + $0x140] sm:$0xff]
                  %340 = vst [vmem:[%s298 + $0xa0] sm:$0xff] %v339
                  %v341 = vld [vmem:[%s297 + $0x150] sm:$0xff]
                  %342 = vst [vmem:[%s298 + $0xa8] sm:$0xff] %v341
                  %v343 = vld [vmem:[%s297 + $0x160] sm:$0xff]
                  %344 = vst [vmem:[%s298 + $0xb0] sm:$0xff] %v343
                  %v345 = vld [vmem:[%s297 + $0x170] sm:$0xff]
                  %346 = vst [vmem:[%s298 + $0xb8] sm:$0xff] %v345
                  %v347 = vld [vmem:[%s297 + $0x180] sm:$0xff]
                  %348 = vst [vmem:[%s298 + $0xc0] sm:$0xff] %v347
                  %v349 = vld [vmem:[%s297 + $0x190] sm:$0xff]
                  %350 = vst [vmem:[%s298 + $0xc8] sm:$0xff] %v349
                  %v351 = vld [vmem:[%s297 + $0x1a0] sm:$0xff]
                  %352 = vst [vmem:[%s298 + $0xd0] sm:$0xff] %v351
                  %v353 = vld [vmem:[%s297 + $0x1b0] sm:$0xff]
                  %354 = vst [vmem:[%s298 + $0xd8] sm:$0xff] %v353
                  %v355 = vld [vmem:[%s297 + $0x1c0] sm:$0xff]
                  %356 = vst [vmem:[%s298 + $0xe0] sm:$0xff] %v355
                  %v357 = vld [vmem:[%s297 + $0x1d0] sm:$0xff]
                  %358 = vst [vmem:[%s298 + $0xe8] sm:$0xff] %v357
                  %v359 = vld [vmem:[%s297 + $0x1e0] sm:$0xff]
                  %360 = vst [vmem:[%s298 + $0xf0] sm:$0xff] %v359
                  %v361 = vld [vmem:[%s297 + $0x1f0] sm:$0xff]
                  %362 = vst [vmem:[%s298 + $0xf8] sm:$0xff] %v361
                $region52: #{resnet_forward.21} parent=46 // loop_footer
                  %s296 = sadd.s32 1, %s292
                $region53: #{resnet_forward.21} parent=46 // loop_footer_branch
                  %291 = sbr.rel target = $region49
                $region54: #{resnet_forward.21} parent=46 // loop_exit
                  _
              $region47: #{resnet_forward.21} parent=31 // pred_fallthru
                _
              // Predicated region
              $region55: #{resnet_forward.21} parent=31 // pred_check
                _
              $region56: #{resnet_forward.21} parent=31 // pred_check_branch
                %364 = sbr.rel target = $region58
              $region57: #{resnet_forward.21} parent=31 // pred_region
                _
              $region58: #{resnet_forward.21} parent=31 // pred_fallthru
                _
            $region32: #{resnet_forward.21} parent=27 // pred_fallthru
              _
            // Predicated region
            $region33: #{resnet_forward.21} parent=27 // pred_check
              _
            $region34: #{resnet_forward.21} parent=27 // pred_check_branch
              %215 = sbr.rel target = $region36
            $region35: #{resnet_forward.21} parent=27 // pred_region
              loop: start=0, step=1, limit=1
              $region37: #{resnet_forward.21} parent=35 // loop_pre_header
                _
              $region38: #{resnet_forward.21} parent=35 // loop_header
                %s218 = sphi 0, %s222
                %p219 = scmp.ge.s32.totalorder %s218, 1
                %s223 = sphi %s209, %s209
                %s224 = sphi %s203, %s203
              $region39: #{resnet_forward.21} parent=35 // loop_header_branch
                %221 = sbr.rel (%p219) target = $region43
              $region40: #{resnet_forward.21} parent=35 // loop_body
                %v225 = vld [vmem:[%s223] sm:$0xff]
                %226 = vst [vmem:[%s224] sm:$0xff] %v225
                %v227 = vld [vmem:[%s223 + $0x10] sm:$0xff]
                %228 = vst [vmem:[%s224 + $0x8] sm:$0xff] %v227
                %v229 = vld [vmem:[%s223 + $0x20] sm:$0xff]
                %230 = vst [vmem:[%s224 + $0x10] sm:$0xff] %v229
                %v231 = vld [vmem:[%s223 + $0x30] sm:$0xff]
                %232 = vst [vmem:[%s224 + $0x18] sm:$0xff] %v231
                %v233 = vld [vmem:[%s223 + $0x40] sm:$0xff]
                %234 = vst [vmem:[%s224 + $0x20] sm:$0xff] %v233
                %v235 = vld [vmem:[%s223 + $0x50] sm:$0xff]
                %236 = vst [vmem:[%s224 + $0x28] sm:$0xff] %v235
                %v237 = vld [vmem:[%s223 + $0x60] sm:$0xff]
                %238 = vst [vmem:[%s224 + $0x30] sm:$0xff] %v237
                %v239 = vld [vmem:[%s223 + $0x70] sm:$0xff]
                %240 = vst [vmem:[%s224 + $0x38] sm:$0xff] %v239
                %v241 = vld [vmem:[%s223 + $0x80] sm:$0xff]
                %242 = vst [vmem:[%s224 + $0x40] sm:$0xff] %v241
                %v243 = vld [vmem:[%s223 + $0x90] sm:$0xff]
                %244 = vst [vmem:[%s224 + $0x48] sm:$0xff] %v243
                %v245 = vld [vmem:[%s223 + $0xa0] sm:$0xff]
                %246 = vst [vmem:[%s224 + $0x50] sm:$0xff] %v245
                %v247 = vld [vmem:[%s223 + $0xb0] sm:$0xff]
                %248 = vst [vmem:[%s224 + $0x58] sm:$0xff] %v247
                %v249 = vld [vmem:[%s223 + $0xc0] sm:$0xff]
                %250 = vst [vmem:[%s224 + $0x60] sm:$0xff] %v249
                %v251 = vld [vmem:[%s223 + $0xd0] sm:$0xff]
                %252 = vst [vmem:[%s224 + $0x68] sm:$0xff] %v251
                %v253 = vld [vmem:[%s223 + $0xe0] sm:$0xff]
                %254 = vst [vmem:[%s224 + $0x70] sm:$0xff] %v253
                %v255 = vld [vmem:[%s223 + $0xf0] sm:$0xff]
                %256 = vst [vmem:[%s224 + $0x78] sm:$0xff] %v255
                %v257 = vld [vmem:[%s223 + $0x100] sm:$0xff]
                %258 = vst [vmem:[%s224 + $0x80] sm:$0xff] %v257
                %v259 = vld [vmem:[%s223 + $0x110] sm:$0xff]
                %260 = vst [vmem:[%s224 + $0x88] sm:$0xff] %v259
                %v261 = vld [vmem:[%s223 + $0x120] sm:$0xff]
                %262 = vst [vmem:[%s224 + $0x90] sm:$0xff] %v261
                %v263 = vld [vmem:[%s223 + $0x130] sm:$0xff]
                %264 = vst [vmem:[%s224 + $0x98] sm:$0xff] %v263
                %v265 = vld [vmem:[%s223 + $0x140] sm:$0xff]
                %266 = vst [vmem:[%s224 + $0xa0] sm:$0xff] %v265
                %v267 = vld [vmem:[%s223 + $0x150] sm:$0xff]
                %268 = vst [vmem:[%s224 + $0xa8] sm:$0xff] %v267
                %v269 = vld [vmem:[%s223 + $0x160] sm:$0xff]
                %270 = vst [vmem:[%s224 + $0xb0] sm:$0xff] %v269
                %v271 = vld [vmem:[%s223 + $0x170] sm:$0xff]
                %272 = vst [vmem:[%s224 + $0xb8] sm:$0xff] %v271
                %v273 = vld [vmem:[%s223 + $0x180] sm:$0xff]
                %274 = vst [vmem:[%s224 + $0xc0] sm:$0xff] %v273
                %v275 = vld [vmem:[%s223 + $0x190] sm:$0xff]
                %276 = vst [vmem:[%s224 + $0xc8] sm:$0xff] %v275
                %v277 = vld [vmem:[%s223 + $0x1a0] sm:$0xff]
                %278 = vst [vmem:[%s224 + $0xd0] sm:$0xff] %v277
                %v279 = vld [vmem:[%s223 + $0x1b0] sm:$0xff]
                %280 = vst [vmem:[%s224 + $0xd8] sm:$0xff] %v279
                %v281 = vld [vmem:[%s223 + $0x1c0] sm:$0xff]
                %282 = vst [vmem:[%s224 + $0xe0] sm:$0xff] %v281
                %v283 = vld [vmem:[%s223 + $0x1d0] sm:$0xff]
                %284 = vst [vmem:[%s224 + $0xe8] sm:$0xff] %v283
                %v285 = vld [vmem:[%s223 + $0x1e0] sm:$0xff]
                %286 = vst [vmem:[%s224 + $0xf0] sm:$0xff] %v285
                %v287 = vld [vmem:[%s223 + $0x1f0] sm:$0xff]
                %288 = vst [vmem:[%s224 + $0xf8] sm:$0xff] %v287
              $region41: #{resnet_forward.21} parent=35 // loop_footer
                %s222 = sadd.s32 1, %s218
              $region42: #{resnet_forward.21} parent=35 // loop_footer_branch
                %217 = sbr.rel target = $region38
              $region43: #{resnet_forward.21} parent=35 // loop_exit
                _
            $region36: #{resnet_forward.21} parent=27 // pred_fallthru
              _
          $region28: #{resnet_forward.21} parent=23 // pred_fallthru
            _
          %365 = vnop
        $region24: #{resnet_forward.21} parent=19 // pred_fallthru
          _
        // Predicated region
        $region59: #{resnet_forward.21} parent=19 // pred_check
          %p366 = pneg %p105
        $region60: #{resnet_forward.21} parent=19 // pred_check_branch
          %368 = sbr.rel (%p366) target = $region62
        $region61: #{resnet_forward.21} parent=19 // pred_region
          %s369 = smul.u32 2, %s18
          %p370 = scmp.lt.s32.totalorder %s369, 3
          %s371 = scalar_select %p370, %s369, 3
          %s372 = scalar_lea.vmem %s2, %s371
          %s373 = smul.u32 2, %s18
        $region62: #{resnet_forward.21} parent=19 // pred_fallthru
          _
        // Predicated region
        $region63: #{resnet_forward.21} parent=19 // pred_check
          %p374 = pneg %p131
        $region64: #{resnet_forward.21} parent=19 // pred_check_branch
          %376 = sbr.rel (%p374) target = $region66
        $region65: #{resnet_forward.21} parent=19 // pred_region
          %s377 = smul.u32 2, %s18
          %p378 = scmp.lt.s32.totalorder %s377, 3
          %s379 = scalar_select %p378, %s377, 3
          %s380 = scalar_lea.vmem %s3, %s379
          %s381 = smul.u32 2, %s18
        $region66: #{resnet_forward.21} parent=19 // pred_fallthru
          _
      $region20: #{resnet_forward.21} parent=5 // pred_fallthru
        _
      %p382 = scmp.le.s32.totalorder 1, %s10
      %p383 = scmp.lt.s32.totalorder %s10, 3
      %p384 = pnand %p382, %p383
      %p385 = pneg %p384
      // Predicated region
      $region67: #{resnet_forward.21} parent=5 // pred_check
        _
      $region68: #{resnet_forward.21} parent=5 // pred_check_branch
        %387 = sbr.rel (%p384) target = $region70
      $region69: #{resnet_forward.21} parent=5 // pred_region
        %s388 = ssub.s32 %s10, 1
        %s389 = sand.u32 %s72, 1
        %s390 = sand.u32 %s72, 1
        %s391 = smul.addr %s390, 256
        %s392 = scalar_lea.vmem [#allocation3], %s391
        // Predicated region
        $region71: #{resnet_forward.21} parent=69 // pred_check
          %p393 = pneg %p85
        $region72: #{resnet_forward.21} parent=69 // pred_check_branch
          %395 = sbr.rel (%p393) target = $region74
        $region73: #{resnet_forward.21} parent=69 // pred_region
          _
        $region74: #{resnet_forward.21} parent=69 // pred_fallthru
          _
        %s396 = smul.u32 2, %s22
        %p397 = scmp.lt.s32.totalorder %s20, 0
        %s398 = scalar_select %p397, %s20, 0
        %p399 = scmp.lt.s32.totalorder %s396, 1
        %s400 = scalar_select %p399, %s396, 1
        %s401 = smul.addr %s398, 2
        %s402 = sadd.s32 %s400, %s401
        %s403 = smul.addr %s402, 4
        %s404 = scalar_lea.vmem %s0, %s403
        %p405 = pneg %p57
        %p406 = pneg %p54
        %s407 = sand.u32 %s72, 1
        %s408 = sand.u32 %s72, 1
        %s409 = smul.addr %s408, 256
        %s410 = scalar_lea.vmem [#allocation3], %s409
        %p411 = pneg %p85
        %p412 = pneg %p82
        %s413 = smul.u32 2, %s21
        %p414 = scmp.lt.s32.totalorder %s413, 3
        %s415 = scalar_select %p414, %s413, 3
        %s416 = scalar_lea.vmem %s2, %s415
        %p417 = pneg %p111
        %p418 = pneg %p108
        %s419 = smul.u32 2, %s21
        %p420 = scmp.lt.s32.totalorder %s419, 3
        %s421 = scalar_select %p420, %s419, 3
        %s422 = scalar_lea.vmem %s3, %s421
        %p423 = pneg %p137
        %p424 = pneg %p134
        %p425 = pneg %p165
        %p426 = pneg %p162
        %s427 = smul.u32 2, %s21
        %p428 = scmp.lt.s32.totalorder %s20, 0
        %s429 = scalar_select %p428, %s20, 0
        %p430 = scmp.lt.s32.totalorder %s427, 3
        %s431 = scalar_select %p430, %s427, 3
        %s432 = smul.addr %s429, 4
        %s433 = sadd.s32 %s431, %s432
        %s434 = smul.addr %s433, 4
        %s435 = scalar_lea.vmem %s4, %s434
        %s436 = smul.u32 2, %s22
        %p437 = scmp.lt.s32.totalorder %s20, 0
        %s438 = scalar_select %p437, %s20, 0
        %p439 = scmp.lt.s32.totalorder %s436, 1
        %s440 = scalar_select %p439, %s436, 1
        %s441 = smul.addr %s438, 2
        %s442 = sadd.s32 %s440, %s441
        %s443 = smul.addr %s442, 4
        %s444 = scalar_lea.vmem %s0, %s443
        %s445 = smul.u32 2, %s22
        %s446 = smul.u32 32, %s22
        %s447 = smul.u32 2, %s21
        %s448 = smul.u32 2, %s21
        %p449 = scmp.lt.s32.totalorder %s448, 3
        %s450 = scalar_select %p449, %s448, 3
        %s451 = scalar_lea.vmem %s2, %s450
        %s452 = smul.u32 2, %s21
        %s453 = smul.u32 2, %s21
        %p454 = scmp.lt.s32.totalorder %s453, 3
        %s455 = scalar_select %p454, %s453, 3
        %s456 = scalar_lea.vmem %s3, %s455
        %s457 = smul.u32 2, %s21
        %s458 = smul.u32 2, %s21
        %p459 = scmp.lt.s32.totalorder %s20, 0
        %s460 = scalar_select %p459, %s20, 0
        %p461 = scmp.lt.s32.totalorder %s458, 3
        %s462 = scalar_select %p461, %s458, 3
        %s463 = smul.addr %s460, 4
        %s464 = sadd.s32 %s462, %s463
        %s465 = smul.addr %s464, 4
        %s466 = scalar_lea.vmem %s4, %s465
        %s467 = smul.u32 2, %s21
        %p468 = scmp.eq.s32.totalorder %s22, 0
        // Predicated region
        $region75: #{resnet_forward.21} parent=69 // pred_check
          %p469 = pneg %p468
        $region76: #{resnet_forward.21} parent=69 // pred_check_branch
          %471 = sbr.rel (%p469) target = $region78
        $region77: #{resnet_forward.21} parent=69 // pred_region
          %472 = vst [vmem:[#allocation2] sm:$0xff] 0.0
          %473 = vst [vmem:[#allocation2 + $0x8] sm:$0xff] 0.0
        $region78: #{resnet_forward.21} parent=69 // pred_fallthru
          _
        %v474 = vld [vmem:[#allocation2] sm:$0xff]
        %v475 = vld [vmem:[#allocation2 + $0x8] sm:$0xff]
        %v476 = vld [vmem:[%s444] sm:$0xff]
        %v477 = vld [vmem:[%s392] sm:$0xff]
        %v478 = vld [vmem:[%s392 + $0x8] sm:$0xff]
        %v479 = vld [vmem:[%s392 + $0x10] sm:$0xff]
        %v480 = vld [vmem:[%s392 + $0x18] sm:$0xff]
        %v481 = vld [vmem:[%s392 + $0x20] sm:$0xff]
        %v482 = vld [vmem:[%s392 + $0x28] sm:$0xff]
        %v483 = vld [vmem:[%s392 + $0x30] sm:$0xff]
        %v484 = vld [vmem:[%s392 + $0x38] sm:$0xff]
        %v485 = vld [vmem:[%s392 + $0x40] sm:$0xff]
        %v486 = vld [vmem:[%s392 + $0x48] sm:$0xff]
        %v487 = vld [vmem:[%s392 + $0x50] sm:$0xff]
        %v488 = vld [vmem:[%s392 + $0x58] sm:$0xff]
        %v489 = vld [vmem:[%s392 + $0x60] sm:$0xff]
        %v490 = vld [vmem:[%s392 + $0x68] sm:$0xff]
        %v491 = vld [vmem:[%s392 + $0x70] sm:$0xff]
        %v492 = vld [vmem:[%s392 + $0x78] sm:$0xff]
        %v493 = vld [vmem:[%s392 + $0x80] sm:$0xff]
        %v494 = vld [vmem:[%s392 + $0x88] sm:$0xff]
        %v495 = vld [vmem:[%s392 + $0x90] sm:$0xff]
        %v496 = vld [vmem:[%s392 + $0x98] sm:$0xff]
        %v497 = vld [vmem:[%s392 + $0xa0] sm:$0xff]
        %v498 = vld [vmem:[%s392 + $0xa8] sm:$0xff]
        %v499 = vld [vmem:[%s392 + $0xb0] sm:$0xff]
        %v500 = vld [vmem:[%s392 + $0xb8] sm:$0xff]
        %v501 = vld [vmem:[%s392 + $0xc0] sm:$0xff]
        %v502 = vld [vmem:[%s392 + $0xc8] sm:$0xff]
        %v503 = vld [vmem:[%s392 + $0xd0] sm:$0xff]
        %v504 = vld [vmem:[%s392 + $0xd8] sm:$0xff]
        %v505 = vld [vmem:[%s392 + $0xe0] sm:$0xff]
        %v506 = vld [vmem:[%s392 + $0xe8] sm:$0xff]
        %v507 = vld [vmem:[%s392 + $0xf0] sm:$0xff]
        %v508 = vld [vmem:[%s392 + $0xf8] sm:$0xff]
        %v510 = vunpack.c.l.b16 %v476
        %v511 = vunpack.c.h.b16 %v476
        %v512 = vpack.c.b16 %v510, %v510
        %v513 = vpack.c.b16 %v511, %v511
        %v548 = vunpack.c.l.b16 %v477
        %v549 = vunpack.c.h.b16 %v477
        %v550 = vunpack.c.l.b16 %v478
        %v551 = vunpack.c.h.b16 %v478
        %v552 = vunpack.c.l.b16 %v479
        %v553 = vunpack.c.h.b16 %v479
        %v554 = vunpack.c.l.b16 %v480
        %v555 = vunpack.c.h.b16 %v480
        %v556 = vunpack.c.l.b16 %v481
        %v557 = vunpack.c.h.b16 %v481
        %v558 = vunpack.c.l.b16 %v482
        %v559 = vunpack.c.h.b16 %v482
        %v560 = vunpack.c.l.b16 %v483
        %v561 = vunpack.c.h.b16 %v483
        %v562 = vunpack.c.l.b16 %v484
        %v563 = vunpack.c.h.b16 %v484
        %v564 = vunpack.c.l.b16 %v485
        %v565 = vunpack.c.h.b16 %v485
        %v566 = vunpack.c.l.b16 %v486
        %v567 = vunpack.c.h.b16 %v486
        %v568 = vunpack.c.l.b16 %v487
        %v569 = vunpack.c.h.b16 %v487
        %v570 = vunpack.c.l.b16 %v488
        %v571 = vunpack.c.h.b16 %v488
        %v572 = vunpack.c.l.b16 %v489
        %v573 = vunpack.c.h.b16 %v489
        %v574 = vunpack.c.l.b16 %v490
        %v575 = vunpack.c.h.b16 %v490
        %v576 = vunpack.c.l.b16 %v491
        %v577 = vunpack.c.h.b16 %v491
        %v578 = vunpack.c.l.b16 %v492
        %v579 = vunpack.c.h.b16 %v492
        %v580 = vunpack.c.l.b16 %v493
        %v581 = vunpack.c.h.b16 %v493
        %v582 = vunpack.c.l.b16 %v494
        %v583 = vunpack.c.h.b16 %v494
        %v584 = vunpack.c.l.b16 %v495
        %v585 = vunpack.c.h.b16 %v495
        %v586 = vunpack.c.l.b16 %v496
        %v587 = vunpack.c.h.b16 %v496
        %v588 = vunpack.c.l.b16 %v497
        %v589 = vunpack.c.h.b16 %v497
        %v590 = vunpack.c.l.b16 %v498
        %v591 = vunpack.c.h.b16 %v498
        %v592 = vunpack.c.l.b16 %v499
        %v593 = vunpack.c.h.b16 %v499
        %v594 = vunpack.c.l.b16 %v500
        %v595 = vunpack.c.h.b16 %v500
        %v596 = vunpack.c.l.b16 %v501
        %v597 = vunpack.c.h.b16 %v501
        %v598 = vunpack.c.l.b16 %v502
        %v599 = vunpack.c.h.b16 %v502
        %v600 = vunpack.c.l.b16 %v503
        %v601 = vunpack.c.h.b16 %v503
        %v602 = vunpack.c.l.b16 %v504
        %v603 = vunpack.c.h.b16 %v504
        %v604 = vunpack.c.l.b16 %v505
        %v605 = vunpack.c.h.b16 %v505
        %v606 = vunpack.c.l.b16 %v506
        %v607 = vunpack.c.h.b16 %v506
        %v608 = vunpack.c.l.b16 %v507
        %v609 = vunpack.c.h.b16 %v507
        %v610 = vunpack.c.l.b16 %v508
        %v611 = vunpack.c.h.b16 %v508
        %v612 = vpack.c.b16 %v550, %v548
        %v613 = vpack.c.b16 %v551, %v549
        %v614 = vpack.c.b16 %v554, %v552
        %v615 = vpack.c.b16 %v555, %v553
        %v616 = vpack.c.b16 %v558, %v556
        %v617 = vpack.c.b16 %v559, %v557
        %v618 = vpack.c.b16 %v562, %v560
        %v619 = vpack.c.b16 %v563, %v561
        %v620 = vpack.c.b16 %v566, %v564
        %v621 = vpack.c.b16 %v567, %v565
        %v622 = vpack.c.b16 %v570, %v568
        %v623 = vpack.c.b16 %v571, %v569
        %v624 = vpack.c.b16 %v574, %v572
        %v625 = vpack.c.b16 %v575, %v573
        %v626 = vpack.c.b16 %v578, %v576
        %v627 = vpack.c.b16 %v579, %v577
        %v628 = vpack.c.b16 %v582, %v580
        %v629 = vpack.c.b16 %v583, %v581
        %v630 = vpack.c.b16 %v586, %v584
        %v631 = vpack.c.b16 %v587, %v585
        %v632 = vpack.c.b16 %v590, %v588
        %v633 = vpack.c.b16 %v591, %v589
        %v634 = vpack.c.b16 %v594, %v592
        %v635 = vpack.c.b16 %v595, %v593
        %v636 = vpack.c.b16 %v598, %v596
        %v637 = vpack.c.b16 %v599, %v597
        %v638 = vpack.c.b16 %v602, %v600
        %v639 = vpack.c.b16 %v603, %v601
        %v640 = vpack.c.b16 %v606, %v604
        %v641 = vpack.c.b16 %v607, %v605
        %v642 = vpack.c.b16 %v610, %v608
        %v643 = vpack.c.b16 %v611, %v609
        %676 = vmatprep.subr.bf16.mxu0 %v613
        %677 = vmatpush1.bf16.msra.mxu0 %v612
        %678 = vmatprep.subr.bf16.mxu0 %v615
        %679 = vmatpush1.bf16.msra.mxu0 %v614
        %680 = vmatprep.subr.bf16.mxu0 %v617
        %681 = vmatpush1.bf16.msra.mxu0 %v616
        %682 = vmatprep.subr.bf16.mxu0 %v619
        %683 = vmatpush1.bf16.msra.mxu0 %v618
        %684 = vmatprep.subr.bf16.mxu0 %v621
        %685 = vmatpush1.bf16.msra.mxu0 %v620
        %686 = vmatprep.subr.bf16.mxu0 %v623
        %687 = vmatpush1.bf16.msra.mxu0 %v622
        %688 = vmatprep.subr.bf16.mxu0 %v625
        %689 = vmatpush1.bf16.msra.mxu0 %v624
        %690 = vmatprep.subr.bf16.mxu0 %v627
        %691 = vmatpush1.bf16.msra.mxu0 %v626
        %692 = vmatprep.subr.bf16.mxu0 %v629
        %693 = vmatpush1.bf16.msra.mxu0 %v628
        %694 = vmatprep.subr.bf16.mxu0 %v631
        %695 = vmatpush1.bf16.msra.mxu0 %v630
        %696 = vmatprep.subr.bf16.mxu0 %v633
        %697 = vmatpush1.bf16.msra.mxu0 %v632
        %698 = vmatprep.subr.bf16.mxu0 %v635
        %699 = vmatpush1.bf16.msra.mxu0 %v634
        %700 = vmatprep.subr.bf16.mxu0 %v637
        %701 = vmatpush1.bf16.msra.mxu0 %v636
        %702 = vmatprep.subr.bf16.mxu0 %v639
        %703 = vmatpush1.bf16.msra.mxu0 %v638
        %704 = vmatprep.subr.bf16.mxu0 %v641
        %705 = vmatpush1.bf16.msra.mxu0 %v640
        %706 = vmatprep.subr.bf16.mxu0 %v643
        %707 = vmatpush1.bf16.msra.mxu0 %v642
        %708 = vmatprep.mubr.bf16.mxu0 %v513
        %709 = vmatmul.mubr.bf16.gmra.mrb[0].mxu0 %v512
        %v710 = vpop.f32.mrb[0].mxu0
        %v711 = vadd.f32 0.0, %v710
        %v712 = vpop.f32.mrb[0].mxu0
        %v713 = vadd.f32 0.0, %v712
        %v714 = vpop.f32.mrb[0].mxu0
        %v715 = vpop.f32.mrb[0].mxu0
        %716 = vdwg.mxu0
        %v717 = vadd.f32 %v474, %v711
        %v718 = vadd.f32 %v475, %v713
        %719 = vst [vmem:[#allocation2] sm:$0xff] %v717
        %720 = vst [vmem:[#allocation2 + $0x8] sm:$0xff] %v718
        // Predicated region
        $region79: #{resnet_forward.21} parent=69 // pred_check
          %p721 = pneg %p468
        $region80: #{resnet_forward.21} parent=69 // pred_check_branch
          %723 = sbr.rel (%p721) target = $region82
        $region81: #{resnet_forward.21} parent=69 // pred_region
          %v724 = vld [vmem:[#allocation2] sm:$0xff]
          %v725 = vld [vmem:[#allocation2 + $0x8] sm:$0xff]
          %v726 = vld [vmem:[%s451] sm:$0x3]
          %v728 = vlaneseq
          %v729 = vshrl.u32 %v728, 7
          %v730 = vsub.s32 0, %v729
          %v731 = vrot.slane %v726, %v730
          %v732 = vlaneseq
          %v733 = vshrl.u32 %v732, 7
          %v734 = vsub.s32 1, %v733
          %v735 = vrot.slane %v726, %v734
          %v738 = vmul.f32 %v724, %v731
          %v739 = vmul.f32 %v725, %v735
          %v740 = vld [vmem:[%s456] sm:$0x3]
          %v742 = vlaneseq
          %v743 = vshrl.u32 %v742, 7
          %v744 = vsub.s32 0, %v743
          %v745 = vrot.slane %v740, %v744
          %v746 = vlaneseq
          %v747 = vshrl.u32 %v746, 7
          %v748 = vsub.s32 1, %v747
          %v749 = vrot.slane %v740, %v748
          %v752 = vadd.f32 %v738, %v745
          %v753 = vadd.f32 %v739, %v749
          %v754 = vpack.c.bf16 %v752, %v752
          %v755 = vpack.c.bf16 %v753, %v753
          %v758 = vunpack.c.l.b16 %v754
          %v759 = vunpack.c.l.b16 %v755
          %v760 = vpack.c.b16 %v759, %v758
          %762 = vst [vmem:[%s466] sm:$0xff] %v760
        $region82: #{resnet_forward.21} parent=69 // pred_fallthru
          _
        %s763 = smul.u32 2, %s21
        %p764 = scmp.lt.s32.totalorder %s20, 0
        %s765 = scalar_select %p764, %s20, 0
        %p766 = scmp.lt.s32.totalorder %s763, 3
        %s767 = scalar_select %p766, %s763, 3
        %s768 = smul.addr %s765, 4
        %s769 = sadd.s32 %s767, %s768
        %s770 = smul.addr %s769, 4
        %s771 = scalar_lea.vmem %s4, %s770
        // Predicated region
        $region83: #{resnet_forward.21} parent=69 // pred_check
          %p772 = pneg %p162
        $region84: #{resnet_forward.21} parent=69 // pred_check_branch
          %774 = sbr.rel (%p772) target = $region86
        $region85: #{resnet_forward.21} parent=69 // pred_region
          %s775 = smul.u32 2, %s21
        $region86: #{resnet_forward.21} parent=69 // pred_fallthru
          _
      $region70: #{resnet_forward.21} parent=5 // pred_fallthru
        _
      %p776 = scmp.le.s32.totalorder 2, %s10
      // Predicated region
      $region87: #{resnet_forward.21} parent=5 // pred_check
        %p777 = pneg %p776
      $region88: #{resnet_forward.21} parent=5 // pred_check_branch
        %779 = sbr.rel (%p777) target = $region90
      $region89: #{resnet_forward.21} parent=5 // pred_region
        %s780 = ssub.s32 %s10, 2
        // Predicated region
        $region91: #{resnet_forward.21} parent=89 // pred_check
          %p781 = pneg %p168
        $region92: #{resnet_forward.21} parent=89 // pred_check_branch
          %783 = sbr.rel (%p781) target = $region94
        $region93: #{resnet_forward.21} parent=89 // pred_region
          %s784 = smul.u32 2, %s24
          %p785 = scmp.lt.s32.totalorder %s23, 0
          %s786 = scalar_select %p785, %s23, 0
          %p787 = scmp.lt.s32.totalorder %s784, 3
          %s788 = scalar_select %p787, %s784, 3
          %s789 = smul.addr %s786, 4
          %s790 = sadd.s32 %s788, %s789
          %s791 = smul.addr %s790, 4
          %s792 = scalar_lea.vmem %s4, %s791
        $region94: #{resnet_forward.21} parent=89 // pred_fallthru
          _
      $region90: #{resnet_forward.21} parent=5 // pred_fallthru
        _
    $region6: #{resnet_forward.21} parent=1 // loop_footer
      %s14 = sadd.s32 1, %s10
    $region7: #{resnet_forward.21} parent=1 // loop_footer_branch
      %9 = sbr.rel target = $region3
    $region8: #{resnet_forward.21} parent=1 // loop_exit
      _

// kernel: resnet_forward.23
$region0: #{resnet_forward.23}
  #allocation0 [shape = 'u32[]', space=smem, size = 0x4, offset = 0x4, fixed_abs, tag = 'smem constant byte address 0x4 - core index']
  #allocation1 [shape = 'u32[144,128]{1,0:T(1,128)}', space=vmem, size = 0x12000, scoped, tag = 'internal scratch']
  #allocation2 [shape = 'f32[8,256]{1,0:T(8,128)}', space=vmem, size = 0x2000, scoped, tag = 'scratch operand']
  %s0 = inlined_call_operand.vmem [shape: bf16[8,4608], index: 0, kind: input, shape index: {}]
  %s1 = inlined_call_operand.vmem [shape: bf16[4608,512], index: 1, kind: input, shape index: {}]
  %s2 = inlined_call_operand.vmem [shape: f32[1,512], index: 2, kind: input, shape index: {}]
  %s3 = inlined_call_operand.vmem [shape: f32[1,512], index: 3, kind: input, shape index: {}]
  %s4 = inlined_call_operand.vmem [shape: bf16[8,512], index: 4, kind: input, shape index: {}]
  %s5 = inlined_call_operand.vmem [shape: bf16[8,512], index: 5, kind: output, shape index: {}]
  %s6 = sld [smem:[#allocation0]]
  $region99: #{resnet_forward.23} parent=0
    _
  %s8 = ssub.s32 1, %s6
  %s9 = scalar_select 0, %s8, %s6
  $region1: #{resnet_forward.23} parent=0
    #allocation3 [shape = 'u8[262144]{0}', space=vmem, size = 0x40000, scoped, tag = 'input window, operand 1']
    loop: start=0, step=1, limit=38
    $region2: #{resnet_forward.23} parent=1 // loop_pre_header
      _
    $region3: #{resnet_forward.23} parent=1 // loop_header
      %s11 = sphi 0, %s15
      %p12 = scmp.ge.s32.totalorder %s11, 38
      %s18 = sphi 0, %s37
      %s19 = sphi 0, %s33
      %s20 = sphi 0, %s29
      %s21 = sphi 0, %s18
      %s22 = sphi 0, %s19
      %s23 = sphi 0, %s20
      %s24 = sphi 0, %s21
      %s25 = sphi 0, %s22
      %s26 = sphi 0, %s23
      %s42 = sphi 0, %s44
      %s45 = sphi 0, %s42
      %s46 = sphi 0, %s45
      %s62 = sphi 0, %s46
      %s70 = sphi 0, %s72
      %s73 = sphi 0, %s70
      %s74 = sphi 0, %s73
      %s90 = sphi 0, %s74
      %s96 = sphi 0, %s98
      %s99 = sphi 0, %s96
      %s100 = sphi 0, %s99
      %s116 = sphi 0, %s100
      %s122 = sphi 0, %s124
      %s125 = sphi 0, %s122
      %s126 = sphi 0, %s125
      %s142 = sphi 0, %s126
      %s150 = sphi 0, %s152
      %s153 = sphi 0, %s150
      %s154 = sphi 0, %s153
      %s170 = sphi 0, %s154
      %s178 = sphi 0, %s180
      %s181 = sphi 0, %s178
      %s182 = sphi 0, %s181
      %s198 = sphi 0, %s182
    $region4: #{resnet_forward.23} parent=1 // loop_header_branch
      %14 = sbr.rel (%p12) target = $region8
    $region5: #{resnet_forward.23} parent=1 // loop_body
      %s16 = ssub.s32 %s11, 1
      %s17 = ssub.s32 %s11, 2
      %s27 = sadd.s32 1, %s20
      %p28 = scmp.ge.s32.totalorder %s27, 18
      %s29 = scalar_select %p28, 0, %s27
      %s30 = sadd.s32 1, %s19
      %s31 = scalar_select %p28, %s30, %s19
      %p32 = scmp.ge.s32.totalorder %s31, 2
      %s33 = scalar_select %p32, 0, %s31
      %s34 = sadd.s32 1, %s18
      %s35 = scalar_select %p32, %s34, %s18
      %p36 = scmp.ge.s32.totalorder %s35, 1
      %s37 = scalar_select %p36, 0, %s35
      %s38 = ssub.s32 %s18, %s37
      %s39 = ssub.s32 %s20, %s29
      %s40 = sor.u32 %s38, %s39
      %p41 = scmp.eq.s32.totalorder %s40, 0
      %s43 = sadd.s32 %s42, 1
      %s44 = scalar_select %p41, %s42, %s43
      %p47 = pneg %p41
      %p48 = scmp.eq.s32.totalorder %s11, 35
      %p49 = por %p47, %p48
      %p50 = scmp.ne.s32.totalorder %s42, %s45
      %p51 = scmp.eq.s32.totalorder %s11, 0
      %p52 = por %p50, %p51
      %p53 = scmp.ne.s32.totalorder %s42, %s45
      %p54 = scmp.eq.s32.totalorder %s16, 35
      %p55 = por %p53, %p54
      %p56 = scmp.ne.s32.totalorder %s45, %s46
      %p57 = scmp.eq.s32.totalorder %s16, 0
      %p58 = por %p56, %p57
      %p59 = scmp.ne.s32.totalorder %s45, %s46
      %p60 = scmp.eq.s32.totalorder %s17, 35
      %p61 = por %p59, %p60
      %p63 = scmp.ne.s32.totalorder %s46, %s62
      %p64 = scmp.eq.s32.totalorder %s17, 0
      %p65 = por %p63, %p64
      %s66 = ssub.s32 %s20, %s29
      %s67 = ssub.s32 %s19, %s33
      %s68 = sor.u32 %s66, %s67
      %p69 = scmp.eq.s32.totalorder %s68, 0
      %s71 = sadd.s32 %s70, 1
      %s72 = scalar_select %p69, %s70, %s71
      %p75 = pneg %p69
      %p76 = scmp.eq.s32.totalorder %s11, 35
      %p77 = por %p75, %p76
      %p78 = scmp.ne.s32.totalorder %s70, %s73
      %p79 = scmp.eq.s32.totalorder %s11, 0
      %p80 = por %p78, %p79
      %p81 = scmp.ne.s32.totalorder %s70, %s73
      %p82 = scmp.eq.s32.totalorder %s16, 35
      %p83 = por %p81, %p82
      %p84 = scmp.ne.s32.totalorder %s73, %s74
      %p85 = scmp.eq.s32.totalorder %s16, 0
      %p86 = por %p84, %p85
      %p87 = scmp.ne.s32.totalorder %s73, %s74
      %p88 = scmp.eq.s32.totalorder %s17, 35
      %p89 = por %p87, %p88
      %p91 = scmp.ne.s32.totalorder %s74, %s90
      %p92 = scmp.eq.s32.totalorder %s17, 0
      %p93 = por %p91, %p92
      %s94 = ssub.s32 %s19, %s33
      %p95 = scmp.eq.s32.totalorder %s94, 0
      %s97 = sadd.s32 %s96, 1
      %s98 = scalar_select %p95, %s96, %s97
      %p101 = pneg %p95
      %p102 = scmp.eq.s32.totalorder %s11, 35
      %p103 = por %p101, %p102
      %p104 = scmp.ne.s32.totalorder %s96, %s99
      %p105 = scmp.eq.s32.totalorder %s11, 0
      %p106 = por %p104, %p105
      %p107 = scmp.ne.s32.totalorder %s96, %s99
      %p108 = scmp.eq.s32.totalorder %s16, 35
      %p109 = por %p107, %p108
      %p110 = scmp.ne.s32.totalorder %s99, %s100
      %p111 = scmp.eq.s32.totalorder %s16, 0
      %p112 = por %p110, %p111
      %p113 = scmp.ne.s32.totalorder %s99, %s100
      %p114 = scmp.eq.s32.totalorder %s17, 35
      %p115 = por %p113, %p114
      %p117 = scmp.ne.s32.totalorder %s100, %s116
      %p118 = scmp.eq.s32.totalorder %s17, 0
      %p119 = por %p117, %p118
      %s120 = ssub.s32 %s19, %s33
      %p121 = scmp.eq.s32.totalorder %s120, 0
      %s123 = sadd.s32 %s122, 1
      %s124 = scalar_select %p121, %s122, %s123
      %p127 = pneg %p121
      %p128 = scmp.eq.s32.totalorder %s11, 35
      %p129 = por %p127, %p128
      %p130 = scmp.ne.s32.totalorder %s122, %s125
      %p131 = scmp.eq.s32.totalorder %s11, 0
      %p132 = por %p130, %p131
      %p133 = scmp.ne.s32.totalorder %s122, %s125
      %p134 = scmp.eq.s32.totalorder %s16, 35
      %p135 = por %p133, %p134
      %p136 = scmp.ne.s32.totalorder %s125, %s126
      %p137 = scmp.eq.s32.totalorder %s16, 0
      %p138 = por %p136, %p137
      %p139 = scmp.ne.s32.totalorder %s125, %s126
      %p140 = scmp.eq.s32.totalorder %s17, 35
      %p141 = por %p139, %p140
      %p143 = scmp.ne.s32.totalorder %s126, %s142
      %p144 = scmp.eq.s32.totalorder %s17, 0
      %p145 = por %p143, %p144
      %s146 = ssub.s32 %s18, %s37
      %s147 = ssub.s32 %s19, %s33
      %s148 = sor.u32 %s146, %s147
      %p149 = scmp.eq.s32.totalorder %s148, 0
      %s151 = sadd.s32 %s150, 1
      %s152 = scalar_select %p149, %s150, %s151
      %p155 = pneg %p149
      %p156 = scmp.eq.s32.totalorder %s11, 35
      %p157 = por %p155, %p156
      %p158 = scmp.ne.s32.totalorder %s150, %s153
      %p159 = scmp.eq.s32.totalorder %s11, 0
      %p160 = por %p158, %p159
      %p161 = scmp.ne.s32.totalorder %s150, %s153
      %p162 = scmp.eq.s32.totalorder %s16, 35
      %p163 = por %p161, %p162
      %p164 = scmp.ne.s32.totalorder %s153, %s154
      %p165 = scmp.eq.s32.totalorder %s16, 0
      %p166 = por %p164, %p165
      %p167 = scmp.ne.s32.totalorder %s153, %s154
      %p168 = scmp.eq.s32.totalorder %s17, 35
      %p169 = por %p167, %p168
      %p171 = scmp.ne.s32.totalorder %s154, %s170
      %p172 = scmp.eq.s32.totalorder %s17, 0
      %p173 = por %p171, %p172
      %s174 = ssub.s32 %s18, %s37
      %s175 = ssub.s32 %s19, %s33
      %s176 = sor.u32 %s174, %s175
      %p177 = scmp.eq.s32.totalorder %s176, 0
      %s179 = sadd.s32 %s178, 1
      %s180 = scalar_select %p177, %s178, %s179
      %p183 = pneg %p177
      %p184 = scmp.eq.s32.totalorder %s11, 35
      %p185 = por %p183, %p184
      %p186 = scmp.ne.s32.totalorder %s178, %s181
      %p187 = scmp.eq.s32.totalorder %s11, 0
      %p188 = por %p186, %p187
      %p189 = scmp.ne.s32.totalorder %s178, %s181
      %p190 = scmp.eq.s32.totalorder %s16, 35
      %p191 = por %p189, %p190
      %p192 = scmp.ne.s32.totalorder %s181, %s182
      %p193 = scmp.eq.s32.totalorder %s16, 0
      %p194 = por %p192, %p193
      %p195 = scmp.ne.s32.totalorder %s181, %s182
      %p196 = scmp.eq.s32.totalorder %s17, 35
      %p197 = por %p195, %p196
      %p199 = scmp.ne.s32.totalorder %s182, %s198
      %p200 = scmp.eq.s32.totalorder %s17, 0
      %p201 = por %p199, %p200
      %p202 = scmp.le.s32.totalorder 1, %s11
      %p203 = scmp.lt.s32.totalorder %s11, 37
      %p204 = pnand %p202, %p203
      %p205 = pneg %p204
      // Predicated region
      $region9: #{resnet_forward.23} parent=5 // pred_check
        _
      $region10: #{resnet_forward.23} parent=5 // pred_check_branch
        %207 = sbr.rel (%p204) target = $region12
      $region11: #{resnet_forward.23} parent=5 // pred_region
        %s208 = ssub.s32 %s11, 1
      $region12: #{resnet_forward.23} parent=5 // pred_fallthru
        _
      %p209 = scmp.lt.s32.totalorder %s11, 36
      // Predicated region
      $region13: #{resnet_forward.23} parent=5 // pred_check
        %p210 = pneg %p209
      $region14: #{resnet_forward.23} parent=5 // pred_check_branch
        %212 = sbr.rel (%p210) target = $region16
      $region15: #{resnet_forward.23} parent=5 // pred_region
        // Predicated region
        $region17: #{resnet_forward.23} parent=15 // pred_check
          %p213 = pneg %p52
        $region18: #{resnet_forward.23} parent=15 // pred_check_branch
          %215 = sbr.rel (%p213) target = $region20
        $region19: #{resnet_forward.23} parent=15 // pred_region
          %s216 = smul.u32 2, %s20
          %p217 = scmp.lt.s32.totalorder %s18, 0
          %s218 = scalar_select %p217, %s18, 0
          %p219 = scmp.lt.s32.totalorder %s216, 35
          %s220 = scalar_select %p219, %s216, 35
          %s221 = smul.addr %s218, 36
          %s222 = sadd.s32 %s220, %s221
          %s223 = smul.addr %s222, 4
          %s224 = scalar_lea.vmem %s0, %s223
          %s225 = smul.u32 2, %s20
        $region20: #{resnet_forward.23} parent=15 // pred_fallthru
          _
        // Predicated region
        $region21: #{resnet_forward.23} parent=15 // pred_check
          %p226 = pneg %p80
        $region22: #{resnet_forward.23} parent=15 // pred_check_branch
          %228 = sbr.rel (%p226) target = $region24
        $region23: #{resnet_forward.23} parent=15 // pred_region
          %s229 = sand.u32 %s70, 1
          %s230 = sand.u32 %s70, 1
          %s231 = smul.addr %s230, 256
          %s232 = scalar_lea.vmem [#allocation3], %s231
          %s233 = smul.u32 32, %s20
          %s234 = smul.u32 2, %s19
          %s235 = smul.addr %s233, 4
          %s236 = sadd.s32 %s234, %s235
          %s237 = smul.addr %s236, 4
          %s238 = scalar_lea.vmem %s1, %s237
          // Predicated region
          $region25: #{resnet_forward.23} parent=23 // pred_check
            _
          $region26: #{resnet_forward.23} parent=23 // pred_check_branch
            %240 = sbr.rel (0) target = $region28
          $region27: #{resnet_forward.23} parent=23 // pred_region
            // Predicated region
            $region29: #{resnet_forward.23} parent=27 // pred_check
              _
            $region30: #{resnet_forward.23} parent=27 // pred_check_branch
              %242 = sbr.rel (0) target = $region32
            $region31: #{resnet_forward.23} parent=27 // pred_region
              // Predicated region
              $region44: #{resnet_forward.23} parent=31 // pred_check
                _
              $region45: #{resnet_forward.23} parent=31 // pred_check_branch
                %319 = sbr.rel (0) target = $region47
              $region46: #{resnet_forward.23} parent=31 // pred_region
                loop: start=0, step=1, limit=1
                $region48: #{resnet_forward.23} parent=46 // loop_pre_header
                  _
                $region49: #{resnet_forward.23} parent=46 // loop_header
                  %s321 = sphi 0, %s325
                  %p322 = scmp.ge.s32.totalorder %s321, 1
                  %s326 = sphi %s238, %s238
                  %s327 = sphi %s232, %s232
                $region50: #{resnet_forward.23} parent=46 // loop_header_branch
                  %324 = sbr.rel (%p322) target = $region54
                $region51: #{resnet_forward.23} parent=46 // loop_body
                  %v328 = vld [vmem:[%s326] sm:$0xff]
                  %329 = vst [vmem:[%s327] sm:$0xff] %v328
                  %v330 = vld [vmem:[%s326 + $0x10] sm:$0xff]
                  %331 = vst [vmem:[%s327 + $0x8] sm:$0xff] %v330
                  %v332 = vld [vmem:[%s326 + $0x20] sm:$0xff]
                  %333 = vst [vmem:[%s327 + $0x10] sm:$0xff] %v332
                  %v334 = vld [vmem:[%s326 + $0x30] sm:$0xff]
                  %335 = vst [vmem:[%s327 + $0x18] sm:$0xff] %v334
                  %v336 = vld [vmem:[%s326 + $0x40] sm:$0xff]
                  %337 = vst [vmem:[%s327 + $0x20] sm:$0xff] %v336
                  %v338 = vld [vmem:[%s326 + $0x50] sm:$0xff]
                  %339 = vst [vmem:[%s327 + $0x28] sm:$0xff] %v338
                  %v340 = vld [vmem:[%s326 + $0x60] sm:$0xff]
                  %341 = vst [vmem:[%s327 + $0x30] sm:$0xff] %v340
                  %v342 = vld [vmem:[%s326 + $0x70] sm:$0xff]
                  %343 = vst [vmem:[%s327 + $0x38] sm:$0xff] %v342
                  %v344 = vld [vmem:[%s326 + $0x80] sm:$0xff]
                  %345 = vst [vmem:[%s327 + $0x40] sm:$0xff] %v344
                  %v346 = vld [vmem:[%s326 + $0x90] sm:$0xff]
                  %347 = vst [vmem:[%s327 + $0x48] sm:$0xff] %v346
                  %v348 = vld [vmem:[%s326 + $0xa0] sm:$0xff]
                  %349 = vst [vmem:[%s327 + $0x50] sm:$0xff] %v348
                  %v350 = vld [vmem:[%s326 + $0xb0] sm:$0xff]
                  %351 = vst [vmem:[%s327 + $0x58] sm:$0xff] %v350
                  %v352 = vld [vmem:[%s326 + $0xc0] sm:$0xff]
                  %353 = vst [vmem:[%s327 + $0x60] sm:$0xff] %v352
                  %v354 = vld [vmem:[%s326 + $0xd0] sm:$0xff]
                  %355 = vst [vmem:[%s327 + $0x68] sm:$0xff] %v354
                  %v356 = vld [vmem:[%s326 + $0xe0] sm:$0xff]
                  %357 = vst [vmem:[%s327 + $0x70] sm:$0xff] %v356
                  %v358 = vld [vmem:[%s326 + $0xf0] sm:$0xff]
                  %359 = vst [vmem:[%s327 + $0x78] sm:$0xff] %v358
                  %v360 = vld [vmem:[%s326 + $0x100] sm:$0xff]
                  %361 = vst [vmem:[%s327 + $0x80] sm:$0xff] %v360
                  %v362 = vld [vmem:[%s326 + $0x110] sm:$0xff]
                  %363 = vst [vmem:[%s327 + $0x88] sm:$0xff] %v362
                  %v364 = vld [vmem:[%s326 + $0x120] sm:$0xff]
                  %365 = vst [vmem:[%s327 + $0x90] sm:$0xff] %v364
                  %v366 = vld [vmem:[%s326 + $0x130] sm:$0xff]
                  %367 = vst [vmem:[%s327 + $0x98] sm:$0xff] %v366
                  %v368 = vld [vmem:[%s326 + $0x140] sm:$0xff]
                  %369 = vst [vmem:[%s327 + $0xa0] sm:$0xff] %v368
                  %v370 = vld [vmem:[%s326 + $0x150] sm:$0xff]
                  %371 = vst [vmem:[%s327 + $0xa8] sm:$0xff] %v370
                  %v372 = vld [vmem:[%s326 + $0x160] sm:$0xff]
                  %373 = vst [vmem:[%s327 + $0xb0] sm:$0xff] %v372
                  %v374 = vld [vmem:[%s326 + $0x170] sm:$0xff]
                  %375 = vst [vmem:[%s327 + $0xb8] sm:$0xff] %v374
                  %v376 = vld [vmem:[%s326 + $0x180] sm:$0xff]
                  %377 = vst [vmem:[%s327 + $0xc0] sm:$0xff] %v376
                  %v378 = vld [vmem:[%s326 + $0x190] sm:$0xff]
                  %379 = vst [vmem:[%s327 + $0xc8] sm:$0xff] %v378
                  %v380 = vld [vmem:[%s326 + $0x1a0] sm:$0xff]
                  %381 = vst [vmem:[%s327 + $0xd0] sm:$0xff] %v380
                  %v382 = vld [vmem:[%s326 + $0x1b0] sm:$0xff]
                  %383 = vst [vmem:[%s327 + $0xd8] sm:$0xff] %v382
                  %v384 = vld [vmem:[%s326 + $0x1c0] sm:$0xff]
                  %385 = vst [vmem:[%s327 + $0xe0] sm:$0xff] %v384
                  %v386 = vld [vmem:[%s326 + $0x1d0] sm:$0xff]
                  %387 = vst [vmem:[%s327 + $0xe8] sm:$0xff] %v386
                  %v388 = vld [vmem:[%s326 + $0x1e0] sm:$0xff]
                  %389 = vst [vmem:[%s327 + $0xf0] sm:$0xff] %v388
                  %v390 = vld [vmem:[%s326 + $0x1f0] sm:$0xff]
                  %391 = vst [vmem:[%s327 + $0xf8] sm:$0xff] %v390
                $region52: #{resnet_forward.23} parent=46 // loop_footer
                  %s325 = sadd.s32 1, %s321
                $region53: #{resnet_forward.23} parent=46 // loop_footer_branch
                  %320 = sbr.rel target = $region49
                $region54: #{resnet_forward.23} parent=46 // loop_exit
                  _
              $region47: #{resnet_forward.23} parent=31 // pred_fallthru
                _
              // Predicated region
              $region55: #{resnet_forward.23} parent=31 // pred_check
                _
              $region56: #{resnet_forward.23} parent=31 // pred_check_branch
                %393 = sbr.rel target = $region58
              $region57: #{resnet_forward.23} parent=31 // pred_region
                _
              $region58: #{resnet_forward.23} parent=31 // pred_fallthru
                _
            $region32: #{resnet_forward.23} parent=27 // pred_fallthru
              _
            // Predicated region
            $region33: #{resnet_forward.23} parent=27 // pred_check
              _
            $region34: #{resnet_forward.23} parent=27 // pred_check_branch
              %244 = sbr.rel target = $region36
            $region35: #{resnet_forward.23} parent=27 // pred_region
              loop: start=0, step=1, limit=1
              $region37: #{resnet_forward.23} parent=35 // loop_pre_header
                _
              $region38: #{resnet_forward.23} parent=35 // loop_header
                %s247 = sphi 0, %s251
                %p248 = scmp.ge.s32.totalorder %s247, 1
                %s252 = sphi %s238, %s238
                %s253 = sphi %s232, %s232
              $region39: #{resnet_forward.23} parent=35 // loop_header_branch
                %250 = sbr.rel (%p248) target = $region43
              $region40: #{resnet_forward.23} parent=35 // loop_body
                %v254 = vld [vmem:[%s252] sm:$0xff]
                %255 = vst [vmem:[%s253] sm:$0xff] %v254
                %v256 = vld [vmem:[%s252 + $0x10] sm:$0xff]
                %257 = vst [vmem:[%s253 + $0x8] sm:$0xff] %v256
                %v258 = vld [vmem:[%s252 + $0x20] sm:$0xff]
                %259 = vst [vmem:[%s253 + $0x10] sm:$0xff] %v258
                %v260 = vld [vmem:[%s252 + $0x30] sm:$0xff]
                %261 = vst [vmem:[%s253 + $0x18] sm:$0xff] %v260
                %v262 = vld [vmem:[%s252 + $0x40] sm:$0xff]
                %263 = vst [vmem:[%s253 + $0x20] sm:$0xff] %v262
                %v264 = vld [vmem:[%s252 + $0x50] sm:$0xff]
                %265 = vst [vmem:[%s253 + $0x28] sm:$0xff] %v264
                %v266 = vld [vmem:[%s252 + $0x60] sm:$0xff]
                %267 = vst [vmem:[%s253 + $0x30] sm:$0xff] %v266
                %v268 = vld [vmem:[%s252 + $0x70] sm:$0xff]
                %269 = vst [vmem:[%s253 + $0x38] sm:$0xff] %v268
                %v270 = vld [vmem:[%s252 + $0x80] sm:$0xff]
                %271 = vst [vmem:[%s253 + $0x40] sm:$0xff] %v270
                %v272 = vld [vmem:[%s252 + $0x90] sm:$0xff]
                %273 = vst [vmem:[%s253 + $0x48] sm:$0xff] %v272
                %v274 = vld [vmem:[%s252 + $0xa0] sm:$0xff]
                %275 = vst [vmem:[%s253 + $0x50] sm:$0xff] %v274
                %v276 = vld [vmem:[%s252 + $0xb0] sm:$0xff]
                %277 = vst [vmem:[%s253 + $0x58] sm:$0xff] %v276
                %v278 = vld [vmem:[%s252 + $0xc0] sm:$0xff]
                %279 = vst [vmem:[%s253 + $0x60] sm:$0xff] %v278
                %v280 = vld [vmem:[%s252 + $0xd0] sm:$0xff]
                %281 = vst [vmem:[%s253 + $0x68] sm:$0xff] %v280
                %v282 = vld [vmem:[%s252 + $0xe0] sm:$0xff]
                %283 = vst [vmem:[%s253 + $0x70] sm:$0xff] %v282
                %v284 = vld [vmem:[%s252 + $0xf0] sm:$0xff]
                %285 = vst [vmem:[%s253 + $0x78] sm:$0xff] %v284
                %v286 = vld [vmem:[%s252 + $0x100] sm:$0xff]
                %287 = vst [vmem:[%s253 + $0x80] sm:$0xff] %v286
                %v288 = vld [vmem:[%s252 + $0x110] sm:$0xff]
                %289 = vst [vmem:[%s253 + $0x88] sm:$0xff] %v288
                %v290 = vld [vmem:[%s252 + $0x120] sm:$0xff]
                %291 = vst [vmem:[%s253 + $0x90] sm:$0xff] %v290
                %v292 = vld [vmem:[%s252 + $0x130] sm:$0xff]
                %293 = vst [vmem:[%s253 + $0x98] sm:$0xff] %v292
                %v294 = vld [vmem:[%s252 + $0x140] sm:$0xff]
                %295 = vst [vmem:[%s253 + $0xa0] sm:$0xff] %v294
                %v296 = vld [vmem:[%s252 + $0x150] sm:$0xff]
                %297 = vst [vmem:[%s253 + $0xa8] sm:$0xff] %v296
                %v298 = vld [vmem:[%s252 + $0x160] sm:$0xff]
                %299 = vst [vmem:[%s253 + $0xb0] sm:$0xff] %v298
                %v300 = vld [vmem:[%s252 + $0x170] sm:$0xff]
                %301 = vst [vmem:[%s253 + $0xb8] sm:$0xff] %v300
                %v302 = vld [vmem:[%s252 + $0x180] sm:$0xff]
                %303 = vst [vmem:[%s253 + $0xc0] sm:$0xff] %v302
                %v304 = vld [vmem:[%s252 + $0x190] sm:$0xff]
                %305 = vst [vmem:[%s253 + $0xc8] sm:$0xff] %v304
                %v306 = vld [vmem:[%s252 + $0x1a0] sm:$0xff]
                %307 = vst [vmem:[%s253 + $0xd0] sm:$0xff] %v306
                %v308 = vld [vmem:[%s252 + $0x1b0] sm:$0xff]
                %309 = vst [vmem:[%s253 + $0xd8] sm:$0xff] %v308
                %v310 = vld [vmem:[%s252 + $0x1c0] sm:$0xff]
                %311 = vst [vmem:[%s253 + $0xe0] sm:$0xff] %v310
                %v312 = vld [vmem:[%s252 + $0x1d0] sm:$0xff]
                %313 = vst [vmem:[%s253 + $0xe8] sm:$0xff] %v312
                %v314 = vld [vmem:[%s252 + $0x1e0] sm:$0xff]
                %315 = vst [vmem:[%s253 + $0xf0] sm:$0xff] %v314
                %v316 = vld [vmem:[%s252 + $0x1f0] sm:$0xff]
                %317 = vst [vmem:[%s253 + $0xf8] sm:$0xff] %v316
              $region41: #{resnet_forward.23} parent=35 // loop_footer
                %s251 = sadd.s32 1, %s247
              $region42: #{resnet_forward.23} parent=35 // loop_footer_branch
                %246 = sbr.rel target = $region38
              $region43: #{resnet_forward.23} parent=35 // loop_exit
                _
            $region36: #{resnet_forward.23} parent=27 // pred_fallthru
              _
          $region28: #{resnet_forward.23} parent=23 // pred_fallthru
            _
          %394 = vnop
        $region24: #{resnet_forward.23} parent=15 // pred_fallthru
          _
        // Predicated region
        $region59: #{resnet_forward.23} parent=15 // pred_check
          %p395 = pneg %p106
        $region60: #{resnet_forward.23} parent=15 // pred_check_branch
          %397 = sbr.rel (%p395) target = $region62
        $region61: #{resnet_forward.23} parent=15 // pred_region
          %s398 = smul.u32 2, %s19
          %p399 = scmp.lt.s32.totalorder %s398, 3
          %s400 = scalar_select %p399, %s398, 3
          %s401 = scalar_lea.vmem %s2, %s400
          %s402 = smul.u32 2, %s19
        $region62: #{resnet_forward.23} parent=15 // pred_fallthru
          _
        // Predicated region
        $region63: #{resnet_forward.23} parent=15 // pred_check
          %p403 = pneg %p132
        $region64: #{resnet_forward.23} parent=15 // pred_check_branch
          %405 = sbr.rel (%p403) target = $region66
        $region65: #{resnet_forward.23} parent=15 // pred_region
          %s406 = smul.u32 2, %s19
          %p407 = scmp.lt.s32.totalorder %s406, 3
          %s408 = scalar_select %p407, %s406, 3
          %s409 = scalar_lea.vmem %s3, %s408
          %s410 = smul.u32 2, %s19
        $region66: #{resnet_forward.23} parent=15 // pred_fallthru
          _
        // Predicated region
        $region67: #{resnet_forward.23} parent=15 // pred_check
          %p411 = pneg %p160
        $region68: #{resnet_forward.23} parent=15 // pred_check_branch
          %413 = sbr.rel (%p411) target = $region70
        $region69: #{resnet_forward.23} parent=15 // pred_region
          %s414 = smul.u32 2, %s19
          %p415 = scmp.lt.s32.totalorder %s18, 0
          %s416 = scalar_select %p415, %s18, 0
          %p417 = scmp.lt.s32.totalorder %s414, 3
          %s418 = scalar_select %p417, %s414, 3
          %s419 = smul.addr %s416, 4
          %s420 = sadd.s32 %s418, %s419
          %s421 = smul.addr %s420, 4
          %s422 = scalar_lea.vmem %s4, %s421
          %s423 = smul.u32 2, %s19
        $region70: #{resnet_forward.23} parent=15 // pred_fallthru
          _
      $region16: #{resnet_forward.23} parent=5 // pred_fallthru
        _
      %p424 = scmp.le.s32.totalorder 1, %s11
      %p425 = scmp.lt.s32.totalorder %s11, 37
      %p426 = pnand %p424, %p425
      %p427 = pneg %p426
      // Predicated region
      $region71: #{resnet_forward.23} parent=5 // pred_check
        _
      $region72: #{resnet_forward.23} parent=5 // pred_check_branch
        %429 = sbr.rel (%p426) target = $region74
      $region73: #{resnet_forward.23} parent=5 // pred_region
        %s430 = ssub.s32 %s11, 1
        %s431 = sand.u32 %s73, 1
        %s432 = sand.u32 %s73, 1
        %s433 = smul.addr %s432, 256
        %s434 = scalar_lea.vmem [#allocation3], %s433
        // Predicated region
        $region75: #{resnet_forward.23} parent=73 // pred_check
          %p435 = pneg %p86
        $region76: #{resnet_forward.23} parent=73 // pred_check_branch
          %437 = sbr.rel (%p435) target = $region78
        $region77: #{resnet_forward.23} parent=73 // pred_region
          _
        $region78: #{resnet_forward.23} parent=73 // pred_fallthru
          _
        %s438 = smul.u32 2, %s23
        %p439 = scmp.lt.s32.totalorder %s21, 0
        %s440 = scalar_select %p439, %s21, 0
        %p441 = scmp.lt.s32.totalorder %s438, 35
        %s442 = scalar_select %p441, %s438, 35
        %s443 = smul.addr %s440, 36
        %s444 = sadd.s32 %s442, %s443
        %s445 = smul.addr %s444, 4
        %s446 = scalar_lea.vmem %s0, %s445
        %p447 = pneg %p58
        %p448 = pneg %p55
        %s449 = sand.u32 %s73, 1
        %s450 = sand.u32 %s73, 1
        %s451 = smul.addr %s450, 256
        %s452 = scalar_lea.vmem [#allocation3], %s451
        %p453 = pneg %p86
        %p454 = pneg %p83
        %s455 = smul.u32 2, %s22
        %p456 = scmp.lt.s32.totalorder %s455, 3
        %s457 = scalar_select %p456, %s455, 3
        %s458 = scalar_lea.vmem %s2, %s457
        %p459 = pneg %p112
        %p460 = pneg %p109
        %s461 = smul.u32 2, %s22
        %p462 = scmp.lt.s32.totalorder %s461, 3
        %s463 = scalar_select %p462, %s461, 3
        %s464 = scalar_lea.vmem %s3, %s463
        %p465 = pneg %p138
        %p466 = pneg %p135
        %s467 = smul.u32 2, %s22
        %p468 = scmp.lt.s32.totalorder %s21, 0
        %s469 = scalar_select %p468, %s21, 0
        %p470 = scmp.lt.s32.totalorder %s467, 3
        %s471 = scalar_select %p470, %s467, 3
        %s472 = smul.addr %s469, 4
        %s473 = sadd.s32 %s471, %s472
        %s474 = smul.addr %s473, 4
        %s475 = scalar_lea.vmem %s4, %s474
        %p476 = pneg %p166
        %p477 = pneg %p163
        %p478 = pneg %p194
        %p479 = pneg %p191
        %s480 = smul.u32 2, %s22
        %p481 = scmp.lt.s32.totalorder %s21, 0
        %s482 = scalar_select %p481, %s21, 0
        %p483 = scmp.lt.s32.totalorder %s480, 3
        %s484 = scalar_select %p483, %s480, 3
        %s485 = smul.addr %s482, 4
        %s486 = sadd.s32 %s484, %s485
        %s487 = smul.addr %s486, 4
        %s488 = scalar_lea.vmem %s5, %s487
        %s489 = smul.u32 2, %s23
        %p490 = scmp.lt.s32.totalorder %s21, 0
        %s491 = scalar_select %p490, %s21, 0
        %p492 = scmp.lt.s32.totalorder %s489, 35
        %s493 = scalar_select %p492, %s489, 35
        %s494 = smul.addr %s491, 36
        %s495 = sadd.s32 %s493, %s494
        %s496 = smul.addr %s495, 4
        %s497 = scalar_lea.vmem %s0, %s496
        %s498 = smul.u32 2, %s23
        %s499 = smul.u32 32, %s23
        %s500 = smul.u32 2, %s22
        %s501 = smul.u32 2, %s22
        %p502 = scmp.lt.s32.totalorder %s501, 3
        %s503 = scalar_select %p502, %s501, 3
        %s504 = scalar_lea.vmem %s2, %s503
        %s505 = smul.u32 2, %s22
        %s506 = smul.u32 2, %s22
        %p507 = scmp.lt.s32.totalorder %s506, 3
        %s508 = scalar_select %p507, %s506, 3
        %s509 = scalar_lea.vmem %s3, %s508
        %s510 = smul.u32 2, %s22
        %s511 = smul.u32 2, %s22
        %p512 = scmp.lt.s32.totalorder %s21, 0
        %s513 = scalar_select %p512, %s21, 0
        %p514 = scmp.lt.s32.totalorder %s511, 3
        %s515 = scalar_select %p514, %s511, 3
        %s516 = smul.addr %s513, 4
        %s517 = sadd.s32 %s515, %s516
        %s518 = smul.addr %s517, 4
        %s519 = scalar_lea.vmem %s4, %s518
        %s520 = smul.u32 2, %s22
        %s521 = smul.u32 2, %s22
        %p522 = scmp.lt.s32.totalorder %s21, 0
        %s523 = scalar_select %p522, %s21, 0
        %p524 = scmp.lt.s32.totalorder %s521, 3
        %s525 = scalar_select %p524, %s521, 3
        %s526 = smul.addr %s523, 4
        %s527 = sadd.s32 %s525, %s526
        %s528 = smul.addr %s527, 4
        %s529 = scalar_lea.vmem %s5, %s528
        %s530 = smul.u32 2, %s22
        %p531 = scmp.eq.s32.totalorder %s23, 0
        // Predicated region
        $region79: #{resnet_forward.23} parent=73 // pred_check
          %p532 = pneg %p531
        $region80: #{resnet_forward.23} parent=73 // pred_check_branch
          %534 = sbr.rel (%p532) target = $region82
        $region81: #{resnet_forward.23} parent=73 // pred_region
          %535 = vst [vmem:[#allocation2] sm:$0xff] 0.0
          %536 = vst [vmem:[#allocation2 + $0x8] sm:$0xff] 0.0
        $region82: #{resnet_forward.23} parent=73 // pred_fallthru
          _
        %v537 = vld [vmem:[#allocation2] sm:$0xff]
        %v538 = vld [vmem:[#allocation2 + $0x8] sm:$0xff]
        %v539 = vld [vmem:[%s497] sm:$0xff]
        %v540 = vld [vmem:[%s434] sm:$0xff]
        %v541 = vld [vmem:[%s434 + $0x8] sm:$0xff]
        %v542 = vld [vmem:[%s434 + $0x10] sm:$0xff]
        %v543 = vld [vmem:[%s434 + $0x18] sm:$0xff]
        %v544 = vld [vmem:[%s434 + $0x20] sm:$0xff]
        %v545 = vld [vmem:[%s434 + $0x28] sm:$0xff]
        %v546 = vld [vmem:[%s434 + $0x30] sm:$0xff]
        %v547 = vld [vmem:[%s434 + $0x38] sm:$0xff]
        %v548 = vld [vmem:[%s434 + $0x40] sm:$0xff]
        %v549 = vld [vmem:[%s434 + $0x48] sm:$0xff]
        %v550 = vld [vmem:[%s434 + $0x50] sm:$0xff]
        %v551 = vld [vmem:[%s434 + $0x58] sm:$0xff]
        %v552 = vld [vmem:[%s434 + $0x60] sm:$0xff]
        %v553 = vld [vmem:[%s434 + $0x68] sm:$0xff]
        %v554 = vld [vmem:[%s434 + $0x70] sm:$0xff]
        %v555 = vld [vmem:[%s434 + $0x78] sm:$0xff]
        %v556 = vld [vmem:[%s434 + $0x80] sm:$0xff]
        %v557 = vld [vmem:[%s434 + $0x88] sm:$0xff]
        %v558 = vld [vmem:[%s434 + $0x90] sm:$0xff]
        %v559 = vld [vmem:[%s434 + $0x98] sm:$0xff]
        %v560 = vld [vmem:[%s434 + $0xa0] sm:$0xff]
        %v561 = vld [vmem:[%s434 + $0xa8] sm:$0xff]
        %v562 = vld [vmem:[%s434 + $0xb0] sm:$0xff]
        %v563 = vld [vmem:[%s434 + $0xb8] sm:$0xff]
        %v564 = vld [vmem:[%s434 + $0xc0] sm:$0xff]
        %v565 = vld [vmem:[%s434 + $0xc8] sm:$0xff]
        %v566 = vld [vmem:[%s434 + $0xd0] sm:$0xff]
        %v567 = vld [vmem:[%s434 + $0xd8] sm:$0xff]
        %v568 = vld [vmem:[%s434 + $0xe0] sm:$0xff]
        %v569 = vld [vmem:[%s434 + $0xe8] sm:$0xff]
        %v570 = vld [vmem:[%s434 + $0xf0] sm:$0xff]
        %v571 = vld [vmem:[%s434 + $0xf8] sm:$0xff]
        %v573 = vunpack.c.l.b16 %v539
        %v574 = vunpack.c.h.b16 %v539
        %v575 = vpack.c.b16 %v573, %v573
        %v576 = vpack.c.b16 %v574, %v574
        %v611 = vunpack.c.l.b16 %v540
        %v612 = vunpack.c.h.b16 %v540
        %v613 = vunpack.c.l.b16 %v541
        %v614 = vunpack.c.h.b16 %v541
        %v615 = vunpack.c.l.b16 %v542
        %v616 = vunpack.c.h.b16 %v542
        %v617 = vunpack.c.l.b16 %v543
        %v618 = vunpack.c.h.b16 %v543
        %v619 = vunpack.c.l.b16 %v544
        %v620 = vunpack.c.h.b16 %v544
        %v621 = vunpack.c.l.b16 %v545
        %v622 = vunpack.c.h.b16 %v545
        %v623 = vunpack.c.l.b16 %v546
        %v624 = vunpack.c.h.b16 %v546
        %v625 = vunpack.c.l.b16 %v547
        %v626 = vunpack.c.h.b16 %v547
        %v627 = vunpack.c.l.b16 %v548
        %v628 = vunpack.c.h.b16 %v548
        %v629 = vunpack.c.l.b16 %v549
        %v630 = vunpack.c.h.b16 %v549
        %v631 = vunpack.c.l.b16 %v550
        %v632 = vunpack.c.h.b16 %v550
        %v633 = vunpack.c.l.b16 %v551
        %v634 = vunpack.c.h.b16 %v551
        %v635 = vunpack.c.l.b16 %v552
        %v636 = vunpack.c.h.b16 %v552
        %v637 = vunpack.c.l.b16 %v553
        %v638 = vunpack.c.h.b16 %v553
        %v639 = vunpack.c.l.b16 %v554
        %v640 = vunpack.c.h.b16 %v554
        %v641 = vunpack.c.l.b16 %v555
        %v642 = vunpack.c.h.b16 %v555
        %v643 = vunpack.c.l.b16 %v556
        %v644 = vunpack.c.h.b16 %v556
        %v645 = vunpack.c.l.b16 %v557
        %v646 = vunpack.c.h.b16 %v557
        %v647 = vunpack.c.l.b16 %v558
        %v648 = vunpack.c.h.b16 %v558
        %v649 = vunpack.c.l.b16 %v559
        %v650 = vunpack.c.h.b16 %v559
        %v651 = vunpack.c.l.b16 %v560
        %v652 = vunpack.c.h.b16 %v560
        %v653 = vunpack.c.l.b16 %v561
        %v654 = vunpack.c.h.b16 %v561
        %v655 = vunpack.c.l.b16 %v562
        %v656 = vunpack.c.h.b16 %v562
        %v657 = vunpack.c.l.b16 %v563
        %v658 = vunpack.c.h.b16 %v563
        %v659 = vunpack.c.l.b16 %v564
        %v660 = vunpack.c.h.b16 %v564
        %v661 = vunpack.c.l.b16 %v565
        %v662 = vunpack.c.h.b16 %v565
        %v663 = vunpack.c.l.b16 %v566
        %v664 = vunpack.c.h.b16 %v566
        %v665 = vunpack.c.l.b16 %v567
        %v666 = vunpack.c.h.b16 %v567
        %v667 = vunpack.c.l.b16 %v568
        %v668 = vunpack.c.h.b16 %v568
        %v669 = vunpack.c.l.b16 %v569
        %v670 = vunpack.c.h.b16 %v569
        %v671 = vunpack.c.l.b16 %v570
        %v672 = vunpack.c.h.b16 %v570
        %v673 = vunpack.c.l.b16 %v571
        %v674 = vunpack.c.h.b16 %v571
        %v675 = vpack.c.b16 %v613, %v611
        %v676 = vpack.c.b16 %v614, %v612
        %v677 = vpack.c.b16 %v617, %v615
        %v678 = vpack.c.b16 %v618, %v616
        %v679 = vpack.c.b16 %v621, %v619
        %v680 = vpack.c.b16 %v622, %v620
        %v681 = vpack.c.b16 %v625, %v623
        %v682 = vpack.c.b16 %v626, %v624
        %v683 = vpack.c.b16 %v629, %v627
        %v684 = vpack.c.b16 %v630, %v628
        %v685 = vpack.c.b16 %v633, %v631
        %v686 = vpack.c.b16 %v634, %v632
        %v687 = vpack.c.b16 %v637, %v635
        %v688 = vpack.c.b16 %v638, %v636
        %v689 = vpack.c.b16 %v641, %v639
        %v690 = vpack.c.b16 %v642, %v640
        %v691 = vpack.c.b16 %v645, %v643
        %v692 = vpack.c.b16 %v646, %v644
        %v693 = vpack.c.b16 %v649, %v647
        %v694 = vpack.c.b16 %v650, %v648
        %v695 = vpack.c.b16 %v653, %v651
        %v696 = vpack.c.b16 %v654, %v652
        %v697 = vpack.c.b16 %v657, %v655
        %v698 = vpack.c.b16 %v658, %v656
        %v699 = vpack.c.b16 %v661, %v659
        %v700 = vpack.c.b16 %v662, %v660
        %v701 = vpack.c.b16 %v665, %v663
        %v702 = vpack.c.b16 %v666, %v664
        %v703 = vpack.c.b16 %v669, %v667
        %v704 = vpack.c.b16 %v670, %v668
        %v705 = vpack.c.b16 %v673, %v671
        %v706 = vpack.c.b16 %v674, %v672
        %739 = vmatprep.subr.bf16.mxu0 %v676
        %740 = vmatpush1.bf16.msra.mxu0 %v675
        %741 = vmatprep.subr.bf16.mxu0 %v678
        %742 = vmatpush1.bf16.msra.mxu0 %v677
        %743 = vmatprep.subr.bf16.mxu0 %v680
        %744 = vmatpush1.bf16.msra.mxu0 %v679
        %745 = vmatprep.subr.bf16.mxu0 %v682
        %746 = vmatpush1.bf16.msra.mxu0 %v681
        %747 = vmatprep.subr.bf16.mxu0 %v684
        %748 = vmatpush1.bf16.msra.mxu0 %v683
        %749 = vmatprep.subr.bf16.mxu0 %v686
        %750 = vmatpush1.bf16.msra.mxu0 %v685
        %751 = vmatprep.subr.bf16.mxu0 %v688
        %752 = vmatpush1.bf16.msra.mxu0 %v687
        %753 = vmatprep.subr.bf16.mxu0 %v690
        %754 = vmatpush1.bf16.msra.mxu0 %v689
        %755 = vmatprep.subr.bf16.mxu0 %v692
        %756 = vmatpush1.bf16.msra.mxu0 %v691
        %757 = vmatprep.subr.bf16.mxu0 %v694
        %758 = vmatpush1.bf16.msra.mxu0 %v693
        %759 = vmatprep.subr.bf16.mxu0 %v696
        %760 = vmatpush1.bf16.msra.mxu0 %v695
        %761 = vmatprep.subr.bf16.mxu0 %v698
        %762 = vmatpush1.bf16.msra.mxu0 %v697
        %763 = vmatprep.subr.bf16.mxu0 %v700
        %764 = vmatpush1.bf16.msra.mxu0 %v699
        %765 = vmatprep.subr.bf16.mxu0 %v702
        %766 = vmatpush1.bf16.msra.mxu0 %v701
        %767 = vmatprep.subr.bf16.mxu0 %v704
        %768 = vmatpush1.bf16.msra.mxu0 %v703
        %769 = vmatprep.subr.bf16.mxu0 %v706
        %770 = vmatpush1.bf16.msra.mxu0 %v705
        %771 = vmatprep.mubr.bf16.mxu0 %v576
        %772 = vmatmul.mubr.bf16.gmra.mrb[0].mxu0 %v575
        %v773 = vpop.f32.mrb[0].mxu0
        %v774 = vadd.f32 0.0, %v773
        %v775 = vpop.f32.mrb[0].mxu0
        %v776 = vadd.f32 0.0, %v775
        %v777 = vpop.f32.mrb[0].mxu0
        %v778 = vpop.f32.mrb[0].mxu0
        %779 = vdwg.mxu0
        %v780 = vadd.f32 %v537, %v774
        %v781 = vadd.f32 %v538, %v776
        %782 = vst [vmem:[#allocation2] sm:$0xff] %v780
        %783 = vst [vmem:[#allocation2 + $0x8] sm:$0xff] %v781
        %p784 = scmp.eq.s32.totalorder %s23, 17
        // Predicated region
        $region83: #{resnet_forward.23} parent=73 // pred_check
          %p785 = pneg %p784
        $region84: #{resnet_forward.23} parent=73 // pred_check_branch
          %787 = sbr.rel (%p785) target = $region86
        $region85: #{resnet_forward.23} parent=73 // pred_region
          %v788 = vld [vmem:[#allocation2] sm:$0xff]
          %v789 = vld [vmem:[#allocation2 + $0x8] sm:$0xff]
          %v790 = vld [vmem:[%s504] sm:$0x3]
          %v792 = vlaneseq
          %v793 = vshrl.u32 %v792, 7
          %v794 = vsub.s32 0, %v793
          %v795 = vrot.slane %v790, %v794
          %v796 = vlaneseq
          %v797 = vshrl.u32 %v796, 7
          %v798 = vsub.s32 1, %v797
          %v799 = vrot.slane %v790, %v798
          %v802 = vmul.f32 %v788, %v795
          %v803 = vmul.f32 %v789, %v799
          %v804 = vld [vmem:[%s509] sm:$0x3]
          %v806 = vlaneseq
          %v807 = vshrl.u32 %v806, 7
          %v808 = vsub.s32 0, %v807
          %v809 = vrot.slane %v804, %v808
          %v810 = vlaneseq
          %v811 = vshrl.u32 %v810, 7
          %v812 = vsub.s32 1, %v811
          %v813 = vrot.slane %v804, %v812
          %v816 = vadd.f32 %v802, %v809
          %v817 = vadd.f32 %v803, %v813
          %v818 = vld [vmem:[%s519] sm:$0xff]
          %v819 = vunpack.c.l.bf16 %v818
          %v820 = vunpack.c.h.bf16 %v818
          %v821 = vadd.f32 %v816, %v819
          %v822 = vadd.f32 %v817, %v820
          %v823 = vmax.f32 %v821, 0.0
          %v824 = vmax.f32 %v822, 0.0
          %v825 = vpack.c.bf16 %v823, %v823
          %v826 = vpack.c.bf16 %v824, %v824
          %v829 = vunpack.c.l.b16 %v825
          %v830 = vunpack.c.l.b16 %v826
          %v831 = vpack.c.b16 %v830, %v829
          %833 = vst [vmem:[%s529] sm:$0xff] %v831
        $region86: #{resnet_forward.23} parent=73 // pred_fallthru
          _
        %s834 = smul.u32 2, %s22
        %p835 = scmp.lt.s32.totalorder %s21, 0
        %s836 = scalar_select %p835, %s21, 0
        %p837 = scmp.lt.s32.totalorder %s834, 3
        %s838 = scalar_select %p837, %s834, 3
        %s839 = smul.addr %s836, 4
        %s840 = sadd.s32 %s838, %s839
        %s841 = smul.addr %s840, 4
        %s842 = scalar_lea.vmem %s5, %s841
        // Predicated region
        $region87: #{resnet_forward.23} parent=73 // pred_check
          %p843 = pneg %p191
        $region88: #{resnet_forward.23} parent=73 // pred_check_branch
          %845 = sbr.rel (%p843) target = $region90
        $region89: #{resnet_forward.23} parent=73 // pred_region
          %s846 = smul.u32 2, %s22
        $region90: #{resnet_forward.23} parent=73 // pred_fallthru
          _
      $region74: #{resnet_forward.23} parent=5 // pred_fallthru
        _
      %p847 = scmp.le.s32.totalorder 2, %s11
      // Predicated region
      $region91: #{resnet_forward.23} parent=5 // pred_check
        %p848 = pneg %p847
      $region92: #{resnet_forward.23} parent=5 // pred_check_branch
        %850 = sbr.rel (%p848) target = $region94
      $region93: #{resnet_forward.23} parent=5 // pred_region
        %s851 = ssub.s32 %s11, 2
        // Predicated region
        $region95: #{resnet_forward.23} parent=93 // pred_check
          %p852 = pneg %p197
        $region96: #{resnet_forward.23} parent=93 // pred_check_branch
          %854 = sbr.rel (%p852) target = $region98
        $region97: #{resnet_forward.23} parent=93 // pred_region
          %s855 = smul.u32 2, %s25
          %p856 = scmp.lt.s32.totalorder %s24, 0
          %s857 = scalar_select %p856, %s24, 0
          %p858 = scmp.lt.s32.totalorder %s855, 3
          %s859 = scalar_select %p858, %s855, 3
          %s860 = smul.addr %s857, 4
          %s861 = sadd.s32 %s859, %s860
          %s862 = smul.addr %s861, 4
          %s863 = scalar_lea.vmem %s5, %s862
        $region98: #{resnet_forward.23} parent=93 // pred_fallthru
          _
      $region94: #{resnet_forward.23} parent=5 // pred_fallthru
        _
    $region6: #{resnet_forward.23} parent=1 // loop_footer
      %s15 = sadd.s32 1, %s11
    $region7: #{resnet_forward.23} parent=1 // loop_footer_branch
      %10 = sbr.rel target = $region3
    $region8: #{resnet_forward.23} parent=1 // loop_exit
      _

</llo_original>
